<compile_context>
chip_gen: v6e
topology: v6e:2x2x1
jax: 0.10.0
libtpu: 0.0.40
codegen_flags: <defaults>
</compile_context>

<pallas_src>
import functools
import math

import jax
import jax.numpy as jnp
from jax.experimental import pallas as pl
from jax.experimental.pallas import tpu as pltpu


# ----------------------------- helpers --------------------------------------

_LANE_PAD = 128   # lane-dense output width for tiny feature-encoder matmuls


def _detect_vmem_limit():
    """Per-generation scoped-VMEM budget (review items 6/7):
    ~48 MiB on v7x (64 MiB physical), up to 96 MiB on v5e/v6e (128 MiB)."""
    cap = None
    try:
        if hasattr(pltpu, "get_tpu_info"):
            cap = int(pltpu.get_tpu_info().vmem_capacity_bytes)
    except Exception:
        cap = None
    if cap is None:
        return 48 * 1024 * 1024
    return int(min(96 * 1024 * 1024, max(32 * 1024 * 1024, (cap * 3) // 4)))


_VMEM_LIMIT = _detect_vmem_limit()


def _cparams(sem):
    return pltpu.CompilerParams(dimension_semantics=sem,
                                vmem_limit_bytes=_VMEM_LIMIT)


def _gelu(x):
    # exact (erf-based) GELU, matching torch.nn.GELU() default
    return 0.5 * x * (1.0 + jax.lax.erf(x * 0.7071067811865475))


def _ln(x, g, b, eps):
    mu = jnp.mean(x, axis=-1, keepdims=True)
    xc = x - mu
    var = jnp.mean(xc * xc, axis=-1, keepdims=True)
    return xc * jax.lax.rsqrt(var + eps) * g + b


def _bf16(x):
    return x.astype(jnp.bfloat16)


def _row_tile(M, cap=1024):
    """Row tile: multiple of 8, divides M, targets ~M/2 so the grid has >=2
    steps (v7x megacore), capped at `cap`.  Falls back to full M if M has no
    multiple-of-8 divisor (never the case for the shapes used here)."""
    if M < 16:
        return M
    target = min(cap, max(8, (M // 2 // 8) * 8))
    t = target - (target % 8)
    while t >= 8:
        if M % t == 0:
            return t
        t -= 8
    return M


# ----------------------------- generic matmul kernel -------------------------

def _matmul_bias_act_kernel(x_ref, w_ref, b_ref, o_ref, *, act):
    y = jnp.dot(_bf16(x_ref[...]), w_ref[...],
                preferred_element_type=jnp.float32) + b_ref[...]
    if act == "relu":
        y = jnp.maximum(y, 0.0)
    elif act == "gelu":
        y = _gelu(y)
    o_ref[...] = y


def matmul_bias_act(x, w, b, act="none"):
    """y = act(x @ w + b).  x:(M,K) f32, w:(K,N) bf16, b:(N,) f32.  N is kept
    lane-dense (>=128) by the callers (review item 10)."""
    M, K = x.shape
    _, N = w.shape
    tm = _row_tile(M)
    return pl.pallas_call(
        functools.partial(_matmul_bias_act_kernel, act=act),
        out_shape=jax.ShapeDtypeStruct((M, N), jnp.float32),
        grid=(M // tm,),
        in_specs=[
            pl.BlockSpec((tm, K), lambda i: (i, 0)),
            pl.BlockSpec((K, N), lambda i: (0, 0)),
            pl.BlockSpec((1, N), lambda i: (0, 0)),
        ],
        out_specs=pl.BlockSpec((tm, N), lambda i: (i, 0)),
        compiler_params=_cparams(("parallel",)),
    )(x, w, b.reshape(1, N))


# ----------------------------- Conformer block: front kernel -----------------
# FFN1 -> MHSA -> Conv-A (LN, pw1+GELU, depthwise(k=1) affine), per batch.

def _block_front_kernel(x_ref, pe_ref, lng_ref, lnb_ref,
                        w1_ref, b1_ref, w2_ref, b2_ref,
                        wqkv_ref, bqkv_ref, wout_ref, bout_ref,
                        pw1_ref, pw1b_ref, dww_ref, dwb_ref,
                        xmid_ref, h_ref, psum_ref, psq_ref, *, eps):
    x = x_ref[0]                                           # (S, D) f32

    # ---- FFN1: LN -> Lin+GELU -> Lin -> 0.5 * residual ----
    hn = _ln(x, lng_ref[0], lnb_ref[0], eps)
    hn = _gelu(jnp.dot(_bf16(hn), w1_ref[...],
                       preferred_element_type=jnp.float32) + b1_ref[...])
    y = jnp.dot(_bf16(hn), w2_ref[...],
                preferred_element_type=jnp.float32) + b2_ref[...]
    x1 = x + 0.5 * y

    # ---- MHSA: LN -> +PE -> per-head attention folded into out-proj -> +res
    # Weights are per-head ((3H,D,Dh) / (H,Dh,D)); no lane-slicing of computed
    # values and no concat.  Softmax 1/sqrt(dh) is baked into the q weights.
    num_heads = wqkv_ref.shape[0] // 3
    hb = _ln(x1, lng_ref[1], lnb_ref[1], eps) + pe_ref[...]
    hb16 = _bf16(hb)
    acc = jnp.zeros(x1.shape, jnp.float32)
    for hd in range(num_heads):                            # static, unrolled
        q = jnp.dot(hb16, wqkv_ref[hd],
                    preferred_element_type=jnp.float32) + bqkv_ref[hd]
        k = jnp.dot(hb16, wqkv_ref[num_heads + hd],
                    preferred_element_type=jnp.float32) + bqkv_ref[num_heads + hd]
        v = jnp.dot(hb16, wqkv_ref[2 * num_heads + hd],
                    preferred_element_type=jnp.float32) + bqkv_ref[2 * num_heads + hd]
        s = jax.lax.dot_general(_bf16(q), _bf16(k), (((1,), (1,)), ((), ())),
                                preferred_element_type=jnp.float32)
        m = jnp.max(s, axis=-1, keepdims=True)
        p = jnp.exp(s - m)
        p = p * pl.reciprocal(jnp.sum(p, axis=-1, keepdims=True), approx=True)
        o = jnp.dot(_bf16(p), _bf16(v), preferred_element_type=jnp.float32)
        acc = acc + jnp.dot(_bf16(o), wout_ref[hd],
                            preferred_element_type=jnp.float32)
    x2 = x1 + acc + bout_ref[...]
    xmid_ref[0] = x2                                       # conv residual base (f32)

    # ---- Conv-A: LN -> pw1 + GELU -> depthwise(k=1) per-channel affine ----
    hc = _ln(x2, lng_ref[2], lnb_ref[2], eps)
    hc = _gelu(jnp.dot(_bf16(hc), pw1_ref[...],
                       preferred_element_type=jnp.float32) + pw1b_ref[...])
    hc = hc * dww_ref[...] + dwb_ref[...]
    h_ref[0] = _bf16(hc)                                   # bf16 across HBM
    psum_ref[0] = jnp.sum(hc, axis=0, keepdims=True)       # per-batch BN partials
    psq_ref[0] = jnp.sum(hc * hc, axis=0, keepdims=True)


# ----------------------------- Conformer block: back kernel ------------------
# BN finalize -> BN+GELU -> pw2 -> +res -> FFN2 -> block-final LayerNorm.

def _block_back_kernel(h_ref, xmid_ref, psum_ref, psq_ref,
                       bng_ref, bnb_ref, pw2_ref, pw2b_ref,
                       lng_ref, lnb_ref, w1_ref, b1_ref, w2_ref, b2_ref,
                       o_ref, *, inv_rows, eps):
    # BatchNorm1d training-mode batch stats (biased variance), recomputed per
    # grid step from the per-batch partial sums (Dc-wide => trivially cheap,
    # keeps the batch axis "parallel" instead of a serialized accumulator).
    s = jnp.sum(psum_ref[...], axis=0)                     # (1, Dc)
    sq = jnp.sum(psq_ref[...], axis=0)
    mean = s * inv_rows
    var = sq * inv_rows - mean * mean
    scale = bng_ref[...] * jax.lax.rsqrt(var + eps)
    shift = bnb_ref[...] - mean * scale

    x2 = xmid_ref[0]                                       # (S, D) f32
    hc = h_ref[0].astype(jnp.float32)                      # (S, Dc)
    yc = _gelu(hc * scale + shift)
    y = jnp.dot(_bf16(yc), pw2_ref[...],
                preferred_element_type=jnp.float32) + pw2b_ref[...] + x2

    # ---- FFN2: LN -> Lin+GELU -> Lin -> 0.5 * residual ----
    z = _ln(y, lng_ref[0], lnb_ref[0], eps)
    z = _gelu(jnp.dot(_bf16(z), w1_ref[...],
                      preferred_element_type=jnp.float32) + b1_ref[...])
    z = jnp.dot(_bf16(z), w2_ref[...],
                preferred_element_type=jnp.float32) + b2_ref[...]
    y = y + 0.5 * z

    # ---- block-final LayerNorm ----
    o_ref[0] = _ln(y, lng_ref[1], lnb_ref[1], eps)


def conformer_block(x3d, blk, pe_s, cfg):
    B, S, D = x3d.shape
    Ff = blk["ffn1_w1"].shape[1]
    Dc = blk["pw1_w"].shape[1]
    H, Dh = cfg["num_heads"], cfg["dim_heads"]

    x_mid, h, psum, psq = pl.pallas_call(
        functools.partial(_block_front_kernel, eps=1e-5),
        out_shape=(jax.ShapeDtypeStruct((B, S, D), jnp.float32),
                   jax.ShapeDtypeStruct((B, S, Dc), jnp.bfloat16),
                   jax.ShapeDtypeStruct((B, 1, Dc), jnp.float32),
                   jax.ShapeDtypeStruct((B, 1, Dc), jnp.float32)),
        grid=(B,),
        in_specs=[
            pl.BlockSpec((1, S, D), lambda b: (b, 0, 0)),
            pl.BlockSpec((S, D), lambda b: (0, 0)),
            pl.BlockSpec((3, 1, D), lambda b: (0, 0, 0)),
            pl.BlockSpec((3, 1, D), lambda b: (0, 0, 0)),
            pl.BlockSpec((D, Ff), lambda b: (0, 0)),
            pl.BlockSpec((1, Ff), lambda b: (0, 0)),
            pl.BlockSpec((Ff, D), lambda b: (0, 0)),
            pl.BlockSpec((1, D), lambda b: (0, 0)),
            pl.BlockSpec((3 * H, D, Dh), lambda b: (0, 0, 0)),
            pl.BlockSpec((3 * H, 1, Dh), lambda b: (0, 0, 0)),
            pl.BlockSpec((H, Dh, D), lambda b: (0, 0, 0)),
            pl.BlockSpec((1, D), lambda b: (0, 0)),
            pl.BlockSpec((D, Dc), lambda b: (0, 0)),
            pl.BlockSpec((1, Dc), lambda b: (0, 0)),
            pl.BlockSpec((1, Dc), lambda b: (0, 0)),
            pl.BlockSpec((1, Dc), lambda b: (0, 0)),
        ],
        out_specs=(pl.BlockSpec((1, S, D), lambda b: (b, 0, 0)),
                   pl.BlockSpec((1, S, Dc), lambda b: (b, 0, 0)),
                   pl.BlockSpec((1, 1, Dc), lambda b: (b, 0, 0)),
                   pl.BlockSpec((1, 1, Dc), lambda b: (b, 0, 0))),
        compiler_params=_cparams(("parallel",)),
    )(x3d, pe_s, blk["front_ln_g"], blk["front_ln_b"],
      blk["ffn1_w1"], blk["ffn1_b1"], blk["ffn1_w2"], blk["ffn1_b2"],
      blk["w_qkv"], blk["b_qkv"], blk["w_out"], blk["b_out"],
      blk["pw1_w"], blk["pw1_b"], blk["dw_w"], blk["dw_b"])

    y = pl.pallas_call(
        functools.partial(_block_back_kernel, inv_rows=1.0 / float(B * S), eps=1e-5),
        out_shape=jax.ShapeDtypeStruct((B, S, D), jnp.float32),
        grid=(B,),
        in_specs=[
            pl.BlockSpec((1, S, Dc), lambda b: (b, 0, 0)),
            pl.BlockSpec((1, S, D), lambda b: (b, 0, 0)),
            pl.BlockSpec((B, 1, Dc), lambda b: (0, 0, 0)),
            pl.BlockSpec((B, 1, Dc), lambda b: (0, 0, 0)),
            pl.BlockSpec((1, Dc), lambda b: (0, 0)),
            pl.BlockSpec((1, Dc), lambda b: (0, 0)),
            pl.BlockSpec((Dc, D), lambda b: (0, 0)),
            pl.BlockSpec((1, D), lambda b: (0, 0)),
            pl.BlockSpec((2, 1, D), lambda b: (0, 0, 0)),
            pl.BlockSpec((2, 1, D), lambda b: (0, 0, 0)),
            pl.BlockSpec((D, Ff), lambda b: (0, 0)),
            pl.BlockSpec((1, Ff), lambda b: (0, 0)),
            pl.BlockSpec((Ff, D), lambda b: (0, 0)),
            pl.BlockSpec((1, D), lambda b: (0, 0)),
        ],
        out_specs=pl.BlockSpec((1, S, D), lambda b: (b, 0, 0)),
        compiler_params=_cparams(("parallel",)),
    )(h, x_mid, psum, psq, blk["bn_g"], blk["bn_b"], blk["pw2_w"], blk["pw2_b"],
      blk["back_ln_g"], blk["back_ln_b"],
      blk["ffn2_w1"], blk["ffn2_b1"], blk["ffn2_w2"], blk["ffn2_b2"])
    return y


# ----------------------------- model glue ------------------------------------

def conv2d_relu(x, w_pad, b_pad, cout, *, stride=2, pad=1, k=3):
    """PyTorch Conv2d(k=3,s=2,p=1)+ReLU via im2col + fused Pallas matmul with a
    lane-dense (zero-padded to 128) output; the `cout` real channels are sliced
    out afterwards.  x: (B, Cin, H, W) NCHW;  w_pad: (Cin*k*k, 128) bf16."""
    # TODO(synk): im2col patch extraction and NCHW<->NHWC transposes remain plain XLA.
    B, Cin, H, W = x.shape
    xp = jnp.pad(x, ((0, 0), (0, 0), (pad, pad), (pad, pad)))
    Ho = (H + 2 * pad - k) // stride + 1
    Wo = (W + 2 * pad - k) // stride + 1
    patches = []
    for dy in range(k):
        for dx in range(k):
            patches.append(
                xp[:, :, dy:dy + stride * Ho:stride, dx:dx + stride * Wo:stride])
    cols = jnp.stack(patches, axis=2)                      # (B, Cin, k*k, Ho, Wo)
    cols = cols.transpose(0, 3, 4, 1, 2).reshape(B * Ho * Wo, Cin * k * k)
    y = matmul_bias_act(cols, w_pad, b_pad, act="relu")    # (B*Ho*Wo, 128) lane-dense
    y = y[:, :cout]
    return y.reshape(B, Ho, Wo, cout).transpose(0, 3, 1, 2)


def sinusoidal_pe(max_seq_len, dim_model):
    pos = jnp.arange(max_seq_len, dtype=jnp.float32)[:, None]
    div = jnp.exp(jnp.arange(0, dim_model, 2, dtype=jnp.float32)
                  * (-math.log(10000.0) / dim_model))
    pe = jnp.zeros((max_seq_len, dim_model), jnp.float32)
    pe = pe.at[:, 0::2].set(jnp.sin(pos * div))
    pe = pe.at[:, 1::2].set(jnp.cos(pos * div))
    return pe


def w2vbert_forward(params, x, cfg, pe):
    # FeatureEncoder: (B, Cin, T, F) -> (B, C, T//4, F//4)
    Ce = cfg["enc_channels"]
    h = conv2d_relu(x, params["fe_w1"], params["fe_b1"], Ce)
    h = conv2d_relu(h, params["fe_w2"], params["fe_b2"], Ce)
    B, C, Tp, Fp = h.shape
    # ContrastiveModule input projection (see TODO(synk) header note).
    seq = h.transpose(0, 2, 1, 3).reshape(B * Tp, C * Fp)
    x2d = matmul_bias_act(seq, params["proj_w"], params["proj_b"], act="none")
    x3d = x2d.reshape(B, Tp, cfg["dim_model"])
    pe_s = pe[:Tp]
    for blk in params["blocks"]:
        x3d = conformer_block(x3d, blk, pe_s, cfg)
    y_c = x3d
    # VectorQuantizer and MaskedPredictionModule are identity in the reference.
    y_m = y_c
    return y_c, y_m


# ----------------------------- parameters ------------------------------------

CFG = dict(
    in_channels=1, enc_channels=8,
    dim_model=128, dim_ffn=256, dim_conv=256,
    num_heads=4, dim_heads=32, num_blocks=2,
    max_seq_len=1024,
)


def init_params(key, cfg, dim_feat):
    D, Ff, Dc = cfg["dim_model"], cfg["dim_ffn"], cfg["dim_conv"]
    H, Dh = cfg["num_heads"], cfg["dim_heads"]
    keys = iter(jax.random.split(key, 1024))

    def wf32(shape, scale=0.02):
        return scale * jax.random.normal(next(keys), shape, jnp.float32)

    def wbf16(shape, scale=0.02):
        # matmul weights stored bf16 (MXU-native; halves weight DMA bytes)
        return wf32(shape, scale).astype(jnp.bfloat16)

    zeros = lambda s: jnp.zeros(s, jnp.float32)
    ones = lambda s: jnp.ones(s, jnp.float32)

    k = 3
    Cin, Ce = cfg["in_channels"], cfg["enc_channels"]
    LP = _LANE_PAD

    def fe_weight(cin):
        wt = wf32((Ce, cin * k * k))                  # torch layout (Cout, Cin*k*k)
        wp = jnp.zeros((cin * k * k, LP), jnp.float32).at[:, :Ce].set(wt.T)
        return wp.astype(jnp.bfloat16)                # zero-padded, lane-dense output

    params = {
        "fe_w1": fe_weight(Cin), "fe_b1": zeros((LP,)),
        "fe_w2": fe_weight(Ce), "fe_b2": zeros((LP,)),
        "proj_w": wbf16((dim_feat, D)), "proj_b": zeros((D,)),
        "blocks": [],
    }

    attn_scale = Dh ** -0.5
    for _ in range(cfg["num_blocks"]):
        # per-head QKV / out-proj layout; softmax scale baked into q (exact)
        w_qkv = wf32((3 * H, D, Dh))
        w_qkv = w_qkv.at[:H].multiply(attn_scale)
        b_qkv = zeros((3 * H, 1, Dh)).at[:H].multiply(attn_scale)
        blk = {
            "front_ln_g": ones((3, 1, D)), "front_ln_b": zeros((3, 1, D)),
            "ffn1_w1": wbf16((D, Ff)), "ffn1_b1": zeros((1, Ff)),
            "ffn1_w2": wbf16((Ff, D)), "ffn1_b2": zeros((1, D)),
            "w_qkv": w_qkv.astype(jnp.bfloat16), "b_qkv": b_qkv,
            "w_out": wbf16((H, Dh, D)), "b_out": zeros((1, D)),
            "pw1_w": wbf16((D, Dc)), "pw1_b": zeros((1, Dc)),
            "dw_w": wf32((1, Dc), 1.0), "dw_b": zeros((1, Dc)),
            "bn_g": ones((1, Dc)), "bn_b": zeros((1, Dc)),
            "pw2_w": wbf16((Dc, D)), "pw2_b": zeros((1, D)),
            "back_ln_g": ones((2, 1, D)), "back_ln_b": zeros((2, 1, D)),
            "ffn2_w1": wbf16((D, Ff)), "ffn2_b1": zeros((1, Ff)),
            "ffn2_w2": wbf16((Ff, D)), "ffn2_b2": zeros((1, D)),
        }
        params["blocks"].append(blk)
    return params


# ----------------------------- main -------------------------------------------

if __name__ == "__main__":
    cfg = CFG
    B, Cin, T, Fdim = 2, cfg["in_channels"], 32, 32
    key = jax.random.PRNGKey(0)
    kx, kp = jax.random.split(key)
    x = jax.random.normal(kx, (B, Cin, T, Fdim), jnp.float32)

    dim_feat = cfg["enc_channels"] * (Fdim // 4)
    params = init_params(kp, cfg, dim_feat)
    pe = sinusoidal_pe(cfg["max_seq_len"], cfg["dim_model"])

    fwd = jax.jit(functools.partial(w2vbert_forward, cfg=cfg, pe=pe))
    y_c, y_m = fwd(params, x)
    jax.block_until_ready((y_c, y_m))

    assert y_c.shape == (B, T // 4, cfg["dim_model"])
    assert y_m.shape == (B, T // 4, cfg["dim_model"])
    assert y_c.dtype == jnp.float32 and y_m.dtype == jnp.float32
    assert bool(jnp.all(jnp.isfinite(y_c)))
    print("KERNEL_OK")
</pallas_src>

<mosaic_0001>
module attributes {stable_mosaic.version = 11 : i64} {
  func.func @_matmul_bias_act_kernel(%arg0: i32, %arg1: memref<256x9xf32, #tpu.memory_space<vmem>>, %arg2: memref<9x128xbf16, #tpu.memory_space<vmem>>, %arg3: memref<1x128xf32, #tpu.memory_space<vmem>>, %arg4: memref<256x128xf32, #tpu.memory_space<vmem>>) attributes {dimension_semantics = [#tpu.dimension_semantics<parallel>], iteration_bounds = array<i64: 2>, scalar_prefetch = 0 : i64, scratch_operands = 0 : i64, tpu.core_type = #tpu.core_type<tc>, window_params = [{transform_indices = @transform_0, window_bounds = array<i64: 256, 9>}, {pipeline_mode = #tpu.pipeline_mode<synchronous>, transform_indices = @transform_1, window_bounds = array<i64: 9, 128>}, {pipeline_mode = #tpu.pipeline_mode<synchronous>, transform_indices = @transform_2, window_bounds = array<i64: 1, 128>}, {transform_indices = @transform_3, window_bounds = array<i64: 256, 128>}]} {
    %c0 = arith.constant 0 : index
    %c0_0 = arith.constant 0 : index
    %0 = vector.load %arg1[%c0, %c0_0] : memref<256x9xf32, #tpu.memory_space<vmem>>, vector<256x9xf32>
    %1 = arith.truncf %0 : vector<256x9xf32> to vector<256x9xbf16>
    %c0_1 = arith.constant 0 : index
    %c0_2 = arith.constant 0 : index
    %2 = vector.load %arg2[%c0_1, %c0_2] : memref<9x128xbf16, #tpu.memory_space<vmem>>, vector<9x128xbf16>
    %cst = arith.constant dense<0.000000e+00> : vector<256x128xf32>
    %3 = tpu.matmul %1, %2, %cst {dimension_numbers = #tpu.dot_dimension_numbers<[1], [0], [0], [1], [0, 0, 1, 1], [], []>} : vector<256x9xbf16>, vector<9x128xbf16>, vector<256x128xf32> -> vector<256x128xf32>
    %c0_3 = arith.constant 0 : index
    %c0_4 = arith.constant 0 : index
    %4 = vector.load %arg3[%c0_3, %c0_4] : memref<1x128xf32, #tpu.memory_space<vmem>>, vector<1x128xf32>
    %5 = vector.broadcast %4 : vector<1x128xf32> to vector<256x128xf32>
    %6 = arith.addf %3, %5 : vector<256x128xf32>
    %cst_5 = arith.constant 0.000000e+00 : f32
    %7 = vector.broadcast %cst_5 : f32 to vector<256x128xf32>
    %8 = arith.maximumf %6, %7 : vector<256x128xf32>
    %c0_6 = arith.constant 0 : index
    %c0_7 = arith.constant 0 : index
    %9 = vector.load %arg4[%c0_6, %c0_7] : memref<256x128xf32, #tpu.memory_space<vmem>>, vector<256x128xf32>
    tpu.vector_store %arg4[%c0_6, %c0_7], %8 {strides = array<i32>} : memref<256x128xf32, #tpu.memory_space<vmem>>, vector<256x128xf32>,
    return
  }
  func.func @transform_0(%arg0: i32) -> (i32, i32) {
    %c0_i32 = arith.constant 0 : i32
    %c0_i32_0 = arith.constant 0 : i32
    return %arg0, %c0_i32 : i32, i32
  }
  func.func @transform_1(%arg0: i32) -> (i32, i32) {
    %c0_i32 = arith.constant 0 : i32
    %c0_i32_0 = arith.constant 0 : i32
    %c0_i32_1 = arith.constant 0 : i32
    return %c0_i32, %c0_i32_0 : i32, i32
  }
  func.func @transform_2(%arg0: i32) -> (i32, i32) {
    %c0_i32 = arith.constant 0 : i32
    %c0_i32_0 = arith.constant 0 : i32
    %c0_i32_1 = arith.constant 0 : i32
    return %c0_i32, %c0_i32_0 : i32, i32
  }
  func.func @transform_3(%arg0: i32) -> (i32, i32) {
    %c0_i32 = arith.constant 0 : i32
    %c0_i32_0 = arith.constant 0 : i32
    return %arg0, %c0_i32 : i32, i32
  }
}

module attributes {stable_mosaic.version = 11 : i64} {
  func.func @_matmul_bias_act_kernel(%arg0: i32, %arg1: memref<64x72xf32, #tpu.memory_space<vmem>>, %arg2: memref<72x128xbf16, #tpu.memory_space<vmem>>, %arg3: memref<1x128xf32, #tpu.memory_space<vmem>>, %arg4: memref<64x128xf32, #tpu.memory_space<vmem>>) attributes {dimension_semantics = [#tpu.dimension_semantics<parallel>], iteration_bounds = array<i64: 2>, scalar_prefetch = 0 : i64, scratch_operands = 0 : i64, tpu.core_type = #tpu.core_type<tc>, window_params = [{transform_indices = @transform_0, window_bounds = array<i64: 64, 72>}, {pipeline_mode = #tpu.pipeline_mode<synchronous>, transform_indices = @transform_1, window_bounds = array<i64: 72, 128>}, {pipeline_mode = #tpu.pipeline_mode<synchronous>, transform_indices = @transform_2, window_bounds = array<i64: 1, 128>}, {transform_indices = @transform_3, window_bounds = array<i64: 64, 128>}]} {
    %c0 = arith.constant 0 : index
    %c0_0 = arith.constant 0 : index
    %0 = vector.load %arg1[%c0, %c0_0] : memref<64x72xf32, #tpu.memory_space<vmem>>, vector<64x72xf32>
    %1 = arith.truncf %0 : vector<64x72xf32> to vector<64x72xbf16>
    %c0_1 = arith.constant 0 : index
    %c0_2 = arith.constant 0 : index
    %2 = vector.load %arg2[%c0_1, %c0_2] : memref<72x128xbf16, #tpu.memory_space<vmem>>, vector<72x128xbf16>
    %cst = arith.constant dense<0.000000e+00> : vector<64x128xf32>
    %3 = tpu.matmul %1, %2, %cst {dimension_numbers = #tpu.dot_dimension_numbers<[1], [0], [0], [1], [0, 0, 1, 1], [], []>} : vector<64x72xbf16>, vector<72x128xbf16>, vector<64x128xf32> -> vector<64x128xf32>
    %c0_3 = arith.constant 0 : index
    %c0_4 = arith.constant 0 : index
    %4 = vector.load %arg3[%c0_3, %c0_4] : memref<1x128xf32, #tpu.memory_space<vmem>>, vector<1x128xf32>
    %5 = vector.broadcast %4 : vector<1x128xf32> to vector<64x128xf32>
    %6 = arith.addf %3, %5 : vector<64x128xf32>
    %cst_5 = arith.constant 0.000000e+00 : f32
    %7 = vector.broadcast %cst_5 : f32 to vector<64x128xf32>
    %8 = arith.maximumf %6, %7 : vector<64x128xf32>
    %c0_6 = arith.constant 0 : index
    %c0_7 = arith.constant 0 : index
    %9 = vector.load %arg4[%c0_6, %c0_7] : memref<64x128xf32, #tpu.memory_space<vmem>>, vector<64x128xf32>
    tpu.vector_store %arg4[%c0_6, %c0_7], %8 {strides = array<i32>} : memref<64x128xf32, #tpu.memory_space<vmem>>, vector<64x128xf32>,
    return
  }
  func.func @transform_0(%arg0: i32) -> (i32, i32) {
    %c0_i32 = arith.constant 0 : i32
    %c0_i32_0 = arith.constant 0 : i32
    return %arg0, %c0_i32 : i32, i32
  }
  func.func @transform_1(%arg0: i32) -> (i32, i32) {
    %c0_i32 = arith.constant 0 : i32
    %c0_i32_0 = arith.constant 0 : i32
    %c0_i32_1 = arith.constant 0 : i32
    return %c0_i32, %c0_i32_0 : i32, i32
  }
  func.func @transform_2(%arg0: i32) -> (i32, i32) {
    %c0_i32 = arith.constant 0 : i32
    %c0_i32_0 = arith.constant 0 : i32
    %c0_i32_1 = arith.constant 0 : i32
    return %c0_i32, %c0_i32_0 : i32, i32
  }
  func.func @transform_3(%arg0: i32) -> (i32, i32) {
    %c0_i32 = arith.constant 0 : i32
    %c0_i32_0 = arith.constant 0 : i32
    return %arg0, %c0_i32 : i32, i32
  }
}

module attributes {stable_mosaic.version = 11 : i64} {
  func.func @_matmul_bias_act_kernel(%arg0: i32, %arg1: memref<8x64xf32, #tpu.memory_space<vmem>>, %arg2: memref<64x128xbf16, #tpu.memory_space<vmem>>, %arg3: memref<1x128xf32, #tpu.memory_space<vmem>>, %arg4: memref<8x128xf32, #tpu.memory_space<vmem>>) attributes {dimension_semantics = [#tpu.dimension_semantics<parallel>], iteration_bounds = array<i64: 2>, scalar_prefetch = 0 : i64, scratch_operands = 0 : i64, tpu.core_type = #tpu.core_type<tc>, window_params = [{transform_indices = @transform_0, window_bounds = array<i64: 8, 64>}, {pipeline_mode = #tpu.pipeline_mode<synchronous>, transform_indices = @transform_1, window_bounds = array<i64: 64, 128>}, {pipeline_mode = #tpu.pipeline_mode<synchronous>, transform_indices = @transform_2, window_bounds = array<i64: 1, 128>}, {transform_indices = @transform_3, window_bounds = array<i64: 8, 128>}]} {
    %c0 = arith.constant 0 : index
    %c0_0 = arith.constant 0 : index
    %0 = vector.load %arg1[%c0, %c0_0] : memref<8x64xf32, #tpu.memory_space<vmem>>, vector<8x64xf32>
    %1 = arith.truncf %0 : vector<8x64xf32> to vector<8x64xbf16>
    %c0_1 = arith.constant 0 : index
    %c0_2 = arith.constant 0 : index
    %2 = vector.load %arg2[%c0_1, %c0_2] : memref<64x128xbf16, #tpu.memory_space<vmem>>, vector<64x128xbf16>
    %cst = arith.constant dense<0.000000e+00> : vector<8x128xf32>
    %3 = tpu.matmul %1, %2, %cst {dimension_numbers = #tpu.dot_dimension_numbers<[1], [0], [0], [1], [0, 0, 1, 1], [], []>} : vector<8x64xbf16>, vector<64x128xbf16>, vector<8x128xf32> -> vector<8x128xf32>
    %c0_3 = arith.constant 0 : index
    %c0_4 = arith.constant 0 : index
    %4 = vector.load %arg3[%c0_3, %c0_4] : memref<1x128xf32, #tpu.memory_space<vmem>>, vector<1x128xf32>
    %5 = vector.broadcast %4 : vector<1x128xf32> to vector<8x128xf32>
    %6 = arith.addf %3, %5 : vector<8x128xf32>
    %c0_5 = arith.constant 0 : index
    %c0_6 = arith.constant 0 : index
    %7 = vector.load %arg4[%c0_5, %c0_6] : memref<8x128xf32, #tpu.memory_space<vmem>>, vector<8x128xf32>
    tpu.vector_store %arg4[%c0_5, %c0_6], %6 {strides = array<i32>} : memref<8x128xf32, #tpu.memory_space<vmem>>, vector<8x128xf32>,
    return
  }
  func.func @transform_0(%arg0: i32) -> (i32, i32) {
    %c0_i32 = arith.constant 0 : i32
    %c0_i32_0 = arith.constant 0 : i32
    return %arg0, %c0_i32 : i32, i32
  }
  func.func @transform_1(%arg0: i32) -> (i32, i32) {
    %c0_i32 = arith.constant 0 : i32
    %c0_i32_0 = arith.constant 0 : i32
    %c0_i32_1 = arith.constant 0 : i32
    return %c0_i32, %c0_i32_0 : i32, i32
  }
  func.func @transform_2(%arg0: i32) -> (i32, i32) {
    %c0_i32 = arith.constant 0 : i32
    %c0_i32_0 = arith.constant 0 : i32
    %c0_i32_1 = arith.constant 0 : i32
    return %c0_i32, %c0_i32_0 : i32, i32
  }
  func.func @transform_3(%arg0: i32) -> (i32, i32) {
    %c0_i32 = arith.constant 0 : i32
    %c0_i32_0 = arith.constant 0 : i32
    return %arg0, %c0_i32 : i32, i32
  }
}

module attributes {stable_mosaic.version = 11 : i64} {
  func.func @_block_front_kernel(%arg0: i32, %arg1: memref<1x8x128xf32, #tpu.memory_space<vmem>>, %arg2: memref<8x128xf32, #tpu.memory_space<vmem>>, %arg3: memref<3x1x128xf32, #tpu.memory_space<vmem>>, %arg4: memref<3x1x128xf32, #tpu.memory_space<vmem>>, %arg5: memref<128x256xbf16, #tpu.memory_space<vmem>>, %arg6: memref<1x256xf32, #tpu.memory_space<vmem>>, %arg7: memref<256x128xbf16, #tpu.memory_space<vmem>>, %arg8: memref<1x128xf32, #tpu.memory_space<vmem>>, %arg9: memref<12x128x32xbf16, #tpu.memory_space<vmem>>, %arg10: memref<12x1x32xf32, #tpu.memory_space<vmem>>, %arg11: memref<4x32x128xbf16, #tpu.memory_space<vmem>>, %arg12: memref<1x128xf32, #tpu.memory_space<vmem>>, %arg13: memref<128x256xbf16, #tpu.memory_space<vmem>>, %arg14: memref<1x256xf32, #tpu.memory_space<vmem>>, %arg15: memref<1x256xf32, #tpu.memory_space<vmem>>, %arg16: memref<1x256xf32, #tpu.memory_space<vmem>>, %arg17: memref<1x8x128xf32, #tpu.memory_space<vmem>>, %arg18: memref<1x8x256xbf16, #tpu.memory_space<vmem>>, %arg19: memref<1x1x256xf32, #tpu.memory_space<vmem>>, %arg20: memref<1x1x256xf32, #tpu.memory_space<vmem>>) attributes {dimension_semantics = [#tpu.dimension_semantics<parallel>], iteration_bounds = array<i64: 2>, scalar_prefetch = 0 : i64, scratch_operands = 0 : i64, tpu.core_type = #tpu.core_type<tc>, window_params = [{transform_indices = @transform_0, window_bounds = array<i64: 1, 8, 128>}, {pipeline_mode = #tpu.pipeline_mode<synchronous>, transform_indices = @transform_1, window_bounds = array<i64: 8, 128>}, {pipeline_mode = #tpu.pipeline_mode<synchronous>, transform_indices = @transform_2, window_bounds = array<i64: 3, 1, 128>}, {pipeline_mode = #tpu.pipeline_mode<synchronous>, transform_indices = @transform_3, window_bounds = array<i64: 3, 1, 128>}, {pipeline_mode = #tpu.pipeline_mode<synchronous>, transform_indices = @transform_4, window_bounds = array<i64: 128, 256>}, {pipeline_mode = #tpu.pipeline_mode<synchronous>, transform_indices = @transform_5, window_bounds = array<i64: 1, 256>}, {pipeline_mode = #tpu.pipeline_mode<synchronous>, transform_indices = @transform_6, window_bounds = array<i64: 256, 128>}, {pipeline_mode = #tpu.pipeline_mode<synchronous>, transform_indices = @transform_7, window_bounds = array<i64: 1, 128>}, {pipeline_mode = #tpu.pipeline_mode<synchronous>, transform_indices = @transform_8, window_bounds = array<i64: 12, 128, 32>}, {pipeline_mode = #tpu.pipeline_mode<synchronous>, transform_indices = @transform_9, window_bounds = array<i64: 12, 1, 32>}, {pipeline_mode = #tpu.pipeline_mode<synchronous>, transform_indices = @transform_10, window_bounds = array<i64: 4, 32, 128>}, {pipeline_mode = #tpu.pipeline_mode<synchronous>, transform_indices = @transform_11, window_bounds = array<i64: 1, 128>}, {pipeline_mode = #tpu.pipeline_mode<synchronous>, transform_indices = @transform_12, window_bounds = array<i64: 128, 256>}, {pipeline_mode = #tpu.pipeline_mode<synchronous>, transform_indices = @transform_13, window_bounds = array<i64: 1, 256>}, {pipeline_mode = #tpu.pipeline_mode<synchronous>, transform_indices = @transform_14, window_bounds = array<i64: 1, 256>}, {pipeline_mode = #tpu.pipeline_mode<synchronous>, transform_indices = @transform_15, window_bounds = array<i64: 1, 256>}, {transform_indices = @transform_16, window_bounds = array<i64: 1, 8, 128>}, {transform_indices = @transform_17, window_bounds = array<i64: 1, 8, 256>}, {transform_indices = @transform_18, window_bounds = array<i64: 1, 1, 256>}, {transform_indices = @transform_19, window_bounds = array<i64: 1, 1, 256>}]} {
    %c0 = arith.constant 0 : index
    %c0_0 = arith.constant 0 : index
    %c0_1 = arith.constant 0 : index
    %0 = vector.load %arg1[%c0, %c0_0, %c0_1] : memref<1x8x128xf32, #tpu.memory_space<vmem>>, vector<1x8x128xf32>
    %1 = vector.shape_cast %0 : vector<1x8x128xf32> to vector<8x128xf32>
    %c0_2 = arith.constant 0 : index
    %c0_3 = arith.constant 0 : index
    %c0_4 = arith.constant 0 : index
    %2 = vector.load %arg3[%c0_2, %c0_3, %c0_4] : memref<3x1x128xf32, #tpu.memory_space<vmem>>, vector<1x1x128xf32>
    %3 = vector.shape_cast %2 : vector<1x1x128xf32> to vector<1x128xf32>
    %c0_5 = arith.constant 0 : index
    %c0_6 = arith.constant 0 : index
    %c0_7 = arith.constant 0 : index
    %4 = vector.load %arg4[%c0_5, %c0_6, %c0_7] : memref<3x1x128xf32, #tpu.memory_space<vmem>>, vector<1x1x128xf32>
    %5 = vector.shape_cast %4 : vector<1x1x128xf32> to vector<1x128xf32>
    %cst = arith.constant dense<0.000000e+00> : vector<8xf32>
    %6 = vector.multi_reduction <add>, %1, %cst [1] : vector<8x128xf32> to vector<8xf32>
    %7 = vector.shape_cast %6 : vector<8xf32> to vector<8x1xf32>
    %cst_8 = arith.constant 1.280000e+02 : f32
    %8 = vector.broadcast %cst_8 : f32 to vector<8x1xf32>
    %9 = arith.divf %7, %8 : vector<8x1xf32>
    %10 = vector.broadcast %9 : vector<8x1xf32> to vector<8x128xf32>
    %11 = arith.subf %1, %10 : vector<8x128xf32>
    %12 = arith.mulf %11, %11 : vector<8x128xf32>
    %cst_9 = arith.constant dense<0.000000e+00> : vector<8xf32>
    %13 = vector.multi_reduction <add>, %12, %cst_9 [1] : vector<8x128xf32> to vector<8xf32>
    %14 = vector.shape_cast %13 : vector<8xf32> to vector<8x1xf32>
    %cst_10 = arith.constant 1.280000e+02 : f32
    %15 = vector.broadcast %cst_10 : f32 to vector<8x1xf32>
    %16 = arith.divf %14, %15 : vector<8x1xf32>
    %cst_11 = arith.constant 9.99999974E-6 : f32
    %17 = vector.broadcast %cst_11 : f32 to vector<8x1xf32>
    %18 = arith.addf %16, %17 : vector<8x1xf32>
    %19 = math.rsqrt %18 : vector<8x1xf32>
    %20 = vector.broadcast %19 : vector<8x1xf32> to vector<8x128xf32>
    %21 = arith.mulf %11, %20 : vector<8x128xf32>
    %22 = vector.broadcast %3 : vector<1x128xf32> to vector<8x128xf32>
    %23 = arith.mulf %21, %22 : vector<8x128xf32>
    %24 = vector.broadcast %5 : vector<1x128xf32> to vector<8x128xf32>
    %25 = arith.addf %23, %24 : vector<8x128xf32>
    %26 = arith.truncf %25 : vector<8x128xf32> to vector<8x128xbf16>
    %c0_12 = arith.constant 0 : index
    %c0_13 = arith.constant 0 : index
    %27 = vector.load %arg5[%c0_12, %c0_13] : memref<128x256xbf16, #tpu.memory_space<vmem>>, vector<128x256xbf16>
    %cst_14 = arith.constant dense<0.000000e+00> : vector<8x256xf32>
    %28 = tpu.matmul %26, %27, %cst_14 {dimension_numbers = #tpu.dot_dimension_numbers<[1], [0], [0], [1], [0, 0, 1, 1], [], []>} : vector<8x128xbf16>, vector<128x256xbf16>, vector<8x256xf32> -> vector<8x256xf32>
    %c0_15 = arith.constant 0 : index
    %c0_16 = arith.constant 0 : index
    %29 = vector.load %arg6[%c0_15, %c0_16] : memref<1x256xf32, #tpu.memory_space<vmem>>, vector<1x256xf32>
    %30 = vector.broadcast %29 : vector<1x256xf32> to vector<8x256xf32>
    %31 = arith.addf %28, %30 : vector<8x256xf32>
    %cst_17 = arith.constant 5.000000e-01 : f32
    %32 = vector.broadcast %cst_17 : f32 to vector<8x256xf32>
    %33 = arith.mulf %32, %31 : vector<8x256xf32>
    %cst_18 = arith.constant 0.707106769 : f32
    %34 = vector.broadcast %cst_18 : f32 to vector<8x256xf32>
    %35 = arith.mulf %31, %34 : vector<8x256xf32>
    %36 = math.erf %35 : vector<8x256xf32>
    %cst_19 = arith.constant 1.000000e+00 : f32
    %37 = vector.broadcast %cst_19 : f32 to vector<8x256xf32>
    %38 = arith.addf %37, %36 : vector<8x256xf32>
    %39 = arith.mulf %33, %38 : vector<8x256xf32>
    %40 = arith.truncf %39 : vector<8x256xf32> to vector<8x256xbf16>
    %c0_20 = arith.constant 0 : index
    %c0_21 = arith.constant 0 : index
    %41 = vector.load %arg7[%c0_20, %c0_21] : memref<256x128xbf16, #tpu.memory_space<vmem>>, vector<256x128xbf16>
    %cst_22 = arith.constant dense<0.000000e+00> : vector<8x128xf32>
    %42 = tpu.matmul %40, %41, %cst_22 {dimension_numbers = #tpu.dot_dimension_numbers<[1], [0], [0], [1], [0, 0, 1, 1], [], []>} : vector<8x256xbf16>, vector<256x128xbf16>, vector<8x128xf32> -> vector<8x128xf32>
    %c0_23 = arith.constant 0 : index
    %c0_24 = arith.constant 0 : index
    %43 = vector.load %arg8[%c0_23, %c0_24] : memref<1x128xf32, #tpu.memory_space<vmem>>, vector<1x128xf32>
    %44 = vector.broadcast %43 : vector<1x128xf32> to vector<8x128xf32>
    %45 = arith.addf %42, %44 : vector<8x128xf32>
    %cst_25 = arith.constant 5.000000e-01 : f32
    %46 = vector.broadcast %cst_25 : f32 to vector<8x128xf32>
    %47 = arith.mulf %46, %45 : vector<8x128xf32>
    %48 = arith.addf %1, %47 : vector<8x128xf32>
    %c1 = arith.constant 1 : index
    %c0_26 = arith.constant 0 : index
    %c0_27 = arith.constant 0 : index
    %49 = vector.load %arg3[%c1, %c0_26, %c0_27] : memref<3x1x128xf32, #tpu.memory_space<vmem>>, vector<1x1x128xf32>
    %50 = vector.shape_cast %49 : vector<1x1x128xf32> to vector<1x128xf32>
    %c1_28 = arith.constant 1 : index
    %c0_29 = arith.constant 0 : index
    %c0_30 = arith.constant 0 : index
    %51 = vector.load %arg4[%c1_28, %c0_29, %c0_30] : memref<3x1x128xf32, #tpu.memory_space<vmem>>, vector<1x1x128xf32>
    %52 = vector.shape_cast %51 : vector<1x1x128xf32> to vector<1x128xf32>
    %cst_31 = arith.constant dense<0.000000e+00> : vector<8xf32>
    %53 = vector.multi_reduction <add>, %48, %cst_31 [1] : vector<8x128xf32> to vector<8xf32>
    %54 = vector.shape_cast %53 : vector<8xf32> to vector<8x1xf32>
    %cst_32 = arith.constant 1.280000e+02 : f32
    %55 = vector.broadcast %cst_32 : f32 to vector<8x1xf32>
    %56 = arith.divf %54, %55 : vector<8x1xf32>
    %57 = vector.broadcast %56 : vector<8x1xf32> to vector<8x128xf32>
    %58 = arith.subf %48, %57 : vector<8x128xf32>
    %59 = arith.mulf %58, %58 : vector<8x128xf32>
    %cst_33 = arith.constant dense<0.000000e+00> : vector<8xf32>
    %60 = vector.multi_reduction <add>, %59, %cst_33 [1] : vector<8x128xf32> to vector<8xf32>
    %61 = vector.shape_cast %60 : vector<8xf32> to vector<8x1xf32>
    %cst_34 = arith.constant 1.280000e+02 : f32
    %62 = vector.broadcast %cst_34 : f32 to vector<8x1xf32>
    %63 = arith.divf %61, %62 : vector<8x1xf32>
    %cst_35 = arith.constant 9.99999974E-6 : f32
    %64 = vector.broadcast %cst_35 : f32 to vector<8x1xf32>
    %65 = arith.addf %63, %64 : vector<8x1xf32>
    %66 = math.rsqrt %65 : vector<8x1xf32>
    %67 = vector.broadcast %66 : vector<8x1xf32> to vector<8x128xf32>
    %68 = arith.mulf %58, %67 : vector<8x128xf32>
    %69 = vector.broadcast %50 : vector<1x128xf32> to vector<8x128xf32>
    %70 = arith.mulf %68, %69 : vector<8x128xf32>
    %71 = vector.broadcast %52 : vector<1x128xf32> to vector<8x128xf32>
    %72 = arith.addf %70, %71 : vector<8x128xf32>
    %c0_36 = arith.constant 0 : index
    %c0_37 = arith.constant 0 : index
    %73 = vector.load %arg2[%c0_36, %c0_37] : memref<8x128xf32, #tpu.memory_space<vmem>>, vector<8x128xf32>
    %74 = arith.addf %72, %73 : vector<8x128xf32>
    %75 = arith.truncf %74 : vector<8x128xf32> to vector<8x128xbf16>
    %cst_38 = arith.constant 0.000000e+00 : f32
    %76 = vector.broadcast %cst_38 : f32 to vector<8x128xf32>
    %c0_39 = arith.constant 0 : index
    %c0_40 = arith.constant 0 : index
    %c0_41 = arith.constant 0 : index
    %77 = vector.load %arg9[%c0_39, %c0_40, %c0_41] : memref<12x128x32xbf16, #tpu.memory_space<vmem>>, vector<1x128x32xbf16>
    %78 = vector.shape_cast %77 : vector<1x128x32xbf16> to vector<128x32xbf16>
    %cst_42 = arith.constant dense<0.000000e+00> : vector<8x32xf32>
    %79 = tpu.matmul %75, %78, %cst_42 {dimension_numbers = #tpu.dot_dimension_numbers<[1], [0], [0], [1], [0, 0, 1, 1], [], []>} : vector<8x128xbf16>, vector<128x32xbf16>, vector<8x32xf32> -> vector<8x32xf32>
    %c0_43 = arith.constant 0 : index
    %c0_44 = arith.constant 0 : index
    %c0_45 = arith.constant 0 : index
    %80 = vector.load %arg10[%c0_43, %c0_44, %c0_45] : memref<12x1x32xf32, #tpu.memory_space<vmem>>, vector<1x1x32xf32>
    %81 = vector.shape_cast %80 : vector<1x1x32xf32> to vector<1x32xf32>
    %82 = vector.broadcast %81 : vector<1x32xf32> to vector<8x32xf32>
    %83 = arith.addf %79, %82 : vector<8x32xf32>
    %c4 = arith.constant 4 : index
    %c0_46 = arith.constant 0 : index
    %c0_47 = arith.constant 0 : index
    %84 = vector.load %arg9[%c4, %c0_46, %c0_47] : memref<12x128x32xbf16, #tpu.memory_space<vmem>>, vector<1x128x32xbf16>
    %85 = vector.shape_cast %84 : vector<1x128x32xbf16> to vector<128x32xbf16>
    %cst_48 = arith.constant dense<0.000000e+00> : vector<8x32xf32>
    %86 = tpu.matmul %75, %85, %cst_48 {dimension_numbers = #tpu.dot_dimension_numbers<[1], [0], [0], [1], [0, 0, 1, 1], [], []>} : vector<8x128xbf16>, vector<128x32xbf16>, vector<8x32xf32> -> vector<8x32xf32>
    %c4_49 = arith.constant 4 : index
    %c0_50 = arith.constant 0 : index
    %c0_51 = arith.constant 0 : index
    %87 = vector.load %arg10[%c4_49, %c0_50, %c0_51] : memref<12x1x32xf32, #tpu.memory_space<vmem>>, vector<1x1x32xf32>
    %88 = vector.shape_cast %87 : vector<1x1x32xf32> to vector<1x32xf32>
    %89 = vector.broadcast %88 : vector<1x32xf32> to vector<8x32xf32>
    %90 = arith.addf %86, %89 : vector<8x32xf32>
    %c8 = arith.constant 8 : index
    %c0_52 = arith.constant 0 : index
    %c0_53 = arith.constant 0 : index
    %91 = vector.load %arg9[%c8, %c0_52, %c0_53] : memref<12x128x32xbf16, #tpu.memory_space<vmem>>, vector<1x128x32xbf16>
    %92 = vector.shape_cast %91 : vector<1x128x32xbf16> to vector<128x32xbf16>
    %cst_54 = arith.constant dense<0.000000e+00> : vector<8x32xf32>
    %93 = tpu.matmul %75, %92, %cst_54 {dimension_numbers = #tpu.dot_dimension_numbers<[1], [0], [0], [1], [0, 0, 1, 1], [], []>} : vector<8x128xbf16>, vector<128x32xbf16>, vector<8x32xf32> -> vector<8x32xf32>
    %c8_55 = arith.constant 8 : index
    %c0_56 = arith.constant 0 : index
    %c0_57 = arith.constant 0 : index
    %94 = vector.load %arg10[%c8_55, %c0_56, %c0_57] : memref<12x1x32xf32, #tpu.memory_space<vmem>>, vector<1x1x32xf32>
    %95 = vector.shape_cast %94 : vector<1x1x32xf32> to vector<1x32xf32>
    %96 = vector.broadcast %95 : vector<1x32xf32> to vector<8x32xf32>
    %97 = arith.addf %93, %96 : vector<8x32xf32>
    %98 = arith.truncf %83 : vector<8x32xf32> to vector<8x32xbf16>
    %99 = arith.truncf %90 : vector<8x32xf32> to vector<8x32xbf16>
    %cst_58 = arith.constant dense<0.000000e+00> : vector<8x8xf32>
    %100 = tpu.matmul %98, %99, %cst_58 {dimension_numbers = #tpu.dot_dimension_numbers<[1], [1], [0], [0], [0, 0, 1, 0], [], []>} : vector<8x32xbf16>, vector<8x32xbf16>, vector<8x8xf32> -> vector<8x8xf32>
    %cst_59 = arith.constant dense<0xFF800000> : vector<8xf32>
    %101 = vector.multi_reduction <maximumf>, %100, %cst_59 [1] : vector<8x8xf32> to vector<8xf32>
    %102 = vector.shape_cast %101 : vector<8xf32> to vector<8x1xf32>
    %103 = vector.broadcast %102 : vector<8x1xf32> to vector<8x8xf32>
    %104 = arith.subf %100, %103 : vector<8x8xf32>
    %105 = math.exp %104 : vector<8x8xf32>
    %cst_60 = arith.constant dense<0.000000e+00> : vector<8xf32>
    %106 = vector.multi_reduction <add>, %105, %cst_60 [1] : vector<8x8xf32> to vector<8xf32>
    %107 = vector.shape_cast %106 : vector<8xf32> to vector<8x1xf32>
    %108 = tpu.reciprocal %107 {approx = true} : vector<8x1xf32> -> vector<8x1xf32>
    %109 = vector.broadcast %108 : vector<8x1xf32> to vector<8x8xf32>
    %110 = arith.mulf %105, %109 : vector<8x8xf32>
    %111 = arith.truncf %110 : vector<8x8xf32> to vector<8x8xbf16>
    %112 = arith.truncf %97 : vector<8x32xf32> to vector<8x32xbf16>
    %cst_61 = arith.constant dense<0.000000e+00> : vector<8x32xf32>
    %113 = tpu.matmul %111, %112, %cst_61 {dimension_numbers = #tpu.dot_dimension_numbers<[1], [0], [0], [1], [0, 0, 1, 1], [], []>} : vector<8x8xbf16>, vector<8x32xbf16>, vector<8x32xf32> -> vector<8x32xf32>
    %114 = arith.truncf %113 : vector<8x32xf32> to vector<8x32xbf16>
    %c0_62 = arith.constant 0 : index
    %c0_63 = arith.constant 0 : index
    %c0_64 = arith.constant 0 : index
    %115 = vector.load %arg11[%c0_62, %c0_63, %c0_64] : memref<4x32x128xbf16, #tpu.memory_space<vmem>>, vector<1x32x128xbf16>
    %116 = vector.shape_cast %115 : vector<1x32x128xbf16> to vector<32x128xbf16>
    %cst_65 = arith.constant dense<0.000000e+00> : vector<8x128xf32>
    %117 = tpu.matmul %114, %116, %cst_65 {dimension_numbers = #tpu.dot_dimension_numbers<[1], [0], [0], [1], [0, 0, 1, 1], [], []>} : vector<8x32xbf16>, vector<32x128xbf16>, vector<8x128xf32> -> vector<8x128xf32>
    %118 = arith.addf %76, %117 : vector<8x128xf32>
    %c1_66 = arith.constant 1 : index
    %c0_67 = arith.constant 0 : index
    %c0_68 = arith.constant 0 : index
    %119 = vector.load %arg9[%c1_66, %c0_67, %c0_68] : memref<12x128x32xbf16, #tpu.memory_space<vmem>>, vector<1x128x32xbf16>
    %120 = vector.shape_cast %119 : vector<1x128x32xbf16> to vector<128x32xbf16>
    %cst_69 = arith.constant dense<0.000000e+00> : vector<8x32xf32>
    %121 = tpu.matmul %75, %120, %cst_69 {dimension_numbers = #tpu.dot_dimension_numbers<[1], [0], [0], [1], [0, 0, 1, 1], [], []>} : vector<8x128xbf16>, vector<128x32xbf16>, vector<8x32xf32> -> vector<8x32xf32>
    %c1_70 = arith.constant 1 : index
    %c0_71 = arith.constant 0 : index
    %c0_72 = arith.constant 0 : index
    %122 = vector.load %arg10[%c1_70, %c0_71, %c0_72] : memref<12x1x32xf32, #tpu.memory_space<vmem>>, vector<1x1x32xf32>
    %123 = vector.shape_cast %122 : vector<1x1x32xf32> to vector<1x32xf32>
    %124 = vector.broadcast %123 : vector<1x32xf32> to vector<8x32xf32>
    %125 = arith.addf %121, %124 : vector<8x32xf32>
    %c5 = arith.constant 5 : index
    %c0_73 = arith.constant 0 : index
    %c0_74 = arith.constant 0 : index
    %126 = vector.load %arg9[%c5, %c0_73, %c0_74] : memref<12x128x32xbf16, #tpu.memory_space<vmem>>, vector<1x128x32xbf16>
    %127 = vector.shape_cast %126 : vector<1x128x32xbf16> to vector<128x32xbf16>
    %cst_75 = arith.constant dense<0.000000e+00> : vector<8x32xf32>
    %128 = tpu.matmul %75, %127, %cst_75 {dimension_numbers = #tpu.dot_dimension_numbers<[1], [0], [0], [1], [0, 0, 1, 1], [], []>} : vector<8x128xbf16>, vector<128x32xbf16>, vector<8x32xf32> -> vector<8x32xf32>
    %c5_76 = arith.constant 5 : index
    %c0_77 = arith.constant 0 : index
    %c0_78 = arith.constant 0 : index
    %129 = vector.load %arg10[%c5_76, %c0_77, %c0_78] : memref<12x1x32xf32, #tpu.memory_space<vmem>>, vector<1x1x32xf32>
    %130 = vector.shape_cast %129 : vector<1x1x32xf32> to vector<1x32xf32>
    %131 = vector.broadcast %130 : vector<1x32xf32> to vector<8x32xf32>
    %132 = arith.addf %128, %131 : vector<8x32xf32>
    %c9 = arith.constant 9 : index
    %c0_79 = arith.constant 0 : index
    %c0_80 = arith.constant 0 : index
    %133 = vector.load %arg9[%c9, %c0_79, %c0_80] : memref<12x128x32xbf16, #tpu.memory_space<vmem>>, vector<1x128x32xbf16>
    %134 = vector.shape_cast %133 : vector<1x128x32xbf16> to vector<128x32xbf16>
    %cst_81 = arith.constant dense<0.000000e+00> : vector<8x32xf32>
    %135 = tpu.matmul %75, %134, %cst_81 {dimension_numbers = #tpu.dot_dimension_numbers<[1], [0], [0], [1], [0, 0, 1, 1], [], []>} : vector<8x128xbf16>, vector<128x32xbf16>, vector<8x32xf32> -> vector<8x32xf32>
    %c9_82 = arith.constant 9 : index
    %c0_83 = arith.constant 0 : index
    %c0_84 = arith.constant 0 : index
    %136 = vector.load %arg10[%c9_82, %c0_83, %c0_84] : memref<12x1x32xf32, #tpu.memory_space<vmem>>, vector<1x1x32xf32>
    %137 = vector.shape_cast %136 : vector<1x1x32xf32> to vector<1x32xf32>
    %138 = vector.broadcast %137 : vector<1x32xf32> to vector<8x32xf32>
    %139 = arith.addf %135, %138 : vector<8x32xf32>
    %140 = arith.truncf %125 : vector<8x32xf32> to vector<8x32xbf16>
    %141 = arith.truncf %132 : vector<8x32xf32> to vector<8x32xbf16>
    %cst_85 = arith.constant dense<0.000000e+00> : vector<8x8xf32>
    %142 = tpu.matmul %140, %141, %cst_85 {dimension_numbers = #tpu.dot_dimension_numbers<[1], [1], [0], [0], [0, 0, 1, 0], [], []>} : vector<8x32xbf16>, vector<8x32xbf16>, vector<8x8xf32> -> vector<8x8xf32>
    %cst_86 = arith.constant dense<0xFF800000> : vector<8xf32>
    %143 = vector.multi_reduction <maximumf>, %142, %cst_86 [1] : vector<8x8xf32> to vector<8xf32>
    %144 = vector.shape_cast %143 : vector<8xf32> to vector<8x1xf32>
    %145 = vector.broadcast %144 : vector<8x1xf32> to vector<8x8xf32>
    %146 = arith.subf %142, %145 : vector<8x8xf32>
    %147 = math.exp %146 : vector<8x8xf32>
    %cst_87 = arith.constant dense<0.000000e+00> : vector<8xf32>
    %148 = vector.multi_reduction <add>, %147, %cst_87 [1] : vector<8x8xf32> to vector<8xf32>
    %149 = vector.shape_cast %148 : vector<8xf32> to vector<8x1xf32>
    %150 = tpu.reciprocal %149 {approx = true} : vector<8x1xf32> -> vector<8x1xf32>
    %151 = vector.broadcast %150 : vector<8x1xf32> to vector<8x8xf32>
    %152 = arith.mulf %147, %151 : vector<8x8xf32>
    %153 = arith.truncf %152 : vector<8x8xf32> to vector<8x8xbf16>
    %154 = arith.truncf %139 : vector<8x32xf32> to vector<8x32xbf16>
    %cst_88 = arith.constant dense<0.000000e+00> : vector<8x32xf32>
    %155 = tpu.matmul %153, %154, %cst_88 {dimension_numbers = #tpu.dot_dimension_numbers<[1], [0], [0], [1], [0, 0, 1, 1], [], []>} : vector<8x8xbf16>, vector<8x32xbf16>, vector<8x32xf32> -> vector<8x32xf32>
    %156 = arith.truncf %155 : vector<8x32xf32> to vector<8x32xbf16>
    %c1_89 = arith.constant 1 : index
    %c0_90 = arith.constant 0 : index
    %c0_91 = arith.constant 0 : index
    %157 = vector.load %arg11[%c1_89, %c0_90, %c0_91] : memref<4x32x128xbf16, #tpu.memory_space<vmem>>, vector<1x32x128xbf16>
    %158 = vector.shape_cast %157 : vector<1x32x128xbf16> to vector<32x128xbf16>
    %cst_92 = arith.constant dense<0.000000e+00> : vector<8x128xf32>
    %159 = tpu.matmul %156, %158, %cst_92 {dimension_numbers = #tpu.dot_dimension_numbers<[1], [0], [0], [1], [0, 0, 1, 1], [], []>} : vector<8x32xbf16>, vector<32x128xbf16>, vector<8x128xf32> -> vector<8x128xf32>
    %160 = arith.addf %118, %159 : vector<8x128xf32>
    %c2 = arith.constant 2 : index
    %c0_93 = arith.constant 0 : index
    %c0_94 = arith.constant 0 : index
    %161 = vector.load %arg9[%c2, %c0_93, %c0_94] : memref<12x128x32xbf16, #tpu.memory_space<vmem>>, vector<1x128x32xbf16>
    %162 = vector.shape_cast %161 : vector<1x128x32xbf16> to vector<128x32xbf16>
    %cst_95 = arith.constant dense<0.000000e+00> : vector<8x32xf32>
    %163 = tpu.matmul %75, %162, %cst_95 {dimension_numbers = #tpu.dot_dimension_numbers<[1], [0], [0], [1], [0, 0, 1, 1], [], []>} : vector<8x128xbf16>, vector<128x32xbf16>, vector<8x32xf32> -> vector<8x32xf32>
    %c2_96 = arith.constant 2 : index
    %c0_97 = arith.constant 0 : index
    %c0_98 = arith.constant 0 : index
    %164 = vector.load %arg10[%c2_96, %c0_97, %c0_98] : memref<12x1x32xf32, #tpu.memory_space<vmem>>, vector<1x1x32xf32>
    %165 = vector.shape_cast %164 : vector<1x1x32xf32> to vector<1x32xf32>
    %166 = vector.broadcast %165 : vector<1x32xf32> to vector<8x32xf32>
    %167 = arith.addf %163, %166 : vector<8x32xf32>
    %c6 = arith.constant 6 : index
    %c0_99 = arith.constant 0 : index
    %c0_100 = arith.constant 0 : index
    %168 = vector.load %arg9[%c6, %c0_99, %c0_100] : memref<12x128x32xbf16, #tpu.memory_space<vmem>>, vector<1x128x32xbf16>
    %169 = vector.shape_cast %168 : vector<1x128x32xbf16> to vector<128x32xbf16>
    %cst_101 = arith.constant dense<0.000000e+00> : vector<8x32xf32>
    %170 = tpu.matmul %75, %169, %cst_101 {dimension_numbers = #tpu.dot_dimension_numbers<[1], [0], [0], [1], [0, 0, 1, 1], [], []>} : vector<8x128xbf16>, vector<128x32xbf16>, vector<8x32xf32> -> vector<8x32xf32>
    %c6_102 = arith.constant 6 : index
    %c0_103 = arith.constant 0 : index
    %c0_104 = arith.constant 0 : index
    %171 = vector.load %arg10[%c6_102, %c0_103, %c0_104] : memref<12x1x32xf32, #tpu.memory_space<vmem>>, vector<1x1x32xf32>
    %172 = vector.shape_cast %171 : vector<1x1x32xf32> to vector<1x32xf32>
    %173 = vector.broadcast %172 : vector<1x32xf32> to vector<8x32xf32>
    %174 = arith.addf %170, %173 : vector<8x32xf32>
    %c10 = arith.constant 10 : index
    %c0_105 = arith.constant 0 : index
    %c0_106 = arith.constant 0 : index
    %175 = vector.load %arg9[%c10, %c0_105, %c0_106] : memref<12x128x32xbf16, #tpu.memory_space<vmem>>, vector<1x128x32xbf16>
    %176 = vector.shape_cast %175 : vector<1x128x32xbf16> to vector<128x32xbf16>
    %cst_107 = arith.constant dense<0.000000e+00> : vector<8x32xf32>
    %177 = tpu.matmul %75, %176, %cst_107 {dimension_numbers = #tpu.dot_dimension_numbers<[1], [0], [0], [1], [0, 0, 1, 1], [], []>} : vector<8x128xbf16>, vector<128x32xbf16>, vector<8x32xf32> -> vector<8x32xf32>
    %c10_108 = arith.constant 10 : index
    %c0_109 = arith.constant 0 : index
    %c0_110 = arith.constant 0 : index
    %178 = vector.load %arg10[%c10_108, %c0_109, %c0_110] : memref<12x1x32xf32, #tpu.memory_space<vmem>>, vector<1x1x32xf32>
    %179 = vector.shape_cast %178 : vector<1x1x32xf32> to vector<1x32xf32>
    %180 = vector.broadcast %179 : vector<1x32xf32> to vector<8x32xf32>
    %181 = arith.addf %177, %180 : vector<8x32xf32>
    %182 = arith.truncf %167 : vector<8x32xf32> to vector<8x32xbf16>
    %183 = arith.truncf %174 : vector<8x32xf32> to vector<8x32xbf16>
    %cst_111 = arith.constant dense<0.000000e+00> : vector<8x8xf32>
    %184 = tpu.matmul %182, %183, %cst_111 {dimension_numbers = #tpu.dot_dimension_numbers<[1], [1], [0], [0], [0, 0, 1, 0], [], []>} : vector<8x32xbf16>, vector<8x32xbf16>, vector<8x8xf32> -> vector<8x8xf32>
    %cst_112 = arith.constant dense<0xFF800000> : vector<8xf32>
    %185 = vector.multi_reduction <maximumf>, %184, %cst_112 [1] : vector<8x8xf32> to vector<8xf32>
    %186 = vector.shape_cast %185 : vector<8xf32> to vector<8x1xf32>
    %187 = vector.broadcast %186 : vector<8x1xf32> to vector<8x8xf32>
    %188 = arith.subf %184, %187 : vector<8x8xf32>
    %189 = math.exp %188 : vector<8x8xf32>
    %cst_113 = arith.constant dense<0.000000e+00> : vector<8xf32>
    %190 = vector.multi_reduction <add>, %189, %cst_113 [1] : vector<8x8xf32> to vector<8xf32>
    %191 = vector.shape_cast %190 : vector<8xf32> to vector<8x1xf32>
    %192 = tpu.reciprocal %191 {approx = true} : vector<8x1xf32> -> vector<8x1xf32>
    %193 = vector.broadcast %192 : vector<8x1xf32> to vector<8x8xf32>
    %194 = arith.mulf %189, %193 : vector<8x8xf32>
    %195 = arith.truncf %194 : vector<8x8xf32> to vector<8x8xbf16>
    %196 = arith.truncf %181 : vector<8x32xf32> to vector<8x32xbf16>
    %cst_114 = arith.constant dense<0.000000e+00> : vector<8x32xf32>
    %197 = tpu.matmul %195, %196, %cst_114 {dimension_numbers = #tpu.dot_dimension_numbers<[1], [0], [0], [1], [0, 0, 1, 1], [], []>} : vector<8x8xbf16>, vector<8x32xbf16>, vector<8x32xf32> -> vector<8x32xf32>
    %198 = arith.truncf %197 : vector<8x32xf32> to vector<8x32xbf16>
    %c2_115 = arith.constant 2 : index
    %c0_116 = arith.constant 0 : index
    %c0_117 = arith.constant 0 : index
    %199 = vector.load %arg11[%c2_115, %c0_116, %c0_117] : memref<4x32x128xbf16, #tpu.memory_space<vmem>>, vector<1x32x128xbf16>
    %200 = vector.shape_cast %199 : vector<1x32x128xbf16> to vector<32x128xbf16>
    %cst_118 = arith.constant dense<0.000000e+00> : vector<8x128xf32>
    %201 = tpu.matmul %198, %200, %cst_118 {dimension_numbers = #tpu.dot_dimension_numbers<[1], [0], [0], [1], [0, 0, 1, 1], [], []>} : vector<8x32xbf16>, vector<32x128xbf16>, vector<8x128xf32> -> vector<8x128xf32>
    %202 = arith.addf %160, %201 : vector<8x128xf32>
    %c3 = arith.constant 3 : index
    %c0_119 = arith.constant 0 : index
    %c0_120 = arith.constant 0 : index
    %203 = vector.load %arg9[%c3, %c0_119, %c0_120] : memref<12x128x32xbf16, #tpu.memory_space<vmem>>, vector<1x128x32xbf16>
    %204 = vector.shape_cast %203 : vector<1x128x32xbf16> to vector<128x32xbf16>
    %cst_121 = arith.constant dense<0.000000e+00> : vector<8x32xf32>
    %205 = tpu.matmul %75, %204, %cst_121 {dimension_numbers = #tpu.dot_dimension_numbers<[1], [0], [0], [1], [0, 0, 1, 1], [], []>} : vector<8x128xbf16>, vector<128x32xbf16>, vector<8x32xf32> -> vector<8x32xf32>
    %c3_122 = arith.constant 3 : index
    %c0_123 = arith.constant 0 : index
    %c0_124 = arith.constant 0 : index
    %206 = vector.load %arg10[%c3_122, %c0_123, %c0_124] : memref<12x1x32xf32, #tpu.memory_space<vmem>>, vector<1x1x32xf32>
    %207 = vector.shape_cast %206 : vector<1x1x32xf32> to vector<1x32xf32>
    %208 = vector.broadcast %207 : vector<1x32xf32> to vector<8x32xf32>
    %209 = arith.addf %205, %208 : vector<8x32xf32>
    %c7 = arith.constant 7 : index
    %c0_125 = arith.constant 0 : index
    %c0_126 = arith.constant 0 : index
    %210 = vector.load %arg9[%c7, %c0_125, %c0_126] : memref<12x128x32xbf16, #tpu.memory_space<vmem>>, vector<1x128x32xbf16>
    %211 = vector.shape_cast %210 : vector<1x128x32xbf16> to vector<128x32xbf16>
    %cst_127 = arith.constant dense<0.000000e+00> : vector<8x32xf32>
    %212 = tpu.matmul %75, %211, %cst_127 {dimension_numbers = #tpu.dot_dimension_numbers<[1], [0], [0], [1], [0, 0, 1, 1], [], []>} : vector<8x128xbf16>, vector<128x32xbf16>, vector<8x32xf32> -> vector<8x32xf32>
    %c7_128 = arith.constant 7 : index
    %c0_129 = arith.constant 0 : index
    %c0_130 = arith.constant 0 : index
    %213 = vector.load %arg10[%c7_128, %c0_129, %c0_130] : memref<12x1x32xf32, #tpu.memory_space<vmem>>, vector<1x1x32xf32>
    %214 = vector.shape_cast %213 : vector<1x1x32xf32> to vector<1x32xf32>
    %215 = vector.broadcast %214 : vector<1x32xf32> to vector<8x32xf32>
    %216 = arith.addf %212, %215 : vector<8x32xf32>
    %c11 = arith.constant 11 : index
    %c0_131 = arith.constant 0 : index
    %c0_132 = arith.constant 0 : index
    %217 = vector.load %arg9[%c11, %c0_131, %c0_132] : memref<12x128x32xbf16, #tpu.memory_space<vmem>>, vector<1x128x32xbf16>
    %218 = vector.shape_cast %217 : vector<1x128x32xbf16> to vector<128x32xbf16>
    %cst_133 = arith.constant dense<0.000000e+00> : vector<8x32xf32>
    %219 = tpu.matmul %75, %218, %cst_133 {dimension_numbers = #tpu.dot_dimension_numbers<[1], [0], [0], [1], [0, 0, 1, 1], [], []>} : vector<8x128xbf16>, vector<128x32xbf16>, vector<8x32xf32> -> vector<8x32xf32>
    %c11_134 = arith.constant 11 : index
    %c0_135 = arith.constant 0 : index
    %c0_136 = arith.constant 0 : index
    %220 = vector.load %arg10[%c11_134, %c0_135, %c0_136] : memref<12x1x32xf32, #tpu.memory_space<vmem>>, vector<1x1x32xf32>
    %221 = vector.shape_cast %220 : vector<1x1x32xf32> to vector<1x32xf32>
    %222 = vector.broadcast %221 : vector<1x32xf32> to vector<8x32xf32>
    %223 = arith.addf %219, %222 : vector<8x32xf32>
    %224 = arith.truncf %209 : vector<8x32xf32> to vector<8x32xbf16>
    %225 = arith.truncf %216 : vector<8x32xf32> to vector<8x32xbf16>
    %cst_137 = arith.constant dense<0.000000e+00> : vector<8x8xf32>
    %226 = tpu.matmul %224, %225, %cst_137 {dimension_numbers = #tpu.dot_dimension_numbers<[1], [1], [0], [0], [0, 0, 1, 0], [], []>} : vector<8x32xbf16>, vector<8x32xbf16>, vector<8x8xf32> -> vector<8x8xf32>
    %cst_138 = arith.constant dense<0xFF800000> : vector<8xf32>
    %227 = vector.multi_reduction <maximumf>, %226, %cst_138 [1] : vector<8x8xf32> to vector<8xf32>
    %228 = vector.shape_cast %227 : vector<8xf32> to vector<8x1xf32>
    %229 = vector.broadcast %228 : vector<8x1xf32> to vector<8x8xf32>
    %230 = arith.subf %226, %229 : vector<8x8xf32>
    %231 = math.exp %230 : vector<8x8xf32>
    %cst_139 = arith.constant dense<0.000000e+00> : vector<8xf32>
    %232 = vector.multi_reduction <add>, %231, %cst_139 [1] : vector<8x8xf32> to vector<8xf32>
    %233 = vector.shape_cast %232 : vector<8xf32> to vector<8x1xf32>
    %234 = tpu.reciprocal %233 {approx = true} : vector<8x1xf32> -> vector<8x1xf32>
    %235 = vector.broadcast %234 : vector<8x1xf32> to vector<8x8xf32>
    %236 = arith.mulf %231, %235 : vector<8x8xf32>
    %237 = arith.truncf %236 : vector<8x8xf32> to vector<8x8xbf16>
    %238 = arith.truncf %223 : vector<8x32xf32> to vector<8x32xbf16>
    %cst_140 = arith.constant dense<0.000000e+00> : vector<8x32xf32>
    %239 = tpu.matmul %237, %238, %cst_140 {dimension_numbers = #tpu.dot_dimension_numbers<[1], [0], [0], [1], [0, 0, 1, 1], [], []>} : vector<8x8xbf16>, vector<8x32xbf16>, vector<8x32xf32> -> vector<8x32xf32>
    %240 = arith.truncf %239 : vector<8x32xf32> to vector<8x32xbf16>
    %c3_141 = arith.constant 3 : index
    %c0_142 = arith.constant 0 : index
    %c0_143 = arith.constant 0 : index
    %241 = vector.load %arg11[%c3_141, %c0_142, %c0_143] : memref<4x32x128xbf16, #tpu.memory_space<vmem>>, vector<1x32x128xbf16>
    %242 = vector.shape_cast %241 : vector<1x32x128xbf16> to vector<32x128xbf16>
    %cst_144 = arith.constant dense<0.000000e+00> : vector<8x128xf32>
    %243 = tpu.matmul %240, %242, %cst_144 {dimension_numbers = #tpu.dot_dimension_numbers<[1], [0], [0], [1], [0, 0, 1, 1], [], []>} : vector<8x32xbf16>, vector<32x128xbf16>, vector<8x128xf32> -> vector<8x128xf32>
    %244 = arith.addf %202, %243 : vector<8x128xf32>
    %245 = arith.addf %48, %244 : vector<8x128xf32>
    %c0_145 = arith.constant 0 : index
    %c0_146 = arith.constant 0 : index
    %246 = vector.load %arg12[%c0_145, %c0_146] : memref<1x128xf32, #tpu.memory_space<vmem>>, vector<1x128xf32>
    %247 = vector.broadcast %246 : vector<1x128xf32> to vector<8x128xf32>
    %248 = arith.addf %245, %247 : vector<8x128xf32>
    %c0_147 = arith.constant 0 : index
    %c0_148 = arith.constant 0 : index
    %c0_149 = arith.constant 0 : index
    %249 = vector.load %arg17[%c0_147, %c0_148, %c0_149] : memref<1x8x128xf32, #tpu.memory_space<vmem>>, vector<1x8x128xf32>
    %250 = vector.shape_cast %249 : vector<1x8x128xf32> to vector<8x128xf32>
    %251 = vector.shape_cast %248 : vector<8x128xf32> to vector<1x8x128xf32>
    tpu.vector_store %arg17[%c0_147, %c0_148, %c0_149], %251 {strides = array<i32>} : memref<1x8x128xf32, #tpu.memory_space<vmem>>, vector<1x8x128xf32>,
    %c2_150 = arith.constant 2 : index
    %c0_151 = arith.constant 0 : index
    %c0_152 = arith.constant 0 : index
    %252 = vector.load %arg3[%c2_150, %c0_151, %c0_152] : memref<3x1x128xf32, #tpu.memory_space<vmem>>, vector<1x1x128xf32>
    %253 = vector.shape_cast %252 : vector<1x1x128xf32> to vector<1x128xf32>
    %c2_153 = arith.constant 2 : index
    %c0_154 = arith.constant 0 : index
    %c0_155 = arith.constant 0 : index
    %254 = vector.load %arg4[%c2_153, %c0_154, %c0_155] : memref<3x1x128xf32, #tpu.memory_space<vmem>>, vector<1x1x128xf32>
    %255 = vector.shape_cast %254 : vector<1x1x128xf32> to vector<1x128xf32>
    %cst_156 = arith.constant dense<0.000000e+00> : vector<8xf32>
    %256 = vector.multi_reduction <add>, %248, %cst_156 [1] : vector<8x128xf32> to vector<8xf32>
    %257 = vector.shape_cast %256 : vector<8xf32> to vector<8x1xf32>
    %cst_157 = arith.constant 1.280000e+02 : f32
    %258 = vector.broadcast %cst_157 : f32 to vector<8x1xf32>
    %259 = arith.divf %257, %258 : vector<8x1xf32>
    %260 = vector.broadcast %259 : vector<8x1xf32> to vector<8x128xf32>
    %261 = arith.subf %248, %260 : vector<8x128xf32>
    %262 = arith.mulf %261, %261 : vector<8x128xf32>
    %cst_158 = arith.constant dense<0.000000e+00> : vector<8xf32>
    %263 = vector.multi_reduction <add>, %262, %cst_158 [1] : vector<8x128xf32> to vector<8xf32>
    %264 = vector.shape_cast %263 : vector<8xf32> to vector<8x1xf32>
    %cst_159 = arith.constant 1.280000e+02 : f32
    %265 = vector.broadcast %cst_159 : f32 to vector<8x1xf32>
    %266 = arith.divf %264, %265 : vector<8x1xf32>
    %cst_160 = arith.constant 9.99999974E-6 : f32
    %267 = vector.broadcast %cst_160 : f32 to vector<8x1xf32>
    %268 = arith.addf %266, %267 : vector<8x1xf32>
    %269 = math.rsqrt %268 : vector<8x1xf32>
    %270 = vector.broadcast %269 : vector<8x1xf32> to vector<8x128xf32>
    %271 = arith.mulf %261, %270 : vector<8x128xf32>
    %272 = vector.broadcast %253 : vector<1x128xf32> to vector<8x128xf32>
    %273 = arith.mulf %271, %272 : vector<8x128xf32>
    %274 = vector.broadcast %255 : vector<1x128xf32> to vector<8x128xf32>
    %275 = arith.addf %273, %274 : vector<8x128xf32>
    %276 = arith.truncf %275 : vector<8x128xf32> to vector<8x128xbf16>
    %c0_161 = arith.constant 0 : index
    %c0_162 = arith.constant 0 : index
    %277 = vector.load %arg13[%c0_161, %c0_162] : memref<128x256xbf16, #tpu.memory_space<vmem>>, vector<128x256xbf16>
    %cst_163 = arith.constant dense<0.000000e+00> : vector<8x256xf32>
    %278 = tpu.matmul %276, %277, %cst_163 {dimension_numbers = #tpu.dot_dimension_numbers<[1], [0], [0], [1], [0, 0, 1, 1], [], []>} : vector<8x128xbf16>, vector<128x256xbf16>, vector<8x256xf32> -> vector<8x256xf32>
    %c0_164 = arith.constant 0 : index
    %c0_165 = arith.constant 0 : index
    %279 = vector.load %arg14[%c0_164, %c0_165] : memref<1x256xf32, #tpu.memory_space<vmem>>, vector<1x256xf32>
    %280 = vector.broadcast %279 : vector<1x256xf32> to vector<8x256xf32>
    %281 = arith.addf %278, %280 : vector<8x256xf32>
    %cst_166 = arith.constant 5.000000e-01 : f32
    %282 = vector.broadcast %cst_166 : f32 to vector<8x256xf32>
    %283 = arith.mulf %282, %281 : vector<8x256xf32>
    %cst_167 = arith.constant 0.707106769 : f32
    %284 = vector.broadcast %cst_167 : f32 to vector<8x256xf32>
    %285 = arith.mulf %281, %284 : vector<8x256xf32>
    %286 = math.erf %285 : vector<8x256xf32>
    %cst_168 = arith.constant 1.000000e+00 : f32
    %287 = vector.broadcast %cst_168 : f32 to vector<8x256xf32>
    %288 = arith.addf %287, %286 : vector<8x256xf32>
    %289 = arith.mulf %283, %288 : vector<8x256xf32>
    %c0_169 = arith.constant 0 : index
    %c0_170 = arith.constant 0 : index
    %290 = vector.load %arg15[%c0_169, %c0_170] : memref<1x256xf32, #tpu.memory_space<vmem>>, vector<1x256xf32>
    %291 = vector.broadcast %290 : vector<1x256xf32> to vector<8x256xf32>
    %292 = arith.mulf %289, %291 : vector<8x256xf32>
    %c0_171 = arith.constant 0 : index
    %c0_172 = arith.constant 0 : index
    %293 = vector.load %arg16[%c0_171, %c0_172] : memref<1x256xf32, #tpu.memory_space<vmem>>, vector<1x256xf32>
    %294 = vector.broadcast %293 : vector<1x256xf32> to vector<8x256xf32>
    %295 = arith.addf %292, %294 : vector<8x256xf32>
    %296 = arith.truncf %295 : vector<8x256xf32> to vector<8x256xbf16>
    %c0_173 = arith.constant 0 : index
    %c0_174 = arith.constant 0 : index
    %c0_175 = arith.constant 0 : index
    %297 = vector.load %arg18[%c0_173, %c0_174, %c0_175] : memref<1x8x256xbf16, #tpu.memory_space<vmem>>, vector<1x8x256xbf16>
    %298 = vector.shape_cast %297 : vector<1x8x256xbf16> to vector<8x256xbf16>
    %299 = vector.shape_cast %296 : vector<8x256xbf16> to vector<1x8x256xbf16>
    tpu.vector_store %arg18[%c0_173, %c0_174, %c0_175], %299 {strides = array<i32>} : memref<1x8x256xbf16, #tpu.memory_space<vmem>>, vector<1x8x256xbf16>,
    %cst_176 = arith.constant dense<0.000000e+00> : vector<256xf32>
    %300 = vector.multi_reduction <add>, %295, %cst_176 [0] : vector<8x256xf32> to vector<256xf32>
    %301 = vector.shape_cast %300 : vector<256xf32> to vector<1x256xf32>
    %c0_177 = arith.constant 0 : index
    %c0_178 = arith.constant 0 : index
    %c0_179 = arith.constant 0 : index
    %302 = vector.load %arg19[%c0_177, %c0_178, %c0_179] : memref<1x1x256xf32, #tpu.memory_space<vmem>>, vector<1x1x256xf32>
    %303 = vector.shape_cast %302 : vector<1x1x256xf32> to vector<1x256xf32>
    %304 = vector.shape_cast %301 : vector<1x256xf32> to vector<1x1x256xf32>
    tpu.vector_store %arg19[%c0_177, %c0_178, %c0_179], %304 {strides = array<i32>} : memref<1x1x256xf32, #tpu.memory_space<vmem>>, vector<1x1x256xf32>,
    %305 = arith.mulf %295, %295 : vector<8x256xf32>
    %cst_180 = arith.constant dense<0.000000e+00> : vector<256xf32>
    %306 = vector.multi_reduction <add>, %305, %cst_180 [0] : vector<8x256xf32> to vector<256xf32>
    %307 = vector.shape_cast %306 : vector<256xf32> to vector<1x256xf32>
    %c0_181 = arith.constant 0 : index
    %c0_182 = arith.constant 0 : index
    %c0_183 = arith.constant 0 : index
    %308 = vector.load %arg20[%c0_181, %c0_182, %c0_183] : memref<1x1x256xf32, #tpu.memory_space<vmem>>, vector<1x1x256xf32>
    %309 = vector.shape_cast %308 : vector<1x1x256xf32> to vector<1x256xf32>
    %310 = vector.shape_cast %307 : vector<1x256xf32> to vector<1x1x256xf32>
    tpu.vector_store %arg20[%c0_181, %c0_182, %c0_183], %310 {strides = array<i32>} : memref<1x1x256xf32, #tpu.memory_space<vmem>>, vector<1x1x256xf32>,
    return
  }
  func.func @transform_0(%arg0: i32) -> (i32, i32, i32) {
    %c0_i32 = arith.constant 0 : i32
    %c0_i32_0 = arith.constant 0 : i32
    %c0_i32_1 = arith.constant 0 : i32
    return %arg0, %c0_i32, %c0_i32_0 : i32, i32, i32
  }
  func.func @transform_1(%arg0: i32) -> (i32, i32) {
    %c0_i32 = arith.constant 0 : i32
    %c0_i32_0 = arith.constant 0 : i32
    %c0_i32_1 = arith.constant 0 : i32
    return %c0_i32, %c0_i32_0 : i32, i32
  }
  func.func @transform_2(%arg0: i32) -> (i32, i32, i32) {
    %c0_i32 = arith.constant 0 : i32
    %c0_i32_0 = arith.constant 0 : i32
    %c0_i32_1 = arith.constant 0 : i32
    %c0_i32_2 = arith.constant 0 : i32
    return %c0_i32, %c0_i32_0, %c0_i32_1 : i32, i32, i32
  }
  func.func @transform_3(%arg0: i32) -> (i32, i32, i32) {
    %c0_i32 = arith.constant 0 : i32
    %c0_i32_0 = arith.constant 0 : i32
    %c0_i32_1 = arith.constant 0 : i32
    %c0_i32_2 = arith.constant 0 : i32
    return %c0_i32, %c0_i32_0, %c0_i32_1 : i32, i32, i32
  }
  func.func @transform_4(%arg0: i32) -> (i32, i32) {
    %c0_i32 = arith.constant 0 : i32
    %c0_i32_0 = arith.constant 0 : i32
    %c0_i32_1 = arith.constant 0 : i32
    return %c0_i32, %c0_i32_0 : i32, i32
  }
  func.func @transform_5(%arg0: i32) -> (i32, i32) {
    %c0_i32 = arith.constant 0 : i32
    %c0_i32_0 = arith.constant 0 : i32
    %c0_i32_1 = arith.constant 0 : i32
    return %c0_i32, %c0_i32_0 : i32, i32
  }
  func.func @transform_6(%arg0: i32) -> (i32, i32) {
    %c0_i32 = arith.constant 0 : i32
    %c0_i32_0 = arith.constant 0 : i32
    %c0_i32_1 = arith.constant 0 : i32
    return %c0_i32, %c0_i32_0 : i32, i32
  }
  func.func @transform_7(%arg0: i32) -> (i32, i32) {
    %c0_i32 = arith.constant 0 : i32
    %c0_i32_0 = arith.constant 0 : i32
    %c0_i32_1 = arith.constant 0 : i32
    return %c0_i32, %c0_i32_0 : i32, i32
  }
  func.func @transform_8(%arg0: i32) -> (i32, i32, i32) {
    %c0_i32 = arith.constant 0 : i32
    %c0_i32_0 = arith.constant 0 : i32
    %c0_i32_1 = arith.constant 0 : i32
    %c0_i32_2 = arith.constant 0 : i32
    return %c0_i32, %c0_i32_0, %c0_i32_1 : i32, i32, i32
  }
  func.func @transform_9(%arg0: i32) -> (i32, i32, i32) {
    %c0_i32 = arith.constant 0 : i32
    %c0_i32_0 = arith.constant 0 : i32
    %c0_i32_1 = arith.constant 0 : i32
    %c0_i32_2 = arith.constant 0 : i32
    return %c0_i32, %c0_i32_0, %c0_i32_1 : i32, i32, i32
  }
  func.func @transform_10(%arg0: i32) -> (i32, i32, i32) {
    %c0_i32 = arith.constant 0 : i32
    %c0_i32_0 = arith.constant 0 : i32
    %c0_i32_1 = arith.constant 0 : i32
    %c0_i32_2 = arith.constant 0 : i32
    return %c0_i32, %c0_i32_0, %c0_i32_1 : i32, i32, i32
  }
  func.func @transform_11(%arg0: i32) -> (i32, i32) {
    %c0_i32 = arith.constant 0 : i32
    %c0_i32_0 = arith.constant 0 : i32
    %c0_i32_1 = arith.constant 0 : i32
    return %c0_i32, %c0_i32_0 : i32, i32
  }
  func.func @transform_12(%arg0: i32) -> (i32, i32) {
    %c0_i32 = arith.constant 0 : i32
    %c0_i32_0 = arith.constant 0 : i32
    %c0_i32_1 = arith.constant 0 : i32
    return %c0_i32, %c0_i32_0 : i32, i32
  }
  func.func @transform_13(%arg0: i32) -> (i32, i32) {
    %c0_i32 = arith.constant 0 : i32
    %c0_i32_0 = arith.constant 0 : i32
    %c0_i32_1 = arith.constant 0 : i32
    return %c0_i32, %c0_i32_0 : i32, i32
  }
  func.func @transform_14(%arg0: i32) -> (i32, i32) {
    %c0_i32 = arith.constant 0 : i32
    %c0_i32_0 = arith.constant 0 : i32
    %c0_i32_1 = arith.constant 0 : i32
    return %c0_i32, %c0_i32_0 : i32, i32
  }
  func.func @transform_15(%arg0: i32) -> (i32, i32) {
    %c0_i32 = arith.constant 0 : i32
    %c0_i32_0 = arith.constant 0 : i32
    %c0_i32_1 = arith.constant 0 : i32
    return %c0_i32, %c0_i32_0 : i32, i32
  }
  func.func @transform_16(%arg0: i32) -> (i32, i32, i32) {
    %c0_i32 = arith.constant 0 : i32
    %c0_i32_0 = arith.constant 0 : i32
    %c0_i32_1 = arith.constant 0 : i32
    return %arg0, %c0_i32, %c0_i32_0 : i32, i32, i32
  }
  func.func @transform_17(%arg0: i32) -> (i32, i32, i32) {
    %c0_i32 = arith.constant 0 : i32
    %c0_i32_0 = arith.constant 0 : i32
    %c0_i32_1 = arith.constant 0 : i32
    return %arg0, %c0_i32, %c0_i32_0 : i32, i32, i32
  }
  func.func @transform_18(%arg0: i32) -> (i32, i32, i32) {
    %c0_i32 = arith.constant 0 : i32
    %c0_i32_0 = arith.constant 0 : i32
    %c0_i32_1 = arith.constant 0 : i32
    return %arg0, %c0_i32, %c0_i32_0 : i32, i32, i32
  }
  func.func @transform_19(%arg0: i32) -> (i32, i32, i32) {
    %c0_i32 = arith.constant 0 : i32
    %c0_i32_0 = arith.constant 0 : i32
    %c0_i32_1 = arith.constant 0 : i32
    return %arg0, %c0_i32, %c0_i32_0 : i32, i32, i32
  }
}

module attributes {stable_mosaic.version = 11 : i64} {
  func.func @_block_back_kernel(%arg0: i32, %arg1: memref<1x8x256xbf16, #tpu.memory_space<vmem>>, %arg2: memref<1x8x128xf32, #tpu.memory_space<vmem>>, %arg3: memref<2x1x256xf32, #tpu.memory_space<vmem>>, %arg4: memref<2x1x256xf32, #tpu.memory_space<vmem>>, %arg5: memref<1x256xf32, #tpu.memory_space<vmem>>, %arg6: memref<1x256xf32, #tpu.memory_space<vmem>>, %arg7: memref<256x128xbf16, #tpu.memory_space<vmem>>, %arg8: memref<1x128xf32, #tpu.memory_space<vmem>>, %arg9: memref<2x1x128xf32, #tpu.memory_space<vmem>>, %arg10: memref<2x1x128xf32, #tpu.memory_space<vmem>>, %arg11: memref<128x256xbf16, #tpu.memory_space<vmem>>, %arg12: memref<1x256xf32, #tpu.memory_space<vmem>>, %arg13: memref<256x128xbf16, #tpu.memory_space<vmem>>, %arg14: memref<1x128xf32, #tpu.memory_space<vmem>>, %arg15: memref<1x8x128xf32, #tpu.memory_space<vmem>>) attributes {dimension_semantics = [#tpu.dimension_semantics<parallel>], iteration_bounds = array<i64: 2>, scalar_prefetch = 0 : i64, scratch_operands = 0 : i64, tpu.core_type = #tpu.core_type<tc>, window_params = [{transform_indices = @transform_0, window_bounds = array<i64: 1, 8, 256>}, {transform_indices = @transform_1, window_bounds = array<i64: 1, 8, 128>}, {pipeline_mode = #tpu.pipeline_mode<synchronous>, transform_indices = @transform_2, window_bounds = array<i64: 2, 1, 256>}, {pipeline_mode = #tpu.pipeline_mode<synchronous>, transform_indices = @transform_3, window_bounds = array<i64: 2, 1, 256>}, {pipeline_mode = #tpu.pipeline_mode<synchronous>, transform_indices = @transform_4, window_bounds = array<i64: 1, 256>}, {pipeline_mode = #tpu.pipeline_mode<synchronous>, transform_indices = @transform_5, window_bounds = array<i64: 1, 256>}, {pipeline_mode = #tpu.pipeline_mode<synchronous>, transform_indices = @transform_6, window_bounds = array<i64: 256, 128>}, {pipeline_mode = #tpu.pipeline_mode<synchronous>, transform_indices = @transform_7, window_bounds = array<i64: 1, 128>}, {pipeline_mode = #tpu.pipeline_mode<synchronous>, transform_indices = @transform_8, window_bounds = array<i64: 2, 1, 128>}, {pipeline_mode = #tpu.pipeline_mode<synchronous>, transform_indices = @transform_9, window_bounds = array<i64: 2, 1, 128>}, {pipeline_mode = #tpu.pipeline_mode<synchronous>, transform_indices = @transform_10, window_bounds = array<i64: 128, 256>}, {pipeline_mode = #tpu.pipeline_mode<synchronous>, transform_indices = @transform_11, window_bounds = array<i64: 1, 256>}, {pipeline_mode = #tpu.pipeline_mode<synchronous>, transform_indices = @transform_12, window_bounds = array<i64: 256, 128>}, {pipeline_mode = #tpu.pipeline_mode<synchronous>, transform_indices = @transform_13, window_bounds = array<i64: 1, 128>}, {transform_indices = @transform_14, window_bounds = array<i64: 1, 8, 128>}]} {
    %c0 = arith.constant 0 : index
    %c0_0 = arith.constant 0 : index
    %c0_1 = arith.constant 0 : index
    %0 = vector.load %arg3[%c0, %c0_0, %c0_1] : memref<2x1x256xf32, #tpu.memory_space<vmem>>, vector<2x1x256xf32>
    %cst = arith.constant dense<0.000000e+00> : vector<1x256xf32>
    %1 = vector.multi_reduction <add>, %0, %cst [0] : vector<2x1x256xf32> to vector<1x256xf32>
    %c0_2 = arith.constant 0 : index
    %c0_3 = arith.constant 0 : index
    %c0_4 = arith.constant 0 : index
    %2 = vector.load %arg4[%c0_2, %c0_3, %c0_4] : memref<2x1x256xf32, #tpu.memory_space<vmem>>, vector<2x1x256xf32>
    %cst_5 = arith.constant dense<0.000000e+00> : vector<1x256xf32>
    %3 = vector.multi_reduction <add>, %2, %cst_5 [0] : vector<2x1x256xf32> to vector<1x256xf32>
    %cst_6 = arith.constant 6.250000e-02 : f32
    %4 = vector.broadcast %cst_6 : f32 to vector<1x256xf32>
    %5 = arith.mulf %1, %4 : vector<1x256xf32>
    %cst_7 = arith.constant 6.250000e-02 : f32
    %6 = vector.broadcast %cst_7 : f32 to vector<1x256xf32>
    %7 = arith.mulf %3, %6 : vector<1x256xf32>
    %8 = arith.mulf %5, %5 : vector<1x256xf32>
    %9 = arith.subf %7, %8 : vector<1x256xf32>
    %c0_8 = arith.constant 0 : index
    %c0_9 = arith.constant 0 : index
    %10 = vector.load %arg5[%c0_8, %c0_9] : memref<1x256xf32, #tpu.memory_space<vmem>>, vector<1x256xf32>
    %cst_10 = arith.constant 9.99999974E-6 : f32
    %11 = vector.broadcast %cst_10 : f32 to vector<1x256xf32>
    %12 = arith.addf %9, %11 : vector<1x256xf32>
    %13 = math.rsqrt %12 : vector<1x256xf32>
    %14 = arith.mulf %10, %13 : vector<1x256xf32>
    %c0_11 = arith.constant 0 : index
    %c0_12 = arith.constant 0 : index
    %15 = vector.load %arg6[%c0_11, %c0_12] : memref<1x256xf32, #tpu.memory_space<vmem>>, vector<1x256xf32>
    %16 = arith.mulf %5, %14 : vector<1x256xf32>
    %17 = arith.subf %15, %16 : vector<1x256xf32>
    %c0_13 = arith.constant 0 : index
    %c0_14 = arith.constant 0 : index
    %c0_15 = arith.constant 0 : index
    %18 = vector.load %arg2[%c0_13, %c0_14, %c0_15] : memref<1x8x128xf32, #tpu.memory_space<vmem>>, vector<1x8x128xf32>
    %19 = vector.shape_cast %18 : vector<1x8x128xf32> to vector<8x128xf32>
    %c0_16 = arith.constant 0 : index
    %c0_17 = arith.constant 0 : index
    %c0_18 = arith.constant 0 : index
    %20 = vector.load %arg1[%c0_16, %c0_17, %c0_18] : memref<1x8x256xbf16, #tpu.memory_space<vmem>>, vector<1x8x256xbf16>
    %21 = vector.shape_cast %20 : vector<1x8x256xbf16> to vector<8x256xbf16>
    %22 = arith.extf %21 : vector<8x256xbf16> to vector<8x256xf32>
    %23 = vector.broadcast %14 : vector<1x256xf32> to vector<8x256xf32>
    %24 = arith.mulf %22, %23 : vector<8x256xf32>
    %25 = vector.broadcast %17 : vector<1x256xf32> to vector<8x256xf32>
    %26 = arith.addf %24, %25 : vector<8x256xf32>
    %cst_19 = arith.constant 5.000000e-01 : f32
    %27 = vector.broadcast %cst_19 : f32 to vector<8x256xf32>
    %28 = arith.mulf %27, %26 : vector<8x256xf32>
    %cst_20 = arith.constant 0.707106769 : f32
    %29 = vector.broadcast %cst_20 : f32 to vector<8x256xf32>
    %30 = arith.mulf %26, %29 : vector<8x256xf32>
    %31 = math.erf %30 : vector<8x256xf32>
    %cst_21 = arith.constant 1.000000e+00 : f32
    %32 = vector.broadcast %cst_21 : f32 to vector<8x256xf32>
    %33 = arith.addf %32, %31 : vector<8x256xf32>
    %34 = arith.mulf %28, %33 : vector<8x256xf32>
    %35 = arith.truncf %34 : vector<8x256xf32> to vector<8x256xbf16>
    %c0_22 = arith.constant 0 : index
    %c0_23 = arith.constant 0 : index
    %36 = vector.load %arg7[%c0_22, %c0_23] : memref<256x128xbf16, #tpu.memory_space<vmem>>, vector<256x128xbf16>
    %cst_24 = arith.constant dense<0.000000e+00> : vector<8x128xf32>
    %37 = tpu.matmul %35, %36, %cst_24 {dimension_numbers = #tpu.dot_dimension_numbers<[1], [0], [0], [1], [0, 0, 1, 1], [], []>} : vector<8x256xbf16>, vector<256x128xbf16>, vector<8x128xf32> -> vector<8x128xf32>
    %c0_25 = arith.constant 0 : index
    %c0_26 = arith.constant 0 : index
    %38 = vector.load %arg8[%c0_25, %c0_26] : memref<1x128xf32, #tpu.memory_space<vmem>>, vector<1x128xf32>
    %39 = vector.broadcast %38 : vector<1x128xf32> to vector<8x128xf32>
    %40 = arith.addf %37, %39 : vector<8x128xf32>
    %41 = arith.addf %40, %19 : vector<8x128xf32>
    %c0_27 = arith.constant 0 : index
    %c0_28 = arith.constant 0 : index
    %c0_29 = arith.constant 0 : index
    %42 = vector.load %arg9[%c0_27, %c0_28, %c0_29] : memref<2x1x128xf32, #tpu.memory_space<vmem>>, vector<1x1x128xf32>
    %43 = vector.shape_cast %42 : vector<1x1x128xf32> to vector<1x128xf32>
    %c0_30 = arith.constant 0 : index
    %c0_31 = arith.constant 0 : index
    %c0_32 = arith.constant 0 : index
    %44 = vector.load %arg10[%c0_30, %c0_31, %c0_32] : memref<2x1x128xf32, #tpu.memory_space<vmem>>, vector<1x1x128xf32>
    %45 = vector.shape_cast %44 : vector<1x1x128xf32> to vector<1x128xf32>
    %cst_33 = arith.constant dense<0.000000e+00> : vector<8xf32>
    %46 = vector.multi_reduction <add>, %41, %cst_33 [1] : vector<8x128xf32> to vector<8xf32>
    %47 = vector.shape_cast %46 : vector<8xf32> to vector<8x1xf32>
    %cst_34 = arith.constant 1.280000e+02 : f32
    %48 = vector.broadcast %cst_34 : f32 to vector<8x1xf32>
    %49 = arith.divf %47, %48 : vector<8x1xf32>
    %50 = vector.broadcast %49 : vector<8x1xf32> to vector<8x128xf32>
    %51 = arith.subf %41, %50 : vector<8x128xf32>
    %52 = arith.mulf %51, %51 : vector<8x128xf32>
    %cst_35 = arith.constant dense<0.000000e+00> : vector<8xf32>
    %53 = vector.multi_reduction <add>, %52, %cst_35 [1] : vector<8x128xf32> to vector<8xf32>
    %54 = vector.shape_cast %53 : vector<8xf32> to vector<8x1xf32>
    %cst_36 = arith.constant 1.280000e+02 : f32
    %55 = vector.broadcast %cst_36 : f32 to vector<8x1xf32>
    %56 = arith.divf %54, %55 : vector<8x1xf32>
    %cst_37 = arith.constant 9.99999974E-6 : f32
    %57 = vector.broadcast %cst_37 : f32 to vector<8x1xf32>
    %58 = arith.addf %56, %57 : vector<8x1xf32>
    %59 = math.rsqrt %58 : vector<8x1xf32>
    %60 = vector.broadcast %59 : vector<8x1xf32> to vector<8x128xf32>
    %61 = arith.mulf %51, %60 : vector<8x128xf32>
    %62 = vector.broadcast %43 : vector<1x128xf32> to vector<8x128xf32>
    %63 = arith.mulf %61, %62 : vector<8x128xf32>
    %64 = vector.broadcast %45 : vector<1x128xf32> to vector<8x128xf32>
    %65 = arith.addf %63, %64 : vector<8x128xf32>
    %66 = arith.truncf %65 : vector<8x128xf32> to vector<8x128xbf16>
    %c0_38 = arith.constant 0 : index
    %c0_39 = arith.constant 0 : index
    %67 = vector.load %arg11[%c0_38, %c0_39] : memref<128x256xbf16, #tpu.memory_space<vmem>>, vector<128x256xbf16>
    %cst_40 = arith.constant dense<0.000000e+00> : vector<8x256xf32>
    %68 = tpu.matmul %66, %67, %cst_40 {dimension_numbers = #tpu.dot_dimension_numbers<[1], [0], [0], [1], [0, 0, 1, 1], [], []>} : vector<8x128xbf16>, vector<128x256xbf16>, vector<8x256xf32> -> vector<8x256xf32>
    %c0_41 = arith.constant 0 : index
    %c0_42 = arith.constant 0 : index
    %69 = vector.load %arg12[%c0_41, %c0_42] : memref<1x256xf32, #tpu.memory_space<vmem>>, vector<1x256xf32>
    %70 = vector.broadcast %69 : vector<1x256xf32> to vector<8x256xf32>
    %71 = arith.addf %68, %70 : vector<8x256xf32>
    %cst_43 = arith.constant 5.000000e-01 : f32
    %72 = vector.broadcast %cst_43 : f32 to vector<8x256xf32>
    %73 = arith.mulf %72, %71 : vector<8x256xf32>
    %cst_44 = arith.constant 0.707106769 : f32
    %74 = vector.broadcast %cst_44 : f32 to vector<8x256xf32>
    %75 = arith.mulf %71, %74 : vector<8x256xf32>
    %76 = math.erf %75 : vector<8x256xf32>
    %cst_45 = arith.constant 1.000000e+00 : f32
    %77 = vector.broadcast %cst_45 : f32 to vector<8x256xf32>
    %78 = arith.addf %77, %76 : vector<8x256xf32>
    %79 = arith.mulf %73, %78 : vector<8x256xf32>
    %80 = arith.truncf %79 : vector<8x256xf32> to vector<8x256xbf16>
    %c0_46 = arith.constant 0 : index
    %c0_47 = arith.constant 0 : index
    %81 = vector.load %arg13[%c0_46, %c0_47] : memref<256x128xbf16, #tpu.memory_space<vmem>>, vector<256x128xbf16>
    %cst_48 = arith.constant dense<0.000000e+00> : vector<8x128xf32>
    %82 = tpu.matmul %80, %81, %cst_48 {dimension_numbers = #tpu.dot_dimension_numbers<[1], [0], [0], [1], [0, 0, 1, 1], [], []>} : vector<8x256xbf16>, vector<256x128xbf16>, vector<8x128xf32> -> vector<8x128xf32>
    %c0_49 = arith.constant 0 : index
    %c0_50 = arith.constant 0 : index
    %83 = vector.load %arg14[%c0_49, %c0_50] : memref<1x128xf32, #tpu.memory_space<vmem>>, vector<1x128xf32>
    %84 = vector.broadcast %83 : vector<1x128xf32> to vector<8x128xf32>
    %85 = arith.addf %82, %84 : vector<8x128xf32>
    %cst_51 = arith.constant 5.000000e-01 : f32
    %86 = vector.broadcast %cst_51 : f32 to vector<8x128xf32>
    %87 = arith.mulf %86, %85 : vector<8x128xf32>
    %88 = arith.addf %41, %87 : vector<8x128xf32>
    %c1 = arith.constant 1 : index
    %c0_52 = arith.constant 0 : index
    %c0_53 = arith.constant 0 : index
    %89 = vector.load %arg9[%c1, %c0_52, %c0_53] : memref<2x1x128xf32, #tpu.memory_space<vmem>>, vector<1x1x128xf32>
    %90 = vector.shape_cast %89 : vector<1x1x128xf32> to vector<1x128xf32>
    %c1_54 = arith.constant 1 : index
    %c0_55 = arith.constant 0 : index
    %c0_56 = arith.constant 0 : index
    %91 = vector.load %arg10[%c1_54, %c0_55, %c0_56] : memref<2x1x128xf32, #tpu.memory_space<vmem>>, vector<1x1x128xf32>
    %92 = vector.shape_cast %91 : vector<1x1x128xf32> to vector<1x128xf32>
    %cst_57 = arith.constant dense<0.000000e+00> : vector<8xf32>
    %93 = vector.multi_reduction <add>, %88, %cst_57 [1] : vector<8x128xf32> to vector<8xf32>
    %94 = vector.shape_cast %93 : vector<8xf32> to vector<8x1xf32>
    %cst_58 = arith.constant 1.280000e+02 : f32
    %95 = vector.broadcast %cst_58 : f32 to vector<8x1xf32>
    %96 = arith.divf %94, %95 : vector<8x1xf32>
    %97 = vector.broadcast %96 : vector<8x1xf32> to vector<8x128xf32>
    %98 = arith.subf %88, %97 : vector<8x128xf32>
    %99 = arith.mulf %98, %98 : vector<8x128xf32>
    %cst_59 = arith.constant dense<0.000000e+00> : vector<8xf32>
    %100 = vector.multi_reduction <add>, %99, %cst_59 [1] : vector<8x128xf32> to vector<8xf32>
    %101 = vector.shape_cast %100 : vector<8xf32> to vector<8x1xf32>
    %cst_60 = arith.constant 1.280000e+02 : f32
    %102 = vector.broadcast %cst_60 : f32 to vector<8x1xf32>
    %103 = arith.divf %101, %102 : vector<8x1xf32>
    %cst_61 = arith.constant 9.99999974E-6 : f32
    %104 = vector.broadcast %cst_61 : f32 to vector<8x1xf32>
    %105 = arith.addf %103, %104 : vector<8x1xf32>
    %106 = math.rsqrt %105 : vector<8x1xf32>
    %107 = vector.broadcast %106 : vector<8x1xf32> to vector<8x128xf32>
    %108 = arith.mulf %98, %107 : vector<8x128xf32>
    %109 = vector.broadcast %90 : vector<1x128xf32> to vector<8x128xf32>
    %110 = arith.mulf %108, %109 : vector<8x128xf32>
    %111 = vector.broadcast %92 : vector<1x128xf32> to vector<8x128xf32>
    %112 = arith.addf %110, %111 : vector<8x128xf32>
    %c0_62 = arith.constant 0 : index
    %c0_63 = arith.constant 0 : index
    %c0_64 = arith.constant 0 : index
    %113 = vector.load %arg15[%c0_62, %c0_63, %c0_64] : memref<1x8x128xf32, #tpu.memory_space<vmem>>, vector<1x8x128xf32>
    %114 = vector.shape_cast %113 : vector<1x8x128xf32> to vector<8x128xf32>
    %115 = vector.shape_cast %112 : vector<8x128xf32> to vector<1x8x128xf32>
    tpu.vector_store %arg15[%c0_62, %c0_63, %c0_64], %115 {strides = array<i32>} : memref<1x8x128xf32, #tpu.memory_space<vmem>>, vector<1x8x128xf32>,
    return
  }
  func.func @transform_0(%arg0: i32) -> (i32, i32, i32) {
    %c0_i32 = arith.constant 0 : i32
    %c0_i32_0 = arith.constant 0 : i32
    %c0_i32_1 = arith.constant 0 : i32
    return %arg0, %c0_i32, %c0_i32_0 : i32, i32, i32
  }
  func.func @transform_1(%arg0: i32) -> (i32, i32, i32) {
    %c0_i32 = arith.constant 0 : i32
    %c0_i32_0 = arith.constant 0 : i32
    %c0_i32_1 = arith.constant 0 : i32
    return %arg0, %c0_i32, %c0_i32_0 : i32, i32, i32
  }
  func.func @transform_2(%arg0: i32) -> (i32, i32, i32) {
    %c0_i32 = arith.constant 0 : i32
    %c0_i32_0 = arith.constant 0 : i32
    %c0_i32_1 = arith.constant 0 : i32
    %c0_i32_2 = arith.constant 0 : i32
    return %c0_i32, %c0_i32_0, %c0_i32_1 : i32, i32, i32
  }
  func.func @transform_3(%arg0: i32) -> (i32, i32, i32) {
    %c0_i32 = arith.constant 0 : i32
    %c0_i32_0 = arith.constant 0 : i32
    %c0_i32_1 = arith.constant 0 : i32
    %c0_i32_2 = arith.constant 0 : i32
    return %c0_i32, %c0_i32_0, %c0_i32_1 : i32, i32, i32
  }
  func.func @transform_4(%arg0: i32) -> (i32, i32) {
    %c0_i32 = arith.constant 0 : i32
    %c0_i32_0 = arith.constant 0 : i32
    %c0_i32_1 = arith.constant 0 : i32
    return %c0_i32, %c0_i32_0 : i32, i32
  }
  func.func @transform_5(%arg0: i32) -> (i32, i32) {
    %c0_i32 = arith.constant 0 : i32
    %c0_i32_0 = arith.constant 0 : i32
    %c0_i32_1 = arith.constant 0 : i32
    return %c0_i32, %c0_i32_0 : i32, i32
  }
  func.func @transform_6(%arg0: i32) -> (i32, i32) {
    %c0_i32 = arith.constant 0 : i32
    %c0_i32_0 = arith.constant 0 : i32
    %c0_i32_1 = arith.constant 0 : i32
    return %c0_i32, %c0_i32_0 : i32, i32
  }
  func.func @transform_7(%arg0: i32) -> (i32, i32) {
    %c0_i32 = arith.constant 0 : i32
    %c0_i32_0 = arith.constant 0 : i32
    %c0_i32_1 = arith.constant 0 : i32
    return %c0_i32, %c0_i32_0 : i32, i32
  }
  func.func @transform_8(%arg0: i32) -> (i32, i32, i32) {
    %c0_i32 = arith.constant 0 : i32
    %c0_i32_0 = arith.constant 0 : i32
    %c0_i32_1 = arith.constant 0 : i32
    %c0_i32_2 = arith.constant 0 : i32
    return %c0_i32, %c0_i32_0, %c0_i32_1 : i32, i32, i32
  }
  func.func @transform_9(%arg0: i32) -> (i32, i32, i32) {
    %c0_i32 = arith.constant 0 : i32
    %c0_i32_0 = arith.constant 0 : i32
    %c0_i32_1 = arith.constant 0 : i32
    %c0_i32_2 = arith.constant 0 : i32
    return %c0_i32, %c0_i32_0, %c0_i32_1 : i32, i32, i32
  }
  func.func @transform_10(%arg0: i32) -> (i32, i32) {
    %c0_i32 = arith.constant 0 : i32
    %c0_i32_0 = arith.constant 0 : i32
    %c0_i32_1 = arith.constant 0 : i32
    return %c0_i32, %c0_i32_0 : i32, i32
  }
  func.func @transform_11(%arg0: i32) -> (i32, i32) {
    %c0_i32 = arith.constant 0 : i32
    %c0_i32_0 = arith.constant 0 : i32
    %c0_i32_1 = arith.constant 0 : i32
    return %c0_i32, %c0_i32_0 : i32, i32
  }
  func.func @transform_12(%arg0: i32) -> (i32, i32) {
    %c0_i32 = arith.constant 0 : i32
    %c0_i32_0 = arith.constant 0 : i32
    %c0_i32_1 = arith.constant 0 : i32
    return %c0_i32, %c0_i32_0 : i32, i32
  }
  func.func @transform_13(%arg0: i32) -> (i32, i32) {
    %c0_i32 = arith.constant 0 : i32
    %c0_i32_0 = arith.constant 0 : i32
    %c0_i32_1 = arith.constant 0 : i32
    return %c0_i32, %c0_i32_0 : i32, i32
  }
  func.func @transform_14(%arg0: i32) -> (i32, i32, i32) {
    %c0_i32 = arith.constant 0 : i32
    %c0_i32_0 = arith.constant 0 : i32
    %c0_i32_1 = arith.constant 0 : i32
    return %arg0, %c0_i32, %c0_i32_0 : i32, i32, i32
  }
}

</mosaic_0001>

<llo_original>
// kernel: w2vbert_forward.7
$region0: #{w2vbert_forward.7}
  #allocation0 [shape = 'u32[]', space=smem, size = 0x4, offset = 0x4, fixed_abs, tag = 'smem constant byte address 0x4 - core index']
  #allocation1 [shape = 'u32[144,128]{1,0:T(1,128)}', space=vmem, size = 0x12000, scoped, tag = 'internal scratch']
  %s0 = inlined_call_operand.vmem [shape: f32[512,9], index: 0, kind: input, shape index: {}]
  %s1 = inlined_call_operand.vmem [shape: bf16[9,128], index: 1, kind: input, shape index: {}]
  %s2 = inlined_call_operand.vmem [shape: f32[1,128], index: 2, kind: input, shape index: {}]
  %s3 = inlined_call_operand.vmem [shape: f32[512,128], index: 3, kind: output, shape index: {}]
  %s4 = sld [smem:[#allocation0]]
  $region45: #{w2vbert_forward.7} parent=0
    _
  %s6 = ssub.s32 1, %s4
  %s7 = scalar_select 0, %s6, %s4
  loop: start=0, step=1, limit=4
  $region2: #{w2vbert_forward.7} parent=0 // loop_pre_header
    _
  $region3: #{w2vbert_forward.7} parent=0 // loop_header
    %s9 = sphi 0, %s13
    %p10 = scmp.ge.s32.totalorder %s9, 4
    %s19 = sphi 0, %s21
    %s22 = sphi 0, %s19
    %s23 = sphi 0, %s22
    %s39 = sphi 0, %s23
    %s43 = sphi 0, %s43
    %s45 = sphi 0, %s43
    %s46 = sphi 0, %s45
    %s60 = sphi 0, %s46
    %s64 = sphi 0, %s64
    %s66 = sphi 0, %s64
    %s67 = sphi 0, %s66
    %s81 = sphi 0, %s67
    %s87 = sphi 0, %s89
    %s90 = sphi 0, %s87
    %s91 = sphi 0, %s90
    %s107 = sphi 0, %s91
  $region4: #{w2vbert_forward.7} parent=0 // loop_header_branch
    %12 = sbr.rel (%p10) target = $region8
  $region5: #{w2vbert_forward.7} parent=0 // loop_body
    %s14 = ssub.s32 %s9, 1
    %s15 = ssub.s32 %s9, 2
    %s16 = sadd.s32 %s9, 1
    %s17 = ssub.s32 %s9, %s16
    %p18 = scmp.eq.s32.totalorder %s17, 0
    %s20 = sadd.s32 %s19, 1
    %s21 = scalar_select %p18, %s19, %s20
    %p24 = pneg %p18
    %p25 = scmp.eq.s32.totalorder %s9, 1
    %p26 = por %p24, %p25
    %p27 = scmp.ne.s32.totalorder %s19, %s22
    %p28 = scmp.eq.s32.totalorder %s9, 0
    %p29 = por %p27, %p28
    %p30 = scmp.ne.s32.totalorder %s19, %s22
    %p31 = scmp.eq.s32.totalorder %s14, 1
    %p32 = por %p30, %p31
    %p33 = scmp.ne.s32.totalorder %s22, %s23
    %p34 = scmp.eq.s32.totalorder %s14, 0
    %p35 = por %p33, %p34
    %p36 = scmp.ne.s32.totalorder %s22, %s23
    %p37 = scmp.eq.s32.totalorder %s15, 1
    %p38 = por %p36, %p37
    %p40 = scmp.ne.s32.totalorder %s23, %s39
    %p41 = scmp.eq.s32.totalorder %s15, 0
    %p42 = por %p40, %p41
    %s44 = sadd.s32 %s43, 1
    %p47 = scmp.eq.s32.totalorder %s9, 1
    %p48 = scmp.ne.s32.totalorder %s43, %s45
    %p49 = scmp.eq.s32.totalorder %s9, 0
    %p50 = por %p48, %p49
    %p51 = scmp.ne.s32.totalorder %s43, %s45
    %p52 = scmp.eq.s32.totalorder %s14, 1
    %p53 = por %p51, %p52
    %p54 = scmp.ne.s32.totalorder %s45, %s46
    %p55 = scmp.eq.s32.totalorder %s14, 0
    %p56 = por %p54, %p55
    %p57 = scmp.ne.s32.totalorder %s45, %s46
    %p58 = scmp.eq.s32.totalorder %s15, 1
    %p59 = por %p57, %p58
    %p61 = scmp.ne.s32.totalorder %s46, %s60
    %p62 = scmp.eq.s32.totalorder %s15, 0
    %p63 = por %p61, %p62
    %s65 = sadd.s32 %s64, 1
    %p68 = scmp.eq.s32.totalorder %s9, 1
    %p69 = scmp.ne.s32.totalorder %s64, %s66
    %p70 = scmp.eq.s32.totalorder %s9, 0
    %p71 = por %p69, %p70
    %p72 = scmp.ne.s32.totalorder %s64, %s66
    %p73 = scmp.eq.s32.totalorder %s14, 1
    %p74 = por %p72, %p73
    %p75 = scmp.ne.s32.totalorder %s66, %s67
    %p76 = scmp.eq.s32.totalorder %s14, 0
    %p77 = por %p75, %p76
    %p78 = scmp.ne.s32.totalorder %s66, %s67
    %p79 = scmp.eq.s32.totalorder %s15, 1
    %p80 = por %p78, %p79
    %p82 = scmp.ne.s32.totalorder %s67, %s81
    %p83 = scmp.eq.s32.totalorder %s15, 0
    %p84 = por %p82, %p83
    %s85 = ssub.s32 %s9, %s16
    %p86 = scmp.eq.s32.totalorder %s85, 0
    %s88 = sadd.s32 %s87, 1
    %s89 = scalar_select %p86, %s87, %s88
    %p92 = pneg %p86
    %p93 = scmp.eq.s32.totalorder %s9, 1
    %p94 = por %p92, %p93
    %p95 = scmp.ne.s32.totalorder %s87, %s90
    %p96 = scmp.eq.s32.totalorder %s9, 0
    %p97 = por %p95, %p96
    %p98 = scmp.ne.s32.totalorder %s87, %s90
    %p99 = scmp.eq.s32.totalorder %s14, 1
    %p100 = por %p98, %p99
    %p101 = scmp.ne.s32.totalorder %s90, %s91
    %p102 = scmp.eq.s32.totalorder %s14, 0
    %p103 = por %p101, %p102
    %p104 = scmp.ne.s32.totalorder %s90, %s91
    %p105 = scmp.eq.s32.totalorder %s15, 1
    %p106 = por %p104, %p105
    %p108 = scmp.ne.s32.totalorder %s91, %s107
    %p109 = scmp.eq.s32.totalorder %s15, 0
    %p110 = por %p108, %p109
    %p111 = scmp.le.s32.totalorder 1, %s9
    %p112 = scmp.lt.s32.totalorder %s9, 3
    %p113 = pnand %p111, %p112
    %p114 = pneg %p113
    // Predicated region
    $region9: #{w2vbert_forward.7} parent=5 // pred_check
      _
    $region10: #{w2vbert_forward.7} parent=5 // pred_check_branch
      %116 = sbr.rel (%p113) target = $region12
    $region11: #{w2vbert_forward.7} parent=5 // pred_region
      %s117 = ssub.s32 %s9, 1
      // Predicated region
      $region13: #{w2vbert_forward.7} parent=11 // pred_check
        %p118 = pneg %p56
      $region14: #{w2vbert_forward.7} parent=11 // pred_check_branch
        %120 = sbr.rel (%p118) target = $region16
      $region15: #{w2vbert_forward.7} parent=11 // pred_region
        _
      $region16: #{w2vbert_forward.7} parent=11 // pred_fallthru
        _
      // Predicated region
      $region17: #{w2vbert_forward.7} parent=11 // pred_check
        %p121 = pneg %p77
      $region18: #{w2vbert_forward.7} parent=11 // pred_check_branch
        %123 = sbr.rel (%p121) target = $region20
      $region19: #{w2vbert_forward.7} parent=11 // pred_region
        _
      $region20: #{w2vbert_forward.7} parent=11 // pred_fallthru
        _
    $region12: #{w2vbert_forward.7} parent=5 // pred_fallthru
      _
    %p124 = scmp.lt.s32.totalorder %s9, 2
    // Predicated region
    $region21: #{w2vbert_forward.7} parent=5 // pred_check
      %p125 = pneg %p124
    $region22: #{w2vbert_forward.7} parent=5 // pred_check_branch
      %127 = sbr.rel (%p125) target = $region24
    $region23: #{w2vbert_forward.7} parent=5 // pred_region
      // Predicated region
      $region25: #{w2vbert_forward.7} parent=23 // pred_check
        %p128 = pneg %p29
      $region26: #{w2vbert_forward.7} parent=23 // pred_check_branch
        %130 = sbr.rel (%p128) target = $region28
      $region27: #{w2vbert_forward.7} parent=23 // pred_region
        %s131 = smul.u32 32, %s9
        %p132 = scmp.lt.s32.totalorder %s131, 63
        %s133 = scalar_select %p132, %s131, 63
        %s134 = smul.addr %s133, 8
        %s135 = scalar_lea.vmem %s0, %s134
        %s136 = smul.u32 32, %s9
      $region28: #{w2vbert_forward.7} parent=23 // pred_fallthru
        _
    $region24: #{w2vbert_forward.7} parent=5 // pred_fallthru
      _
    %p137 = scmp.le.s32.totalorder 1, %s9
    %p138 = scmp.lt.s32.totalorder %s9, 3
    %p139 = pnand %p137, %p138
    %p140 = pneg %p139
    // Predicated region
    $region29: #{w2vbert_forward.7} parent=5 // pred_check
      _
    $region30: #{w2vbert_forward.7} parent=5 // pred_check_branch
      %142 = sbr.rel (%p139) target = $region32
    $region31: #{w2vbert_forward.7} parent=5 // pred_region
      %s143 = ssub.s32 %s9, 1
      %s144 = smul.u32 32, %s14
      %p145 = scmp.lt.s32.totalorder %s144, 63
      %s146 = scalar_select %p145, %s144, 63
      %s147 = smul.addr %s146, 8
      %s148 = scalar_lea.vmem %s0, %s147
      %p149 = pneg %p35
      %p150 = pneg %p32
      %p151 = pneg %p56
      %p152 = pneg %p53
      %p153 = pneg %p77
      %p154 = pneg %p74
      %p155 = pneg %p103
      %p156 = pneg %p100
      %s157 = smul.u32 32, %s14
      %p158 = scmp.lt.s32.totalorder %s157, 63
      %s159 = scalar_select %p158, %s157, 63
      %s160 = smul.addr %s159, 8
      %s161 = scalar_lea.vmem %s3, %s160
      %s162 = smul.u32 32, %s14
      %p163 = scmp.lt.s32.totalorder %s162, 63
      %s164 = scalar_select %p163, %s162, 63
      %s165 = smul.addr %s164, 8
      %s166 = scalar_lea.vmem %s0, %s165
      %s167 = smul.u32 32, %s14
      %s168 = smul.u32 32, %s14
      %p169 = scmp.lt.s32.totalorder %s168, 63
      %s170 = scalar_select %p169, %s168, 63
      %s171 = smul.addr %s170, 8
      %s172 = scalar_lea.vmem %s3, %s171
      %s173 = smul.u32 32, %s14
      %v175 = vld [vmem:[%s166] sm:$0xff]
      %v176 = vld [vmem:[%s166 + $0x8] sm:$0xff]
      %v177 = vld [vmem:[%s166 + $0x10] sm:$0xff]
      %v178 = vld [vmem:[%s166 + $0x18] sm:$0xff]
      %v179 = vld [vmem:[%s166 + $0x20] sm:$0xff]
      %v180 = vld [vmem:[%s166 + $0x28] sm:$0xff]
      %v181 = vld [vmem:[%s166 + $0x30] sm:$0xff]
      %v182 = vld [vmem:[%s166 + $0x38] sm:$0xff]
      %v183 = vld [vmem:[%s166 + $0x40] sm:$0xff]
      %v184 = vld [vmem:[%s166 + $0x48] sm:$0xff]
      %v185 = vld [vmem:[%s166 + $0x50] sm:$0xff]
      %v186 = vld [vmem:[%s166 + $0x58] sm:$0xff]
      %v187 = vld [vmem:[%s166 + $0x60] sm:$0xff]
      %v188 = vld [vmem:[%s166 + $0x68] sm:$0xff]
      %v189 = vld [vmem:[%s166 + $0x70] sm:$0xff]
      %v190 = vld [vmem:[%s166 + $0x78] sm:$0xff]
      %v191 = vld [vmem:[%s166 + $0x80] sm:$0xff]
      %v192 = vld [vmem:[%s166 + $0x88] sm:$0xff]
      %v193 = vld [vmem:[%s166 + $0x90] sm:$0xff]
      %v194 = vld [vmem:[%s166 + $0x98] sm:$0xff]
      %v195 = vld [vmem:[%s166 + $0xa0] sm:$0xff]
      %v196 = vld [vmem:[%s166 + $0xa8] sm:$0xff]
      %v197 = vld [vmem:[%s166 + $0xb0] sm:$0xff]
      %v198 = vld [vmem:[%s166 + $0xb8] sm:$0xff]
      %v199 = vld [vmem:[%s166 + $0xc0] sm:$0xff]
      %v200 = vld [vmem:[%s166 + $0xc8] sm:$0xff]
      %v201 = vld [vmem:[%s166 + $0xd0] sm:$0xff]
      %v202 = vld [vmem:[%s166 + $0xd8] sm:$0xff]
      %v203 = vld [vmem:[%s166 + $0xe0] sm:$0xff]
      %v204 = vld [vmem:[%s166 + $0xe8] sm:$0xff]
      %v205 = vld [vmem:[%s166 + $0xf0] sm:$0xff]
      %v206 = vld [vmem:[%s166 + $0xf8] sm:$0xff]
      %v207 = vpack.c.bf16 %v176, %v175
      %v208 = vpack.c.bf16 %v178, %v177
      %v209 = vpack.c.bf16 %v180, %v179
      %v210 = vpack.c.bf16 %v182, %v181
      %v211 = vpack.c.bf16 %v184, %v183
      %v212 = vpack.c.bf16 %v186, %v185
      %v213 = vpack.c.bf16 %v188, %v187
      %v214 = vpack.c.bf16 %v190, %v189
      %v215 = vpack.c.bf16 %v192, %v191
      %v216 = vpack.c.bf16 %v194, %v193
      %v217 = vpack.c.bf16 %v196, %v195
      %v218 = vpack.c.bf16 %v198, %v197
      %v219 = vpack.c.bf16 %v200, %v199
      %v220 = vpack.c.bf16 %v202, %v201
      %v221 = vpack.c.bf16 %v204, %v203
      %v222 = vpack.c.bf16 %v206, %v205
      %v223 = vld [vmem:[%s1] sm:$0xf]
      %v224 = vld [vmem:[%s1 + $0x4] sm:$0x1]
      %v225 = vld [vmem:[%s2] sm:$0x1]
      %v227 = vlaneseq
      %v228 = vshrl.u32 %v227, 7
      %v229 = vsub.s32 0, %v228
      %v230 = vrot.slane %v225, %v229
      %v234 = vunpack.c.l.b16 %v223
      %v235 = vunpack.c.l.b16 %v224
      %v236 = vpack.c.b16 %v235, %v234
      %vm237 = vcmask 72704
      %v239 = vsel %vm237, %v207, 0
      %v242 = vsel %vm237, %v208, 0
      %v245 = vsel %vm237, %v209, 0
      %v248 = vsel %vm237, %v210, 0
      %v251 = vsel %vm237, %v211, 0
      %v254 = vsel %vm237, %v212, 0
      %v257 = vsel %vm237, %v213, 0
      %v260 = vsel %vm237, %v214, 0
      %v263 = vsel %vm237, %v215, 0
      %v266 = vsel %vm237, %v216, 0
      %v269 = vsel %vm237, %v217, 0
      %v272 = vsel %vm237, %v218, 0
      %v275 = vsel %vm237, %v219, 0
      %v278 = vsel %vm237, %v220, 0
      %v281 = vsel %vm237, %v221, 0
      %v284 = vsel %vm237, %v222, 0
      %vm286 = vcmask 1043456
      %vm287 = vcmask 1044480
      %v288 = vsel %vm286, 4294967295, 65535
      %v289 = vsel %vm287, %v288, 0
      %v291 = vand.u32 %v236, %v289
      %293 = vmatprep.subr.bf16.mxu0 0
      %294 = vmatpush1.bf16.msra.mxu0 0
      %295 = vmatprep.subr.bf16.mxu0 0
      %296 = vmatpush1.bf16.msra.mxu0 0
      %297 = vmatprep.subr.bf16.mxu0 0
      %298 = vmatpush1.bf16.msra.mxu0 0
      %299 = vmatprep.subr.bf16.mxu0 0
      %300 = vmatpush1.bf16.msra.mxu0 0
      %301 = vmatprep.subr.bf16.mxu0 0
      %302 = vmatpush1.bf16.msra.mxu0 0
      %303 = vmatprep.subr.bf16.mxu0 0
      %304 = vmatpush1.bf16.msra.mxu0 0
      %305 = vmatprep.subr.bf16.mxu0 0
      %306 = vmatpush1.bf16.msra.mxu0 0
      %307 = vmatprep.subr.bf16.mxu0 0
      %308 = vmatpush1.bf16.msra.mxu0 %v291
      %309 = vmatprep.subr.bf16.mxu0 0
      %310 = vmatpush2.bf16.msra.mxu0 0
      %311 = vmatprep.subr.bf16.mxu0 0
      %312 = vmatpush2.bf16.msra.mxu0 0
      %313 = vmatprep.subr.bf16.mxu0 0
      %314 = vmatpush2.bf16.msra.mxu0 0
      %315 = vmatprep.subr.bf16.mxu0 0
      %316 = vmatpush2.bf16.msra.mxu0 0
      %317 = vmatprep.subr.bf16.mxu0 0
      %318 = vmatpush2.bf16.msra.mxu0 0
      %319 = vmatprep.subr.bf16.mxu0 0
      %320 = vmatpush2.bf16.msra.mxu0 0
      %321 = vmatprep.subr.bf16.mxu0 0
      %322 = vmatpush2.bf16.msra.mxu0 0
      %323 = vmatprep.subr.bf16.mxu0 0
      %324 = vmatpush2.bf16.msra.mxu0 0
      %325 = vmatprep.mubr.bf16.mxu0 0
      %326 = vmatmul.mubr.bf16.gmra.mxu0 %v239
      %v327 = vpop.f32.mrf.mxu0
      %v328 = vadd.f32 %v230, %v327
      %v329 = vpop.f32.mrf.mxu0
      %v330 = vpop.f32.mrf.mxu0
      %v331 = vadd.f32 %v230, %v330
      %v332 = vpop.f32.mrf.mxu0
      %333 = vmatprep.mubr.bf16.mxu0 0
      %334 = vmatmul.mubr.bf16.gmra.mxu0 %v242
      %v335 = vpop.f32.mrf.mxu0
      %v336 = vadd.f32 %v230, %v335
      %v337 = vpop.f32.mrf.mxu0
      %v338 = vpop.f32.mrf.mxu0
      %v339 = vadd.f32 %v230, %v338
      %v340 = vpop.f32.mrf.mxu0
      %341 = vmatprep.mubr.bf16.mxu0 0
      %342 = vmatmul.mubr.bf16.gmra.mxu0 %v245
      %v343 = vpop.f32.mrf.mxu0
      %v344 = vadd.f32 %v230, %v343
      %v345 = vpop.f32.mrf.mxu0
      %v346 = vpop.f32.mrf.mxu0
      %v347 = vadd.f32 %v230, %v346
      %v348 = vpop.f32.mrf.mxu0
      %349 = vmatprep.mubr.bf16.mxu0 0
      %350 = vmatmul.mubr.bf16.gmra.mxu0 %v248
      %v351 = vpop.f32.mrf.mxu0
      %v352 = vadd.f32 %v230, %v351
      %v353 = vpop.f32.mrf.mxu0
      %v354 = vpop.f32.mrf.mxu0
      %v355 = vadd.f32 %v230, %v354
      %v356 = vpop.f32.mrf.mxu0
      %357 = vmatprep.mubr.bf16.mxu0 0
      %358 = vmatmul.mubr.bf16.gmra.mxu0 %v251
      %v359 = vpop.f32.mrf.mxu0
      %v360 = vadd.f32 %v230, %v359
      %v361 = vpop.f32.mrf.mxu0
      %v362 = vpop.f32.mrf.mxu0
      %v363 = vadd.f32 %v230, %v362
      %v364 = vpop.f32.mrf.mxu0
      %365 = vmatprep.mubr.bf16.mxu0 0
      %366 = vmatmul.mubr.bf16.gmra.mxu0 %v254
      %v367 = vpop.f32.mrf.mxu0
      %v368 = vadd.f32 %v230, %v367
      %v369 = vpop.f32.mrf.mxu0
      %v370 = vpop.f32.mrf.mxu0
      %v371 = vadd.f32 %v230, %v370
      %v372 = vpop.f32.mrf.mxu0
      %373 = vmatprep.mubr.bf16.mxu0 0
      %374 = vmatmul.mubr.bf16.gmra.mxu0 %v257
      %v375 = vpop.f32.mrf.mxu0
      %v376 = vadd.f32 %v230, %v375
      %v377 = vpop.f32.mrf.mxu0
      %v378 = vpop.f32.mrf.mxu0
      %v379 = vadd.f32 %v230, %v378
      %v380 = vpop.f32.mrf.mxu0
      %381 = vmatprep.mubr.bf16.mxu0 0
      %382 = vmatmul.mubr.bf16.gmra.mxu0 %v260
      %v383 = vpop.f32.mrf.mxu0
      %v384 = vadd.f32 %v230, %v383
      %v385 = vpop.f32.mrf.mxu0
      %v386 = vpop.f32.mrf.mxu0
      %v387 = vadd.f32 %v230, %v386
      %v388 = vpop.f32.mrf.mxu0
      %389 = vmatprep.mubr.bf16.mxu0 0
      %390 = vmatmul.mubr.bf16.gmra.mxu0 %v263
      %v391 = vpop.f32.mrf.mxu0
      %v392 = vadd.f32 %v230, %v391
      %v393 = vpop.f32.mrf.mxu0
      %v394 = vpop.f32.mrf.mxu0
      %v395 = vadd.f32 %v230, %v394
      %v396 = vpop.f32.mrf.mxu0
      %397 = vmatprep.mubr.bf16.mxu0 0
      %398 = vmatmul.mubr.bf16.gmra.mxu0 %v266
      %v399 = vpop.f32.mrf.mxu0
      %v400 = vadd.f32 %v230, %v399
      %v401 = vpop.f32.mrf.mxu0
      %v402 = vpop.f32.mrf.mxu0
      %v403 = vadd.f32 %v230, %v402
      %v404 = vpop.f32.mrf.mxu0
      %405 = vmatprep.mubr.bf16.mxu0 0
      %406 = vmatmul.mubr.bf16.gmra.mxu0 %v269
      %v407 = vpop.f32.mrf.mxu0
      %v408 = vadd.f32 %v230, %v407
      %v409 = vpop.f32.mrf.mxu0
      %v410 = vpop.f32.mrf.mxu0
      %v411 = vadd.f32 %v230, %v410
      %v412 = vpop.f32.mrf.mxu0
      %413 = vmatprep.mubr.bf16.mxu0 0
      %414 = vmatmul.mubr.bf16.gmra.mxu0 %v272
      %v415 = vpop.f32.mrf.mxu0
      %v416 = vadd.f32 %v230, %v415
      %v417 = vpop.f32.mrf.mxu0
      %v418 = vpop.f32.mrf.mxu0
      %v419 = vadd.f32 %v230, %v418
      %v420 = vpop.f32.mrf.mxu0
      %421 = vmatprep.mubr.bf16.mxu0 0
      %422 = vmatmul.mubr.bf16.gmra.mxu0 %v275
      %v423 = vpop.f32.mrf.mxu0
      %v424 = vadd.f32 %v230, %v423
      %v425 = vpop.f32.mrf.mxu0
      %v426 = vpop.f32.mrf.mxu0
      %v427 = vadd.f32 %v230, %v426
      %v428 = vpop.f32.mrf.mxu0
      %429 = vmatprep.mubr.bf16.mxu0 0
      %430 = vmatmul.mubr.bf16.gmra.mxu0 %v278
      %v431 = vpop.f32.mrf.mxu0
      %v432 = vadd.f32 %v230, %v431
      %v433 = vpop.f32.mrf.mxu0
      %v434 = vpop.f32.mrf.mxu0
      %v435 = vadd.f32 %v230, %v434
      %v436 = vpop.f32.mrf.mxu0
      %437 = vmatprep.mubr.bf16.mxu0 0
      %438 = vmatmul.mubr.bf16.gmra.mxu0 %v281
      %v439 = vpop.f32.mrf.mxu0
      %v440 = vadd.f32 %v230, %v439
      %v441 = vpop.f32.mrf.mxu0
      %v442 = vpop.f32.mrf.mxu0
      %v443 = vadd.f32 %v230, %v442
      %v444 = vpop.f32.mrf.mxu0
      %445 = vmatprep.mubr.bf16.mxu0 0
      %446 = vmatmul.mubr.bf16.gmra.mxu0 %v284
      %v447 = vpop.f32.mrf.mxu0
      %v448 = vadd.f32 %v230, %v447
      %v449 = vpop.f32.mrf.mxu0
      %v450 = vpop.f32.mrf.mxu0
      %v451 = vadd.f32 %v230, %v450
      %v452 = vpop.f32.mrf.mxu0
      %453 = vdwg.mxu0
      %v454 = vmax.f32 %v328, 0.0
      %v455 = vmax.f32 %v331, 0.0
      %v456 = vmax.f32 %v336, 0.0
      %v457 = vmax.f32 %v339, 0.0
      %v458 = vmax.f32 %v344, 0.0
      %v459 = vmax.f32 %v347, 0.0
      %v460 = vmax.f32 %v352, 0.0
      %v461 = vmax.f32 %v355, 0.0
      %v462 = vmax.f32 %v360, 0.0
      %v463 = vmax.f32 %v363, 0.0
      %v464 = vmax.f32 %v368, 0.0
      %v465 = vmax.f32 %v371, 0.0
      %v466 = vmax.f32 %v376, 0.0
      %v467 = vmax.f32 %v379, 0.0
      %v468 = vmax.f32 %v384, 0.0
      %v469 = vmax.f32 %v387, 0.0
      %v470 = vmax.f32 %v392, 0.0
      %v471 = vmax.f32 %v395, 0.0
      %v472 = vmax.f32 %v400, 0.0
      %v473 = vmax.f32 %v403, 0.0
      %v474 = vmax.f32 %v408, 0.0
      %v475 = vmax.f32 %v411, 0.0
      %v476 = vmax.f32 %v416, 0.0
      %v477 = vmax.f32 %v419, 0.0
      %v478 = vmax.f32 %v424, 0.0
      %v479 = vmax.f32 %v427, 0.0
      %v480 = vmax.f32 %v432, 0.0
      %v481 = vmax.f32 %v435, 0.0
      %v482 = vmax.f32 %v440, 0.0
      %v483 = vmax.f32 %v443, 0.0
      %v484 = vmax.f32 %v448, 0.0
      %v485 = vmax.f32 %v451, 0.0
      %486 = vst [vmem:[%s172] sm:$0xff] %v454
      %487 = vst [vmem:[%s172 + $0x8] sm:$0xff] %v455
      %488 = vst [vmem:[%s172 + $0x10] sm:$0xff] %v456
      %489 = vst [vmem:[%s172 + $0x18] sm:$0xff] %v457
      %490 = vst [vmem:[%s172 + $0x20] sm:$0xff] %v458
      %491 = vst [vmem:[%s172 + $0x28] sm:$0xff] %v459
      %492 = vst [vmem:[%s172 + $0x30] sm:$0xff] %v460
      %493 = vst [vmem:[%s172 + $0x38] sm:$0xff] %v461
      %494 = vst [vmem:[%s172 + $0x40] sm:$0xff] %v462
      %495 = vst [vmem:[%s172 + $0x48] sm:$0xff] %v463
      %496 = vst [vmem:[%s172 + $0x50] sm:$0xff] %v464
      %497 = vst [vmem:[%s172 + $0x58] sm:$0xff] %v465
      %498 = vst [vmem:[%s172 + $0x60] sm:$0xff] %v466
      %499 = vst [vmem:[%s172 + $0x68] sm:$0xff] %v467
      %500 = vst [vmem:[%s172 + $0x70] sm:$0xff] %v468
      %501 = vst [vmem:[%s172 + $0x78] sm:$0xff] %v469
      %502 = vst [vmem:[%s172 + $0x80] sm:$0xff] %v470
      %503 = vst [vmem:[%s172 + $0x88] sm:$0xff] %v471
      %504 = vst [vmem:[%s172 + $0x90] sm:$0xff] %v472
      %505 = vst [vmem:[%s172 + $0x98] sm:$0xff] %v473
      %506 = vst [vmem:[%s172 + $0xa0] sm:$0xff] %v474
      %507 = vst [vmem:[%s172 + $0xa8] sm:$0xff] %v475
      %508 = vst [vmem:[%s172 + $0xb0] sm:$0xff] %v476
      %509 = vst [vmem:[%s172 + $0xb8] sm:$0xff] %v477
      %510 = vst [vmem:[%s172 + $0xc0] sm:$0xff] %v478
      %511 = vst [vmem:[%s172 + $0xc8] sm:$0xff] %v479
      %512 = vst [vmem:[%s172 + $0xd0] sm:$0xff] %v480
      %513 = vst [vmem:[%s172 + $0xd8] sm:$0xff] %v481
      %514 = vst [vmem:[%s172 + $0xe0] sm:$0xff] %v482
      %515 = vst [vmem:[%s172 + $0xe8] sm:$0xff] %v483
      %516 = vst [vmem:[%s172 + $0xf0] sm:$0xff] %v484
      %517 = vst [vmem:[%s172 + $0xf8] sm:$0xff] %v485
      %s518 = smul.u32 32, %s14
      %p519 = scmp.lt.s32.totalorder %s518, 63
      %s520 = scalar_select %p519, %s518, 63
      %s521 = smul.addr %s520, 8
      %s522 = scalar_lea.vmem %s3, %s521
      // Predicated region
      $region33: #{w2vbert_forward.7} parent=31 // pred_check
        %p523 = pneg %p100
      $region34: #{w2vbert_forward.7} parent=31 // pred_check_branch
        %525 = sbr.rel (%p523) target = $region36
      $region35: #{w2vbert_forward.7} parent=31 // pred_region
        %s526 = smul.u32 32, %s14
      $region36: #{w2vbert_forward.7} parent=31 // pred_fallthru
        _
    $region32: #{w2vbert_forward.7} parent=5 // pred_fallthru
      _
    %p527 = scmp.le.s32.totalorder 2, %s9
    // Predicated region
    $region37: #{w2vbert_forward.7} parent=5 // pred_check
      %p528 = pneg %p527
    $region38: #{w2vbert_forward.7} parent=5 // pred_check_branch
      %530 = sbr.rel (%p528) target = $region40
    $region39: #{w2vbert_forward.7} parent=5 // pred_region
      %s531 = ssub.s32 %s9, 2
      // Predicated region
      $region41: #{w2vbert_forward.7} parent=39 // pred_check
        %p532 = pneg %p106
      $region42: #{w2vbert_forward.7} parent=39 // pred_check_branch
        %534 = sbr.rel (%p532) target = $region44
      $region43: #{w2vbert_forward.7} parent=39 // pred_region
        %s535 = smul.u32 32, %s15
        %p536 = scmp.lt.s32.totalorder %s535, 63
        %s537 = scalar_select %p536, %s535, 63
        %s538 = smul.addr %s537, 8
        %s539 = scalar_lea.vmem %s3, %s538
      $region44: #{w2vbert_forward.7} parent=39 // pred_fallthru
        _
    $region40: #{w2vbert_forward.7} parent=5 // pred_fallthru
      _
  $region6: #{w2vbert_forward.7} parent=0 // loop_footer
    %s13 = sadd.s32 1, %s9
  $region7: #{w2vbert_forward.7} parent=0 // loop_footer_branch
    %8 = sbr.rel target = $region3
  $region8: #{w2vbert_forward.7} parent=0 // loop_exit
    _

// kernel: w2vbert_forward.8
$region0: #{w2vbert_forward.8}
  #allocation0 [shape = 'u32[]', space=smem, size = 0x4, offset = 0x4, fixed_abs, tag = 'smem constant byte address 0x4 - core index']
  #allocation1 [shape = 'u32[144,128]{1,0:T(1,128)}', space=vmem, size = 0x12000, scoped, tag = 'internal scratch']
  %s0 = inlined_call_operand.vmem [shape: f32[128,72], index: 0, kind: input, shape index: {}]
  %s1 = inlined_call_operand.vmem [shape: bf16[72,128], index: 1, kind: input, shape index: {}]
  %s2 = inlined_call_operand.vmem [shape: f32[1,128], index: 2, kind: input, shape index: {}]
  %s3 = inlined_call_operand.vmem [shape: f32[128,128], index: 3, kind: output, shape index: {}]
  %s4 = sld [smem:[#allocation0]]
  $region45: #{w2vbert_forward.8} parent=0
    _
  %s6 = ssub.s32 1, %s4
  %s7 = scalar_select 0, %s6, %s4
  loop: start=0, step=1, limit=4
  $region2: #{w2vbert_forward.8} parent=0 // loop_pre_header
    _
  $region3: #{w2vbert_forward.8} parent=0 // loop_header
    %s9 = sphi 0, %s13
    %p10 = scmp.ge.s32.totalorder %s9, 4
    %s19 = sphi 0, %s21
    %s22 = sphi 0, %s19
    %s23 = sphi 0, %s22
    %s39 = sphi 0, %s23
    %s43 = sphi 0, %s43
    %s45 = sphi 0, %s43
    %s46 = sphi 0, %s45
    %s60 = sphi 0, %s46
    %s64 = sphi 0, %s64
    %s66 = sphi 0, %s64
    %s67 = sphi 0, %s66
    %s81 = sphi 0, %s67
    %s87 = sphi 0, %s89
    %s90 = sphi 0, %s87
    %s91 = sphi 0, %s90
    %s107 = sphi 0, %s91
  $region4: #{w2vbert_forward.8} parent=0 // loop_header_branch
    %12 = sbr.rel (%p10) target = $region8
  $region5: #{w2vbert_forward.8} parent=0 // loop_body
    %s14 = ssub.s32 %s9, 1
    %s15 = ssub.s32 %s9, 2
    %s16 = sadd.s32 %s9, 1
    %s17 = ssub.s32 %s9, %s16
    %p18 = scmp.eq.s32.totalorder %s17, 0
    %s20 = sadd.s32 %s19, 1
    %s21 = scalar_select %p18, %s19, %s20
    %p24 = pneg %p18
    %p25 = scmp.eq.s32.totalorder %s9, 1
    %p26 = por %p24, %p25
    %p27 = scmp.ne.s32.totalorder %s19, %s22
    %p28 = scmp.eq.s32.totalorder %s9, 0
    %p29 = por %p27, %p28
    %p30 = scmp.ne.s32.totalorder %s19, %s22
    %p31 = scmp.eq.s32.totalorder %s14, 1
    %p32 = por %p30, %p31
    %p33 = scmp.ne.s32.totalorder %s22, %s23
    %p34 = scmp.eq.s32.totalorder %s14, 0
    %p35 = por %p33, %p34
    %p36 = scmp.ne.s32.totalorder %s22, %s23
    %p37 = scmp.eq.s32.totalorder %s15, 1
    %p38 = por %p36, %p37
    %p40 = scmp.ne.s32.totalorder %s23, %s39
    %p41 = scmp.eq.s32.totalorder %s15, 0
    %p42 = por %p40, %p41
    %s44 = sadd.s32 %s43, 1
    %p47 = scmp.eq.s32.totalorder %s9, 1
    %p48 = scmp.ne.s32.totalorder %s43, %s45
    %p49 = scmp.eq.s32.totalorder %s9, 0
    %p50 = por %p48, %p49
    %p51 = scmp.ne.s32.totalorder %s43, %s45
    %p52 = scmp.eq.s32.totalorder %s14, 1
    %p53 = por %p51, %p52
    %p54 = scmp.ne.s32.totalorder %s45, %s46
    %p55 = scmp.eq.s32.totalorder %s14, 0
    %p56 = por %p54, %p55
    %p57 = scmp.ne.s32.totalorder %s45, %s46
    %p58 = scmp.eq.s32.totalorder %s15, 1
    %p59 = por %p57, %p58
    %p61 = scmp.ne.s32.totalorder %s46, %s60
    %p62 = scmp.eq.s32.totalorder %s15, 0
    %p63 = por %p61, %p62
    %s65 = sadd.s32 %s64, 1
    %p68 = scmp.eq.s32.totalorder %s9, 1
    %p69 = scmp.ne.s32.totalorder %s64, %s66
    %p70 = scmp.eq.s32.totalorder %s9, 0
    %p71 = por %p69, %p70
    %p72 = scmp.ne.s32.totalorder %s64, %s66
    %p73 = scmp.eq.s32.totalorder %s14, 1
    %p74 = por %p72, %p73
    %p75 = scmp.ne.s32.totalorder %s66, %s67
    %p76 = scmp.eq.s32.totalorder %s14, 0
    %p77 = por %p75, %p76
    %p78 = scmp.ne.s32.totalorder %s66, %s67
    %p79 = scmp.eq.s32.totalorder %s15, 1
    %p80 = por %p78, %p79
    %p82 = scmp.ne.s32.totalorder %s67, %s81
    %p83 = scmp.eq.s32.totalorder %s15, 0
    %p84 = por %p82, %p83
    %s85 = ssub.s32 %s9, %s16
    %p86 = scmp.eq.s32.totalorder %s85, 0
    %s88 = sadd.s32 %s87, 1
    %s89 = scalar_select %p86, %s87, %s88
    %p92 = pneg %p86
    %p93 = scmp.eq.s32.totalorder %s9, 1
    %p94 = por %p92, %p93
    %p95 = scmp.ne.s32.totalorder %s87, %s90
    %p96 = scmp.eq.s32.totalorder %s9, 0
    %p97 = por %p95, %p96
    %p98 = scmp.ne.s32.totalorder %s87, %s90
    %p99 = scmp.eq.s32.totalorder %s14, 1
    %p100 = por %p98, %p99
    %p101 = scmp.ne.s32.totalorder %s90, %s91
    %p102 = scmp.eq.s32.totalorder %s14, 0
    %p103 = por %p101, %p102
    %p104 = scmp.ne.s32.totalorder %s90, %s91
    %p105 = scmp.eq.s32.totalorder %s15, 1
    %p106 = por %p104, %p105
    %p108 = scmp.ne.s32.totalorder %s91, %s107
    %p109 = scmp.eq.s32.totalorder %s15, 0
    %p110 = por %p108, %p109
    %p111 = scmp.le.s32.totalorder 1, %s9
    %p112 = scmp.lt.s32.totalorder %s9, 3
    %p113 = pnand %p111, %p112
    %p114 = pneg %p113
    // Predicated region
    $region9: #{w2vbert_forward.8} parent=5 // pred_check
      _
    $region10: #{w2vbert_forward.8} parent=5 // pred_check_branch
      %116 = sbr.rel (%p113) target = $region12
    $region11: #{w2vbert_forward.8} parent=5 // pred_region
      %s117 = ssub.s32 %s9, 1
      // Predicated region
      $region13: #{w2vbert_forward.8} parent=11 // pred_check
        %p118 = pneg %p56
      $region14: #{w2vbert_forward.8} parent=11 // pred_check_branch
        %120 = sbr.rel (%p118) target = $region16
      $region15: #{w2vbert_forward.8} parent=11 // pred_region
        _
      $region16: #{w2vbert_forward.8} parent=11 // pred_fallthru
        _
      // Predicated region
      $region17: #{w2vbert_forward.8} parent=11 // pred_check
        %p121 = pneg %p77
      $region18: #{w2vbert_forward.8} parent=11 // pred_check_branch
        %123 = sbr.rel (%p121) target = $region20
      $region19: #{w2vbert_forward.8} parent=11 // pred_region
        _
      $region20: #{w2vbert_forward.8} parent=11 // pred_fallthru
        _
    $region12: #{w2vbert_forward.8} parent=5 // pred_fallthru
      _
    %p124 = scmp.lt.s32.totalorder %s9, 2
    // Predicated region
    $region21: #{w2vbert_forward.8} parent=5 // pred_check
      %p125 = pneg %p124
    $region22: #{w2vbert_forward.8} parent=5 // pred_check_branch
      %127 = sbr.rel (%p125) target = $region24
    $region23: #{w2vbert_forward.8} parent=5 // pred_region
      // Predicated region
      $region25: #{w2vbert_forward.8} parent=23 // pred_check
        %p128 = pneg %p29
      $region26: #{w2vbert_forward.8} parent=23 // pred_check_branch
        %130 = sbr.rel (%p128) target = $region28
      $region27: #{w2vbert_forward.8} parent=23 // pred_region
        %s131 = smul.u32 8, %s9
        %p132 = scmp.lt.s32.totalorder %s131, 15
        %s133 = scalar_select %p132, %s131, 15
        %s134 = smul.addr %s133, 8
        %s135 = scalar_lea.vmem %s0, %s134
        %s136 = smul.u32 8, %s9
      $region28: #{w2vbert_forward.8} parent=23 // pred_fallthru
        _
    $region24: #{w2vbert_forward.8} parent=5 // pred_fallthru
      _
    %p137 = scmp.le.s32.totalorder 1, %s9
    %p138 = scmp.lt.s32.totalorder %s9, 3
    %p139 = pnand %p137, %p138
    %p140 = pneg %p139
    // Predicated region
    $region29: #{w2vbert_forward.8} parent=5 // pred_check
      _
    $region30: #{w2vbert_forward.8} parent=5 // pred_check_branch
      %142 = sbr.rel (%p139) target = $region32
    $region31: #{w2vbert_forward.8} parent=5 // pred_region
      %s143 = ssub.s32 %s9, 1
      %s144 = smul.u32 8, %s14
      %p145 = scmp.lt.s32.totalorder %s144, 15
      %s146 = scalar_select %p145, %s144, 15
      %s147 = smul.addr %s146, 8
      %s148 = scalar_lea.vmem %s0, %s147
      %p149 = pneg %p35
      %p150 = pneg %p32
      %p151 = pneg %p56
      %p152 = pneg %p53
      %p153 = pneg %p77
      %p154 = pneg %p74
      %p155 = pneg %p103
      %p156 = pneg %p100
      %s157 = smul.u32 8, %s14
      %p158 = scmp.lt.s32.totalorder %s157, 15
      %s159 = scalar_select %p158, %s157, 15
      %s160 = smul.addr %s159, 8
      %s161 = scalar_lea.vmem %s3, %s160
      %s162 = smul.u32 8, %s14
      %p163 = scmp.lt.s32.totalorder %s162, 15
      %s164 = scalar_select %p163, %s162, 15
      %s165 = smul.addr %s164, 8
      %s166 = scalar_lea.vmem %s0, %s165
      %s167 = smul.u32 8, %s14
      %s168 = smul.u32 8, %s14
      %p169 = scmp.lt.s32.totalorder %s168, 15
      %s170 = scalar_select %p169, %s168, 15
      %s171 = smul.addr %s170, 8
      %s172 = scalar_lea.vmem %s3, %s171
      %s173 = smul.u32 8, %s14
      %v175 = vld [vmem:[%s166] sm:$0xff]
      %v176 = vld [vmem:[%s166 + $0x8] sm:$0xff]
      %v177 = vld [vmem:[%s166 + $0x10] sm:$0xff]
      %v178 = vld [vmem:[%s166 + $0x18] sm:$0xff]
      %v179 = vld [vmem:[%s166 + $0x20] sm:$0xff]
      %v180 = vld [vmem:[%s166 + $0x28] sm:$0xff]
      %v181 = vld [vmem:[%s166 + $0x30] sm:$0xff]
      %v182 = vld [vmem:[%s166 + $0x38] sm:$0xff]
      %v183 = vpack.c.bf16 %v176, %v175
      %v184 = vpack.c.bf16 %v178, %v177
      %v185 = vpack.c.bf16 %v180, %v179
      %v186 = vpack.c.bf16 %v182, %v181
      %v187 = vld [vmem:[%s1] sm:$0xf]
      %v188 = vld [vmem:[%s1 + $0x4] sm:$0xf]
      %v189 = vld [vmem:[%s1 + $0x8] sm:$0xf]
      %v190 = vld [vmem:[%s1 + $0xc] sm:$0xf]
      %v191 = vld [vmem:[%s1 + $0x10] sm:$0xf]
      %v192 = vld [vmem:[%s1 + $0x14] sm:$0xf]
      %v193 = vld [vmem:[%s1 + $0x18] sm:$0xf]
      %v194 = vld [vmem:[%s1 + $0x1c] sm:$0xf]
      %v195 = vld [vmem:[%s1 + $0x20] sm:$0xf]
      %v196 = vld [vmem:[%s2] sm:$0x1]
      %v198 = vlaneseq
      %v199 = vshrl.u32 %v198, 7
      %v200 = vsub.s32 0, %v199
      %v201 = vrot.slane %v196, %v200
      %v212 = vunpack.c.l.b16 %v187
      %v213 = vunpack.c.l.b16 %v188
      %v214 = vunpack.c.l.b16 %v189
      %v215 = vunpack.c.l.b16 %v190
      %v216 = vunpack.c.l.b16 %v191
      %v217 = vunpack.c.l.b16 %v192
      %v218 = vunpack.c.l.b16 %v193
      %v219 = vunpack.c.l.b16 %v194
      %v220 = vunpack.c.l.b16 %v195
      %v221 = vpack.c.b16 %v213, %v212
      %v222 = vpack.c.b16 %v215, %v214
      %v223 = vpack.c.b16 %v217, %v216
      %v224 = vpack.c.b16 %v219, %v218
      %v225 = vpack.c.b16 %v220, %v220
      %vm230 = vcmask 588800
      %v232 = vsel %vm230, %v183, 0
      %v235 = vsel %vm230, %v184, 0
      %v238 = vsel %vm230, %v185, 0
      %v241 = vsel %vm230, %v186, 0
      %vm243 = vcmask 1043456
      %v245 = vsel %vm243, %v225, 0
      %247 = vmatprep.subr.bf16.mxu0 0
      %248 = vmatpush1.bf16.msra.mxu0 0
      %249 = vmatprep.subr.bf16.mxu0 0
      %250 = vmatpush1.bf16.msra.mxu0 0
      %251 = vmatprep.subr.bf16.mxu0 0
      %252 = vmatpush1.bf16.msra.mxu0 0
      %253 = vmatprep.subr.bf16.mxu0 0
      %254 = vmatpush1.bf16.msra.mxu0 %v245
      %255 = vmatprep.subr.bf16.mxu0 0
      %256 = vmatpush1.bf16.msra.mxu0 %v224
      %257 = vmatprep.subr.bf16.mxu0 0
      %258 = vmatpush1.bf16.msra.mxu0 %v223
      %259 = vmatprep.subr.bf16.mxu0 0
      %260 = vmatpush1.bf16.msra.mxu0 %v222
      %261 = vmatprep.subr.bf16.mxu0 0
      %262 = vmatpush1.bf16.msra.mxu0 %v221
      %263 = vmatprep.subr.bf16.mxu0 0
      %264 = vmatpush2.bf16.msra.mxu0 0
      %265 = vmatprep.subr.bf16.mxu0 0
      %266 = vmatpush2.bf16.msra.mxu0 0
      %267 = vmatprep.subr.bf16.mxu0 0
      %268 = vmatpush2.bf16.msra.mxu0 0
      %269 = vmatprep.subr.bf16.mxu0 0
      %270 = vmatpush2.bf16.msra.mxu0 0
      %271 = vmatprep.subr.bf16.mxu0 0
      %272 = vmatpush2.bf16.msra.mxu0 0
      %273 = vmatprep.subr.bf16.mxu0 0
      %274 = vmatpush2.bf16.msra.mxu0 0
      %275 = vmatprep.subr.bf16.mxu0 0
      %276 = vmatpush2.bf16.msra.mxu0 0
      %277 = vmatprep.subr.bf16.mxu0 0
      %278 = vmatpush2.bf16.msra.mxu0 0
      %279 = vmatprep.mubr.bf16.mxu0 0
      %280 = vmatmul.mubr.bf16.gmra.mxu0 %v232
      %v281 = vpop.f32.mrf.mxu0
      %v282 = vadd.f32 %v201, %v281
      %v283 = vpop.f32.mrf.mxu0
      %v284 = vpop.f32.mrf.mxu0
      %v285 = vadd.f32 %v201, %v284
      %v286 = vpop.f32.mrf.mxu0
      %287 = vmatprep.mubr.bf16.mxu0 0
      %288 = vmatmul.mubr.bf16.gmra.mxu0 %v235
      %v289 = vpop.f32.mrf.mxu0
      %v290 = vadd.f32 %v201, %v289
      %v291 = vpop.f32.mrf.mxu0
      %v292 = vpop.f32.mrf.mxu0
      %v293 = vadd.f32 %v201, %v292
      %v294 = vpop.f32.mrf.mxu0
      %295 = vmatprep.mubr.bf16.mxu0 0
      %296 = vmatmul.mubr.bf16.gmra.mxu0 %v238
      %v297 = vpop.f32.mrf.mxu0
      %v298 = vadd.f32 %v201, %v297
      %v299 = vpop.f32.mrf.mxu0
      %v300 = vpop.f32.mrf.mxu0
      %v301 = vadd.f32 %v201, %v300
      %v302 = vpop.f32.mrf.mxu0
      %303 = vmatprep.mubr.bf16.mxu0 0
      %304 = vmatmul.mubr.bf16.gmra.mxu0 %v241
      %v305 = vpop.f32.mrf.mxu0
      %v306 = vadd.f32 %v201, %v305
      %v307 = vpop.f32.mrf.mxu0
      %v308 = vpop.f32.mrf.mxu0
      %v309 = vadd.f32 %v201, %v308
      %v310 = vpop.f32.mrf.mxu0
      %311 = vdwg.mxu0
      %v312 = vmax.f32 %v282, 0.0
      %v313 = vmax.f32 %v285, 0.0
      %v314 = vmax.f32 %v290, 0.0
      %v315 = vmax.f32 %v293, 0.0
      %v316 = vmax.f32 %v298, 0.0
      %v317 = vmax.f32 %v301, 0.0
      %v318 = vmax.f32 %v306, 0.0
      %v319 = vmax.f32 %v309, 0.0
      %320 = vst [vmem:[%s172] sm:$0xff] %v312
      %321 = vst [vmem:[%s172 + $0x8] sm:$0xff] %v313
      %322 = vst [vmem:[%s172 + $0x10] sm:$0xff] %v314
      %323 = vst [vmem:[%s172 + $0x18] sm:$0xff] %v315
      %324 = vst [vmem:[%s172 + $0x20] sm:$0xff] %v316
      %325 = vst [vmem:[%s172 + $0x28] sm:$0xff] %v317
      %326 = vst [vmem:[%s172 + $0x30] sm:$0xff] %v318
      %327 = vst [vmem:[%s172 + $0x38] sm:$0xff] %v319
      %s328 = smul.u32 8, %s14
      %p329 = scmp.lt.s32.totalorder %s328, 15
      %s330 = scalar_select %p329, %s328, 15
      %s331 = smul.addr %s330, 8
      %s332 = scalar_lea.vmem %s3, %s331
      // Predicated region
      $region33: #{w2vbert_forward.8} parent=31 // pred_check
        %p333 = pneg %p100
      $region34: #{w2vbert_forward.8} parent=31 // pred_check_branch
        %335 = sbr.rel (%p333) target = $region36
      $region35: #{w2vbert_forward.8} parent=31 // pred_region
        %s336 = smul.u32 8, %s14
      $region36: #{w2vbert_forward.8} parent=31 // pred_fallthru
        _
    $region32: #{w2vbert_forward.8} parent=5 // pred_fallthru
      _
    %p337 = scmp.le.s32.totalorder 2, %s9
    // Predicated region
    $region37: #{w2vbert_forward.8} parent=5 // pred_check
      %p338 = pneg %p337
    $region38: #{w2vbert_forward.8} parent=5 // pred_check_branch
      %340 = sbr.rel (%p338) target = $region40
    $region39: #{w2vbert_forward.8} parent=5 // pred_region
      %s341 = ssub.s32 %s9, 2
      // Predicated region
      $region41: #{w2vbert_forward.8} parent=39 // pred_check
        %p342 = pneg %p106
      $region42: #{w2vbert_forward.8} parent=39 // pred_check_branch
        %344 = sbr.rel (%p342) target = $region44
      $region43: #{w2vbert_forward.8} parent=39 // pred_region
        %s345 = smul.u32 8, %s15
        %p346 = scmp.lt.s32.totalorder %s345, 15
        %s347 = scalar_select %p346, %s345, 15
        %s348 = smul.addr %s347, 8
        %s349 = scalar_lea.vmem %s3, %s348
      $region44: #{w2vbert_forward.8} parent=39 // pred_fallthru
        _
    $region40: #{w2vbert_forward.8} parent=5 // pred_fallthru
      _
  $region6: #{w2vbert_forward.8} parent=0 // loop_footer
    %s13 = sadd.s32 1, %s9
  $region7: #{w2vbert_forward.8} parent=0 // loop_footer_branch
    %8 = sbr.rel target = $region3
  $region8: #{w2vbert_forward.8} parent=0 // loop_exit
    _

// kernel: w2vbert_forward.9
$region0: #{w2vbert_forward.9}
  #allocation0 [shape = 'u32[]', space=smem, size = 0x4, offset = 0x4, fixed_abs, tag = 'smem constant byte address 0x4 - core index']
  #allocation1 [shape = 'u32[144,128]{1,0:T(1,128)}', space=vmem, size = 0x12000, scoped, tag = 'internal scratch']
  %s0 = inlined_call_operand.vmem [shape: f32[16,64], index: 0, kind: input, shape index: {}]
  %s1 = inlined_call_operand.vmem [shape: bf16[64,128], index: 1, kind: input, shape index: {}]
  %s2 = inlined_call_operand.vmem [shape: f32[1,128], index: 2, kind: input, shape index: {}]
  %s3 = inlined_call_operand.vmem [shape: f32[16,128], index: 3, kind: output, shape index: {}]
  %s4 = sld [smem:[#allocation0]]
  $region45: #{w2vbert_forward.9} parent=0
    _
  %s6 = ssub.s32 1, %s4
  %s7 = scalar_select 0, %s6, %s4
  loop: start=0, step=1, limit=4
  $region2: #{w2vbert_forward.9} parent=0 // loop_pre_header
    _
  $region3: #{w2vbert_forward.9} parent=0 // loop_header
    %s9 = sphi 0, %s13
    %p10 = scmp.ge.s32.totalorder %s9, 4
    %s19 = sphi 0, %s21
    %s22 = sphi 0, %s19
    %s23 = sphi 0, %s22
    %s39 = sphi 0, %s23
    %s43 = sphi 0, %s43
    %s45 = sphi 0, %s43
    %s46 = sphi 0, %s45
    %s60 = sphi 0, %s46
    %s64 = sphi 0, %s64
    %s66 = sphi 0, %s64
    %s67 = sphi 0, %s66
    %s81 = sphi 0, %s67
    %s87 = sphi 0, %s89
    %s90 = sphi 0, %s87
    %s91 = sphi 0, %s90
    %s107 = sphi 0, %s91
  $region4: #{w2vbert_forward.9} parent=0 // loop_header_branch
    %12 = sbr.rel (%p10) target = $region8
  $region5: #{w2vbert_forward.9} parent=0 // loop_body
    %s14 = ssub.s32 %s9, 1
    %s15 = ssub.s32 %s9, 2
    %s16 = sadd.s32 %s9, 1
    %s17 = ssub.s32 %s9, %s16
    %p18 = scmp.eq.s32.totalorder %s17, 0
    %s20 = sadd.s32 %s19, 1
    %s21 = scalar_select %p18, %s19, %s20
    %p24 = pneg %p18
    %p25 = scmp.eq.s32.totalorder %s9, 1
    %p26 = por %p24, %p25
    %p27 = scmp.ne.s32.totalorder %s19, %s22
    %p28 = scmp.eq.s32.totalorder %s9, 0
    %p29 = por %p27, %p28
    %p30 = scmp.ne.s32.totalorder %s19, %s22
    %p31 = scmp.eq.s32.totalorder %s14, 1
    %p32 = por %p30, %p31
    %p33 = scmp.ne.s32.totalorder %s22, %s23
    %p34 = scmp.eq.s32.totalorder %s14, 0
    %p35 = por %p33, %p34
    %p36 = scmp.ne.s32.totalorder %s22, %s23
    %p37 = scmp.eq.s32.totalorder %s15, 1
    %p38 = por %p36, %p37
    %p40 = scmp.ne.s32.totalorder %s23, %s39
    %p41 = scmp.eq.s32.totalorder %s15, 0
    %p42 = por %p40, %p41
    %s44 = sadd.s32 %s43, 1
    %p47 = scmp.eq.s32.totalorder %s9, 1
    %p48 = scmp.ne.s32.totalorder %s43, %s45
    %p49 = scmp.eq.s32.totalorder %s9, 0
    %p50 = por %p48, %p49
    %p51 = scmp.ne.s32.totalorder %s43, %s45
    %p52 = scmp.eq.s32.totalorder %s14, 1
    %p53 = por %p51, %p52
    %p54 = scmp.ne.s32.totalorder %s45, %s46
    %p55 = scmp.eq.s32.totalorder %s14, 0
    %p56 = por %p54, %p55
    %p57 = scmp.ne.s32.totalorder %s45, %s46
    %p58 = scmp.eq.s32.totalorder %s15, 1
    %p59 = por %p57, %p58
    %p61 = scmp.ne.s32.totalorder %s46, %s60
    %p62 = scmp.eq.s32.totalorder %s15, 0
    %p63 = por %p61, %p62
    %s65 = sadd.s32 %s64, 1
    %p68 = scmp.eq.s32.totalorder %s9, 1
    %p69 = scmp.ne.s32.totalorder %s64, %s66
    %p70 = scmp.eq.s32.totalorder %s9, 0
    %p71 = por %p69, %p70
    %p72 = scmp.ne.s32.totalorder %s64, %s66
    %p73 = scmp.eq.s32.totalorder %s14, 1
    %p74 = por %p72, %p73
    %p75 = scmp.ne.s32.totalorder %s66, %s67
    %p76 = scmp.eq.s32.totalorder %s14, 0
    %p77 = por %p75, %p76
    %p78 = scmp.ne.s32.totalorder %s66, %s67
    %p79 = scmp.eq.s32.totalorder %s15, 1
    %p80 = por %p78, %p79
    %p82 = scmp.ne.s32.totalorder %s67, %s81
    %p83 = scmp.eq.s32.totalorder %s15, 0
    %p84 = por %p82, %p83
    %s85 = ssub.s32 %s9, %s16
    %p86 = scmp.eq.s32.totalorder %s85, 0
    %s88 = sadd.s32 %s87, 1
    %s89 = scalar_select %p86, %s87, %s88
    %p92 = pneg %p86
    %p93 = scmp.eq.s32.totalorder %s9, 1
    %p94 = por %p92, %p93
    %p95 = scmp.ne.s32.totalorder %s87, %s90
    %p96 = scmp.eq.s32.totalorder %s9, 0
    %p97 = por %p95, %p96
    %p98 = scmp.ne.s32.totalorder %s87, %s90
    %p99 = scmp.eq.s32.totalorder %s14, 1
    %p100 = por %p98, %p99
    %p101 = scmp.ne.s32.totalorder %s90, %s91
    %p102 = scmp.eq.s32.totalorder %s14, 0
    %p103 = por %p101, %p102
    %p104 = scmp.ne.s32.totalorder %s90, %s91
    %p105 = scmp.eq.s32.totalorder %s15, 1
    %p106 = por %p104, %p105
    %p108 = scmp.ne.s32.totalorder %s91, %s107
    %p109 = scmp.eq.s32.totalorder %s15, 0
    %p110 = por %p108, %p109
    %p111 = scmp.le.s32.totalorder 1, %s9
    %p112 = scmp.lt.s32.totalorder %s9, 3
    %p113 = pnand %p111, %p112
    %p114 = pneg %p113
    // Predicated region
    $region9: #{w2vbert_forward.9} parent=5 // pred_check
      _
    $region10: #{w2vbert_forward.9} parent=5 // pred_check_branch
      %116 = sbr.rel (%p113) target = $region12
    $region11: #{w2vbert_forward.9} parent=5 // pred_region
      %s117 = ssub.s32 %s9, 1
      // Predicated region
      $region13: #{w2vbert_forward.9} parent=11 // pred_check
        %p118 = pneg %p56
      $region14: #{w2vbert_forward.9} parent=11 // pred_check_branch
        %120 = sbr.rel (%p118) target = $region16
      $region15: #{w2vbert_forward.9} parent=11 // pred_region
        _
      $region16: #{w2vbert_forward.9} parent=11 // pred_fallthru
        _
      // Predicated region
      $region17: #{w2vbert_forward.9} parent=11 // pred_check
        %p121 = pneg %p77
      $region18: #{w2vbert_forward.9} parent=11 // pred_check_branch
        %123 = sbr.rel (%p121) target = $region20
      $region19: #{w2vbert_forward.9} parent=11 // pred_region
        _
      $region20: #{w2vbert_forward.9} parent=11 // pred_fallthru
        _
    $region12: #{w2vbert_forward.9} parent=5 // pred_fallthru
      _
    %p124 = scmp.lt.s32.totalorder %s9, 2
    // Predicated region
    $region21: #{w2vbert_forward.9} parent=5 // pred_check
      %p125 = pneg %p124
    $region22: #{w2vbert_forward.9} parent=5 // pred_check_branch
      %127 = sbr.rel (%p125) target = $region24
    $region23: #{w2vbert_forward.9} parent=5 // pred_region
      // Predicated region
      $region25: #{w2vbert_forward.9} parent=23 // pred_check
        %p128 = pneg %p29
      $region26: #{w2vbert_forward.9} parent=23 // pred_check_branch
        %130 = sbr.rel (%p128) target = $region28
      $region27: #{w2vbert_forward.9} parent=23 // pred_region
        %p131 = scmp.lt.s32.totalorder %s9, 1
        %s132 = scalar_select %p131, %s9, 1
        %s133 = smul.addr %s132, 8
        %s134 = scalar_lea.vmem %s0, %s133
      $region28: #{w2vbert_forward.9} parent=23 // pred_fallthru
        _
    $region24: #{w2vbert_forward.9} parent=5 // pred_fallthru
      _
    %p135 = scmp.le.s32.totalorder 1, %s9
    %p136 = scmp.lt.s32.totalorder %s9, 3
    %p137 = pnand %p135, %p136
    %p138 = pneg %p137
    // Predicated region
    $region29: #{w2vbert_forward.9} parent=5 // pred_check
      _
    $region30: #{w2vbert_forward.9} parent=5 // pred_check_branch
      %140 = sbr.rel (%p137) target = $region32
    $region31: #{w2vbert_forward.9} parent=5 // pred_region
      %s141 = ssub.s32 %s9, 1
      %p142 = scmp.lt.s32.totalorder %s14, 1
      %s143 = scalar_select %p142, %s14, 1
      %s144 = smul.addr %s143, 8
      %s145 = scalar_lea.vmem %s0, %s144
      %p146 = pneg %p35
      %p147 = pneg %p32
      %p148 = pneg %p56
      %p149 = pneg %p53
      %p150 = pneg %p77
      %p151 = pneg %p74
      %p152 = pneg %p103
      %p153 = pneg %p100
      %p154 = scmp.lt.s32.totalorder %s14, 1
      %s155 = scalar_select %p154, %s14, 1
      %s156 = smul.addr %s155, 8
      %s157 = scalar_lea.vmem %s3, %s156
      %p158 = scmp.lt.s32.totalorder %s14, 1
      %s159 = scalar_select %p158, %s14, 1
      %s160 = smul.addr %s159, 8
      %s161 = scalar_lea.vmem %s0, %s160
      %p162 = scmp.lt.s32.totalorder %s14, 1
      %s163 = scalar_select %p162, %s14, 1
      %s164 = smul.addr %s163, 8
      %s165 = scalar_lea.vmem %s3, %s164
      %v167 = vld [vmem:[%s161] sm:$0xff]
      %v168 = vpack.c.bf16 %v167, %v167
      %v169 = vld [vmem:[%s1] sm:$0xf]
      %v170 = vld [vmem:[%s1 + $0x4] sm:$0xf]
      %v171 = vld [vmem:[%s1 + $0x8] sm:$0xf]
      %v172 = vld [vmem:[%s1 + $0xc] sm:$0xf]
      %v173 = vld [vmem:[%s1 + $0x10] sm:$0xf]
      %v174 = vld [vmem:[%s1 + $0x14] sm:$0xf]
      %v175 = vld [vmem:[%s1 + $0x18] sm:$0xf]
      %v176 = vld [vmem:[%s1 + $0x1c] sm:$0xf]
      %v177 = vld [vmem:[%s2] sm:$0x1]
      %v179 = vlaneseq
      %v180 = vshrl.u32 %v179, 7
      %v181 = vsub.s32 0, %v180
      %v182 = vrot.slane %v177, %v181
      %v192 = vunpack.c.l.b16 %v169
      %v193 = vunpack.c.l.b16 %v170
      %v194 = vunpack.c.l.b16 %v171
      %v195 = vunpack.c.l.b16 %v172
      %v196 = vunpack.c.l.b16 %v173
      %v197 = vunpack.c.l.b16 %v174
      %v198 = vunpack.c.l.b16 %v175
      %v199 = vunpack.c.l.b16 %v176
      %v200 = vpack.c.b16 %v193, %v192
      %v201 = vpack.c.b16 %v195, %v194
      %v202 = vpack.c.b16 %v197, %v196
      %v203 = vpack.c.b16 %v199, %v198
      %vm208 = vcmask 523264
      %v210 = vsel %vm208, %v168, 0
      %212 = vmatprep.subr.bf16.mxu0 0
      %213 = vmatpush1.bf16.msra.mxu0 0
      %214 = vmatprep.subr.bf16.mxu0 0
      %215 = vmatpush1.bf16.msra.mxu0 0
      %216 = vmatprep.subr.bf16.mxu0 0
      %217 = vmatpush1.bf16.msra.mxu0 0
      %218 = vmatprep.subr.bf16.mxu0 0
      %219 = vmatpush1.bf16.msra.mxu0 0
      %220 = vmatprep.subr.bf16.mxu0 0
      %221 = vmatpush1.bf16.msra.mxu0 %v203
      %222 = vmatprep.subr.bf16.mxu0 0
      %223 = vmatpush1.bf16.msra.mxu0 %v202
      %224 = vmatprep.subr.bf16.mxu0 0
      %225 = vmatpush1.bf16.msra.mxu0 %v201
      %226 = vmatprep.subr.bf16.mxu0 0
      %227 = vmatpush1.bf16.msra.mxu0 %v200
      %228 = vmatprep.subr.bf16.mxu0 0
      %229 = vmatpush2.bf16.msra.mxu0 0
      %230 = vmatprep.subr.bf16.mxu0 0
      %231 = vmatpush2.bf16.msra.mxu0 0
      %232 = vmatprep.subr.bf16.mxu0 0
      %233 = vmatpush2.bf16.msra.mxu0 0
      %234 = vmatprep.subr.bf16.mxu0 0
      %235 = vmatpush2.bf16.msra.mxu0 0
      %236 = vmatprep.subr.bf16.mxu0 0
      %237 = vmatpush2.bf16.msra.mxu0 0
      %238 = vmatprep.subr.bf16.mxu0 0
      %239 = vmatpush2.bf16.msra.mxu0 0
      %240 = vmatprep.subr.bf16.mxu0 0
      %241 = vmatpush2.bf16.msra.mxu0 0
      %242 = vmatprep.subr.bf16.mxu0 0
      %243 = vmatpush2.bf16.msra.mxu0 0
      %244 = vmatprep.mubr.bf16.mxu0 0
      %245 = vmatmul.mubr.bf16.gmra.mxu0 %v210
      %v246 = vpop.f32.mrf.mxu0
      %v247 = vadd.f32 %v182, %v246
      %v248 = vpop.f32.mrf.mxu0
      %v249 = vpop.f32.mrf.mxu0
      %v250 = vpop.f32.mrf.mxu0
      %251 = vdwg.mxu0
      %252 = vst [vmem:[%s165] sm:$0xff] %v247
      %p253 = scmp.lt.s32.totalorder %s14, 1
      %s254 = scalar_select %p253, %s14, 1
      %s255 = smul.addr %s254, 8
      %s256 = scalar_lea.vmem %s3, %s255
      // Predicated region
      $region33: #{w2vbert_forward.9} parent=31 // pred_check
        %p257 = pneg %p100
      $region34: #{w2vbert_forward.9} parent=31 // pred_check_branch
        %259 = sbr.rel (%p257) target = $region36
      $region35: #{w2vbert_forward.9} parent=31 // pred_region
        _
      $region36: #{w2vbert_forward.9} parent=31 // pred_fallthru
        _
    $region32: #{w2vbert_forward.9} parent=5 // pred_fallthru
      _
    %p260 = scmp.le.s32.totalorder 2, %s9
    // Predicated region
    $region37: #{w2vbert_forward.9} parent=5 // pred_check
      %p261 = pneg %p260
    $region38: #{w2vbert_forward.9} parent=5 // pred_check_branch
      %263 = sbr.rel (%p261) target = $region40
    $region39: #{w2vbert_forward.9} parent=5 // pred_region
      %s264 = ssub.s32 %s9, 2
      // Predicated region
      $region41: #{w2vbert_forward.9} parent=39 // pred_check
        %p265 = pneg %p106
      $region42: #{w2vbert_forward.9} parent=39 // pred_check_branch
        %267 = sbr.rel (%p265) target = $region44
      $region43: #{w2vbert_forward.9} parent=39 // pred_region
        %p268 = scmp.lt.s32.totalorder %s15, 1
        %s269 = scalar_select %p268, %s15, 1
        %s270 = smul.addr %s269, 8
        %s271 = scalar_lea.vmem %s3, %s270
      $region44: #{w2vbert_forward.9} parent=39 // pred_fallthru
        _
    $region40: #{w2vbert_forward.9} parent=5 // pred_fallthru
      _
  $region6: #{w2vbert_forward.9} parent=0 // loop_footer
    %s13 = sadd.s32 1, %s9
  $region7: #{w2vbert_forward.9} parent=0 // loop_footer_branch
    %8 = sbr.rel target = $region3
  $region8: #{w2vbert_forward.9} parent=0 // loop_exit
    _

// kernel: w2vbert_forward.11
$region0: #{w2vbert_forward.11}
  #allocation0 [shape = 'u32[]', space=smem, size = 0x4, offset = 0x4, fixed_abs, tag = 'smem constant byte address 0x4 - core index']
  #allocation1 [shape = 'u32[144,128]{1,0:T(1,128)}', space=vmem, size = 0x12000, scoped, tag = 'internal scratch']
  %s0 = inlined_call_operand.vmem [shape: bf16[2,8,256], index: 0, kind: input, shape index: {}]
  %s1 = inlined_call_operand.vmem [shape: f32[2,8,128], index: 1, kind: input, shape index: {}]
  %s2 = inlined_call_operand.vmem [shape: f32[2,1,256], index: 2, kind: input, shape index: {}]
  %s3 = inlined_call_operand.vmem [shape: f32[2,1,256], index: 3, kind: input, shape index: {}]
  %s4 = inlined_call_operand.vmem [shape: f32[1,256], index: 4, kind: input, shape index: {}]
  %s5 = inlined_call_operand.vmem [shape: f32[1,256], index: 5, kind: input, shape index: {}]
  %s6 = inlined_call_operand.vmem [shape: bf16[256,128], index: 6, kind: input, shape index: {}]
  %s7 = inlined_call_operand.vmem [shape: f32[1,128], index: 7, kind: input, shape index: {}]
  %s8 = inlined_call_operand.vmem [shape: f32[2,1,128], index: 8, kind: input, shape index: {}]
  %s9 = inlined_call_operand.vmem [shape: f32[2,1,128], index: 9, kind: input, shape index: {}]
  %s10 = inlined_call_operand.vmem [shape: bf16[128,256], index: 10, kind: input, shape index: {}]
  %s11 = inlined_call_operand.vmem [shape: f32[1,256], index: 11, kind: input, shape index: {}]
  %s12 = inlined_call_operand.vmem [shape: bf16[256,128], index: 12, kind: input, shape index: {}]
  %s13 = inlined_call_operand.vmem [shape: f32[1,128], index: 13, kind: input, shape index: {}]
  %s14 = inlined_call_operand.vmem [shape: f32[2,8,128], index: 14, kind: output, shape index: {}]
  %s15 = sld [smem:[#allocation0]]
  $region89: #{w2vbert_forward.11} parent=0
    _
  %s17 = ssub.s32 1, %s15
  %s18 = scalar_select 0, %s17, %s15
  loop: start=0, step=1, limit=4
  $region2: #{w2vbert_forward.11} parent=0 // loop_pre_header
    _
  $region3: #{w2vbert_forward.11} parent=0 // loop_header
    %s20 = sphi 0, %s24
    %p21 = scmp.ge.s32.totalorder %s20, 4
    %s30 = sphi 0, %s32
    %s33 = sphi 0, %s30
    %s34 = sphi 0, %s33
    %s50 = sphi 0, %s34
    %s56 = sphi 0, %s58
    %s59 = sphi 0, %s56
    %s60 = sphi 0, %s59
    %s76 = sphi 0, %s60
    %s80 = sphi 0, %s80
    %s82 = sphi 0, %s80
    %s83 = sphi 0, %s82
    %s97 = sphi 0, %s83
    %s101 = sphi 0, %s101
    %s103 = sphi 0, %s101
    %s104 = sphi 0, %s103
    %s118 = sphi 0, %s104
    %s122 = sphi 0, %s122
    %s124 = sphi 0, %s122
    %s125 = sphi 0, %s124
    %s139 = sphi 0, %s125
    %s143 = sphi 0, %s143
    %s145 = sphi 0, %s143
    %s146 = sphi 0, %s145
    %s160 = sphi 0, %s146
    %s164 = sphi 0, %s164
    %s166 = sphi 0, %s164
    %s167 = sphi 0, %s166
    %s181 = sphi 0, %s167
    %s185 = sphi 0, %s185
    %s187 = sphi 0, %s185
    %s188 = sphi 0, %s187
    %s202 = sphi 0, %s188
    %s206 = sphi 0, %s206
    %s208 = sphi 0, %s206
    %s209 = sphi 0, %s208
    %s223 = sphi 0, %s209
    %s227 = sphi 0, %s227
    %s229 = sphi 0, %s227
    %s230 = sphi 0, %s229
    %s244 = sphi 0, %s230
    %s248 = sphi 0, %s248
    %s250 = sphi 0, %s248
    %s251 = sphi 0, %s250
    %s265 = sphi 0, %s251
    %s269 = sphi 0, %s269
    %s271 = sphi 0, %s269
    %s272 = sphi 0, %s271
    %s286 = sphi 0, %s272
    %s290 = sphi 0, %s290
    %s292 = sphi 0, %s290
    %s293 = sphi 0, %s292
    %s307 = sphi 0, %s293
    %s311 = sphi 0, %s311
    %s313 = sphi 0, %s311
    %s314 = sphi 0, %s313
    %s328 = sphi 0, %s314
    %s334 = sphi 0, %s336
    %s337 = sphi 0, %s334
    %s338 = sphi 0, %s337
    %s354 = sphi 0, %s338
  $region4: #{w2vbert_forward.11} parent=0 // loop_header_branch
    %23 = sbr.rel (%p21) target = $region8
  $region5: #{w2vbert_forward.11} parent=0 // loop_body
    %s25 = ssub.s32 %s20, 1
    %s26 = ssub.s32 %s20, 2
    %s27 = sadd.s32 %s20, 1
    %s28 = ssub.s32 %s20, %s27
    %p29 = scmp.eq.s32.totalorder %s28, 0
    %s31 = sadd.s32 %s30, 1
    %s32 = scalar_select %p29, %s30, %s31
    %p35 = pneg %p29
    %p36 = scmp.eq.s32.totalorder %s20, 1
    %p37 = por %p35, %p36
    %p38 = scmp.ne.s32.totalorder %s30, %s33
    %p39 = scmp.eq.s32.totalorder %s20, 0
    %p40 = por %p38, %p39
    %p41 = scmp.ne.s32.totalorder %s30, %s33
    %p42 = scmp.eq.s32.totalorder %s25, 1
    %p43 = por %p41, %p42
    %p44 = scmp.ne.s32.totalorder %s33, %s34
    %p45 = scmp.eq.s32.totalorder %s25, 0
    %p46 = por %p44, %p45
    %p47 = scmp.ne.s32.totalorder %s33, %s34
    %p48 = scmp.eq.s32.totalorder %s26, 1
    %p49 = por %p47, %p48
    %p51 = scmp.ne.s32.totalorder %s34, %s50
    %p52 = scmp.eq.s32.totalorder %s26, 0
    %p53 = por %p51, %p52
    %s54 = ssub.s32 %s20, %s27
    %p55 = scmp.eq.s32.totalorder %s54, 0
    %s57 = sadd.s32 %s56, 1
    %s58 = scalar_select %p55, %s56, %s57
    %p61 = pneg %p55
    %p62 = scmp.eq.s32.totalorder %s20, 1
    %p63 = por %p61, %p62
    %p64 = scmp.ne.s32.totalorder %s56, %s59
    %p65 = scmp.eq.s32.totalorder %s20, 0
    %p66 = por %p64, %p65
    %p67 = scmp.ne.s32.totalorder %s56, %s59
    %p68 = scmp.eq.s32.totalorder %s25, 1
    %p69 = por %p67, %p68
    %p70 = scmp.ne.s32.totalorder %s59, %s60
    %p71 = scmp.eq.s32.totalorder %s25, 0
    %p72 = por %p70, %p71
    %p73 = scmp.ne.s32.totalorder %s59, %s60
    %p74 = scmp.eq.s32.totalorder %s26, 1
    %p75 = por %p73, %p74
    %p77 = scmp.ne.s32.totalorder %s60, %s76
    %p78 = scmp.eq.s32.totalorder %s26, 0
    %p79 = por %p77, %p78
    %s81 = sadd.s32 %s80, 1
    %p84 = scmp.eq.s32.totalorder %s20, 1
    %p85 = scmp.ne.s32.totalorder %s80, %s82
    %p86 = scmp.eq.s32.totalorder %s20, 0
    %p87 = por %p85, %p86
    %p88 = scmp.ne.s32.totalorder %s80, %s82
    %p89 = scmp.eq.s32.totalorder %s25, 1
    %p90 = por %p88, %p89
    %p91 = scmp.ne.s32.totalorder %s82, %s83
    %p92 = scmp.eq.s32.totalorder %s25, 0
    %p93 = por %p91, %p92
    %p94 = scmp.ne.s32.totalorder %s82, %s83
    %p95 = scmp.eq.s32.totalorder %s26, 1
    %p96 = por %p94, %p95
    %p98 = scmp.ne.s32.totalorder %s83, %s97
    %p99 = scmp.eq.s32.totalorder %s26, 0
    %p100 = por %p98, %p99
    %s102 = sadd.s32 %s101, 1
    %p105 = scmp.eq.s32.totalorder %s20, 1
    %p106 = scmp.ne.s32.totalorder %s101, %s103
    %p107 = scmp.eq.s32.totalorder %s20, 0
    %p108 = por %p106, %p107
    %p109 = scmp.ne.s32.totalorder %s101, %s103
    %p110 = scmp.eq.s32.totalorder %s25, 1
    %p111 = por %p109, %p110
    %p112 = scmp.ne.s32.totalorder %s103, %s104
    %p113 = scmp.eq.s32.totalorder %s25, 0
    %p114 = por %p112, %p113
    %p115 = scmp.ne.s32.totalorder %s103, %s104
    %p116 = scmp.eq.s32.totalorder %s26, 1
    %p117 = por %p115, %p116
    %p119 = scmp.ne.s32.totalorder %s104, %s118
    %p120 = scmp.eq.s32.totalorder %s26, 0
    %p121 = por %p119, %p120
    %s123 = sadd.s32 %s122, 1
    %p126 = scmp.eq.s32.totalorder %s20, 1
    %p127 = scmp.ne.s32.totalorder %s122, %s124
    %p128 = scmp.eq.s32.totalorder %s20, 0
    %p129 = por %p127, %p128
    %p130 = scmp.ne.s32.totalorder %s122, %s124
    %p131 = scmp.eq.s32.totalorder %s25, 1
    %p132 = por %p130, %p131
    %p133 = scmp.ne.s32.totalorder %s124, %s125
    %p134 = scmp.eq.s32.totalorder %s25, 0
    %p135 = por %p133, %p134
    %p136 = scmp.ne.s32.totalorder %s124, %s125
    %p137 = scmp.eq.s32.totalorder %s26, 1
    %p138 = por %p136, %p137
    %p140 = scmp.ne.s32.totalorder %s125, %s139
    %p141 = scmp.eq.s32.totalorder %s26, 0
    %p142 = por %p140, %p141
    %s144 = sadd.s32 %s143, 1
    %p147 = scmp.eq.s32.totalorder %s20, 1
    %p148 = scmp.ne.s32.totalorder %s143, %s145
    %p149 = scmp.eq.s32.totalorder %s20, 0
    %p150 = por %p148, %p149
    %p151 = scmp.ne.s32.totalorder %s143, %s145
    %p152 = scmp.eq.s32.totalorder %s25, 1
    %p153 = por %p151, %p152
    %p154 = scmp.ne.s32.totalorder %s145, %s146
    %p155 = scmp.eq.s32.totalorder %s25, 0
    %p156 = por %p154, %p155
    %p157 = scmp.ne.s32.totalorder %s145, %s146
    %p158 = scmp.eq.s32.totalorder %s26, 1
    %p159 = por %p157, %p158
    %p161 = scmp.ne.s32.totalorder %s146, %s160
    %p162 = scmp.eq.s32.totalorder %s26, 0
    %p163 = por %p161, %p162
    %s165 = sadd.s32 %s164, 1
    %p168 = scmp.eq.s32.totalorder %s20, 1
    %p169 = scmp.ne.s32.totalorder %s164, %s166
    %p170 = scmp.eq.s32.totalorder %s20, 0
    %p171 = por %p169, %p170
    %p172 = scmp.ne.s32.totalorder %s164, %s166
    %p173 = scmp.eq.s32.totalorder %s25, 1
    %p174 = por %p172, %p173
    %p175 = scmp.ne.s32.totalorder %s166, %s167
    %p176 = scmp.eq.s32.totalorder %s25, 0
    %p177 = por %p175, %p176
    %p178 = scmp.ne.s32.totalorder %s166, %s167
    %p179 = scmp.eq.s32.totalorder %s26, 1
    %p180 = por %p178, %p179
    %p182 = scmp.ne.s32.totalorder %s167, %s181
    %p183 = scmp.eq.s32.totalorder %s26, 0
    %p184 = por %p182, %p183
    %s186 = sadd.s32 %s185, 1
    %p189 = scmp.eq.s32.totalorder %s20, 1
    %p190 = scmp.ne.s32.totalorder %s185, %s187
    %p191 = scmp.eq.s32.totalorder %s20, 0
    %p192 = por %p190, %p191
    %p193 = scmp.ne.s32.totalorder %s185, %s187
    %p194 = scmp.eq.s32.totalorder %s25, 1
    %p195 = por %p193, %p194
    %p196 = scmp.ne.s32.totalorder %s187, %s188
    %p197 = scmp.eq.s32.totalorder %s25, 0
    %p198 = por %p196, %p197
    %p199 = scmp.ne.s32.totalorder %s187, %s188
    %p200 = scmp.eq.s32.totalorder %s26, 1
    %p201 = por %p199, %p200
    %p203 = scmp.ne.s32.totalorder %s188, %s202
    %p204 = scmp.eq.s32.totalorder %s26, 0
    %p205 = por %p203, %p204
    %s207 = sadd.s32 %s206, 1
    %p210 = scmp.eq.s32.totalorder %s20, 1
    %p211 = scmp.ne.s32.totalorder %s206, %s208
    %p212 = scmp.eq.s32.totalorder %s20, 0
    %p213 = por %p211, %p212
    %p214 = scmp.ne.s32.totalorder %s206, %s208
    %p215 = scmp.eq.s32.totalorder %s25, 1
    %p216 = por %p214, %p215
    %p217 = scmp.ne.s32.totalorder %s208, %s209
    %p218 = scmp.eq.s32.totalorder %s25, 0
    %p219 = por %p217, %p218
    %p220 = scmp.ne.s32.totalorder %s208, %s209
    %p221 = scmp.eq.s32.totalorder %s26, 1
    %p222 = por %p220, %p221
    %p224 = scmp.ne.s32.totalorder %s209, %s223
    %p225 = scmp.eq.s32.totalorder %s26, 0
    %p226 = por %p224, %p225
    %s228 = sadd.s32 %s227, 1
    %p231 = scmp.eq.s32.totalorder %s20, 1
    %p232 = scmp.ne.s32.totalorder %s227, %s229
    %p233 = scmp.eq.s32.totalorder %s20, 0
    %p234 = por %p232, %p233
    %p235 = scmp.ne.s32.totalorder %s227, %s229
    %p236 = scmp.eq.s32.totalorder %s25, 1
    %p237 = por %p235, %p236
    %p238 = scmp.ne.s32.totalorder %s229, %s230
    %p239 = scmp.eq.s32.totalorder %s25, 0
    %p240 = por %p238, %p239
    %p241 = scmp.ne.s32.totalorder %s229, %s230
    %p242 = scmp.eq.s32.totalorder %s26, 1
    %p243 = por %p241, %p242
    %p245 = scmp.ne.s32.totalorder %s230, %s244
    %p246 = scmp.eq.s32.totalorder %s26, 0
    %p247 = por %p245, %p246
    %s249 = sadd.s32 %s248, 1
    %p252 = scmp.eq.s32.totalorder %s20, 1
    %p253 = scmp.ne.s32.totalorder %s248, %s250
    %p254 = scmp.eq.s32.totalorder %s20, 0
    %p255 = por %p253, %p254
    %p256 = scmp.ne.s32.totalorder %s248, %s250
    %p257 = scmp.eq.s32.totalorder %s25, 1
    %p258 = por %p256, %p257
    %p259 = scmp.ne.s32.totalorder %s250, %s251
    %p260 = scmp.eq.s32.totalorder %s25, 0
    %p261 = por %p259, %p260
    %p262 = scmp.ne.s32.totalorder %s250, %s251
    %p263 = scmp.eq.s32.totalorder %s26, 1
    %p264 = por %p262, %p263
    %p266 = scmp.ne.s32.totalorder %s251, %s265
    %p267 = scmp.eq.s32.totalorder %s26, 0
    %p268 = por %p266, %p267
    %s270 = sadd.s32 %s269, 1
    %p273 = scmp.eq.s32.totalorder %s20, 1
    %p274 = scmp.ne.s32.totalorder %s269, %s271
    %p275 = scmp.eq.s32.totalorder %s20, 0
    %p276 = por %p274, %p275
    %p277 = scmp.ne.s32.totalorder %s269, %s271
    %p278 = scmp.eq.s32.totalorder %s25, 1
    %p279 = por %p277, %p278
    %p280 = scmp.ne.s32.totalorder %s271, %s272
    %p281 = scmp.eq.s32.totalorder %s25, 0
    %p282 = por %p280, %p281
    %p283 = scmp.ne.s32.totalorder %s271, %s272
    %p284 = scmp.eq.s32.totalorder %s26, 1
    %p285 = por %p283, %p284
    %p287 = scmp.ne.s32.totalorder %s272, %s286
    %p288 = scmp.eq.s32.totalorder %s26, 0
    %p289 = por %p287, %p288
    %s291 = sadd.s32 %s290, 1
    %p294 = scmp.eq.s32.totalorder %s20, 1
    %p295 = scmp.ne.s32.totalorder %s290, %s292
    %p296 = scmp.eq.s32.totalorder %s20, 0
    %p297 = por %p295, %p296
    %p298 = scmp.ne.s32.totalorder %s290, %s292
    %p299 = scmp.eq.s32.totalorder %s25, 1
    %p300 = por %p298, %p299
    %p301 = scmp.ne.s32.totalorder %s292, %s293
    %p302 = scmp.eq.s32.totalorder %s25, 0
    %p303 = por %p301, %p302
    %p304 = scmp.ne.s32.totalorder %s292, %s293
    %p305 = scmp.eq.s32.totalorder %s26, 1
    %p306 = por %p304, %p305
    %p308 = scmp.ne.s32.totalorder %s293, %s307
    %p309 = scmp.eq.s32.totalorder %s26, 0
    %p310 = por %p308, %p309
    %s312 = sadd.s32 %s311, 1
    %p315 = scmp.eq.s32.totalorder %s20, 1
    %p316 = scmp.ne.s32.totalorder %s311, %s313
    %p317 = scmp.eq.s32.totalorder %s20, 0
    %p318 = por %p316, %p317
    %p319 = scmp.ne.s32.totalorder %s311, %s313
    %p320 = scmp.eq.s32.totalorder %s25, 1
    %p321 = por %p319, %p320
    %p322 = scmp.ne.s32.totalorder %s313, %s314
    %p323 = scmp.eq.s32.totalorder %s25, 0
    %p324 = por %p322, %p323
    %p325 = scmp.ne.s32.totalorder %s313, %s314
    %p326 = scmp.eq.s32.totalorder %s26, 1
    %p327 = por %p325, %p326
    %p329 = scmp.ne.s32.totalorder %s314, %s328
    %p330 = scmp.eq.s32.totalorder %s26, 0
    %p331 = por %p329, %p330
    %s332 = ssub.s32 %s20, %s27
    %p333 = scmp.eq.s32.totalorder %s332, 0
    %s335 = sadd.s32 %s334, 1
    %s336 = scalar_select %p333, %s334, %s335
    %p339 = pneg %p333
    %p340 = scmp.eq.s32.totalorder %s20, 1
    %p341 = por %p339, %p340
    %p342 = scmp.ne.s32.totalorder %s334, %s337
    %p343 = scmp.eq.s32.totalorder %s20, 0
    %p344 = por %p342, %p343
    %p345 = scmp.ne.s32.totalorder %s334, %s337
    %p346 = scmp.eq.s32.totalorder %s25, 1
    %p347 = por %p345, %p346
    %p348 = scmp.ne.s32.totalorder %s337, %s338
    %p349 = scmp.eq.s32.totalorder %s25, 0
    %p350 = por %p348, %p349
    %p351 = scmp.ne.s32.totalorder %s337, %s338
    %p352 = scmp.eq.s32.totalorder %s26, 1
    %p353 = por %p351, %p352
    %p355 = scmp.ne.s32.totalorder %s338, %s354
    %p356 = scmp.eq.s32.totalorder %s26, 0
    %p357 = por %p355, %p356
    %p358 = scmp.le.s32.totalorder 1, %s20
    %p359 = scmp.lt.s32.totalorder %s20, 3
    %p360 = pnand %p358, %p359
    %p361 = pneg %p360
    // Predicated region
    $region9: #{w2vbert_forward.11} parent=5 // pred_check
      _
    $region10: #{w2vbert_forward.11} parent=5 // pred_check_branch
      %363 = sbr.rel (%p360) target = $region12
    $region11: #{w2vbert_forward.11} parent=5 // pred_region
      %s364 = ssub.s32 %s20, 1
      // Predicated region
      $region13: #{w2vbert_forward.11} parent=11 // pred_check
        %p365 = pneg %p93
      $region14: #{w2vbert_forward.11} parent=11 // pred_check_branch
        %367 = sbr.rel (%p365) target = $region16
      $region15: #{w2vbert_forward.11} parent=11 // pred_region
        _
      $region16: #{w2vbert_forward.11} parent=11 // pred_fallthru
        _
      // Predicated region
      $region17: #{w2vbert_forward.11} parent=11 // pred_check
        %p368 = pneg %p114
      $region18: #{w2vbert_forward.11} parent=11 // pred_check_branch
        %370 = sbr.rel (%p368) target = $region20
      $region19: #{w2vbert_forward.11} parent=11 // pred_region
        _
      $region20: #{w2vbert_forward.11} parent=11 // pred_fallthru
        _
      // Predicated region
      $region21: #{w2vbert_forward.11} parent=11 // pred_check
        %p371 = pneg %p135
      $region22: #{w2vbert_forward.11} parent=11 // pred_check_branch
        %373 = sbr.rel (%p371) target = $region24
      $region23: #{w2vbert_forward.11} parent=11 // pred_region
        _
      $region24: #{w2vbert_forward.11} parent=11 // pred_fallthru
        _
      // Predicated region
      $region25: #{w2vbert_forward.11} parent=11 // pred_check
        %p374 = pneg %p156
      $region26: #{w2vbert_forward.11} parent=11 // pred_check_branch
        %376 = sbr.rel (%p374) target = $region28
      $region27: #{w2vbert_forward.11} parent=11 // pred_region
        _
      $region28: #{w2vbert_forward.11} parent=11 // pred_fallthru
        _
      // Predicated region
      $region29: #{w2vbert_forward.11} parent=11 // pred_check
        %p377 = pneg %p177
      $region30: #{w2vbert_forward.11} parent=11 // pred_check_branch
        %379 = sbr.rel (%p377) target = $region32
      $region31: #{w2vbert_forward.11} parent=11 // pred_region
        _
      $region32: #{w2vbert_forward.11} parent=11 // pred_fallthru
        _
      // Predicated region
      $region33: #{w2vbert_forward.11} parent=11 // pred_check
        %p380 = pneg %p198
      $region34: #{w2vbert_forward.11} parent=11 // pred_check_branch
        %382 = sbr.rel (%p380) target = $region36
      $region35: #{w2vbert_forward.11} parent=11 // pred_region
        _
      $region36: #{w2vbert_forward.11} parent=11 // pred_fallthru
        _
      // Predicated region
      $region37: #{w2vbert_forward.11} parent=11 // pred_check
        %p383 = pneg %p219
      $region38: #{w2vbert_forward.11} parent=11 // pred_check_branch
        %385 = sbr.rel (%p383) target = $region40
      $region39: #{w2vbert_forward.11} parent=11 // pred_region
        _
      $region40: #{w2vbert_forward.11} parent=11 // pred_fallthru
        _
      // Predicated region
      $region41: #{w2vbert_forward.11} parent=11 // pred_check
        %p386 = pneg %p240
      $region42: #{w2vbert_forward.11} parent=11 // pred_check_branch
        %388 = sbr.rel (%p386) target = $region44
      $region43: #{w2vbert_forward.11} parent=11 // pred_region
        _
      $region44: #{w2vbert_forward.11} parent=11 // pred_fallthru
        _
      // Predicated region
      $region45: #{w2vbert_forward.11} parent=11 // pred_check
        %p389 = pneg %p261
      $region46: #{w2vbert_forward.11} parent=11 // pred_check_branch
        %391 = sbr.rel (%p389) target = $region48
      $region47: #{w2vbert_forward.11} parent=11 // pred_region
        _
      $region48: #{w2vbert_forward.11} parent=11 // pred_fallthru
        _
      // Predicated region
      $region49: #{w2vbert_forward.11} parent=11 // pred_check
        %p392 = pneg %p282
      $region50: #{w2vbert_forward.11} parent=11 // pred_check_branch
        %394 = sbr.rel (%p392) target = $region52
      $region51: #{w2vbert_forward.11} parent=11 // pred_region
        _
      $region52: #{w2vbert_forward.11} parent=11 // pred_fallthru
        _
      // Predicated region
      $region53: #{w2vbert_forward.11} parent=11 // pred_check
        %p395 = pneg %p303
      $region54: #{w2vbert_forward.11} parent=11 // pred_check_branch
        %397 = sbr.rel (%p395) target = $region56
      $region55: #{w2vbert_forward.11} parent=11 // pred_region
        _
      $region56: #{w2vbert_forward.11} parent=11 // pred_fallthru
        _
      // Predicated region
      $region57: #{w2vbert_forward.11} parent=11 // pred_check
        %p398 = pneg %p324
      $region58: #{w2vbert_forward.11} parent=11 // pred_check_branch
        %400 = sbr.rel (%p398) target = $region60
      $region59: #{w2vbert_forward.11} parent=11 // pred_region
        _
      $region60: #{w2vbert_forward.11} parent=11 // pred_fallthru
        _
    $region12: #{w2vbert_forward.11} parent=5 // pred_fallthru
      _
    %p401 = scmp.lt.s32.totalorder %s20, 2
    // Predicated region
    $region61: #{w2vbert_forward.11} parent=5 // pred_check
      %p402 = pneg %p401
    $region62: #{w2vbert_forward.11} parent=5 // pred_check_branch
      %404 = sbr.rel (%p402) target = $region64
    $region63: #{w2vbert_forward.11} parent=5 // pred_region
      // Predicated region
      $region65: #{w2vbert_forward.11} parent=63 // pred_check
        %p405 = pneg %p40
      $region66: #{w2vbert_forward.11} parent=63 // pred_check_branch
        %407 = sbr.rel (%p405) target = $region68
      $region67: #{w2vbert_forward.11} parent=63 // pred_region
        %p408 = scmp.lt.s32.totalorder %s20, 1
        %s409 = scalar_select %p408, %s20, 1
        %s410 = smul.addr %s409, 2
        %s411 = smul.addr %s410, 4
        %s412 = scalar_lea.vmem %s0, %s411
      $region68: #{w2vbert_forward.11} parent=63 // pred_fallthru
        _
      // Predicated region
      $region69: #{w2vbert_forward.11} parent=63 // pred_check
        %p413 = pneg %p66
      $region70: #{w2vbert_forward.11} parent=63 // pred_check_branch
        %415 = sbr.rel (%p413) target = $region72
      $region71: #{w2vbert_forward.11} parent=63 // pred_region
        %p416 = scmp.lt.s32.totalorder %s20, 1
        %s417 = scalar_select %p416, %s20, 1
        %s418 = smul.addr %s417, 8
        %s419 = scalar_lea.vmem %s1, %s418
      $region72: #{w2vbert_forward.11} parent=63 // pred_fallthru
        _
    $region64: #{w2vbert_forward.11} parent=5 // pred_fallthru
      _
    %p420 = scmp.le.s32.totalorder 1, %s20
    %p421 = scmp.lt.s32.totalorder %s20, 3
    %p422 = pnand %p420, %p421
    %p423 = pneg %p422
    // Predicated region
    $region73: #{w2vbert_forward.11} parent=5 // pred_check
      _
    $region74: #{w2vbert_forward.11} parent=5 // pred_check_branch
      %425 = sbr.rel (%p422) target = $region76
    $region75: #{w2vbert_forward.11} parent=5 // pred_region
      %s426 = ssub.s32 %s20, 1
      %p427 = scmp.lt.s32.totalorder %s25, 1
      %s428 = scalar_select %p427, %s25, 1
      %s429 = smul.addr %s428, 2
      %s430 = smul.addr %s429, 4
      %s431 = scalar_lea.vmem %s0, %s430
      %p432 = pneg %p46
      %p433 = pneg %p43
      %p434 = scmp.lt.s32.totalorder %s25, 1
      %s435 = scalar_select %p434, %s25, 1
      %s436 = smul.addr %s435, 8
      %s437 = scalar_lea.vmem %s1, %s436
      %p438 = pneg %p72
      %p439 = pneg %p69
      %p440 = pneg %p93
      %p441 = pneg %p90
      %p442 = pneg %p114
      %p443 = pneg %p111
      %p444 = pneg %p135
      %p445 = pneg %p132
      %p446 = pneg %p156
      %p447 = pneg %p153
      %p448 = pneg %p177
      %p449 = pneg %p174
      %p450 = pneg %p198
      %p451 = pneg %p195
      %p452 = pneg %p219
      %p453 = pneg %p216
      %p454 = pneg %p240
      %p455 = pneg %p237
      %p456 = pneg %p261
      %p457 = pneg %p258
      %p458 = pneg %p282
      %p459 = pneg %p279
      %p460 = pneg %p303
      %p461 = pneg %p300
      %p462 = pneg %p324
      %p463 = pneg %p321
      %p464 = pneg %p350
      %p465 = pneg %p347
      %p466 = scmp.lt.s32.totalorder %s25, 1
      %s467 = scalar_select %p466, %s25, 1
      %s468 = smul.addr %s467, 8
      %s469 = scalar_lea.vmem %s14, %s468
      %p470 = scmp.lt.s32.totalorder %s25, 1
      %s471 = scalar_select %p470, %s25, 1
      %s472 = smul.addr %s471, 2
      %s473 = smul.addr %s472, 4
      %s474 = scalar_lea.vmem %s0, %s473
      %p475 = scmp.lt.s32.totalorder %s25, 1
      %s476 = scalar_select %p475, %s25, 1
      %s477 = smul.addr %s476, 8
      %s478 = scalar_lea.vmem %s1, %s477
      %p479 = scmp.lt.s32.totalorder %s25, 1
      %s480 = scalar_select %p479, %s25, 1
      %s481 = smul.addr %s480, 8
      %s482 = scalar_lea.vmem %s14, %s481
      %v484 = vld [vmem:[%s2] sm:$0x3]
      %v485 = vld [vmem:[%s2 + $0x2] sm:$0x3]
      %v488 = vlaneseq
      %v489 = vshrl.u32 %v488, 7
      %v490 = vsub.s32 0, %v489
      %v491 = vrot.slane %v484, %v490
      %v492 = vlaneseq
      %v493 = vshrl.u32 %v492, 7
      %v494 = vsub.s32 1, %v493
      %v495 = vrot.slane %v484, %v494
      %v496 = vlaneseq
      %v497 = vshrl.u32 %v496, 7
      %v498 = vsub.s32 0, %v497
      %v499 = vrot.slane %v485, %v498
      %v500 = vlaneseq
      %v501 = vshrl.u32 %v500, 7
      %v502 = vsub.s32 1, %v501
      %v503 = vrot.slane %v485, %v502
      %vm508 = vcmask 1040384
      %v509 = vsel %vm508, %v491, 0.0
      %v510 = vsel %vm508, %v499, 0.0
      %v511 = vadd.f32 %v509, %v510
      %v512 = vsel %vm508, %v495, 0.0
      %v513 = vsel %vm508, %v503, 0.0
      %v514 = vadd.f32 %v512, %v513
      %v515 = vld [vmem:[%s3] sm:$0x3]
      %v516 = vld [vmem:[%s3 + $0x2] sm:$0x3]
      %v519 = vlaneseq
      %v520 = vshrl.u32 %v519, 7
      %v521 = vsub.s32 0, %v520
      %v522 = vrot.slane %v515, %v521
      %v523 = vlaneseq
      %v524 = vshrl.u32 %v523, 7
      %v525 = vsub.s32 1, %v524
      %v526 = vrot.slane %v515, %v525
      %v527 = vlaneseq
      %v528 = vshrl.u32 %v527, 7
      %v529 = vsub.s32 0, %v528
      %v530 = vrot.slane %v516, %v529
      %v531 = vlaneseq
      %v532 = vshrl.u32 %v531, 7
      %v533 = vsub.s32 1, %v532
      %v534 = vrot.slane %v516, %v533
      %v539 = vsel %vm508, %v522, 0.0
      %v540 = vsel %vm508, %v530, 0.0
      %v541 = vadd.f32 %v539, %v540
      %v542 = vsel %vm508, %v526, 0.0
      %v543 = vsel %vm508, %v534, 0.0
      %v544 = vadd.f32 %v542, %v543
      %v545 = vmul.f32 %v511, 0.0625
      %v546 = vmul.f32 %v514, 0.0625
      %v547 = vmul.f32 %v541, 0.0625
      %v548 = vmul.f32 %v544, 0.0625
      %v549 = vmul.f32 %v545, %v545
      %v550 = vmul.f32 %v546, %v546
      %v551 = vsub.f32 %v547, %v549
      %v552 = vsub.f32 %v548, %v550
      %v553 = vld [vmem:[%s4] sm:$0x3]
      %v554 = vadd.f32 %v551, 1e-05
      %v555 = vadd.f32 %v552, 1e-05
      %v556 = vrsqrt.pop %v554
      %v557 = vrsqrt.pop %v555
      %v560 = vcombine.low %v556, %v557
      %v562 = vunpack.c.l.s4 1966171168
      %v563 = vunpack.c.0.s8 %v562
      %v564 = vlaneseq
      %v565 = vshrl.u32 %v564, 7
      %v566 = vsub.s32 %v563, %v565
      %v567 = vrot.slane %v560, %v566
      %v569 = vunpack.c.l.s4 1966171168
      %v570 = vunpack.c.0.s8 %v569
      %v571 = vlaneseq
      %v572 = vshrl.u32 %v571, 7
      %v573 = vsub.s32 %v570, %v572
      %v574 = vrot.slane %v567, %v573
      %v576 = vmul.f32 %v553, %v574
      %v577 = vld [vmem:[%s5] sm:$0x3]
      %v579 = vlaneseq
      %v580 = vshrl.u32 %v579, 7
      %v581 = vsub.s32 0, %v580
      %v582 = vrot.slane %v576, %v581
      %v583 = vlaneseq
      %v584 = vshrl.u32 %v583, 7
      %v585 = vsub.s32 1, %v584
      %v586 = vrot.slane %v576, %v585
      %v589 = vmul.f32 %v545, %v582
      %v590 = vmul.f32 %v546, %v586
      %v593 = vcombine.low %v589, %v590
      %v595 = vunpack.c.l.s4 1966171168
      %v596 = vunpack.c.0.s8 %v595
      %v597 = vlaneseq
      %v598 = vshrl.u32 %v597, 7
      %v599 = vsub.s32 %v596, %v598
      %v600 = vrot.slane %v593, %v599
      %v602 = vunpack.c.l.s4 1966171168
      %v603 = vunpack.c.0.s8 %v602
      %v604 = vlaneseq
      %v605 = vshrl.u32 %v604, 7
      %v606 = vsub.s32 %v603, %v605
      %v607 = vrot.slane %v600, %v606
      %v609 = vsub.f32 %v577, %v607
      %v610 = vld [vmem:[%s478] sm:$0xff]
      %v611 = vld [vmem:[%s474] sm:$0xff]
      %v612 = vunpack.c.l.bf16 %v611
      %v613 = vunpack.c.h.bf16 %v611
      %v614 = vmul.f32 %v612, %v582
      %v615 = vmul.f32 %v613, %v586
      %v617 = vlaneseq
      %v618 = vshrl.u32 %v617, 7
      %v619 = vsub.s32 0, %v618
      %v620 = vrot.slane %v609, %v619
      %v621 = vlaneseq
      %v622 = vshrl.u32 %v621, 7
      %v623 = vsub.s32 1, %v622
      %v624 = vrot.slane %v609, %v623
      %v627 = vadd.f32 %v614, %v620
      %v628 = vadd.f32 %v615, %v624
      %v629 = vmul.f32 %v627, 0.5
      %v630 = vmul.f32 %v628, 0.5
      %v631 = vmul.f32 %v627, 0.70710677
      %v632 = vmul.f32 %v628, 0.70710677
      %v633 = verf.f32.pop %v631
      %v634 = verf.f32.pop %v632
      %v635 = vadd.f32 %v633, 1.0
      %v636 = vadd.f32 %v634, 1.0
      %v637 = vmul.f32 %v629, %v635
      %v638 = vmul.f32 %v630, %v636
      %v639 = vpack.c.bf16 %v637, %v637
      %v640 = vpack.c.bf16 %v638, %v638
      %v641 = vld [vmem:[%s6] sm:$0xf]
      %v642 = vld [vmem:[%s6 + $0x4] sm:$0xf]
      %v643 = vld [vmem:[%s6 + $0x8] sm:$0xf]
      %v644 = vld [vmem:[%s6 + $0xc] sm:$0xf]
      %v645 = vld [vmem:[%s6 + $0x10] sm:$0xf]
      %v646 = vld [vmem:[%s6 + $0x14] sm:$0xf]
      %v647 = vld [vmem:[%s6 + $0x18] sm:$0xf]
      %v648 = vld [vmem:[%s6 + $0x1c] sm:$0xf]
      %v649 = vld [vmem:[%s6 + $0x20] sm:$0xf]
      %v650 = vld [vmem:[%s6 + $0x24] sm:$0xf]
      %v651 = vld [vmem:[%s6 + $0x28] sm:$0xf]
      %v652 = vld [vmem:[%s6 + $0x2c] sm:$0xf]
      %v653 = vld [vmem:[%s6 + $0x30] sm:$0xf]
      %v654 = vld [vmem:[%s6 + $0x34] sm:$0xf]
      %v655 = vld [vmem:[%s6 + $0x38] sm:$0xf]
      %v656 = vld [vmem:[%s6 + $0x3c] sm:$0xf]
      %v657 = vld [vmem:[%s6 + $0x40] sm:$0xf]
      %v658 = vld [vmem:[%s6 + $0x44] sm:$0xf]
      %v659 = vld [vmem:[%s6 + $0x48] sm:$0xf]
      %v660 = vld [vmem:[%s6 + $0x4c] sm:$0xf]
      %v661 = vld [vmem:[%s6 + $0x50] sm:$0xf]
      %v662 = vld [vmem:[%s6 + $0x54] sm:$0xf]
      %v663 = vld [vmem:[%s6 + $0x58] sm:$0xf]
      %v664 = vld [vmem:[%s6 + $0x5c] sm:$0xf]
      %v665 = vld [vmem:[%s6 + $0x60] sm:$0xf]
      %v666 = vld [vmem:[%s6 + $0x64] sm:$0xf]
      %v667 = vld [vmem:[%s6 + $0x68] sm:$0xf]
      %v668 = vld [vmem:[%s6 + $0x6c] sm:$0xf]
      %v669 = vld [vmem:[%s6 + $0x70] sm:$0xf]
      %v670 = vld [vmem:[%s6 + $0x74] sm:$0xf]
      %v671 = vld [vmem:[%s6 + $0x78] sm:$0xf]
      %v672 = vld [vmem:[%s6 + $0x7c] sm:$0xf]
      %v673 = vld [vmem:[%s7] sm:$0x1]
      %v675 = vlaneseq
      %v676 = vshrl.u32 %v675, 7
      %v677 = vsub.s32 0, %v676
      %v678 = vrot.slane %v673, %v677
      %v712 = vunpack.c.l.b16 %v641
      %v713 = vunpack.c.l.b16 %v642
      %v714 = vunpack.c.l.b16 %v643
      %v715 = vunpack.c.l.b16 %v644
      %v716 = vunpack.c.l.b16 %v645
      %v717 = vunpack.c.l.b16 %v646
      %v718 = vunpack.c.l.b16 %v647
      %v719 = vunpack.c.l.b16 %v648
      %v720 = vunpack.c.l.b16 %v649
      %v721 = vunpack.c.l.b16 %v650
      %v722 = vunpack.c.l.b16 %v651
      %v723 = vunpack.c.l.b16 %v652
      %v724 = vunpack.c.l.b16 %v653
      %v725 = vunpack.c.l.b16 %v654
      %v726 = vunpack.c.l.b16 %v655
      %v727 = vunpack.c.l.b16 %v656
      %v728 = vunpack.c.l.b16 %v657
      %v729 = vunpack.c.l.b16 %v658
      %v730 = vunpack.c.l.b16 %v659
      %v731 = vunpack.c.l.b16 %v660
      %v732 = vunpack.c.l.b16 %v661
      %v733 = vunpack.c.l.b16 %v662
      %v734 = vunpack.c.l.b16 %v663
      %v735 = vunpack.c.l.b16 %v664
      %v736 = vunpack.c.l.b16 %v665
      %v737 = vunpack.c.l.b16 %v666
      %v738 = vunpack.c.l.b16 %v667
      %v739 = vunpack.c.l.b16 %v668
      %v740 = vunpack.c.l.b16 %v669
      %v741 = vunpack.c.l.b16 %v670
      %v742 = vunpack.c.l.b16 %v671
      %v743 = vunpack.c.l.b16 %v672
      %v744 = vpack.c.b16 %v713, %v712
      %v745 = vpack.c.b16 %v715, %v714
      %v746 = vpack.c.b16 %v717, %v716
      %v747 = vpack.c.b16 %v719, %v718
      %v748 = vpack.c.b16 %v721, %v720
      %v749 = vpack.c.b16 %v723, %v722
      %v750 = vpack.c.b16 %v725, %v724
      %v751 = vpack.c.b16 %v727, %v726
      %v752 = vpack.c.b16 %v729, %v728
      %v753 = vpack.c.b16 %v731, %v730
      %v754 = vpack.c.b16 %v733, %v732
      %v755 = vpack.c.b16 %v735, %v734
      %v756 = vpack.c.b16 %v737, %v736
      %v757 = vpack.c.b16 %v739, %v738
      %v758 = vpack.c.b16 %v741, %v740
      %v759 = vpack.c.b16 %v743, %v742
      %776 = vmatprep.subr.bf16.mxu0 0
      %777 = vmatpush1.bf16.msra.mxu0 %v751
      %778 = vmatprep.subr.bf16.mxu0 0
      %779 = vmatpush1.bf16.msra.mxu0 %v750
      %780 = vmatprep.subr.bf16.mxu0 0
      %781 = vmatpush1.bf16.msra.mxu0 %v749
      %782 = vmatprep.subr.bf16.mxu0 0
      %783 = vmatpush1.bf16.msra.mxu0 %v748
      %784 = vmatprep.subr.bf16.mxu0 0
      %785 = vmatpush1.bf16.msra.mxu0 %v747
      %786 = vmatprep.subr.bf16.mxu0 0
      %787 = vmatpush1.bf16.msra.mxu0 %v746
      %788 = vmatprep.subr.bf16.mxu0 0
      %789 = vmatpush1.bf16.msra.mxu0 %v745
      %790 = vmatprep.subr.bf16.mxu0 0
      %791 = vmatpush1.bf16.msra.mxu0 %v744
      %792 = vmatprep.subr.bf16.mxu0 0
      %793 = vmatpush2.bf16.msra.mxu0 %v759
      %794 = vmatprep.subr.bf16.mxu0 0
      %795 = vmatpush2.bf16.msra.mxu0 %v758
      %796 = vmatprep.subr.bf16.mxu0 0
      %797 = vmatpush2.bf16.msra.mxu0 %v757
      %798 = vmatprep.subr.bf16.mxu0 0
      %799 = vmatpush2.bf16.msra.mxu0 %v756
      %800 = vmatprep.subr.bf16.mxu0 0
      %801 = vmatpush2.bf16.msra.mxu0 %v755
      %802 = vmatprep.subr.bf16.mxu0 0
      %803 = vmatpush2.bf16.msra.mxu0 %v754
      %804 = vmatprep.subr.bf16.mxu0 0
      %805 = vmatpush2.bf16.msra.mxu0 %v753
      %806 = vmatprep.subr.bf16.mxu0 0
      %807 = vmatpush2.bf16.msra.mxu0 %v752
      %808 = vmatprep.mubr.bf16.mxu0 %v640
      %809 = vmatmul.mubr.bf16.gmra.mxu0 %v639
      %v810 = vpop.f32.mrf.mxu0
      %v811 = vadd.f32 %v678, %v810
      %v812 = vpop.f32.mrf.mxu0
      %v813 = vpop.f32.mrf.mxu0
      %v814 = vpop.f32.mrf.mxu0
      %815 = vdwg.mxu0
      %v816 = vadd.f32 %v811, %v610
      %v817 = vld [vmem:[%s8] sm:$0x1]
      %v818 = vld [vmem:[%s9] sm:$0x1]
      %819 = vadd.xlane.f32.xlu0 %v816
      %v820 = vpop.xlane.xlu0 %819
      %v821 = vrcp.pop 128.0
      %v822 = vmul.f32 %v820, %v821
      %v823 = vsub.f32 %v816, %v822
      %v824 = vmul.f32 %v823, %v823
      %825 = vadd.xlane.f32.xlu0 %v824
      %v826 = vpop.xlane.xlu0 %825
      %v827 = vmul.f32 %v826, %v821
      %v828 = vadd.f32 %v827, 1e-05
      %v829 = vrsqrt.pop %v828
      %v830 = vmul.f32 %v823, %v829
      %v832 = vlaneseq
      %v833 = vshrl.u32 %v832, 7
      %v834 = vsub.s32 0, %v833
      %v835 = vrot.slane %v817, %v834
      %v837 = vmul.f32 %v830, %v835
      %v839 = vlaneseq
      %v840 = vshrl.u32 %v839, 7
      %v841 = vsub.s32 0, %v840
      %v842 = vrot.slane %v818, %v841
      %v844 = vadd.f32 %v837, %v842
      %v845 = vpack.c.bf16 %v844, %v844
      %v846 = vld [vmem:[%s10] sm:$0xff]
      %v847 = vld [vmem:[%s10 + $0x8] sm:$0xff]
      %v848 = vld [vmem:[%s10 + $0x10] sm:$0xff]
      %v849 = vld [vmem:[%s10 + $0x18] sm:$0xff]
      %v850 = vld [vmem:[%s10 + $0x20] sm:$0xff]
      %v851 = vld [vmem:[%s10 + $0x28] sm:$0xff]
      %v852 = vld [vmem:[%s10 + $0x30] sm:$0xff]
      %v853 = vld [vmem:[%s10 + $0x38] sm:$0xff]
      %v854 = vld [vmem:[%s10 + $0x40] sm:$0xff]
      %v855 = vld [vmem:[%s10 + $0x48] sm:$0xff]
      %v856 = vld [vmem:[%s10 + $0x50] sm:$0xff]
      %v857 = vld [vmem:[%s10 + $0x58] sm:$0xff]
      %v858 = vld [vmem:[%s10 + $0x60] sm:$0xff]
      %v859 = vld [vmem:[%s10 + $0x68] sm:$0xff]
      %v860 = vld [vmem:[%s10 + $0x70] sm:$0xff]
      %v861 = vld [vmem:[%s10 + $0x78] sm:$0xff]
      %v862 = vld [vmem:[%s11] sm:$0x3]
      %v864 = vlaneseq
      %v865 = vshrl.u32 %v864, 7
      %v866 = vsub.s32 0, %v865
      %v867 = vrot.slane %v862, %v866
      %v868 = vlaneseq
      %v869 = vshrl.u32 %v868, 7
      %v870 = vsub.s32 1, %v869
      %v871 = vrot.slane %v862, %v870
      %v890 = vunpack.c.l.b16 %v846
      %v891 = vunpack.c.h.b16 %v846
      %v892 = vunpack.c.l.b16 %v847
      %v893 = vunpack.c.h.b16 %v847
      %v894 = vunpack.c.l.b16 %v848
      %v895 = vunpack.c.h.b16 %v848
      %v896 = vunpack.c.l.b16 %v849
      %v897 = vunpack.c.h.b16 %v849
      %v898 = vunpack.c.l.b16 %v850
      %v899 = vunpack.c.h.b16 %v850
      %v900 = vunpack.c.l.b16 %v851
      %v901 = vunpack.c.h.b16 %v851
      %v902 = vunpack.c.l.b16 %v852
      %v903 = vunpack.c.h.b16 %v852
      %v904 = vunpack.c.l.b16 %v853
      %v905 = vunpack.c.h.b16 %v853
      %v906 = vunpack.c.l.b16 %v854
      %v907 = vunpack.c.h.b16 %v854
      %v908 = vunpack.c.l.b16 %v855
      %v909 = vunpack.c.h.b16 %v855
      %v910 = vunpack.c.l.b16 %v856
      %v911 = vunpack.c.h.b16 %v856
      %v912 = vunpack.c.l.b16 %v857
      %v913 = vunpack.c.h.b16 %v857
      %v914 = vunpack.c.l.b16 %v858
      %v915 = vunpack.c.h.b16 %v858
      %v916 = vunpack.c.l.b16 %v859
      %v917 = vunpack.c.h.b16 %v859
      %v918 = vunpack.c.l.b16 %v860
      %v919 = vunpack.c.h.b16 %v860
      %v920 = vunpack.c.l.b16 %v861
      %v921 = vunpack.c.h.b16 %v861
      %v922 = vpack.c.b16 %v892, %v890
      %v923 = vpack.c.b16 %v893, %v891
      %v924 = vpack.c.b16 %v896, %v894
      %v925 = vpack.c.b16 %v897, %v895
      %v926 = vpack.c.b16 %v900, %v898
      %v927 = vpack.c.b16 %v901, %v899
      %v928 = vpack.c.b16 %v904, %v902
      %v929 = vpack.c.b16 %v905, %v903
      %v930 = vpack.c.b16 %v908, %v906
      %v931 = vpack.c.b16 %v909, %v907
      %v932 = vpack.c.b16 %v912, %v910
      %v933 = vpack.c.b16 %v913, %v911
      %v934 = vpack.c.b16 %v916, %v914
      %v935 = vpack.c.b16 %v917, %v915
      %v936 = vpack.c.b16 %v920, %v918
      %v937 = vpack.c.b16 %v921, %v919
      %954 = vmatprep.subr.bf16.mxu0 %v937
      %955 = vmatpush1.bf16.msra.mxu0 %v936
      %956 = vmatprep.subr.bf16.mxu0 %v935
      %957 = vmatpush1.bf16.msra.mxu0 %v934
      %958 = vmatprep.subr.bf16.mxu0 %v933
      %959 = vmatpush1.bf16.msra.mxu0 %v932
      %960 = vmatprep.subr.bf16.mxu0 %v931
      %961 = vmatpush1.bf16.msra.mxu0 %v930
      %962 = vmatprep.subr.bf16.mxu0 %v929
      %963 = vmatpush1.bf16.msra.mxu0 %v928
      %964 = vmatprep.subr.bf16.mxu0 %v927
      %965 = vmatpush1.bf16.msra.mxu0 %v926
      %966 = vmatprep.subr.bf16.mxu0 %v925
      %967 = vmatpush1.bf16.msra.mxu0 %v924
      %968 = vmatprep.subr.bf16.mxu0 %v923
      %969 = vmatpush1.bf16.msra.mxu0 %v922
      %970 = vmatprep.subr.bf16.mxu0 0
      %971 = vmatpush2.bf16.msra.mxu0 0
      %972 = vmatprep.subr.bf16.mxu0 0
      %973 = vmatpush2.bf16.msra.mxu0 0
      %974 = vmatprep.subr.bf16.mxu0 0
      %975 = vmatpush2.bf16.msra.mxu0 0
      %976 = vmatprep.subr.bf16.mxu0 0
      %977 = vmatpush2.bf16.msra.mxu0 0
      %978 = vmatprep.subr.bf16.mxu0 0
      %979 = vmatpush2.bf16.msra.mxu0 0
      %980 = vmatprep.subr.bf16.mxu0 0
      %981 = vmatpush2.bf16.msra.mxu0 0
      %982 = vmatprep.subr.bf16.mxu0 0
      %983 = vmatpush2.bf16.msra.mxu0 0
      %984 = vmatprep.subr.bf16.mxu0 0
      %985 = vmatpush2.bf16.msra.mxu0 0
      %986 = vmatprep.mubr.bf16.mxu0 0
      %987 = vmatmul.mubr.bf16.gmra.mxu0 %v845
      %v988 = vpop.f32.mrf.mxu0
      %v989 = vadd.f32 %v867, %v988
      %v990 = vpop.f32.mrf.mxu0
      %v991 = vadd.f32 %v871, %v990
      %v992 = vpop.f32.mrf.mxu0
      %v993 = vpop.f32.mrf.mxu0
      %994 = vdwg.mxu0
      %v995 = vmul.f32 %v989, 0.5
      %v996 = vmul.f32 %v991, 0.5
      %v997 = vmul.f32 %v989, 0.70710677
      %v998 = vmul.f32 %v991, 0.70710677
      %v999 = verf.f32.pop %v997
      %v1000 = verf.f32.pop %v998
      %v1001 = vadd.f32 %v999, 1.0
      %v1002 = vadd.f32 %v1000, 1.0
      %v1003 = vmul.f32 %v995, %v1001
      %v1004 = vmul.f32 %v996, %v1002
      %v1005 = vpack.c.bf16 %v1003, %v1003
      %v1006 = vpack.c.bf16 %v1004, %v1004
      %v1007 = vld [vmem:[%s12] sm:$0xf]
      %v1008 = vld [vmem:[%s12 + $0x4] sm:$0xf]
      %v1009 = vld [vmem:[%s12 + $0x8] sm:$0xf]
      %v1010 = vld [vmem:[%s12 + $0xc] sm:$0xf]
      %v1011 = vld [vmem:[%s12 + $0x10] sm:$0xf]
      %v1012 = vld [vmem:[%s12 + $0x14] sm:$0xf]
      %v1013 = vld [vmem:[%s12 + $0x18] sm:$0xf]
      %v1014 = vld [vmem:[%s12 + $0x1c] sm:$0xf]
      %v1015 = vld [vmem:[%s12 + $0x20] sm:$0xf]
      %v1016 = vld [vmem:[%s12 + $0x24] sm:$0xf]
      %v1017 = vld [vmem:[%s12 + $0x28] sm:$0xf]
      %v1018 = vld [vmem:[%s12 + $0x2c] sm:$0xf]
      %v1019 = vld [vmem:[%s12 + $0x30] sm:$0xf]
      %v1020 = vld [vmem:[%s12 + $0x34] sm:$0xf]
      %v1021 = vld [vmem:[%s12 + $0x38] sm:$0xf]
      %v1022 = vld [vmem:[%s12 + $0x3c] sm:$0xf]
      %v1023 = vld [vmem:[%s12 + $0x40] sm:$0xf]
      %v1024 = vld [vmem:[%s12 + $0x44] sm:$0xf]
      %v1025 = vld [vmem:[%s12 + $0x48] sm:$0xf]
      %v1026 = vld [vmem:[%s12 + $0x4c] sm:$0xf]
      %v1027 = vld [vmem:[%s12 + $0x50] sm:$0xf]
      %v1028 = vld [vmem:[%s12 + $0x54] sm:$0xf]
      %v1029 = vld [vmem:[%s12 + $0x58] sm:$0xf]
      %v1030 = vld [vmem:[%s12 + $0x5c] sm:$0xf]
      %v1031 = vld [vmem:[%s12 + $0x60] sm:$0xf]
      %v1032 = vld [vmem:[%s12 + $0x64] sm:$0xf]
      %v1033 = vld [vmem:[%s12 + $0x68] sm:$0xf]
      %v1034 = vld [vmem:[%s12 + $0x6c] sm:$0xf]
      %v1035 = vld [vmem:[%s12 + $0x70] sm:$0xf]
      %v1036 = vld [vmem:[%s12 + $0x74] sm:$0xf]
      %v1037 = vld [vmem:[%s12 + $0x78] sm:$0xf]
      %v1038 = vld [vmem:[%s12 + $0x7c] sm:$0xf]
      %v1039 = vld [vmem:[%s13] sm:$0x1]
      %v1041 = vlaneseq
      %v1042 = vshrl.u32 %v1041, 7
      %v1043 = vsub.s32 0, %v1042
      %v1044 = vrot.slane %v1039, %v1043
      %v1078 = vunpack.c.l.b16 %v1007
      %v1079 = vunpack.c.l.b16 %v1008
      %v1080 = vunpack.c.l.b16 %v1009
      %v1081 = vunpack.c.l.b16 %v1010
      %v1082 = vunpack.c.l.b16 %v1011
      %v1083 = vunpack.c.l.b16 %v1012
      %v1084 = vunpack.c.l.b16 %v1013
      %v1085 = vunpack.c.l.b16 %v1014
      %v1086 = vunpack.c.l.b16 %v1015
      %v1087 = vunpack.c.l.b16 %v1016
      %v1088 = vunpack.c.l.b16 %v1017
      %v1089 = vunpack.c.l.b16 %v1018
      %v1090 = vunpack.c.l.b16 %v1019
      %v1091 = vunpack.c.l.b16 %v1020
      %v1092 = vunpack.c.l.b16 %v1021
      %v1093 = vunpack.c.l.b16 %v1022
      %v1094 = vunpack.c.l.b16 %v1023
      %v1095 = vunpack.c.l.b16 %v1024
      %v1096 = vunpack.c.l.b16 %v1025
      %v1097 = vunpack.c.l.b16 %v1026
      %v1098 = vunpack.c.l.b16 %v1027
      %v1099 = vunpack.c.l.b16 %v1028
      %v1100 = vunpack.c.l.b16 %v1029
      %v1101 = vunpack.c.l.b16 %v1030
      %v1102 = vunpack.c.l.b16 %v1031
      %v1103 = vunpack.c.l.b16 %v1032
      %v1104 = vunpack.c.l.b16 %v1033
      %v1105 = vunpack.c.l.b16 %v1034
      %v1106 = vunpack.c.l.b16 %v1035
      %v1107 = vunpack.c.l.b16 %v1036
      %v1108 = vunpack.c.l.b16 %v1037
      %v1109 = vunpack.c.l.b16 %v1038
      %v1110 = vpack.c.b16 %v1079, %v1078
      %v1111 = vpack.c.b16 %v1081, %v1080
      %v1112 = vpack.c.b16 %v1083, %v1082
      %v1113 = vpack.c.b16 %v1085, %v1084
      %v1114 = vpack.c.b16 %v1087, %v1086
      %v1115 = vpack.c.b16 %v1089, %v1088
      %v1116 = vpack.c.b16 %v1091, %v1090
      %v1117 = vpack.c.b16 %v1093, %v1092
      %v1118 = vpack.c.b16 %v1095, %v1094
      %v1119 = vpack.c.b16 %v1097, %v1096
      %v1120 = vpack.c.b16 %v1099, %v1098
      %v1121 = vpack.c.b16 %v1101, %v1100
      %v1122 = vpack.c.b16 %v1103, %v1102
      %v1123 = vpack.c.b16 %v1105, %v1104
      %v1124 = vpack.c.b16 %v1107, %v1106
      %v1125 = vpack.c.b16 %v1109, %v1108
      %1142 = vmatprep.subr.bf16.mxu0 0
      %1143 = vmatpush1.bf16.msra.mxu0 %v1117
      %1144 = vmatprep.subr.bf16.mxu0 0
      %1145 = vmatpush1.bf16.msra.mxu0 %v1116
      %1146 = vmatprep.subr.bf16.mxu0 0
      %1147 = vmatpush1.bf16.msra.mxu0 %v1115
      %1148 = vmatprep.subr.bf16.mxu0 0
      %1149 = vmatpush1.bf16.msra.mxu0 %v1114
      %1150 = vmatprep.subr.bf16.mxu0 0
      %1151 = vmatpush1.bf16.msra.mxu0 %v1113
      %1152 = vmatprep.subr.bf16.mxu0 0
      %1153 = vmatpush1.bf16.msra.mxu0 %v1112
      %1154 = vmatprep.subr.bf16.mxu0 0
      %1155 = vmatpush1.bf16.msra.mxu0 %v1111
      %1156 = vmatprep.subr.bf16.mxu0 0
      %1157 = vmatpush1.bf16.msra.mxu0 %v1110
      %1158 = vmatprep.subr.bf16.mxu0 0
      %1159 = vmatpush2.bf16.msra.mxu0 %v1125
      %1160 = vmatprep.subr.bf16.mxu0 0
      %1161 = vmatpush2.bf16.msra.mxu0 %v1124
      %1162 = vmatprep.subr.bf16.mxu0 0
      %1163 = vmatpush2.bf16.msra.mxu0 %v1123
      %1164 = vmatprep.subr.bf16.mxu0 0
      %1165 = vmatpush2.bf16.msra.mxu0 %v1122
      %1166 = vmatprep.subr.bf16.mxu0 0
      %1167 = vmatpush2.bf16.msra.mxu0 %v1121
      %1168 = vmatprep.subr.bf16.mxu0 0
      %1169 = vmatpush2.bf16.msra.mxu0 %v1120
      %1170 = vmatprep.subr.bf16.mxu0 0
      %1171 = vmatpush2.bf16.msra.mxu0 %v1119
      %1172 = vmatprep.subr.bf16.mxu0 0
      %1173 = vmatpush2.bf16.msra.mxu0 %v1118
      %1174 = vmatprep.mubr.bf16.mxu0 %v1006
      %1175 = vmatmul.mubr.bf16.gmra.mxu0 %v1005
      %v1176 = vpop.f32.mrf.mxu0
      %v1177 = vadd.f32 %v1044, %v1176
      %v1178 = vpop.f32.mrf.mxu0
      %v1179 = vpop.f32.mrf.mxu0
      %v1180 = vpop.f32.mrf.mxu0
      %1181 = vdwg.mxu0
      %v1182 = vmul.f32 %v1177, 0.5
      %v1183 = vadd.f32 %v816, %v1182
      %s1184 = scalar_lea.vmem %s8, 1
      %v1185 = vld [vmem:[%s1184] sm:$0x1]
      %s1186 = scalar_lea.vmem %s9, 1
      %v1187 = vld [vmem:[%s1186] sm:$0x1]
      %1188 = vadd.xlane.f32.xlu0 %v1183
      %v1189 = vpop.xlane.xlu0 %1188
      %v1190 = vmul.f32 %v1189, %v821
      %v1191 = vsub.f32 %v1183, %v1190
      %v1192 = vmul.f32 %v1191, %v1191
      %1193 = vadd.xlane.f32.xlu0 %v1192
      %v1194 = vpop.xlane.xlu0 %1193
      %v1195 = vmul.f32 %v1194, %v821
      %v1196 = vadd.f32 %v1195, 1e-05
      %v1197 = vrsqrt.pop %v1196
      %v1198 = vmul.f32 %v1191, %v1197
      %v1200 = vlaneseq
      %v1201 = vshrl.u32 %v1200, 7
      %v1202 = vsub.s32 0, %v1201
      %v1203 = vrot.slane %v1185, %v1202
      %v1205 = vmul.f32 %v1198, %v1203
      %v1207 = vlaneseq
      %v1208 = vshrl.u32 %v1207, 7
      %v1209 = vsub.s32 0, %v1208
      %v1210 = vrot.slane %v1187, %v1209
      %v1212 = vadd.f32 %v1205, %v1210
      %1213 = vst [vmem:[%s482] sm:$0xff] %v1212
      %p1214 = scmp.lt.s32.totalorder %s25, 1
      %s1215 = scalar_select %p1214, %s25, 1
      %s1216 = smul.addr %s1215, 8
      %s1217 = scalar_lea.vmem %s14, %s1216
      // Predicated region
      $region77: #{w2vbert_forward.11} parent=75 // pred_check
        %p1218 = pneg %p347
      $region78: #{w2vbert_forward.11} parent=75 // pred_check_branch
        %1220 = sbr.rel (%p1218) target = $region80
      $region79: #{w2vbert_forward.11} parent=75 // pred_region
        _
      $region80: #{w2vbert_forward.11} parent=75 // pred_fallthru
        _
    $region76: #{w2vbert_forward.11} parent=5 // pred_fallthru
      _
    %p1221 = scmp.le.s32.totalorder 2, %s20
    // Predicated region
    $region81: #{w2vbert_forward.11} parent=5 // pred_check
      %p1222 = pneg %p1221
    $region82: #{w2vbert_forward.11} parent=5 // pred_check_branch
      %1224 = sbr.rel (%p1222) target = $region84
    $region83: #{w2vbert_forward.11} parent=5 // pred_region
      %s1225 = ssub.s32 %s20, 2
      // Predicated region
      $region85: #{w2vbert_forward.11} parent=83 // pred_check
        %p1226 = pneg %p353
      $region86: #{w2vbert_forward.11} parent=83 // pred_check_branch
        %1228 = sbr.rel (%p1226) target = $region88
      $region87: #{w2vbert_forward.11} parent=83 // pred_region
        %p1229 = scmp.lt.s32.totalorder %s26, 1
        %s1230 = scalar_select %p1229, %s26, 1
        %s1231 = smul.addr %s1230, 8
        %s1232 = scalar_lea.vmem %s14, %s1231
      $region88: #{w2vbert_forward.11} parent=83 // pred_fallthru
        _
    $region84: #{w2vbert_forward.11} parent=5 // pred_fallthru
      _
  $region6: #{w2vbert_forward.11} parent=0 // loop_footer
    %s24 = sadd.s32 1, %s20
  $region7: #{w2vbert_forward.11} parent=0 // loop_footer_branch
    %19 = sbr.rel target = $region3
  $region8: #{w2vbert_forward.11} parent=0 // loop_exit
    _

// kernel: w2vbert_forward.10
$region0: #{w2vbert_forward.10}
  #allocation0 [shape = 'u32[]', space=smem, size = 0x4, offset = 0x4, fixed_abs, tag = 'smem constant byte address 0x4 - core index']
  #allocation1 [shape = 'u32[144,128]{1,0:T(1,128)}', space=vmem, size = 0x12000, scoped, tag = 'internal scratch']
  %s0 = inlined_call_operand.vmem [shape: f32[2,8,128], index: 0, kind: input, shape index: {}]
  %s1 = inlined_call_operand.vmem [shape: f32[8,128], index: 1, kind: input, shape index: {}]
  %s2 = inlined_call_operand.vmem [shape: f32[3,1,128], index: 2, kind: input, shape index: {}]
  %s3 = inlined_call_operand.vmem [shape: f32[3,1,128], index: 3, kind: input, shape index: {}]
  %s4 = inlined_call_operand.vmem [shape: bf16[128,256], index: 4, kind: input, shape index: {}]
  %s5 = inlined_call_operand.vmem [shape: f32[1,256], index: 5, kind: input, shape index: {}]
  %s6 = inlined_call_operand.vmem [shape: bf16[256,128], index: 6, kind: input, shape index: {}]
  %s7 = inlined_call_operand.vmem [shape: f32[1,128], index: 7, kind: input, shape index: {}]
  %s8 = inlined_call_operand.vmem [shape: bf16[12,128,32], index: 8, kind: input, shape index: {}]
  %s9 = inlined_call_operand.vmem [shape: f32[12,1,32], index: 9, kind: input, shape index: {}]
  %s10 = inlined_call_operand.vmem [shape: bf16[4,32,128], index: 10, kind: input, shape index: {}]
  %s11 = inlined_call_operand.vmem [shape: f32[1,128], index: 11, kind: input, shape index: {}]
  %s12 = inlined_call_operand.vmem [shape: bf16[128,256], index: 12, kind: input, shape index: {}]
  %s13 = inlined_call_operand.vmem [shape: f32[1,256], index: 13, kind: input, shape index: {}]
  %s14 = inlined_call_operand.vmem [shape: f32[1,256], index: 14, kind: input, shape index: {}]
  %s15 = inlined_call_operand.vmem [shape: f32[1,256], index: 15, kind: input, shape index: {}]
  %s16 = inlined_call_operand.vmem [shape: f32[2,8,128], index: 16, kind: output, shape index: {0}]
  %s17 = inlined_call_operand.vmem [shape: bf16[2,8,256], index: 17, kind: output, shape index: {1}]
  %s18 = inlined_call_operand.vmem [shape: f32[2,1,256], index: 18, kind: output, shape index: {2}]
  %s19 = inlined_call_operand.vmem [shape: f32[2,1,256], index: 19, kind: output, shape index: {3}]
  %20 = xla_tuple %s16, %s17, %s18, %s19
  %s21 = sld [smem:[#allocation0]]
  $region121: #{w2vbert_forward.10} parent=0
    _
  %s23 = ssub.s32 1, %s21
  %s24 = scalar_select 0, %s23, %s21
  loop: start=0, step=1, limit=4
  $region2: #{w2vbert_forward.10} parent=0 // loop_pre_header
    _
  $region3: #{w2vbert_forward.10} parent=0 // loop_header
    %s26 = sphi 0, %s30
    %p27 = scmp.ge.s32.totalorder %s26, 4
    %s36 = sphi 0, %s38
    %s39 = sphi 0, %s36
    %s40 = sphi 0, %s39
    %s56 = sphi 0, %s40
    %s60 = sphi 0, %s60
    %s62 = sphi 0, %s60
    %s63 = sphi 0, %s62
    %s77 = sphi 0, %s63
    %s81 = sphi 0, %s81
    %s83 = sphi 0, %s81
    %s84 = sphi 0, %s83
    %s98 = sphi 0, %s84
    %s102 = sphi 0, %s102
    %s104 = sphi 0, %s102
    %s105 = sphi 0, %s104
    %s119 = sphi 0, %s105
    %s123 = sphi 0, %s123
    %s125 = sphi 0, %s123
    %s126 = sphi 0, %s125
    %s140 = sphi 0, %s126
    %s144 = sphi 0, %s144
    %s146 = sphi 0, %s144
    %s147 = sphi 0, %s146
    %s161 = sphi 0, %s147
    %s165 = sphi 0, %s165
    %s167 = sphi 0, %s165
    %s168 = sphi 0, %s167
    %s182 = sphi 0, %s168
    %s186 = sphi 0, %s186
    %s188 = sphi 0, %s186
    %s189 = sphi 0, %s188
    %s203 = sphi 0, %s189
    %s207 = sphi 0, %s207
    %s209 = sphi 0, %s207
    %s210 = sphi 0, %s209
    %s224 = sphi 0, %s210
    %s228 = sphi 0, %s228
    %s230 = sphi 0, %s228
    %s231 = sphi 0, %s230
    %s245 = sphi 0, %s231
    %s249 = sphi 0, %s249
    %s251 = sphi 0, %s249
    %s252 = sphi 0, %s251
    %s266 = sphi 0, %s252
    %s270 = sphi 0, %s270
    %s272 = sphi 0, %s270
    %s273 = sphi 0, %s272
    %s287 = sphi 0, %s273
    %s291 = sphi 0, %s291
    %s293 = sphi 0, %s291
    %s294 = sphi 0, %s293
    %s308 = sphi 0, %s294
    %s312 = sphi 0, %s312
    %s314 = sphi 0, %s312
    %s315 = sphi 0, %s314
    %s329 = sphi 0, %s315
    %s333 = sphi 0, %s333
    %s335 = sphi 0, %s333
    %s336 = sphi 0, %s335
    %s350 = sphi 0, %s336
    %s354 = sphi 0, %s354
    %s356 = sphi 0, %s354
    %s357 = sphi 0, %s356
    %s371 = sphi 0, %s357
    %s377 = sphi 0, %s379
    %s380 = sphi 0, %s377
    %s381 = sphi 0, %s380
    %s397 = sphi 0, %s381
    %s403 = sphi 0, %s405
    %s406 = sphi 0, %s403
    %s407 = sphi 0, %s406
    %s423 = sphi 0, %s407
    %s429 = sphi 0, %s431
    %s432 = sphi 0, %s429
    %s433 = sphi 0, %s432
    %s449 = sphi 0, %s433
    %s455 = sphi 0, %s457
    %s458 = sphi 0, %s455
    %s459 = sphi 0, %s458
    %s475 = sphi 0, %s459
  $region4: #{w2vbert_forward.10} parent=0 // loop_header_branch
    %29 = sbr.rel (%p27) target = $region8
  $region5: #{w2vbert_forward.10} parent=0 // loop_body
    %s31 = ssub.s32 %s26, 1
    %s32 = ssub.s32 %s26, 2
    %s33 = sadd.s32 %s26, 1
    %s34 = ssub.s32 %s26, %s33
    %p35 = scmp.eq.s32.totalorder %s34, 0
    %s37 = sadd.s32 %s36, 1
    %s38 = scalar_select %p35, %s36, %s37
    %p41 = pneg %p35
    %p42 = scmp.eq.s32.totalorder %s26, 1
    %p43 = por %p41, %p42
    %p44 = scmp.ne.s32.totalorder %s36, %s39
    %p45 = scmp.eq.s32.totalorder %s26, 0
    %p46 = por %p44, %p45
    %p47 = scmp.ne.s32.totalorder %s36, %s39
    %p48 = scmp.eq.s32.totalorder %s31, 1
    %p49 = por %p47, %p48
    %p50 = scmp.ne.s32.totalorder %s39, %s40
    %p51 = scmp.eq.s32.totalorder %s31, 0
    %p52 = por %p50, %p51
    %p53 = scmp.ne.s32.totalorder %s39, %s40
    %p54 = scmp.eq.s32.totalorder %s32, 1
    %p55 = por %p53, %p54
    %p57 = scmp.ne.s32.totalorder %s40, %s56
    %p58 = scmp.eq.s32.totalorder %s32, 0
    %p59 = por %p57, %p58
    %s61 = sadd.s32 %s60, 1
    %p64 = scmp.eq.s32.totalorder %s26, 1
    %p65 = scmp.ne.s32.totalorder %s60, %s62
    %p66 = scmp.eq.s32.totalorder %s26, 0
    %p67 = por %p65, %p66
    %p68 = scmp.ne.s32.totalorder %s60, %s62
    %p69 = scmp.eq.s32.totalorder %s31, 1
    %p70 = por %p68, %p69
    %p71 = scmp.ne.s32.totalorder %s62, %s63
    %p72 = scmp.eq.s32.totalorder %s31, 0
    %p73 = por %p71, %p72
    %p74 = scmp.ne.s32.totalorder %s62, %s63
    %p75 = scmp.eq.s32.totalorder %s32, 1
    %p76 = por %p74, %p75
    %p78 = scmp.ne.s32.totalorder %s63, %s77
    %p79 = scmp.eq.s32.totalorder %s32, 0
    %p80 = por %p78, %p79
    %s82 = sadd.s32 %s81, 1
    %p85 = scmp.eq.s32.totalorder %s26, 1
    %p86 = scmp.ne.s32.totalorder %s81, %s83
    %p87 = scmp.eq.s32.totalorder %s26, 0
    %p88 = por %p86, %p87
    %p89 = scmp.ne.s32.totalorder %s81, %s83
    %p90 = scmp.eq.s32.totalorder %s31, 1
    %p91 = por %p89, %p90
    %p92 = scmp.ne.s32.totalorder %s83, %s84
    %p93 = scmp.eq.s32.totalorder %s31, 0
    %p94 = por %p92, %p93
    %p95 = scmp.ne.s32.totalorder %s83, %s84
    %p96 = scmp.eq.s32.totalorder %s32, 1
    %p97 = por %p95, %p96
    %p99 = scmp.ne.s32.totalorder %s84, %s98
    %p100 = scmp.eq.s32.totalorder %s32, 0
    %p101 = por %p99, %p100
    %s103 = sadd.s32 %s102, 1
    %p106 = scmp.eq.s32.totalorder %s26, 1
    %p107 = scmp.ne.s32.totalorder %s102, %s104
    %p108 = scmp.eq.s32.totalorder %s26, 0
    %p109 = por %p107, %p108
    %p110 = scmp.ne.s32.totalorder %s102, %s104
    %p111 = scmp.eq.s32.totalorder %s31, 1
    %p112 = por %p110, %p111
    %p113 = scmp.ne.s32.totalorder %s104, %s105
    %p114 = scmp.eq.s32.totalorder %s31, 0
    %p115 = por %p113, %p114
    %p116 = scmp.ne.s32.totalorder %s104, %s105
    %p117 = scmp.eq.s32.totalorder %s32, 1
    %p118 = por %p116, %p117
    %p120 = scmp.ne.s32.totalorder %s105, %s119
    %p121 = scmp.eq.s32.totalorder %s32, 0
    %p122 = por %p120, %p121
    %s124 = sadd.s32 %s123, 1
    %p127 = scmp.eq.s32.totalorder %s26, 1
    %p128 = scmp.ne.s32.totalorder %s123, %s125
    %p129 = scmp.eq.s32.totalorder %s26, 0
    %p130 = por %p128, %p129
    %p131 = scmp.ne.s32.totalorder %s123, %s125
    %p132 = scmp.eq.s32.totalorder %s31, 1
    %p133 = por %p131, %p132
    %p134 = scmp.ne.s32.totalorder %s125, %s126
    %p135 = scmp.eq.s32.totalorder %s31, 0
    %p136 = por %p134, %p135
    %p137 = scmp.ne.s32.totalorder %s125, %s126
    %p138 = scmp.eq.s32.totalorder %s32, 1
    %p139 = por %p137, %p138
    %p141 = scmp.ne.s32.totalorder %s126, %s140
    %p142 = scmp.eq.s32.totalorder %s32, 0
    %p143 = por %p141, %p142
    %s145 = sadd.s32 %s144, 1
    %p148 = scmp.eq.s32.totalorder %s26, 1
    %p149 = scmp.ne.s32.totalorder %s144, %s146
    %p150 = scmp.eq.s32.totalorder %s26, 0
    %p151 = por %p149, %p150
    %p152 = scmp.ne.s32.totalorder %s144, %s146
    %p153 = scmp.eq.s32.totalorder %s31, 1
    %p154 = por %p152, %p153
    %p155 = scmp.ne.s32.totalorder %s146, %s147
    %p156 = scmp.eq.s32.totalorder %s31, 0
    %p157 = por %p155, %p156
    %p158 = scmp.ne.s32.totalorder %s146, %s147
    %p159 = scmp.eq.s32.totalorder %s32, 1
    %p160 = por %p158, %p159
    %p162 = scmp.ne.s32.totalorder %s147, %s161
    %p163 = scmp.eq.s32.totalorder %s32, 0
    %p164 = por %p162, %p163
    %s166 = sadd.s32 %s165, 1
    %p169 = scmp.eq.s32.totalorder %s26, 1
    %p170 = scmp.ne.s32.totalorder %s165, %s167
    %p171 = scmp.eq.s32.totalorder %s26, 0
    %p172 = por %p170, %p171
    %p173 = scmp.ne.s32.totalorder %s165, %s167
    %p174 = scmp.eq.s32.totalorder %s31, 1
    %p175 = por %p173, %p174
    %p176 = scmp.ne.s32.totalorder %s167, %s168
    %p177 = scmp.eq.s32.totalorder %s31, 0
    %p178 = por %p176, %p177
    %p179 = scmp.ne.s32.totalorder %s167, %s168
    %p180 = scmp.eq.s32.totalorder %s32, 1
    %p181 = por %p179, %p180
    %p183 = scmp.ne.s32.totalorder %s168, %s182
    %p184 = scmp.eq.s32.totalorder %s32, 0
    %p185 = por %p183, %p184
    %s187 = sadd.s32 %s186, 1
    %p190 = scmp.eq.s32.totalorder %s26, 1
    %p191 = scmp.ne.s32.totalorder %s186, %s188
    %p192 = scmp.eq.s32.totalorder %s26, 0
    %p193 = por %p191, %p192
    %p194 = scmp.ne.s32.totalorder %s186, %s188
    %p195 = scmp.eq.s32.totalorder %s31, 1
    %p196 = por %p194, %p195
    %p197 = scmp.ne.s32.totalorder %s188, %s189
    %p198 = scmp.eq.s32.totalorder %s31, 0
    %p199 = por %p197, %p198
    %p200 = scmp.ne.s32.totalorder %s188, %s189
    %p201 = scmp.eq.s32.totalorder %s32, 1
    %p202 = por %p200, %p201
    %p204 = scmp.ne.s32.totalorder %s189, %s203
    %p205 = scmp.eq.s32.totalorder %s32, 0
    %p206 = por %p204, %p205
    %s208 = sadd.s32 %s207, 1
    %p211 = scmp.eq.s32.totalorder %s26, 1
    %p212 = scmp.ne.s32.totalorder %s207, %s209
    %p213 = scmp.eq.s32.totalorder %s26, 0
    %p214 = por %p212, %p213
    %p215 = scmp.ne.s32.totalorder %s207, %s209
    %p216 = scmp.eq.s32.totalorder %s31, 1
    %p217 = por %p215, %p216
    %p218 = scmp.ne.s32.totalorder %s209, %s210
    %p219 = scmp.eq.s32.totalorder %s31, 0
    %p220 = por %p218, %p219
    %p221 = scmp.ne.s32.totalorder %s209, %s210
    %p222 = scmp.eq.s32.totalorder %s32, 1
    %p223 = por %p221, %p222
    %p225 = scmp.ne.s32.totalorder %s210, %s224
    %p226 = scmp.eq.s32.totalorder %s32, 0
    %p227 = por %p225, %p226
    %s229 = sadd.s32 %s228, 1
    %p232 = scmp.eq.s32.totalorder %s26, 1
    %p233 = scmp.ne.s32.totalorder %s228, %s230
    %p234 = scmp.eq.s32.totalorder %s26, 0
    %p235 = por %p233, %p234
    %p236 = scmp.ne.s32.totalorder %s228, %s230
    %p237 = scmp.eq.s32.totalorder %s31, 1
    %p238 = por %p236, %p237
    %p239 = scmp.ne.s32.totalorder %s230, %s231
    %p240 = scmp.eq.s32.totalorder %s31, 0
    %p241 = por %p239, %p240
    %p242 = scmp.ne.s32.totalorder %s230, %s231
    %p243 = scmp.eq.s32.totalorder %s32, 1
    %p244 = por %p242, %p243
    %p246 = scmp.ne.s32.totalorder %s231, %s245
    %p247 = scmp.eq.s32.totalorder %s32, 0
    %p248 = por %p246, %p247
    %s250 = sadd.s32 %s249, 1
    %p253 = scmp.eq.s32.totalorder %s26, 1
    %p254 = scmp.ne.s32.totalorder %s249, %s251
    %p255 = scmp.eq.s32.totalorder %s26, 0
    %p256 = por %p254, %p255
    %p257 = scmp.ne.s32.totalorder %s249, %s251
    %p258 = scmp.eq.s32.totalorder %s31, 1
    %p259 = por %p257, %p258
    %p260 = scmp.ne.s32.totalorder %s251, %s252
    %p261 = scmp.eq.s32.totalorder %s31, 0
    %p262 = por %p260, %p261
    %p263 = scmp.ne.s32.totalorder %s251, %s252
    %p264 = scmp.eq.s32.totalorder %s32, 1
    %p265 = por %p263, %p264
    %p267 = scmp.ne.s32.totalorder %s252, %s266
    %p268 = scmp.eq.s32.totalorder %s32, 0
    %p269 = por %p267, %p268
    %s271 = sadd.s32 %s270, 1
    %p274 = scmp.eq.s32.totalorder %s26, 1
    %p275 = scmp.ne.s32.totalorder %s270, %s272
    %p276 = scmp.eq.s32.totalorder %s26, 0
    %p277 = por %p275, %p276
    %p278 = scmp.ne.s32.totalorder %s270, %s272
    %p279 = scmp.eq.s32.totalorder %s31, 1
    %p280 = por %p278, %p279
    %p281 = scmp.ne.s32.totalorder %s272, %s273
    %p282 = scmp.eq.s32.totalorder %s31, 0
    %p283 = por %p281, %p282
    %p284 = scmp.ne.s32.totalorder %s272, %s273
    %p285 = scmp.eq.s32.totalorder %s32, 1
    %p286 = por %p284, %p285
    %p288 = scmp.ne.s32.totalorder %s273, %s287
    %p289 = scmp.eq.s32.totalorder %s32, 0
    %p290 = por %p288, %p289
    %s292 = sadd.s32 %s291, 1
    %p295 = scmp.eq.s32.totalorder %s26, 1
    %p296 = scmp.ne.s32.totalorder %s291, %s293
    %p297 = scmp.eq.s32.totalorder %s26, 0
    %p298 = por %p296, %p297
    %p299 = scmp.ne.s32.totalorder %s291, %s293
    %p300 = scmp.eq.s32.totalorder %s31, 1
    %p301 = por %p299, %p300
    %p302 = scmp.ne.s32.totalorder %s293, %s294
    %p303 = scmp.eq.s32.totalorder %s31, 0
    %p304 = por %p302, %p303
    %p305 = scmp.ne.s32.totalorder %s293, %s294
    %p306 = scmp.eq.s32.totalorder %s32, 1
    %p307 = por %p305, %p306
    %p309 = scmp.ne.s32.totalorder %s294, %s308
    %p310 = scmp.eq.s32.totalorder %s32, 0
    %p311 = por %p309, %p310
    %s313 = sadd.s32 %s312, 1
    %p316 = scmp.eq.s32.totalorder %s26, 1
    %p317 = scmp.ne.s32.totalorder %s312, %s314
    %p318 = scmp.eq.s32.totalorder %s26, 0
    %p319 = por %p317, %p318
    %p320 = scmp.ne.s32.totalorder %s312, %s314
    %p321 = scmp.eq.s32.totalorder %s31, 1
    %p322 = por %p320, %p321
    %p323 = scmp.ne.s32.totalorder %s314, %s315
    %p324 = scmp.eq.s32.totalorder %s31, 0
    %p325 = por %p323, %p324
    %p326 = scmp.ne.s32.totalorder %s314, %s315
    %p327 = scmp.eq.s32.totalorder %s32, 1
    %p328 = por %p326, %p327
    %p330 = scmp.ne.s32.totalorder %s315, %s329
    %p331 = scmp.eq.s32.totalorder %s32, 0
    %p332 = por %p330, %p331
    %s334 = sadd.s32 %s333, 1
    %p337 = scmp.eq.s32.totalorder %s26, 1
    %p338 = scmp.ne.s32.totalorder %s333, %s335
    %p339 = scmp.eq.s32.totalorder %s26, 0
    %p340 = por %p338, %p339
    %p341 = scmp.ne.s32.totalorder %s333, %s335
    %p342 = scmp.eq.s32.totalorder %s31, 1
    %p343 = por %p341, %p342
    %p344 = scmp.ne.s32.totalorder %s335, %s336
    %p345 = scmp.eq.s32.totalorder %s31, 0
    %p346 = por %p344, %p345
    %p347 = scmp.ne.s32.totalorder %s335, %s336
    %p348 = scmp.eq.s32.totalorder %s32, 1
    %p349 = por %p347, %p348
    %p351 = scmp.ne.s32.totalorder %s336, %s350
    %p352 = scmp.eq.s32.totalorder %s32, 0
    %p353 = por %p351, %p352
    %s355 = sadd.s32 %s354, 1
    %p358 = scmp.eq.s32.totalorder %s26, 1
    %p359 = scmp.ne.s32.totalorder %s354, %s356
    %p360 = scmp.eq.s32.totalorder %s26, 0
    %p361 = por %p359, %p360
    %p362 = scmp.ne.s32.totalorder %s354, %s356
    %p363 = scmp.eq.s32.totalorder %s31, 1
    %p364 = por %p362, %p363
    %p365 = scmp.ne.s32.totalorder %s356, %s357
    %p366 = scmp.eq.s32.totalorder %s31, 0
    %p367 = por %p365, %p366
    %p368 = scmp.ne.s32.totalorder %s356, %s357
    %p369 = scmp.eq.s32.totalorder %s32, 1
    %p370 = por %p368, %p369
    %p372 = scmp.ne.s32.totalorder %s357, %s371
    %p373 = scmp.eq.s32.totalorder %s32, 0
    %p374 = por %p372, %p373
    %s375 = ssub.s32 %s26, %s33
    %p376 = scmp.eq.s32.totalorder %s375, 0
    %s378 = sadd.s32 %s377, 1
    %s379 = scalar_select %p376, %s377, %s378
    %p382 = pneg %p376
    %p383 = scmp.eq.s32.totalorder %s26, 1
    %p384 = por %p382, %p383
    %p385 = scmp.ne.s32.totalorder %s377, %s380
    %p386 = scmp.eq.s32.totalorder %s26, 0
    %p387 = por %p385, %p386
    %p388 = scmp.ne.s32.totalorder %s377, %s380
    %p389 = scmp.eq.s32.totalorder %s31, 1
    %p390 = por %p388, %p389
    %p391 = scmp.ne.s32.totalorder %s380, %s381
    %p392 = scmp.eq.s32.totalorder %s31, 0
    %p393 = por %p391, %p392
    %p394 = scmp.ne.s32.totalorder %s380, %s381
    %p395 = scmp.eq.s32.totalorder %s32, 1
    %p396 = por %p394, %p395
    %p398 = scmp.ne.s32.totalorder %s381, %s397
    %p399 = scmp.eq.s32.totalorder %s32, 0
    %p400 = por %p398, %p399
    %s401 = ssub.s32 %s26, %s33
    %p402 = scmp.eq.s32.totalorder %s401, 0
    %s404 = sadd.s32 %s403, 1
    %s405 = scalar_select %p402, %s403, %s404
    %p408 = pneg %p402
    %p409 = scmp.eq.s32.totalorder %s26, 1
    %p410 = por %p408, %p409
    %p411 = scmp.ne.s32.totalorder %s403, %s406
    %p412 = scmp.eq.s32.totalorder %s26, 0
    %p413 = por %p411, %p412
    %p414 = scmp.ne.s32.totalorder %s403, %s406
    %p415 = scmp.eq.s32.totalorder %s31, 1
    %p416 = por %p414, %p415
    %p417 = scmp.ne.s32.totalorder %s406, %s407
    %p418 = scmp.eq.s32.totalorder %s31, 0
    %p419 = por %p417, %p418
    %p420 = scmp.ne.s32.totalorder %s406, %s407
    %p421 = scmp.eq.s32.totalorder %s32, 1
    %p422 = por %p420, %p421
    %p424 = scmp.ne.s32.totalorder %s407, %s423
    %p425 = scmp.eq.s32.totalorder %s32, 0
    %p426 = por %p424, %p425
    %s427 = ssub.s32 %s26, %s33
    %p428 = scmp.eq.s32.totalorder %s427, 0
    %s430 = sadd.s32 %s429, 1
    %s431 = scalar_select %p428, %s429, %s430
    %p434 = pneg %p428
    %p435 = scmp.eq.s32.totalorder %s26, 1
    %p436 = por %p434, %p435
    %p437 = scmp.ne.s32.totalorder %s429, %s432
    %p438 = scmp.eq.s32.totalorder %s26, 0
    %p439 = por %p437, %p438
    %p440 = scmp.ne.s32.totalorder %s429, %s432
    %p441 = scmp.eq.s32.totalorder %s31, 1
    %p442 = por %p440, %p441
    %p443 = scmp.ne.s32.totalorder %s432, %s433
    %p444 = scmp.eq.s32.totalorder %s31, 0
    %p445 = por %p443, %p444
    %p446 = scmp.ne.s32.totalorder %s432, %s433
    %p447 = scmp.eq.s32.totalorder %s32, 1
    %p448 = por %p446, %p447
    %p450 = scmp.ne.s32.totalorder %s433, %s449
    %p451 = scmp.eq.s32.totalorder %s32, 0
    %p452 = por %p450, %p451
    %s453 = ssub.s32 %s26, %s33
    %p454 = scmp.eq.s32.totalorder %s453, 0
    %s456 = sadd.s32 %s455, 1
    %s457 = scalar_select %p454, %s455, %s456
    %p460 = pneg %p454
    %p461 = scmp.eq.s32.totalorder %s26, 1
    %p462 = por %p460, %p461
    %p463 = scmp.ne.s32.totalorder %s455, %s458
    %p464 = scmp.eq.s32.totalorder %s26, 0
    %p465 = por %p463, %p464
    %p466 = scmp.ne.s32.totalorder %s455, %s458
    %p467 = scmp.eq.s32.totalorder %s31, 1
    %p468 = por %p466, %p467
    %p469 = scmp.ne.s32.totalorder %s458, %s459
    %p470 = scmp.eq.s32.totalorder %s31, 0
    %p471 = por %p469, %p470
    %p472 = scmp.ne.s32.totalorder %s458, %s459
    %p473 = scmp.eq.s32.totalorder %s32, 1
    %p474 = por %p472, %p473
    %p476 = scmp.ne.s32.totalorder %s459, %s475
    %p477 = scmp.eq.s32.totalorder %s32, 0
    %p478 = por %p476, %p477
    %p479 = scmp.le.s32.totalorder 1, %s26
    %p480 = scmp.lt.s32.totalorder %s26, 3
    %p481 = pnand %p479, %p480
    %p482 = pneg %p481
    // Predicated region
    $region9: #{w2vbert_forward.10} parent=5 // pred_check
      _
    $region10: #{w2vbert_forward.10} parent=5 // pred_check_branch
      %484 = sbr.rel (%p481) target = $region12
    $region11: #{w2vbert_forward.10} parent=5 // pred_region
      %s485 = ssub.s32 %s26, 1
      // Predicated region
      $region13: #{w2vbert_forward.10} parent=11 // pred_check
        %p486 = pneg %p73
      $region14: #{w2vbert_forward.10} parent=11 // pred_check_branch
        %488 = sbr.rel (%p486) target = $region16
      $region15: #{w2vbert_forward.10} parent=11 // pred_region
        _
      $region16: #{w2vbert_forward.10} parent=11 // pred_fallthru
        _
      // Predicated region
      $region17: #{w2vbert_forward.10} parent=11 // pred_check
        %p489 = pneg %p94
      $region18: #{w2vbert_forward.10} parent=11 // pred_check_branch
        %491 = sbr.rel (%p489) target = $region20
      $region19: #{w2vbert_forward.10} parent=11 // pred_region
        _
      $region20: #{w2vbert_forward.10} parent=11 // pred_fallthru
        _
      // Predicated region
      $region21: #{w2vbert_forward.10} parent=11 // pred_check
        %p492 = pneg %p115
      $region22: #{w2vbert_forward.10} parent=11 // pred_check_branch
        %494 = sbr.rel (%p492) target = $region24
      $region23: #{w2vbert_forward.10} parent=11 // pred_region
        _
      $region24: #{w2vbert_forward.10} parent=11 // pred_fallthru
        _
      // Predicated region
      $region25: #{w2vbert_forward.10} parent=11 // pred_check
        %p495 = pneg %p136
      $region26: #{w2vbert_forward.10} parent=11 // pred_check_branch
        %497 = sbr.rel (%p495) target = $region28
      $region27: #{w2vbert_forward.10} parent=11 // pred_region
        _
      $region28: #{w2vbert_forward.10} parent=11 // pred_fallthru
        _
      // Predicated region
      $region29: #{w2vbert_forward.10} parent=11 // pred_check
        %p498 = pneg %p157
      $region30: #{w2vbert_forward.10} parent=11 // pred_check_branch
        %500 = sbr.rel (%p498) target = $region32
      $region31: #{w2vbert_forward.10} parent=11 // pred_region
        _
      $region32: #{w2vbert_forward.10} parent=11 // pred_fallthru
        _
      // Predicated region
      $region33: #{w2vbert_forward.10} parent=11 // pred_check
        %p501 = pneg %p178
      $region34: #{w2vbert_forward.10} parent=11 // pred_check_branch
        %503 = sbr.rel (%p501) target = $region36
      $region35: #{w2vbert_forward.10} parent=11 // pred_region
        _
      $region36: #{w2vbert_forward.10} parent=11 // pred_fallthru
        _
      // Predicated region
      $region37: #{w2vbert_forward.10} parent=11 // pred_check
        %p504 = pneg %p199
      $region38: #{w2vbert_forward.10} parent=11 // pred_check_branch
        %506 = sbr.rel (%p504) target = $region40
      $region39: #{w2vbert_forward.10} parent=11 // pred_region
        _
      $region40: #{w2vbert_forward.10} parent=11 // pred_fallthru
        _
      // Predicated region
      $region41: #{w2vbert_forward.10} parent=11 // pred_check
        %p507 = pneg %p220
      $region42: #{w2vbert_forward.10} parent=11 // pred_check_branch
        %509 = sbr.rel (%p507) target = $region44
      $region43: #{w2vbert_forward.10} parent=11 // pred_region
        _
      $region44: #{w2vbert_forward.10} parent=11 // pred_fallthru
        _
      // Predicated region
      $region45: #{w2vbert_forward.10} parent=11 // pred_check
        %p510 = pneg %p241
      $region46: #{w2vbert_forward.10} parent=11 // pred_check_branch
        %512 = sbr.rel (%p510) target = $region48
      $region47: #{w2vbert_forward.10} parent=11 // pred_region
        _
      $region48: #{w2vbert_forward.10} parent=11 // pred_fallthru
        _
      // Predicated region
      $region49: #{w2vbert_forward.10} parent=11 // pred_check
        %p513 = pneg %p262
      $region50: #{w2vbert_forward.10} parent=11 // pred_check_branch
        %515 = sbr.rel (%p513) target = $region52
      $region51: #{w2vbert_forward.10} parent=11 // pred_region
        _
      $region52: #{w2vbert_forward.10} parent=11 // pred_fallthru
        _
      // Predicated region
      $region53: #{w2vbert_forward.10} parent=11 // pred_check
        %p516 = pneg %p283
      $region54: #{w2vbert_forward.10} parent=11 // pred_check_branch
        %518 = sbr.rel (%p516) target = $region56
      $region55: #{w2vbert_forward.10} parent=11 // pred_region
        _
      $region56: #{w2vbert_forward.10} parent=11 // pred_fallthru
        _
      // Predicated region
      $region57: #{w2vbert_forward.10} parent=11 // pred_check
        %p519 = pneg %p304
      $region58: #{w2vbert_forward.10} parent=11 // pred_check_branch
        %521 = sbr.rel (%p519) target = $region60
      $region59: #{w2vbert_forward.10} parent=11 // pred_region
        _
      $region60: #{w2vbert_forward.10} parent=11 // pred_fallthru
        _
      // Predicated region
      $region61: #{w2vbert_forward.10} parent=11 // pred_check
        %p522 = pneg %p325
      $region62: #{w2vbert_forward.10} parent=11 // pred_check_branch
        %524 = sbr.rel (%p522) target = $region64
      $region63: #{w2vbert_forward.10} parent=11 // pred_region
        _
      $region64: #{w2vbert_forward.10} parent=11 // pred_fallthru
        _
      // Predicated region
      $region65: #{w2vbert_forward.10} parent=11 // pred_check
        %p525 = pneg %p346
      $region66: #{w2vbert_forward.10} parent=11 // pred_check_branch
        %527 = sbr.rel (%p525) target = $region68
      $region67: #{w2vbert_forward.10} parent=11 // pred_region
        _
      $region68: #{w2vbert_forward.10} parent=11 // pred_fallthru
        _
      // Predicated region
      $region69: #{w2vbert_forward.10} parent=11 // pred_check
        %p528 = pneg %p367
      $region70: #{w2vbert_forward.10} parent=11 // pred_check_branch
        %530 = sbr.rel (%p528) target = $region72
      $region71: #{w2vbert_forward.10} parent=11 // pred_region
        _
      $region72: #{w2vbert_forward.10} parent=11 // pred_fallthru
        _
    $region12: #{w2vbert_forward.10} parent=5 // pred_fallthru
      _
    %p531 = scmp.lt.s32.totalorder %s26, 2
    // Predicated region
    $region73: #{w2vbert_forward.10} parent=5 // pred_check
      %p532 = pneg %p531
    $region74: #{w2vbert_forward.10} parent=5 // pred_check_branch
      %534 = sbr.rel (%p532) target = $region76
    $region75: #{w2vbert_forward.10} parent=5 // pred_region
      // Predicated region
      $region77: #{w2vbert_forward.10} parent=75 // pred_check
        %p535 = pneg %p46
      $region78: #{w2vbert_forward.10} parent=75 // pred_check_branch
        %537 = sbr.rel (%p535) target = $region80
      $region79: #{w2vbert_forward.10} parent=75 // pred_region
        %p538 = scmp.lt.s32.totalorder %s26, 1
        %s539 = scalar_select %p538, %s26, 1
        %s540 = smul.addr %s539, 8
        %s541 = scalar_lea.vmem %s0, %s540
      $region80: #{w2vbert_forward.10} parent=75 // pred_fallthru
        _
    $region76: #{w2vbert_forward.10} parent=5 // pred_fallthru
      _
    %p542 = scmp.le.s32.totalorder 1, %s26
    %p543 = scmp.lt.s32.totalorder %s26, 3
    %p544 = pnand %p542, %p543
    %p545 = pneg %p544
    // Predicated region
    $region81: #{w2vbert_forward.10} parent=5 // pred_check
      _
    $region82: #{w2vbert_forward.10} parent=5 // pred_check_branch
      %547 = sbr.rel (%p544) target = $region84
    $region83: #{w2vbert_forward.10} parent=5 // pred_region
      %s548 = ssub.s32 %s26, 1
      %p549 = scmp.lt.s32.totalorder %s31, 1
      %s550 = scalar_select %p549, %s31, 1
      %s551 = smul.addr %s550, 8
      %s552 = scalar_lea.vmem %s0, %s551
      %p553 = pneg %p52
      %p554 = pneg %p49
      %p555 = pneg %p73
      %p556 = pneg %p70
      %p557 = pneg %p94
      %p558 = pneg %p91
      %p559 = pneg %p115
      %p560 = pneg %p112
      %p561 = pneg %p136
      %p562 = pneg %p133
      %p563 = pneg %p157
      %p564 = pneg %p154
      %p565 = pneg %p178
      %p566 = pneg %p175
      %p567 = pneg %p199
      %p568 = pneg %p196
      %p569 = pneg %p220
      %p570 = pneg %p217
      %p571 = pneg %p241
      %p572 = pneg %p238
      %p573 = pneg %p262
      %p574 = pneg %p259
      %p575 = pneg %p283
      %p576 = pneg %p280
      %p577 = pneg %p304
      %p578 = pneg %p301
      %p579 = pneg %p325
      %p580 = pneg %p322
      %p581 = pneg %p346
      %p582 = pneg %p343
      %p583 = pneg %p367
      %p584 = pneg %p364
      %p585 = pneg %p393
      %p586 = pneg %p390
      %p587 = scmp.lt.s32.totalorder %s31, 1
      %s588 = scalar_select %p587, %s31, 1
      %s589 = smul.addr %s588, 8
      %s590 = scalar_lea.vmem %s16, %s589
      %p591 = pneg %p419
      %p592 = pneg %p416
      %p593 = scmp.lt.s32.totalorder %s31, 1
      %s594 = scalar_select %p593, %s31, 1
      %s595 = smul.addr %s594, 2
      %s596 = smul.addr %s595, 4
      %s597 = scalar_lea.vmem %s17, %s596
      %p598 = pneg %p445
      %p599 = pneg %p442
      %p600 = scmp.lt.s32.totalorder %s31, 1
      %s601 = scalar_select %p600, %s31, 1
      %s602 = smul.addr %s601, 2
      %s603 = scalar_lea.vmem %s18, %s602
      %p604 = pneg %p471
      %p605 = pneg %p468
      %p606 = scmp.lt.s32.totalorder %s31, 1
      %s607 = scalar_select %p606, %s31, 1
      %s608 = smul.addr %s607, 2
      %s609 = scalar_lea.vmem %s19, %s608
      %p610 = scmp.lt.s32.totalorder %s31, 1
      %s611 = scalar_select %p610, %s31, 1
      %s612 = smul.addr %s611, 8
      %s613 = scalar_lea.vmem %s0, %s612
      %p614 = scmp.lt.s32.totalorder %s31, 1
      %s615 = scalar_select %p614, %s31, 1
      %s616 = smul.addr %s615, 8
      %s617 = scalar_lea.vmem %s16, %s616
      %p618 = scmp.lt.s32.totalorder %s31, 1
      %s619 = scalar_select %p618, %s31, 1
      %s620 = smul.addr %s619, 2
      %s621 = smul.addr %s620, 4
      %s622 = scalar_lea.vmem %s17, %s621
      %p623 = scmp.lt.s32.totalorder %s31, 1
      %s624 = scalar_select %p623, %s31, 1
      %s625 = smul.addr %s624, 2
      %s626 = scalar_lea.vmem %s18, %s625
      %p627 = scmp.lt.s32.totalorder %s31, 1
      %s628 = scalar_select %p627, %s31, 1
      %s629 = smul.addr %s628, 2
      %s630 = scalar_lea.vmem %s19, %s629
      %v632 = vld [vmem:[%s613] sm:$0xff]
      %v633 = vld [vmem:[%s2] sm:$0x1]
      %v634 = vld [vmem:[%s3] sm:$0x1]
      %635 = vadd.xlane.f32.xlu0 %v632
      %v636 = vpop.xlane.xlu0 %635
      %v637 = vrcp.pop 128.0
      %v638 = vmul.f32 %v636, %v637
      %v639 = vsub.f32 %v632, %v638
      %v640 = vmul.f32 %v639, %v639
      %641 = vadd.xlane.f32.xlu0 %v640
      %v642 = vpop.xlane.xlu0 %641
      %v643 = vmul.f32 %v642, %v637
      %v644 = vadd.f32 %v643, 1e-05
      %v645 = vrsqrt.pop %v644
      %v646 = vmul.f32 %v639, %v645
      %v648 = vlaneseq
      %v649 = vshrl.u32 %v648, 7
      %v650 = vsub.s32 0, %v649
      %v651 = vrot.slane %v633, %v650
      %v653 = vmul.f32 %v646, %v651
      %v655 = vlaneseq
      %v656 = vshrl.u32 %v655, 7
      %v657 = vsub.s32 0, %v656
      %v658 = vrot.slane %v634, %v657
      %v660 = vadd.f32 %v653, %v658
      %v661 = vpack.c.bf16 %v660, %v660
      %v662 = vld [vmem:[%s4] sm:$0xff]
      %v663 = vld [vmem:[%s4 + $0x8] sm:$0xff]
      %v664 = vld [vmem:[%s4 + $0x10] sm:$0xff]
      %v665 = vld [vmem:[%s4 + $0x18] sm:$0xff]
      %v666 = vld [vmem:[%s4 + $0x20] sm:$0xff]
      %v667 = vld [vmem:[%s4 + $0x28] sm:$0xff]
      %v668 = vld [vmem:[%s4 + $0x30] sm:$0xff]
      %v669 = vld [vmem:[%s4 + $0x38] sm:$0xff]
      %v670 = vld [vmem:[%s4 + $0x40] sm:$0xff]
      %v671 = vld [vmem:[%s4 + $0x48] sm:$0xff]
      %v672 = vld [vmem:[%s4 + $0x50] sm:$0xff]
      %v673 = vld [vmem:[%s4 + $0x58] sm:$0xff]
      %v674 = vld [vmem:[%s4 + $0x60] sm:$0xff]
      %v675 = vld [vmem:[%s4 + $0x68] sm:$0xff]
      %v676 = vld [vmem:[%s4 + $0x70] sm:$0xff]
      %v677 = vld [vmem:[%s4 + $0x78] sm:$0xff]
      %v678 = vld [vmem:[%s5] sm:$0x3]
      %v680 = vlaneseq
      %v681 = vshrl.u32 %v680, 7
      %v682 = vsub.s32 0, %v681
      %v683 = vrot.slane %v678, %v682
      %v684 = vlaneseq
      %v685 = vshrl.u32 %v684, 7
      %v686 = vsub.s32 1, %v685
      %v687 = vrot.slane %v678, %v686
      %v706 = vunpack.c.l.b16 %v662
      %v707 = vunpack.c.h.b16 %v662
      %v708 = vunpack.c.l.b16 %v663
      %v709 = vunpack.c.h.b16 %v663
      %v710 = vunpack.c.l.b16 %v664
      %v711 = vunpack.c.h.b16 %v664
      %v712 = vunpack.c.l.b16 %v665
      %v713 = vunpack.c.h.b16 %v665
      %v714 = vunpack.c.l.b16 %v666
      %v715 = vunpack.c.h.b16 %v666
      %v716 = vunpack.c.l.b16 %v667
      %v717 = vunpack.c.h.b16 %v667
      %v718 = vunpack.c.l.b16 %v668
      %v719 = vunpack.c.h.b16 %v668
      %v720 = vunpack.c.l.b16 %v669
      %v721 = vunpack.c.h.b16 %v669
      %v722 = vunpack.c.l.b16 %v670
      %v723 = vunpack.c.h.b16 %v670
      %v724 = vunpack.c.l.b16 %v671
      %v725 = vunpack.c.h.b16 %v671
      %v726 = vunpack.c.l.b16 %v672
      %v727 = vunpack.c.h.b16 %v672
      %v728 = vunpack.c.l.b16 %v673
      %v729 = vunpack.c.h.b16 %v673
      %v730 = vunpack.c.l.b16 %v674
      %v731 = vunpack.c.h.b16 %v674
      %v732 = vunpack.c.l.b16 %v675
      %v733 = vunpack.c.h.b16 %v675
      %v734 = vunpack.c.l.b16 %v676
      %v735 = vunpack.c.h.b16 %v676
      %v736 = vunpack.c.l.b16 %v677
      %v737 = vunpack.c.h.b16 %v677
      %v738 = vpack.c.b16 %v708, %v706
      %v739 = vpack.c.b16 %v709, %v707
      %v740 = vpack.c.b16 %v712, %v710
      %v741 = vpack.c.b16 %v713, %v711
      %v742 = vpack.c.b16 %v716, %v714
      %v743 = vpack.c.b16 %v717, %v715
      %v744 = vpack.c.b16 %v720, %v718
      %v745 = vpack.c.b16 %v721, %v719
      %v746 = vpack.c.b16 %v724, %v722
      %v747 = vpack.c.b16 %v725, %v723
      %v748 = vpack.c.b16 %v728, %v726
      %v749 = vpack.c.b16 %v729, %v727
      %v750 = vpack.c.b16 %v732, %v730
      %v751 = vpack.c.b16 %v733, %v731
      %v752 = vpack.c.b16 %v736, %v734
      %v753 = vpack.c.b16 %v737, %v735
      %770 = vmatprep.subr.bf16.mxu0 %v753
      %771 = vmatpush1.bf16.msra.mxu0 %v752
      %772 = vmatprep.subr.bf16.mxu0 %v751
      %773 = vmatpush1.bf16.msra.mxu0 %v750
      %774 = vmatprep.subr.bf16.mxu0 %v749
      %775 = vmatpush1.bf16.msra.mxu0 %v748
      %776 = vmatprep.subr.bf16.mxu0 %v747
      %777 = vmatpush1.bf16.msra.mxu0 %v746
      %778 = vmatprep.subr.bf16.mxu0 %v745
      %779 = vmatpush1.bf16.msra.mxu0 %v744
      %780 = vmatprep.subr.bf16.mxu0 %v743
      %781 = vmatpush1.bf16.msra.mxu0 %v742
      %782 = vmatprep.subr.bf16.mxu0 %v741
      %783 = vmatpush1.bf16.msra.mxu0 %v740
      %784 = vmatprep.subr.bf16.mxu0 %v739
      %785 = vmatpush1.bf16.msra.mxu0 %v738
      %786 = vmatprep.subr.bf16.mxu0 0
      %787 = vmatpush2.bf16.msra.mxu0 0
      %788 = vmatprep.subr.bf16.mxu0 0
      %789 = vmatpush2.bf16.msra.mxu0 0
      %790 = vmatprep.subr.bf16.mxu0 0
      %791 = vmatpush2.bf16.msra.mxu0 0
      %792 = vmatprep.subr.bf16.mxu0 0
      %793 = vmatpush2.bf16.msra.mxu0 0
      %794 = vmatprep.subr.bf16.mxu0 0
      %795 = vmatpush2.bf16.msra.mxu0 0
      %796 = vmatprep.subr.bf16.mxu0 0
      %797 = vmatpush2.bf16.msra.mxu0 0
      %798 = vmatprep.subr.bf16.mxu0 0
      %799 = vmatpush2.bf16.msra.mxu0 0
      %800 = vmatprep.subr.bf16.mxu0 0
      %801 = vmatpush2.bf16.msra.mxu0 0
      %802 = vmatprep.mubr.bf16.mxu0 0
      %803 = vmatmul.mubr.bf16.gmra.mxu0 %v661
      %v804 = vpop.f32.mrf.mxu0
      %v805 = vadd.f32 %v683, %v804
      %v806 = vpop.f32.mrf.mxu0
      %v807 = vadd.f32 %v687, %v806
      %v808 = vpop.f32.mrf.mxu0
      %v809 = vpop.f32.mrf.mxu0
      %810 = vdwg.mxu0
      %v811 = vmul.f32 %v805, 0.5
      %v812 = vmul.f32 %v807, 0.5
      %v813 = vmul.f32 %v805, 0.70710677
      %v814 = vmul.f32 %v807, 0.70710677
      %v815 = verf.f32.pop %v813
      %v816 = verf.f32.pop %v814
      %v817 = vadd.f32 %v815, 1.0
      %v818 = vadd.f32 %v816, 1.0
      %v819 = vmul.f32 %v811, %v817
      %v820 = vmul.f32 %v812, %v818
      %v821 = vpack.c.bf16 %v819, %v819
      %v822 = vpack.c.bf16 %v820, %v820
      %v823 = vld [vmem:[%s6] sm:$0xf]
      %v824 = vld [vmem:[%s6 + $0x4] sm:$0xf]
      %v825 = vld [vmem:[%s6 + $0x8] sm:$0xf]
      %v826 = vld [vmem:[%s6 + $0xc] sm:$0xf]
      %v827 = vld [vmem:[%s6 + $0x10] sm:$0xf]
      %v828 = vld [vmem:[%s6 + $0x14] sm:$0xf]
      %v829 = vld [vmem:[%s6 + $0x18] sm:$0xf]
      %v830 = vld [vmem:[%s6 + $0x1c] sm:$0xf]
      %v831 = vld [vmem:[%s6 + $0x20] sm:$0xf]
      %v832 = vld [vmem:[%s6 + $0x24] sm:$0xf]
      %v833 = vld [vmem:[%s6 + $0x28] sm:$0xf]
      %v834 = vld [vmem:[%s6 + $0x2c] sm:$0xf]
      %v835 = vld [vmem:[%s6 + $0x30] sm:$0xf]
      %v836 = vld [vmem:[%s6 + $0x34] sm:$0xf]
      %v837 = vld [vmem:[%s6 + $0x38] sm:$0xf]
      %v838 = vld [vmem:[%s6 + $0x3c] sm:$0xf]
      %v839 = vld [vmem:[%s6 + $0x40] sm:$0xf]
      %v840 = vld [vmem:[%s6 + $0x44] sm:$0xf]
      %v841 = vld [vmem:[%s6 + $0x48] sm:$0xf]
      %v842 = vld [vmem:[%s6 + $0x4c] sm:$0xf]
      %v843 = vld [vmem:[%s6 + $0x50] sm:$0xf]
      %v844 = vld [vmem:[%s6 + $0x54] sm:$0xf]
      %v845 = vld [vmem:[%s6 + $0x58] sm:$0xf]
      %v846 = vld [vmem:[%s6 + $0x5c] sm:$0xf]
      %v847 = vld [vmem:[%s6 + $0x60] sm:$0xf]
      %v848 = vld [vmem:[%s6 + $0x64] sm:$0xf]
      %v849 = vld [vmem:[%s6 + $0x68] sm:$0xf]
      %v850 = vld [vmem:[%s6 + $0x6c] sm:$0xf]
      %v851 = vld [vmem:[%s6 + $0x70] sm:$0xf]
      %v852 = vld [vmem:[%s6 + $0x74] sm:$0xf]
      %v853 = vld [vmem:[%s6 + $0x78] sm:$0xf]
      %v854 = vld [vmem:[%s6 + $0x7c] sm:$0xf]
      %v855 = vld [vmem:[%s7] sm:$0x1]
      %v857 = vlaneseq
      %v858 = vshrl.u32 %v857, 7
      %v859 = vsub.s32 0, %v858
      %v860 = vrot.slane %v855, %v859
      %v894 = vunpack.c.l.b16 %v823
      %v895 = vunpack.c.l.b16 %v824
      %v896 = vunpack.c.l.b16 %v825
      %v897 = vunpack.c.l.b16 %v826
      %v898 = vunpack.c.l.b16 %v827
      %v899 = vunpack.c.l.b16 %v828
      %v900 = vunpack.c.l.b16 %v829
      %v901 = vunpack.c.l.b16 %v830
      %v902 = vunpack.c.l.b16 %v831
      %v903 = vunpack.c.l.b16 %v832
      %v904 = vunpack.c.l.b16 %v833
      %v905 = vunpack.c.l.b16 %v834
      %v906 = vunpack.c.l.b16 %v835
      %v907 = vunpack.c.l.b16 %v836
      %v908 = vunpack.c.l.b16 %v837
      %v909 = vunpack.c.l.b16 %v838
      %v910 = vunpack.c.l.b16 %v839
      %v911 = vunpack.c.l.b16 %v840
      %v912 = vunpack.c.l.b16 %v841
      %v913 = vunpack.c.l.b16 %v842
      %v914 = vunpack.c.l.b16 %v843
      %v915 = vunpack.c.l.b16 %v844
      %v916 = vunpack.c.l.b16 %v845
      %v917 = vunpack.c.l.b16 %v846
      %v918 = vunpack.c.l.b16 %v847
      %v919 = vunpack.c.l.b16 %v848
      %v920 = vunpack.c.l.b16 %v849
      %v921 = vunpack.c.l.b16 %v850
      %v922 = vunpack.c.l.b16 %v851
      %v923 = vunpack.c.l.b16 %v852
      %v924 = vunpack.c.l.b16 %v853
      %v925 = vunpack.c.l.b16 %v854
      %v926 = vpack.c.b16 %v895, %v894
      %v927 = vpack.c.b16 %v897, %v896
      %v928 = vpack.c.b16 %v899, %v898
      %v929 = vpack.c.b16 %v901, %v900
      %v930 = vpack.c.b16 %v903, %v902
      %v931 = vpack.c.b16 %v905, %v904
      %v932 = vpack.c.b16 %v907, %v906
      %v933 = vpack.c.b16 %v909, %v908
      %v934 = vpack.c.b16 %v911, %v910
      %v935 = vpack.c.b16 %v913, %v912
      %v936 = vpack.c.b16 %v915, %v914
      %v937 = vpack.c.b16 %v917, %v916
      %v938 = vpack.c.b16 %v919, %v918
      %v939 = vpack.c.b16 %v921, %v920
      %v940 = vpack.c.b16 %v923, %v922
      %v941 = vpack.c.b16 %v925, %v924
      %958 = vmatprep.subr.bf16.mxu0 0
      %959 = vmatpush1.bf16.msra.mxu0 %v933
      %960 = vmatprep.subr.bf16.mxu0 0
      %961 = vmatpush1.bf16.msra.mxu0 %v932
      %962 = vmatprep.subr.bf16.mxu0 0
      %963 = vmatpush1.bf16.msra.mxu0 %v931
      %964 = vmatprep.subr.bf16.mxu0 0
      %965 = vmatpush1.bf16.msra.mxu0 %v930
      %966 = vmatprep.subr.bf16.mxu0 0
      %967 = vmatpush1.bf16.msra.mxu0 %v929
      %968 = vmatprep.subr.bf16.mxu0 0
      %969 = vmatpush1.bf16.msra.mxu0 %v928
      %970 = vmatprep.subr.bf16.mxu0 0
      %971 = vmatpush1.bf16.msra.mxu0 %v927
      %972 = vmatprep.subr.bf16.mxu0 0
      %973 = vmatpush1.bf16.msra.mxu0 %v926
      %974 = vmatprep.subr.bf16.mxu0 0
      %975 = vmatpush2.bf16.msra.mxu0 %v941
      %976 = vmatprep.subr.bf16.mxu0 0
      %977 = vmatpush2.bf16.msra.mxu0 %v940
      %978 = vmatprep.subr.bf16.mxu0 0
      %979 = vmatpush2.bf16.msra.mxu0 %v939
      %980 = vmatprep.subr.bf16.mxu0 0
      %981 = vmatpush2.bf16.msra.mxu0 %v938
      %982 = vmatprep.subr.bf16.mxu0 0
      %983 = vmatpush2.bf16.msra.mxu0 %v937
      %984 = vmatprep.subr.bf16.mxu0 0
      %985 = vmatpush2.bf16.msra.mxu0 %v936
      %986 = vmatprep.subr.bf16.mxu0 0
      %987 = vmatpush2.bf16.msra.mxu0 %v935
      %988 = vmatprep.subr.bf16.mxu0 0
      %989 = vmatpush2.bf16.msra.mxu0 %v934
      %990 = vmatprep.mubr.bf16.mxu0 %v822
      %991 = vmatmul.mubr.bf16.gmra.mxu0 %v821
      %v992 = vpop.f32.mrf.mxu0
      %v993 = vadd.f32 %v860, %v992
      %v994 = vpop.f32.mrf.mxu0
      %v995 = vpop.f32.mrf.mxu0
      %v996 = vpop.f32.mrf.mxu0
      %997 = vdwg.mxu0
      %v998 = vmul.f32 %v993, 0.5
      %v999 = vadd.f32 %v632, %v998
      %s1000 = scalar_lea.vmem %s2, 1
      %v1001 = vld [vmem:[%s1000] sm:$0x1]
      %s1002 = scalar_lea.vmem %s3, 1
      %v1003 = vld [vmem:[%s1002] sm:$0x1]
      %1004 = vadd.xlane.f32.xlu0 %v999
      %v1005 = vpop.xlane.xlu0 %1004
      %v1006 = vmul.f32 %v1005, %v637
      %v1007 = vsub.f32 %v999, %v1006
      %v1008 = vmul.f32 %v1007, %v1007
      %1009 = vadd.xlane.f32.xlu0 %v1008
      %v1010 = vpop.xlane.xlu0 %1009
      %v1011 = vmul.f32 %v1010, %v637
      %v1012 = vadd.f32 %v1011, 1e-05
      %v1013 = vrsqrt.pop %v1012
      %v1014 = vmul.f32 %v1007, %v1013
      %v1016 = vlaneseq
      %v1017 = vshrl.u32 %v1016, 7
      %v1018 = vsub.s32 0, %v1017
      %v1019 = vrot.slane %v1001, %v1018
      %v1021 = vmul.f32 %v1014, %v1019
      %v1023 = vlaneseq
      %v1024 = vshrl.u32 %v1023, 7
      %v1025 = vsub.s32 0, %v1024
      %v1026 = vrot.slane %v1003, %v1025
      %v1028 = vadd.f32 %v1021, %v1026
      %v1029 = vld [vmem:[%s1] sm:$0xff]
      %v1030 = vadd.f32 %v1028, %v1029
      %v1031 = vpack.c.bf16 %v1030, %v1030
      %v1032 = vld [vmem:[%s8] sm:$0xf]
      %v1033 = vld [vmem:[%s8 + $0x4] sm:$0xf]
      %v1034 = vld [vmem:[%s8 + $0x8] sm:$0xf]
      %v1035 = vld [vmem:[%s8 + $0xc] sm:$0xf]
      %v1036 = vld [vmem:[%s8 + $0x10] sm:$0xf]
      %v1037 = vld [vmem:[%s8 + $0x14] sm:$0xf]
      %v1038 = vld [vmem:[%s8 + $0x18] sm:$0xf]
      %v1039 = vld [vmem:[%s8 + $0x1c] sm:$0xf]
      %v1040 = vld [vmem:[%s8 + $0x20] sm:$0xf]
      %v1041 = vld [vmem:[%s8 + $0x24] sm:$0xf]
      %v1042 = vld [vmem:[%s8 + $0x28] sm:$0xf]
      %v1043 = vld [vmem:[%s8 + $0x2c] sm:$0xf]
      %v1044 = vld [vmem:[%s8 + $0x30] sm:$0xf]
      %v1045 = vld [vmem:[%s8 + $0x34] sm:$0xf]
      %v1046 = vld [vmem:[%s8 + $0x38] sm:$0xf]
      %v1047 = vld [vmem:[%s8 + $0x3c] sm:$0xf]
      %v1048 = vld [vmem:[%s9] sm:$0x1]
      %v1050 = vlaneseq
      %v1051 = vshrl.u32 %v1050, 7
      %v1052 = vsub.s32 0, %v1051
      %v1053 = vrot.slane %v1048, %v1052
      %v1071 = vunpack.c.l.b16 %v1032
      %v1072 = vunpack.c.l.b16 %v1033
      %v1073 = vunpack.c.l.b16 %v1034
      %v1074 = vunpack.c.l.b16 %v1035
      %v1075 = vunpack.c.l.b16 %v1036
      %v1076 = vunpack.c.l.b16 %v1037
      %v1077 = vunpack.c.l.b16 %v1038
      %v1078 = vunpack.c.l.b16 %v1039
      %v1079 = vunpack.c.l.b16 %v1040
      %v1080 = vunpack.c.l.b16 %v1041
      %v1081 = vunpack.c.l.b16 %v1042
      %v1082 = vunpack.c.l.b16 %v1043
      %v1083 = vunpack.c.l.b16 %v1044
      %v1084 = vunpack.c.l.b16 %v1045
      %v1085 = vunpack.c.l.b16 %v1046
      %v1086 = vunpack.c.l.b16 %v1047
      %v1087 = vpack.c.b16 %v1072, %v1071
      %v1088 = vpack.c.b16 %v1074, %v1073
      %v1089 = vpack.c.b16 %v1076, %v1075
      %v1090 = vpack.c.b16 %v1078, %v1077
      %v1091 = vpack.c.b16 %v1080, %v1079
      %v1092 = vpack.c.b16 %v1082, %v1081
      %v1093 = vpack.c.b16 %v1084, %v1083
      %v1094 = vpack.c.b16 %v1086, %v1085
      %1103 = vmatprep.subr.bf16.mxu0 0
      %1104 = vmatpush1.bf16.msra.mxu0 %v1094
      %1105 = vmatprep.subr.bf16.mxu0 0
      %1106 = vmatpush1.bf16.msra.mxu0 %v1093
      %1107 = vmatprep.subr.bf16.mxu0 0
      %1108 = vmatpush1.bf16.msra.mxu0 %v1092
      %1109 = vmatprep.subr.bf16.mxu0 0
      %1110 = vmatpush1.bf16.msra.mxu0 %v1091
      %1111 = vmatprep.subr.bf16.mxu0 0
      %1112 = vmatpush1.bf16.msra.mxu0 %v1090
      %1113 = vmatprep.subr.bf16.mxu0 0
      %1114 = vmatpush1.bf16.msra.mxu0 %v1089
      %1115 = vmatprep.subr.bf16.mxu0 0
      %1116 = vmatpush1.bf16.msra.mxu0 %v1088
      %1117 = vmatprep.subr.bf16.mxu0 0
      %1118 = vmatpush1.bf16.msra.mxu0 %v1087
      %1119 = vmatprep.subr.bf16.mxu0 0
      %1120 = vmatpush2.bf16.msra.mxu0 0
      %1121 = vmatprep.subr.bf16.mxu0 0
      %1122 = vmatpush2.bf16.msra.mxu0 0
      %1123 = vmatprep.subr.bf16.mxu0 0
      %1124 = vmatpush2.bf16.msra.mxu0 0
      %1125 = vmatprep.subr.bf16.mxu0 0
      %1126 = vmatpush2.bf16.msra.mxu0 0
      %1127 = vmatprep.subr.bf16.mxu0 0
      %1128 = vmatpush2.bf16.msra.mxu0 0
      %1129 = vmatprep.subr.bf16.mxu0 0
      %1130 = vmatpush2.bf16.msra.mxu0 0
      %1131 = vmatprep.subr.bf16.mxu0 0
      %1132 = vmatpush2.bf16.msra.mxu0 0
      %1133 = vmatprep.subr.bf16.mxu0 0
      %1134 = vmatpush2.bf16.msra.mxu0 0
      %1135 = vmatprep.mubr.bf16.mxu0 0
      %1136 = vmatmul.mubr.bf16.gmra.mxu0 %v1031
      %v1137 = vpop.f32.mrf.mxu0
      %v1138 = vadd.f32 %v1053, %v1137
      %v1139 = vpop.f32.mrf.mxu0
      %v1140 = vpop.f32.mrf.mxu0
      %v1141 = vpop.f32.mrf.mxu0
      %1142 = vdwg.mxu0
      %s1143 = scalar_lea.vmem %s8, 256
      %v1144 = vld [vmem:[%s1143] sm:$0xf]
      %v1145 = vld [vmem:[%s1143 + $0x4] sm:$0xf]
      %v1146 = vld [vmem:[%s1143 + $0x8] sm:$0xf]
      %v1147 = vld [vmem:[%s1143 + $0xc] sm:$0xf]
      %v1148 = vld [vmem:[%s1143 + $0x10] sm:$0xf]
      %v1149 = vld [vmem:[%s1143 + $0x14] sm:$0xf]
      %v1150 = vld [vmem:[%s1143 + $0x18] sm:$0xf]
      %v1151 = vld [vmem:[%s1143 + $0x1c] sm:$0xf]
      %v1152 = vld [vmem:[%s1143 + $0x20] sm:$0xf]
      %v1153 = vld [vmem:[%s1143 + $0x24] sm:$0xf]
      %v1154 = vld [vmem:[%s1143 + $0x28] sm:$0xf]
      %v1155 = vld [vmem:[%s1143 + $0x2c] sm:$0xf]
      %v1156 = vld [vmem:[%s1143 + $0x30] sm:$0xf]
      %v1157 = vld [vmem:[%s1143 + $0x34] sm:$0xf]
      %v1158 = vld [vmem:[%s1143 + $0x38] sm:$0xf]
      %v1159 = vld [vmem:[%s1143 + $0x3c] sm:$0xf]
      %s1160 = scalar_lea.vmem %s9, 4
      %v1161 = vld [vmem:[%s1160] sm:$0x1]
      %v1163 = vlaneseq
      %v1164 = vshrl.u32 %v1163, 7
      %v1165 = vsub.s32 0, %v1164
      %v1166 = vrot.slane %v1161, %v1165
      %v1184 = vunpack.c.l.b16 %v1144
      %v1185 = vunpack.c.l.b16 %v1145
      %v1186 = vunpack.c.l.b16 %v1146
      %v1187 = vunpack.c.l.b16 %v1147
      %v1188 = vunpack.c.l.b16 %v1148
      %v1189 = vunpack.c.l.b16 %v1149
      %v1190 = vunpack.c.l.b16 %v1150
      %v1191 = vunpack.c.l.b16 %v1151
      %v1192 = vunpack.c.l.b16 %v1152
      %v1193 = vunpack.c.l.b16 %v1153
      %v1194 = vunpack.c.l.b16 %v1154
      %v1195 = vunpack.c.l.b16 %v1155
      %v1196 = vunpack.c.l.b16 %v1156
      %v1197 = vunpack.c.l.b16 %v1157
      %v1198 = vunpack.c.l.b16 %v1158
      %v1199 = vunpack.c.l.b16 %v1159
      %v1200 = vpack.c.b16 %v1185, %v1184
      %v1201 = vpack.c.b16 %v1187, %v1186
      %v1202 = vpack.c.b16 %v1189, %v1188
      %v1203 = vpack.c.b16 %v1191, %v1190
      %v1204 = vpack.c.b16 %v1193, %v1192
      %v1205 = vpack.c.b16 %v1195, %v1194
      %v1206 = vpack.c.b16 %v1197, %v1196
      %v1207 = vpack.c.b16 %v1199, %v1198
      %1216 = vmatprep.subr.bf16.mxu0 0
      %1217 = vmatpush1.bf16.msra.mxu0 %v1207
      %1218 = vmatprep.subr.bf16.mxu0 0
      %1219 = vmatpush1.bf16.msra.mxu0 %v1206
      %1220 = vmatprep.subr.bf16.mxu0 0
      %1221 = vmatpush1.bf16.msra.mxu0 %v1205
      %1222 = vmatprep.subr.bf16.mxu0 0
      %1223 = vmatpush1.bf16.msra.mxu0 %v1204
      %1224 = vmatprep.subr.bf16.mxu0 0
      %1225 = vmatpush1.bf16.msra.mxu0 %v1203
      %1226 = vmatprep.subr.bf16.mxu0 0
      %1227 = vmatpush1.bf16.msra.mxu0 %v1202
      %1228 = vmatprep.subr.bf16.mxu0 0
      %1229 = vmatpush1.bf16.msra.mxu0 %v1201
      %1230 = vmatprep.subr.bf16.mxu0 0
      %1231 = vmatpush1.bf16.msra.mxu0 %v1200
      %1232 = vmatprep.subr.bf16.mxu0 0
      %1233 = vmatpush2.bf16.msra.mxu0 0
      %1234 = vmatprep.subr.bf16.mxu0 0
      %1235 = vmatpush2.bf16.msra.mxu0 0
      %1236 = vmatprep.subr.bf16.mxu0 0
      %1237 = vmatpush2.bf16.msra.mxu0 0
      %1238 = vmatprep.subr.bf16.mxu0 0
      %1239 = vmatpush2.bf16.msra.mxu0 0
      %1240 = vmatprep.subr.bf16.mxu0 0
      %1241 = vmatpush2.bf16.msra.mxu0 0
      %1242 = vmatprep.subr.bf16.mxu0 0
      %1243 = vmatpush2.bf16.msra.mxu0 0
      %1244 = vmatprep.subr.bf16.mxu0 0
      %1245 = vmatpush2.bf16.msra.mxu0 0
      %1246 = vmatprep.subr.bf16.mxu0 0
      %1247 = vmatpush2.bf16.msra.mxu0 0
      %1248 = vmatprep.mubr.bf16.mxu0 0
      %1249 = vmatmul.mubr.bf16.gmra.mxu0 %v1031
      %v1250 = vpop.f32.mrf.mxu0
      %v1251 = vadd.f32 %v1166, %v1250
      %v1252 = vpop.f32.mrf.mxu0
      %v1253 = vpop.f32.mrf.mxu0
      %v1254 = vpop.f32.mrf.mxu0
      %1255 = vdwg.mxu0
      %s1256 = scalar_lea.vmem %s8, 512
      %v1257 = vld [vmem:[%s1256] sm:$0xf]
      %v1258 = vld [vmem:[%s1256 + $0x4] sm:$0xf]
      %v1259 = vld [vmem:[%s1256 + $0x8] sm:$0xf]
      %v1260 = vld [vmem:[%s1256 + $0xc] sm:$0xf]
      %v1261 = vld [vmem:[%s1256 + $0x10] sm:$0xf]
      %v1262 = vld [vmem:[%s1256 + $0x14] sm:$0xf]
      %v1263 = vld [vmem:[%s1256 + $0x18] sm:$0xf]
      %v1264 = vld [vmem:[%s1256 + $0x1c] sm:$0xf]
      %v1265 = vld [vmem:[%s1256 + $0x20] sm:$0xf]
      %v1266 = vld [vmem:[%s1256 + $0x24] sm:$0xf]
      %v1267 = vld [vmem:[%s1256 + $0x28] sm:$0xf]
      %v1268 = vld [vmem:[%s1256 + $0x2c] sm:$0xf]
      %v1269 = vld [vmem:[%s1256 + $0x30] sm:$0xf]
      %v1270 = vld [vmem:[%s1256 + $0x34] sm:$0xf]
      %v1271 = vld [vmem:[%s1256 + $0x38] sm:$0xf]
      %v1272 = vld [vmem:[%s1256 + $0x3c] sm:$0xf]
      %s1273 = scalar_lea.vmem %s9, 8
      %v1274 = vld [vmem:[%s1273] sm:$0x1]
      %v1276 = vlaneseq
      %v1277 = vshrl.u32 %v1276, 7
      %v1278 = vsub.s32 0, %v1277
      %v1279 = vrot.slane %v1274, %v1278
      %v1297 = vunpack.c.l.b16 %v1257
      %v1298 = vunpack.c.l.b16 %v1258
      %v1299 = vunpack.c.l.b16 %v1259
      %v1300 = vunpack.c.l.b16 %v1260
      %v1301 = vunpack.c.l.b16 %v1261
      %v1302 = vunpack.c.l.b16 %v1262
      %v1303 = vunpack.c.l.b16 %v1263
      %v1304 = vunpack.c.l.b16 %v1264
      %v1305 = vunpack.c.l.b16 %v1265
      %v1306 = vunpack.c.l.b16 %v1266
      %v1307 = vunpack.c.l.b16 %v1267
      %v1308 = vunpack.c.l.b16 %v1268
      %v1309 = vunpack.c.l.b16 %v1269
      %v1310 = vunpack.c.l.b16 %v1270
      %v1311 = vunpack.c.l.b16 %v1271
      %v1312 = vunpack.c.l.b16 %v1272
      %v1313 = vpack.c.b16 %v1298, %v1297
      %v1314 = vpack.c.b16 %v1300, %v1299
      %v1315 = vpack.c.b16 %v1302, %v1301
      %v1316 = vpack.c.b16 %v1304, %v1303
      %v1317 = vpack.c.b16 %v1306, %v1305
      %v1318 = vpack.c.b16 %v1308, %v1307
      %v1319 = vpack.c.b16 %v1310, %v1309
      %v1320 = vpack.c.b16 %v1312, %v1311
      %1329 = vmatprep.subr.bf16.mxu0 0
      %1330 = vmatpush1.bf16.msra.mxu0 %v1320
      %1331 = vmatprep.subr.bf16.mxu0 0
      %1332 = vmatpush1.bf16.msra.mxu0 %v1319
      %1333 = vmatprep.subr.bf16.mxu0 0
      %1334 = vmatpush1.bf16.msra.mxu0 %v1318
      %1335 = vmatprep.subr.bf16.mxu0 0
      %1336 = vmatpush1.bf16.msra.mxu0 %v1317
      %1337 = vmatprep.subr.bf16.mxu0 0
      %1338 = vmatpush1.bf16.msra.mxu0 %v1316
      %1339 = vmatprep.subr.bf16.mxu0 0
      %1340 = vmatpush1.bf16.msra.mxu0 %v1315
      %1341 = vmatprep.subr.bf16.mxu0 0
      %1342 = vmatpush1.bf16.msra.mxu0 %v1314
      %1343 = vmatprep.subr.bf16.mxu0 0
      %1344 = vmatpush1.bf16.msra.mxu0 %v1313
      %1345 = vmatprep.subr.bf16.mxu0 0
      %1346 = vmatpush2.bf16.msra.mxu0 0
      %1347 = vmatprep.subr.bf16.mxu0 0
      %1348 = vmatpush2.bf16.msra.mxu0 0
      %1349 = vmatprep.subr.bf16.mxu0 0
      %1350 = vmatpush2.bf16.msra.mxu0 0
      %1351 = vmatprep.subr.bf16.mxu0 0
      %1352 = vmatpush2.bf16.msra.mxu0 0
      %1353 = vmatprep.subr.bf16.mxu0 0
      %1354 = vmatpush2.bf16.msra.mxu0 0
      %1355 = vmatprep.subr.bf16.mxu0 0
      %1356 = vmatpush2.bf16.msra.mxu0 0
      %1357 = vmatprep.subr.bf16.mxu0 0
      %1358 = vmatpush2.bf16.msra.mxu0 0
      %1359 = vmatprep.subr.bf16.mxu0 0
      %1360 = vmatpush2.bf16.msra.mxu0 0
      %1361 = vmatprep.mubr.bf16.mxu0 0
      %1362 = vmatmul.mubr.bf16.gmra.mxu0 %v1031
      %v1363 = vpop.f32.mrf.mxu0
      %v1364 = vadd.f32 %v1279, %v1363
      %v1365 = vpop.f32.mrf.mxu0
      %v1366 = vpop.f32.mrf.mxu0
      %v1367 = vpop.f32.mrf.mxu0
      %1368 = vdwg.mxu0
      %v1369 = vpack.c.bf16 %v1138, %v1138
      %v1370 = vpack.c.bf16 %v1251, %v1251
      %vm1371 = vcmask 261120
      %v1373 = vsel %vm1371, %v1369, 0
      %v1376 = vsel %vm1371, %v1370, 0
      %1378 = vmatprep.subr.bf16.mxu0 0
      %1379 = vmatpush1.bf16.xpose.msra.mxu0 0
      %1380 = vmatprep.subr.bf16.mxu0 0
      %1381 = vmatpush1.bf16.xpose.msra.mxu0 0
      %1382 = vmatprep.subr.bf16.mxu0 0
      %1383 = vmatpush1.bf16.xpose.msra.mxu0 0
      %1384 = vmatprep.subr.bf16.mxu0 0
      %1385 = vmatpush1.bf16.xpose.msra.mxu0 0
      %1386 = vmatprep.subr.bf16.mxu0 0
      %1387 = vmatpush1.bf16.xpose.msra.mxu0 0
      %1388 = vmatprep.subr.bf16.mxu0 0
      %1389 = vmatpush1.bf16.xpose.msra.mxu0 0
      %1390 = vmatprep.subr.bf16.mxu0 0
      %1391 = vmatpush1.bf16.xpose.msra.mxu0 0
      %1392 = vmatprep.subr.bf16.mxu0 0
      %1393 = vmatpush1.bf16.xpose.msra.mxu0 %v1376
      %1394 = vmatprep.subr.bf16.mxu0 0
      %1395 = vmatpush2.bf16.xpose.msra.mxu0 0
      %1396 = vmatprep.subr.bf16.mxu0 0
      %1397 = vmatpush2.bf16.xpose.msra.mxu0 0
      %1398 = vmatprep.subr.bf16.mxu0 0
      %1399 = vmatpush2.bf16.xpose.msra.mxu0 0
      %1400 = vmatprep.subr.bf16.mxu0 0
      %1401 = vmatpush2.bf16.xpose.msra.mxu0 0
      %1402 = vmatprep.subr.bf16.mxu0 0
      %1403 = vmatpush2.bf16.xpose.msra.mxu0 0
      %1404 = vmatprep.subr.bf16.mxu0 0
      %1405 = vmatpush2.bf16.xpose.msra.mxu0 0
      %1406 = vmatprep.subr.bf16.mxu0 0
      %1407 = vmatpush2.bf16.xpose.msra.mxu0 0
      %1408 = vmatprep.subr.bf16.mxu0 0
      %1409 = vmatpush2.bf16.xpose.msra.mxu0 0
      %1410 = vmatprep.mubr.bf16.mxu0 0
      %1411 = vmatmul.mubr.bf16.gmra.mxu0 %v1373
      %v1412 = vpop.f32.mrf.mxu0
      %v1413 = vadd.f32 0.0, %v1412
      %v1414 = vpop.f32.mrf.mxu0
      %v1415 = vpop.f32.mrf.mxu0
      %v1416 = vpop.f32.mrf.mxu0
      %1417 = vdwg.mxu0
      %vm1418 = vcmask 64512
      %v1419 = vsel %vm1418, %v1413, -inf
      %1420 = vmax.xlane.f32.xlu0 %v1419
      %v1421 = vpop.xlane.xlu0 %1420
      %v1422 = vsub.f32 %v1413, %v1421
      %v1423 = vmul.f32 %v1422, 1.442695
      %v1424 = vpow.pop %v1423
      %v1425 = vsel %vm1418, %v1424, 0.0
      %1426 = vadd.xlane.f32.xlu0 %v1425
      %v1427 = vpop.xlane.xlu0 %1426
      %v1428 = vrcp.pop %v1427
      %v1429 = vmul.f32 %v1424, %v1428
      %v1430 = vpack.c.bf16 %v1429, %v1429
      %v1431 = vpack.c.bf16 %v1364, %v1364
      %v1433 = vsel %vm1418, %v1430, 0
      %vm1435 = vcmask 1043456
      %v1437 = vsel %vm1435, %v1431, 0
      %1439 = vmatprep.subr.bf16.mxu0 0
      %1440 = vmatpush1.bf16.msra.mxu0 0
      %1441 = vmatprep.subr.bf16.mxu0 0
      %1442 = vmatpush1.bf16.msra.mxu0 0
      %1443 = vmatprep.subr.bf16.mxu0 0
      %1444 = vmatpush1.bf16.msra.mxu0 0
      %1445 = vmatprep.subr.bf16.mxu0 0
      %1446 = vmatpush1.bf16.msra.mxu0 0
      %1447 = vmatprep.subr.bf16.mxu0 0
      %1448 = vmatpush1.bf16.msra.mxu0 0
      %1449 = vmatprep.subr.bf16.mxu0 0
      %1450 = vmatpush1.bf16.msra.mxu0 0
      %1451 = vmatprep.subr.bf16.mxu0 0
      %1452 = vmatpush1.bf16.msra.mxu0 0
      %1453 = vmatprep.subr.bf16.mxu0 0
      %1454 = vmatpush1.bf16.msra.mxu0 %v1437
      %1455 = vmatprep.subr.bf16.mxu0 0
      %1456 = vmatpush2.bf16.msra.mxu0 0
      %1457 = vmatprep.subr.bf16.mxu0 0
      %1458 = vmatpush2.bf16.msra.mxu0 0
      %1459 = vmatprep.subr.bf16.mxu0 0
      %1460 = vmatpush2.bf16.msra.mxu0 0
      %1461 = vmatprep.subr.bf16.mxu0 0
      %1462 = vmatpush2.bf16.msra.mxu0 0
      %1463 = vmatprep.subr.bf16.mxu0 0
      %1464 = vmatpush2.bf16.msra.mxu0 0
      %1465 = vmatprep.subr.bf16.mxu0 0
      %1466 = vmatpush2.bf16.msra.mxu0 0
      %1467 = vmatprep.subr.bf16.mxu0 0
      %1468 = vmatpush2.bf16.msra.mxu0 0
      %1469 = vmatprep.subr.bf16.mxu0 0
      %1470 = vmatpush2.bf16.msra.mxu0 0
      %1471 = vmatprep.mubr.bf16.mxu0 0
      %1472 = vmatmul.mubr.bf16.gmra.mxu0 %v1433
      %v1473 = vpop.f32.mrf.mxu0
      %v1474 = vadd.f32 0.0, %v1473
      %v1475 = vpop.f32.mrf.mxu0
      %v1476 = vpop.f32.mrf.mxu0
      %v1477 = vpop.f32.mrf.mxu0
      %1478 = vdwg.mxu0
      %v1479 = vpack.c.bf16 %v1474, %v1474
      %v1480 = vld [vmem:[%s10] sm:$0xf]
      %v1481 = vld [vmem:[%s10 + $0x4] sm:$0xf]
      %v1482 = vld [vmem:[%s10 + $0x8] sm:$0xf]
      %v1483 = vld [vmem:[%s10 + $0xc] sm:$0xf]
      %s1484 = scalar_lea.vmem %s8, 64
      %v1485 = vld [vmem:[%s1484] sm:$0xf]
      %v1486 = vld [vmem:[%s1484 + $0x4] sm:$0xf]
      %v1487 = vld [vmem:[%s1484 + $0x8] sm:$0xf]
      %v1488 = vld [vmem:[%s1484 + $0xc] sm:$0xf]
      %v1489 = vld [vmem:[%s1484 + $0x10] sm:$0xf]
      %v1490 = vld [vmem:[%s1484 + $0x14] sm:$0xf]
      %v1491 = vld [vmem:[%s1484 + $0x18] sm:$0xf]
      %v1492 = vld [vmem:[%s1484 + $0x1c] sm:$0xf]
      %v1493 = vld [vmem:[%s1484 + $0x20] sm:$0xf]
      %v1494 = vld [vmem:[%s1484 + $0x24] sm:$0xf]
      %v1495 = vld [vmem:[%s1484 + $0x28] sm:$0xf]
      %v1496 = vld [vmem:[%s1484 + $0x2c] sm:$0xf]
      %v1497 = vld [vmem:[%s1484 + $0x30] sm:$0xf]
      %v1498 = vld [vmem:[%s1484 + $0x34] sm:$0xf]
      %v1499 = vld [vmem:[%s1484 + $0x38] sm:$0xf]
      %v1500 = vld [vmem:[%s1484 + $0x3c] sm:$0xf]
      %s1501 = scalar_lea.vmem %s9, 1
      %v1502 = vld [vmem:[%s1501] sm:$0x1]
      %v1504 = vlaneseq
      %v1505 = vshrl.u32 %v1504, 7
      %v1506 = vsub.s32 0, %v1505
      %v1507 = vrot.slane %v1502, %v1506
      %v1525 = vunpack.c.l.b16 %v1485
      %v1526 = vunpack.c.l.b16 %v1486
      %v1527 = vunpack.c.l.b16 %v1487
      %v1528 = vunpack.c.l.b16 %v1488
      %v1529 = vunpack.c.l.b16 %v1489
      %v1530 = vunpack.c.l.b16 %v1490
      %v1531 = vunpack.c.l.b16 %v1491
      %v1532 = vunpack.c.l.b16 %v1492
      %v1533 = vunpack.c.l.b16 %v1493
      %v1534 = vunpack.c.l.b16 %v1494
      %v1535 = vunpack.c.l.b16 %v1495
      %v1536 = vunpack.c.l.b16 %v1496
      %v1537 = vunpack.c.l.b16 %v1497
      %v1538 = vunpack.c.l.b16 %v1498
      %v1539 = vunpack.c.l.b16 %v1499
      %v1540 = vunpack.c.l.b16 %v1500
      %v1541 = vpack.c.b16 %v1526, %v1525
      %v1542 = vpack.c.b16 %v1528, %v1527
      %v1543 = vpack.c.b16 %v1530, %v1529
      %v1544 = vpack.c.b16 %v1532, %v1531
      %v1545 = vpack.c.b16 %v1534, %v1533
      %v1546 = vpack.c.b16 %v1536, %v1535
      %v1547 = vpack.c.b16 %v1538, %v1537
      %v1548 = vpack.c.b16 %v1540, %v1539
      %1557 = vmatprep.subr.bf16.mxu0 0
      %1558 = vmatpush1.bf16.msra.mxu0 %v1548
      %1559 = vmatprep.subr.bf16.mxu0 0
      %1560 = vmatpush1.bf16.msra.mxu0 %v1547
      %1561 = vmatprep.subr.bf16.mxu0 0
      %1562 = vmatpush1.bf16.msra.mxu0 %v1546
      %1563 = vmatprep.subr.bf16.mxu0 0
      %1564 = vmatpush1.bf16.msra.mxu0 %v1545
      %1565 = vmatprep.subr.bf16.mxu0 0
      %1566 = vmatpush1.bf16.msra.mxu0 %v1544
      %1567 = vmatprep.subr.bf16.mxu0 0
      %1568 = vmatpush1.bf16.msra.mxu0 %v1543
      %1569 = vmatprep.subr.bf16.mxu0 0
      %1570 = vmatpush1.bf16.msra.mxu0 %v1542
      %1571 = vmatprep.subr.bf16.mxu0 0
      %1572 = vmatpush1.bf16.msra.mxu0 %v1541
      %1573 = vmatprep.subr.bf16.mxu0 0
      %1574 = vmatpush2.bf16.msra.mxu0 0
      %1575 = vmatprep.subr.bf16.mxu0 0
      %1576 = vmatpush2.bf16.msra.mxu0 0
      %1577 = vmatprep.subr.bf16.mxu0 0
      %1578 = vmatpush2.bf16.msra.mxu0 0
      %1579 = vmatprep.subr.bf16.mxu0 0
      %1580 = vmatpush2.bf16.msra.mxu0 0
      %1581 = vmatprep.subr.bf16.mxu0 0
      %1582 = vmatpush2.bf16.msra.mxu0 0
      %1583 = vmatprep.subr.bf16.mxu0 0
      %1584 = vmatpush2.bf16.msra.mxu0 0
      %1585 = vmatprep.subr.bf16.mxu0 0
      %1586 = vmatpush2.bf16.msra.mxu0 0
      %1587 = vmatprep.subr.bf16.mxu0 0
      %1588 = vmatpush2.bf16.msra.mxu0 0
      %1589 = vmatprep.mubr.bf16.mxu0 0
      %1590 = vmatmul.mubr.bf16.gmra.mxu0 %v1031
      %v1591 = vpop.f32.mrf.mxu0
      %v1592 = vadd.f32 %v1507, %v1591
      %v1593 = vpop.f32.mrf.mxu0
      %v1594 = vpop.f32.mrf.mxu0
      %v1595 = vpop.f32.mrf.mxu0
      %1596 = vdwg.mxu0
      %s1597 = scalar_lea.vmem %s8, 320
      %v1598 = vld [vmem:[%s1597] sm:$0xf]
      %v1599 = vld [vmem:[%s1597 + $0x4] sm:$0xf]
      %v1600 = vld [vmem:[%s1597 + $0x8] sm:$0xf]
      %v1601 = vld [vmem:[%s1597 + $0xc] sm:$0xf]
      %v1602 = vld [vmem:[%s1597 + $0x10] sm:$0xf]
      %v1603 = vld [vmem:[%s1597 + $0x14] sm:$0xf]
      %v1604 = vld [vmem:[%s1597 + $0x18] sm:$0xf]
      %v1605 = vld [vmem:[%s1597 + $0x1c] sm:$0xf]
      %v1606 = vld [vmem:[%s1597 + $0x20] sm:$0xf]
      %v1607 = vld [vmem:[%s1597 + $0x24] sm:$0xf]
      %v1608 = vld [vmem:[%s1597 + $0x28] sm:$0xf]
      %v1609 = vld [vmem:[%s1597 + $0x2c] sm:$0xf]
      %v1610 = vld [vmem:[%s1597 + $0x30] sm:$0xf]
      %v1611 = vld [vmem:[%s1597 + $0x34] sm:$0xf]
      %v1612 = vld [vmem:[%s1597 + $0x38] sm:$0xf]
      %v1613 = vld [vmem:[%s1597 + $0x3c] sm:$0xf]
      %s1614 = scalar_lea.vmem %s9, 5
      %v1615 = vld [vmem:[%s1614] sm:$0x1]
      %v1617 = vlaneseq
      %v1618 = vshrl.u32 %v1617, 7
      %v1619 = vsub.s32 0, %v1618
      %v1620 = vrot.slane %v1615, %v1619
      %v1638 = vunpack.c.l.b16 %v1598
      %v1639 = vunpack.c.l.b16 %v1599
      %v1640 = vunpack.c.l.b16 %v1600
      %v1641 = vunpack.c.l.b16 %v1601
      %v1642 = vunpack.c.l.b16 %v1602
      %v1643 = vunpack.c.l.b16 %v1603
      %v1644 = vunpack.c.l.b16 %v1604
      %v1645 = vunpack.c.l.b16 %v1605
      %v1646 = vunpack.c.l.b16 %v1606
      %v1647 = vunpack.c.l.b16 %v1607
      %v1648 = vunpack.c.l.b16 %v1608
      %v1649 = vunpack.c.l.b16 %v1609
      %v1650 = vunpack.c.l.b16 %v1610
      %v1651 = vunpack.c.l.b16 %v1611
      %v1652 = vunpack.c.l.b16 %v1612
      %v1653 = vunpack.c.l.b16 %v1613
      %v1654 = vpack.c.b16 %v1639, %v1638
      %v1655 = vpack.c.b16 %v1641, %v1640
      %v1656 = vpack.c.b16 %v1643, %v1642
      %v1657 = vpack.c.b16 %v1645, %v1644
      %v1658 = vpack.c.b16 %v1647, %v1646
      %v1659 = vpack.c.b16 %v1649, %v1648
      %v1660 = vpack.c.b16 %v1651, %v1650
      %v1661 = vpack.c.b16 %v1653, %v1652
      %1670 = vmatprep.subr.bf16.mxu0 0
      %1671 = vmatpush1.bf16.msra.mxu0 %v1661
      %1672 = vmatprep.subr.bf16.mxu0 0
      %1673 = vmatpush1.bf16.msra.mxu0 %v1660
      %1674 = vmatprep.subr.bf16.mxu0 0
      %1675 = vmatpush1.bf16.msra.mxu0 %v1659
      %1676 = vmatprep.subr.bf16.mxu0 0
      %1677 = vmatpush1.bf16.msra.mxu0 %v1658
      %1678 = vmatprep.subr.bf16.mxu0 0
      %1679 = vmatpush1.bf16.msra.mxu0 %v1657
      %1680 = vmatprep.subr.bf16.mxu0 0
      %1681 = vmatpush1.bf16.msra.mxu0 %v1656
      %1682 = vmatprep.subr.bf16.mxu0 0
      %1683 = vmatpush1.bf16.msra.mxu0 %v1655
      %1684 = vmatprep.subr.bf16.mxu0 0
      %1685 = vmatpush1.bf16.msra.mxu0 %v1654
      %1686 = vmatprep.subr.bf16.mxu0 0
      %1687 = vmatpush2.bf16.msra.mxu0 0
      %1688 = vmatprep.subr.bf16.mxu0 0
      %1689 = vmatpush2.bf16.msra.mxu0 0
      %1690 = vmatprep.subr.bf16.mxu0 0
      %1691 = vmatpush2.bf16.msra.mxu0 0
      %1692 = vmatprep.subr.bf16.mxu0 0
      %1693 = vmatpush2.bf16.msra.mxu0 0
      %1694 = vmatprep.subr.bf16.mxu0 0
      %1695 = vmatpush2.bf16.msra.mxu0 0
      %1696 = vmatprep.subr.bf16.mxu0 0
      %1697 = vmatpush2.bf16.msra.mxu0 0
      %1698 = vmatprep.subr.bf16.mxu0 0
      %1699 = vmatpush2.bf16.msra.mxu0 0
      %1700 = vmatprep.subr.bf16.mxu0 0
      %1701 = vmatpush2.bf16.msra.mxu0 0
      %1702 = vmatprep.mubr.bf16.mxu0 0
      %1703 = vmatmul.mubr.bf16.gmra.mxu0 %v1031
      %v1704 = vpop.f32.mrf.mxu0
      %v1705 = vadd.f32 %v1620, %v1704
      %v1706 = vpop.f32.mrf.mxu0
      %v1707 = vpop.f32.mrf.mxu0
      %v1708 = vpop.f32.mrf.mxu0
      %1709 = vdwg.mxu0
      %s1710 = scalar_lea.vmem %s8, 576
      %v1711 = vld [vmem:[%s1710] sm:$0xf]
      %v1712 = vld [vmem:[%s1710 + $0x4] sm:$0xf]
      %v1713 = vld [vmem:[%s1710 + $0x8] sm:$0xf]
      %v1714 = vld [vmem:[%s1710 + $0xc] sm:$0xf]
      %v1715 = vld [vmem:[%s1710 + $0x10] sm:$0xf]
      %v1716 = vld [vmem:[%s1710 + $0x14] sm:$0xf]
      %v1717 = vld [vmem:[%s1710 + $0x18] sm:$0xf]
      %v1718 = vld [vmem:[%s1710 + $0x1c] sm:$0xf]
      %v1719 = vld [vmem:[%s1710 + $0x20] sm:$0xf]
      %v1720 = vld [vmem:[%s1710 + $0x24] sm:$0xf]
      %v1721 = vld [vmem:[%s1710 + $0x28] sm:$0xf]
      %v1722 = vld [vmem:[%s1710 + $0x2c] sm:$0xf]
      %v1723 = vld [vmem:[%s1710 + $0x30] sm:$0xf]
      %v1724 = vld [vmem:[%s1710 + $0x34] sm:$0xf]
      %v1725 = vld [vmem:[%s1710 + $0x38] sm:$0xf]
      %v1726 = vld [vmem:[%s1710 + $0x3c] sm:$0xf]
      %s1727 = scalar_lea.vmem %s9, 9
      %v1728 = vld [vmem:[%s1727] sm:$0x1]
      %v1730 = vlaneseq
      %v1731 = vshrl.u32 %v1730, 7
      %v1732 = vsub.s32 0, %v1731
      %v1733 = vrot.slane %v1728, %v1732
      %v1751 = vunpack.c.l.b16 %v1711
      %v1752 = vunpack.c.l.b16 %v1712
      %v1753 = vunpack.c.l.b16 %v1713
      %v1754 = vunpack.c.l.b16 %v1714
      %v1755 = vunpack.c.l.b16 %v1715
      %v1756 = vunpack.c.l.b16 %v1716
      %v1757 = vunpack.c.l.b16 %v1717
      %v1758 = vunpack.c.l.b16 %v1718
      %v1759 = vunpack.c.l.b16 %v1719
      %v1760 = vunpack.c.l.b16 %v1720
      %v1761 = vunpack.c.l.b16 %v1721
      %v1762 = vunpack.c.l.b16 %v1722
      %v1763 = vunpack.c.l.b16 %v1723
      %v1764 = vunpack.c.l.b16 %v1724
      %v1765 = vunpack.c.l.b16 %v1725
      %v1766 = vunpack.c.l.b16 %v1726
      %v1767 = vpack.c.b16 %v1752, %v1751
      %v1768 = vpack.c.b16 %v1754, %v1753
      %v1769 = vpack.c.b16 %v1756, %v1755
      %v1770 = vpack.c.b16 %v1758, %v1757
      %v1771 = vpack.c.b16 %v1760, %v1759
      %v1772 = vpack.c.b16 %v1762, %v1761
      %v1773 = vpack.c.b16 %v1764, %v1763
      %v1774 = vpack.c.b16 %v1766, %v1765
      %1783 = vmatprep.subr.bf16.mxu0 0
      %1784 = vmatpush1.bf16.msra.mxu0 %v1774
      %1785 = vmatprep.subr.bf16.mxu0 0
      %1786 = vmatpush1.bf16.msra.mxu0 %v1773
      %1787 = vmatprep.subr.bf16.mxu0 0
      %1788 = vmatpush1.bf16.msra.mxu0 %v1772
      %1789 = vmatprep.subr.bf16.mxu0 0
      %1790 = vmatpush1.bf16.msra.mxu0 %v1771
      %1791 = vmatprep.subr.bf16.mxu0 0
      %1792 = vmatpush1.bf16.msra.mxu0 %v1770
      %1793 = vmatprep.subr.bf16.mxu0 0
      %1794 = vmatpush1.bf16.msra.mxu0 %v1769
      %1795 = vmatprep.subr.bf16.mxu0 0
      %1796 = vmatpush1.bf16.msra.mxu0 %v1768
      %1797 = vmatprep.subr.bf16.mxu0 0
      %1798 = vmatpush1.bf16.msra.mxu0 %v1767
      %1799 = vmatprep.subr.bf16.mxu0 0
      %1800 = vmatpush2.bf16.msra.mxu0 0
      %1801 = vmatprep.subr.bf16.mxu0 0
      %1802 = vmatpush2.bf16.msra.mxu0 0
      %1803 = vmatprep.subr.bf16.mxu0 0
      %1804 = vmatpush2.bf16.msra.mxu0 0
      %1805 = vmatprep.subr.bf16.mxu0 0
      %1806 = vmatpush2.bf16.msra.mxu0 0
      %1807 = vmatprep.subr.bf16.mxu0 0
      %1808 = vmatpush2.bf16.msra.mxu0 0
      %1809 = vmatprep.subr.bf16.mxu0 0
      %1810 = vmatpush2.bf16.msra.mxu0 0
      %1811 = vmatprep.subr.bf16.mxu0 0
      %1812 = vmatpush2.bf16.msra.mxu0 0
      %1813 = vmatprep.subr.bf16.mxu0 0
      %1814 = vmatpush2.bf16.msra.mxu0 0
      %1815 = vmatprep.mubr.bf16.mxu0 0
      %1816 = vmatmul.mubr.bf16.gmra.mxu0 %v1031
      %v1817 = vpop.f32.mrf.mxu0
      %v1818 = vadd.f32 %v1733, %v1817
      %v1819 = vpop.f32.mrf.mxu0
      %v1820 = vpop.f32.mrf.mxu0
      %v1821 = vpop.f32.mrf.mxu0
      %1822 = vdwg.mxu0
      %v1823 = vpack.c.bf16 %v1592, %v1592
      %v1824 = vpack.c.bf16 %v1705, %v1705
      %v1826 = vsel %vm1371, %v1823, 0
      %v1829 = vsel %vm1371, %v1824, 0
      %1831 = vmatprep.subr.bf16.mxu0 0
      %1832 = vmatpush1.bf16.xpose.msra.mxu0 0
      %1833 = vmatprep.subr.bf16.mxu0 0
      %1834 = vmatpush1.bf16.xpose.msra.mxu0 0
      %1835 = vmatprep.subr.bf16.mxu0 0
      %1836 = vmatpush1.bf16.xpose.msra.mxu0 0
      %1837 = vmatprep.subr.bf16.mxu0 0
      %1838 = vmatpush1.bf16.xpose.msra.mxu0 0
      %1839 = vmatprep.subr.bf16.mxu0 0
      %1840 = vmatpush1.bf16.xpose.msra.mxu0 0
      %1841 = vmatprep.subr.bf16.mxu0 0
      %1842 = vmatpush1.bf16.xpose.msra.mxu0 0
      %1843 = vmatprep.subr.bf16.mxu0 0
      %1844 = vmatpush1.bf16.xpose.msra.mxu0 0
      %1845 = vmatprep.subr.bf16.mxu0 0
      %1846 = vmatpush1.bf16.xpose.msra.mxu0 %v1829
      %1847 = vmatprep.subr.bf16.mxu0 0
      %1848 = vmatpush2.bf16.xpose.msra.mxu0 0
      %1849 = vmatprep.subr.bf16.mxu0 0
      %1850 = vmatpush2.bf16.xpose.msra.mxu0 0
      %1851 = vmatprep.subr.bf16.mxu0 0
      %1852 = vmatpush2.bf16.xpose.msra.mxu0 0
      %1853 = vmatprep.subr.bf16.mxu0 0
      %1854 = vmatpush2.bf16.xpose.msra.mxu0 0
      %1855 = vmatprep.subr.bf16.mxu0 0
      %1856 = vmatpush2.bf16.xpose.msra.mxu0 0
      %1857 = vmatprep.subr.bf16.mxu0 0
      %1858 = vmatpush2.bf16.xpose.msra.mxu0 0
      %1859 = vmatprep.subr.bf16.mxu0 0
      %1860 = vmatpush2.bf16.xpose.msra.mxu0 0
      %1861 = vmatprep.subr.bf16.mxu0 0
      %1862 = vmatpush2.bf16.xpose.msra.mxu0 0
      %1863 = vmatprep.mubr.bf16.mxu0 0
      %1864 = vmatmul.mubr.bf16.gmra.mxu0 %v1826
      %v1865 = vpop.f32.mrf.mxu0
      %v1866 = vadd.f32 0.0, %v1865
      %v1867 = vpop.f32.mrf.mxu0
      %v1868 = vpop.f32.mrf.mxu0
      %v1869 = vpop.f32.mrf.mxu0
      %1870 = vdwg.mxu0
      %v1871 = vsel %vm1418, %v1866, -inf
      %1872 = vmax.xlane.f32.xlu0 %v1871
      %v1873 = vpop.xlane.xlu0 %1872
      %v1874 = vsub.f32 %v1866, %v1873
      %v1875 = vmul.f32 %v1874, 1.442695
      %v1876 = vpow.pop %v1875
      %v1877 = vsel %vm1418, %v1876, 0.0
      %1878 = vadd.xlane.f32.xlu0 %v1877
      %v1879 = vpop.xlane.xlu0 %1878
      %v1880 = vrcp.pop %v1879
      %v1881 = vmul.f32 %v1876, %v1880
      %v1882 = vpack.c.bf16 %v1881, %v1881
      %v1883 = vpack.c.bf16 %v1818, %v1818
      %v1885 = vsel %vm1418, %v1882, 0
      %v1888 = vsel %vm1435, %v1883, 0
      %1890 = vmatprep.subr.bf16.mxu0 0
      %1891 = vmatpush1.bf16.msra.mxu0 0
      %1892 = vmatprep.subr.bf16.mxu0 0
      %1893 = vmatpush1.bf16.msra.mxu0 0
      %1894 = vmatprep.subr.bf16.mxu0 0
      %1895 = vmatpush1.bf16.msra.mxu0 0
      %1896 = vmatprep.subr.bf16.mxu0 0
      %1897 = vmatpush1.bf16.msra.mxu0 0
      %1898 = vmatprep.subr.bf16.mxu0 0
      %1899 = vmatpush1.bf16.msra.mxu0 0
      %1900 = vmatprep.subr.bf16.mxu0 0
      %1901 = vmatpush1.bf16.msra.mxu0 0
      %1902 = vmatprep.subr.bf16.mxu0 0
      %1903 = vmatpush1.bf16.msra.mxu0 0
      %1904 = vmatprep.subr.bf16.mxu0 0
      %1905 = vmatpush1.bf16.msra.mxu0 %v1888
      %1906 = vmatprep.subr.bf16.mxu0 0
      %1907 = vmatpush2.bf16.msra.mxu0 0
      %1908 = vmatprep.subr.bf16.mxu0 0
      %1909 = vmatpush2.bf16.msra.mxu0 0
      %1910 = vmatprep.subr.bf16.mxu0 0
      %1911 = vmatpush2.bf16.msra.mxu0 0
      %1912 = vmatprep.subr.bf16.mxu0 0
      %1913 = vmatpush2.bf16.msra.mxu0 0
      %1914 = vmatprep.subr.bf16.mxu0 0
      %1915 = vmatpush2.bf16.msra.mxu0 0
      %1916 = vmatprep.subr.bf16.mxu0 0
      %1917 = vmatpush2.bf16.msra.mxu0 0
      %1918 = vmatprep.subr.bf16.mxu0 0
      %1919 = vmatpush2.bf16.msra.mxu0 0
      %1920 = vmatprep.subr.bf16.mxu0 0
      %1921 = vmatpush2.bf16.msra.mxu0 0
      %1922 = vmatprep.mubr.bf16.mxu0 0
      %1923 = vmatmul.mubr.bf16.gmra.mxu0 %v1885
      %v1924 = vpop.f32.mrf.mxu0
      %v1925 = vadd.f32 0.0, %v1924
      %v1926 = vpop.f32.mrf.mxu0
      %v1927 = vpop.f32.mrf.mxu0
      %v1928 = vpop.f32.mrf.mxu0
      %1929 = vdwg.mxu0
      %v1930 = vpack.c.bf16 %v1925, %v1925
      %s1931 = scalar_lea.vmem %s10, 16
      %v1932 = vld [vmem:[%s1931] sm:$0xf]
      %v1933 = vld [vmem:[%s1931 + $0x4] sm:$0xf]
      %v1934 = vld [vmem:[%s1931 + $0x8] sm:$0xf]
      %v1935 = vld [vmem:[%s1931 + $0xc] sm:$0xf]
      %v1940 = vunpack.c.l.b16 %v1932
      %v1941 = vunpack.c.l.b16 %v1933
      %v1942 = vunpack.c.l.b16 %v1934
      %v1943 = vunpack.c.l.b16 %v1935
      %v1944 = vpack.c.b16 %v1941, %v1940
      %v1945 = vpack.c.b16 %v1943, %v1942
      %v1949 = vsel %vm1371, %v1930, 0
      %1951 = vmatprep.subr.bf16.mxu0 0
      %1952 = vmatpush1.bf16.msra.mxu0 0
      %1953 = vmatprep.subr.bf16.mxu0 0
      %1954 = vmatpush1.bf16.msra.mxu0 0
      %1955 = vmatprep.subr.bf16.mxu0 0
      %1956 = vmatpush1.bf16.msra.mxu0 0
      %1957 = vmatprep.subr.bf16.mxu0 0
      %1958 = vmatpush1.bf16.msra.mxu0 0
      %1959 = vmatprep.subr.bf16.mxu0 0
      %1960 = vmatpush1.bf16.msra.mxu0 0
      %1961 = vmatprep.subr.bf16.mxu0 0
      %1962 = vmatpush1.bf16.msra.mxu0 0
      %1963 = vmatprep.subr.bf16.mxu0 0
      %1964 = vmatpush1.bf16.msra.mxu0 %v1945
      %1965 = vmatprep.subr.bf16.mxu0 0
      %1966 = vmatpush1.bf16.msra.mxu0 %v1944
      %1967 = vmatprep.subr.bf16.mxu0 0
      %1968 = vmatpush2.bf16.msra.mxu0 0
      %1969 = vmatprep.subr.bf16.mxu0 0
      %1970 = vmatpush2.bf16.msra.mxu0 0
      %1971 = vmatprep.subr.bf16.mxu0 0
      %1972 = vmatpush2.bf16.msra.mxu0 0
      %1973 = vmatprep.subr.bf16.mxu0 0
      %1974 = vmatpush2.bf16.msra.mxu0 0
      %1975 = vmatprep.subr.bf16.mxu0 0
      %1976 = vmatpush2.bf16.msra.mxu0 0
      %1977 = vmatprep.subr.bf16.mxu0 0
      %1978 = vmatpush2.bf16.msra.mxu0 0
      %1979 = vmatprep.subr.bf16.mxu0 0
      %1980 = vmatpush2.bf16.msra.mxu0 0
      %1981 = vmatprep.subr.bf16.mxu0 0
      %1982 = vmatpush2.bf16.msra.mxu0 0
      %1983 = vmatprep.mubr.bf16.mxu0 0
      %1984 = vmatmul.mubr.bf16.gmra.mxu0 %v1949
      %v1985 = vpop.f32.mrf.mxu0
      %v1986 = vadd.f32 0.0, %v1985
      %v1987 = vpop.f32.mrf.mxu0
      %v1988 = vpop.f32.mrf.mxu0
      %v1989 = vpop.f32.mrf.mxu0
      %1990 = vdwg.mxu0
      %v1995 = vunpack.c.l.b16 %v1480
      %v1996 = vunpack.c.l.b16 %v1481
      %v1997 = vunpack.c.l.b16 %v1482
      %v1998 = vunpack.c.l.b16 %v1483
      %v1999 = vpack.c.b16 %v1996, %v1995
      %v2000 = vpack.c.b16 %v1998, %v1997
      %v2004 = vsel %vm1371, %v1479, 0
      %2006 = vmatprep.subr.bf16.mxu0 0
      %2007 = vmatpush1.bf16.msra.mxu0 0
      %2008 = vmatprep.subr.bf16.mxu0 0
      %2009 = vmatpush1.bf16.msra.mxu0 0
      %2010 = vmatprep.subr.bf16.mxu0 0
      %2011 = vmatpush1.bf16.msra.mxu0 0
      %2012 = vmatprep.subr.bf16.mxu0 0
      %2013 = vmatpush1.bf16.msra.mxu0 0
      %2014 = vmatprep.subr.bf16.mxu0 0
      %2015 = vmatpush1.bf16.msra.mxu0 0
      %2016 = vmatprep.subr.bf16.mxu0 0
      %2017 = vmatpush1.bf16.msra.mxu0 0
      %2018 = vmatprep.subr.bf16.mxu0 0
      %2019 = vmatpush1.bf16.msra.mxu0 %v2000
      %2020 = vmatprep.subr.bf16.mxu0 0
      %2021 = vmatpush1.bf16.msra.mxu0 %v1999
      %2022 = vmatprep.subr.bf16.mxu0 0
      %2023 = vmatpush2.bf16.msra.mxu0 0
      %2024 = vmatprep.subr.bf16.mxu0 0
      %2025 = vmatpush2.bf16.msra.mxu0 0
      %2026 = vmatprep.subr.bf16.mxu0 0
      %2027 = vmatpush2.bf16.msra.mxu0 0
      %2028 = vmatprep.subr.bf16.mxu0 0
      %2029 = vmatpush2.bf16.msra.mxu0 0
      %2030 = vmatprep.subr.bf16.mxu0 0
      %2031 = vmatpush2.bf16.msra.mxu0 0
      %2032 = vmatprep.subr.bf16.mxu0 0
      %2033 = vmatpush2.bf16.msra.mxu0 0
      %2034 = vmatprep.subr.bf16.mxu0 0
      %2035 = vmatpush2.bf16.msra.mxu0 0
      %2036 = vmatprep.subr.bf16.mxu0 0
      %2037 = vmatpush2.bf16.msra.mxu0 0
      %2038 = vmatprep.mubr.bf16.mxu0 0
      %2039 = vmatmul.mubr.bf16.gmra.mxu0 %v2004
      %v2040 = vpop.f32.mrf.mxu0
      %v2041 = vadd.f32 %v1986, %v2040
      %v2042 = vpop.f32.mrf.mxu0
      %v2043 = vpop.f32.mrf.mxu0
      %v2044 = vpop.f32.mrf.mxu0
      %2045 = vdwg.mxu0
      %s2046 = scalar_lea.vmem %s8, 128
      %v2047 = vld [vmem:[%s2046] sm:$0xf]
      %v2048 = vld [vmem:[%s2046 + $0x4] sm:$0xf]
      %v2049 = vld [vmem:[%s2046 + $0x8] sm:$0xf]
      %v2050 = vld [vmem:[%s2046 + $0xc] sm:$0xf]
      %v2051 = vld [vmem:[%s2046 + $0x10] sm:$0xf]
      %v2052 = vld [vmem:[%s2046 + $0x14] sm:$0xf]
      %v2053 = vld [vmem:[%s2046 + $0x18] sm:$0xf]
      %v2054 = vld [vmem:[%s2046 + $0x1c] sm:$0xf]
      %v2055 = vld [vmem:[%s2046 + $0x20] sm:$0xf]
      %v2056 = vld [vmem:[%s2046 + $0x24] sm:$0xf]
      %v2057 = vld [vmem:[%s2046 + $0x28] sm:$0xf]
      %v2058 = vld [vmem:[%s2046 + $0x2c] sm:$0xf]
      %v2059 = vld [vmem:[%s2046 + $0x30] sm:$0xf]
      %v2060 = vld [vmem:[%s2046 + $0x34] sm:$0xf]
      %v2061 = vld [vmem:[%s2046 + $0x38] sm:$0xf]
      %v2062 = vld [vmem:[%s2046 + $0x3c] sm:$0xf]
      %s2063 = scalar_lea.vmem %s9, 2
      %v2064 = vld [vmem:[%s2063] sm:$0x1]
      %v2066 = vlaneseq
      %v2067 = vshrl.u32 %v2066, 7
      %v2068 = vsub.s32 0, %v2067
      %v2069 = vrot.slane %v2064, %v2068
      %v2087 = vunpack.c.l.b16 %v2047
      %v2088 = vunpack.c.l.b16 %v2048
      %v2089 = vunpack.c.l.b16 %v2049
      %v2090 = vunpack.c.l.b16 %v2050
      %v2091 = vunpack.c.l.b16 %v2051
      %v2092 = vunpack.c.l.b16 %v2052
      %v2093 = vunpack.c.l.b16 %v2053
      %v2094 = vunpack.c.l.b16 %v2054
      %v2095 = vunpack.c.l.b16 %v2055
      %v2096 = vunpack.c.l.b16 %v2056
      %v2097 = vunpack.c.l.b16 %v2057
      %v2098 = vunpack.c.l.b16 %v2058
      %v2099 = vunpack.c.l.b16 %v2059
      %v2100 = vunpack.c.l.b16 %v2060
      %v2101 = vunpack.c.l.b16 %v2061
      %v2102 = vunpack.c.l.b16 %v2062
      %v2103 = vpack.c.b16 %v2088, %v2087
      %v2104 = vpack.c.b16 %v2090, %v2089
      %v2105 = vpack.c.b16 %v2092, %v2091
      %v2106 = vpack.c.b16 %v2094, %v2093
      %v2107 = vpack.c.b16 %v2096, %v2095
      %v2108 = vpack.c.b16 %v2098, %v2097
      %v2109 = vpack.c.b16 %v2100, %v2099
      %v2110 = vpack.c.b16 %v2102, %v2101
      %2119 = vmatprep.subr.bf16.mxu0 0
      %2120 = vmatpush1.bf16.msra.mxu0 %v2110
      %2121 = vmatprep.subr.bf16.mxu0 0
      %2122 = vmatpush1.bf16.msra.mxu0 %v2109
      %2123 = vmatprep.subr.bf16.mxu0 0
      %2124 = vmatpush1.bf16.msra.mxu0 %v2108
      %2125 = vmatprep.subr.bf16.mxu0 0
      %2126 = vmatpush1.bf16.msra.mxu0 %v2107
      %2127 = vmatprep.subr.bf16.mxu0 0
      %2128 = vmatpush1.bf16.msra.mxu0 %v2106
      %2129 = vmatprep.subr.bf16.mxu0 0
      %2130 = vmatpush1.bf16.msra.mxu0 %v2105
      %2131 = vmatprep.subr.bf16.mxu0 0
      %2132 = vmatpush1.bf16.msra.mxu0 %v2104
      %2133 = vmatprep.subr.bf16.mxu0 0
      %2134 = vmatpush1.bf16.msra.mxu0 %v2103
      %2135 = vmatprep.subr.bf16.mxu0 0
      %2136 = vmatpush2.bf16.msra.mxu0 0
      %2137 = vmatprep.subr.bf16.mxu0 0
      %2138 = vmatpush2.bf16.msra.mxu0 0
      %2139 = vmatprep.subr.bf16.mxu0 0
      %2140 = vmatpush2.bf16.msra.mxu0 0
      %2141 = vmatprep.subr.bf16.mxu0 0
      %2142 = vmatpush2.bf16.msra.mxu0 0
      %2143 = vmatprep.subr.bf16.mxu0 0
      %2144 = vmatpush2.bf16.msra.mxu0 0
      %2145 = vmatprep.subr.bf16.mxu0 0
      %2146 = vmatpush2.bf16.msra.mxu0 0
      %2147 = vmatprep.subr.bf16.mxu0 0
      %2148 = vmatpush2.bf16.msra.mxu0 0
      %2149 = vmatprep.subr.bf16.mxu0 0
      %2150 = vmatpush2.bf16.msra.mxu0 0
      %2151 = vmatprep.mubr.bf16.mxu0 0
      %2152 = vmatmul.mubr.bf16.gmra.mxu0 %v1031
      %v2153 = vpop.f32.mrf.mxu0
      %v2154 = vadd.f32 %v2069, %v2153
      %v2155 = vpop.f32.mrf.mxu0
      %v2156 = vpop.f32.mrf.mxu0
      %v2157 = vpop.f32.mrf.mxu0
      %2158 = vdwg.mxu0
      %s2159 = scalar_lea.vmem %s8, 384
      %v2160 = vld [vmem:[%s2159] sm:$0xf]
      %v2161 = vld [vmem:[%s2159 + $0x4] sm:$0xf]
      %v2162 = vld [vmem:[%s2159 + $0x8] sm:$0xf]
      %v2163 = vld [vmem:[%s2159 + $0xc] sm:$0xf]
      %v2164 = vld [vmem:[%s2159 + $0x10] sm:$0xf]
      %v2165 = vld [vmem:[%s2159 + $0x14] sm:$0xf]
      %v2166 = vld [vmem:[%s2159 + $0x18] sm:$0xf]
      %v2167 = vld [vmem:[%s2159 + $0x1c] sm:$0xf]
      %v2168 = vld [vmem:[%s2159 + $0x20] sm:$0xf]
      %v2169 = vld [vmem:[%s2159 + $0x24] sm:$0xf]
      %v2170 = vld [vmem:[%s2159 + $0x28] sm:$0xf]
      %v2171 = vld [vmem:[%s2159 + $0x2c] sm:$0xf]
      %v2172 = vld [vmem:[%s2159 + $0x30] sm:$0xf]
      %v2173 = vld [vmem:[%s2159 + $0x34] sm:$0xf]
      %v2174 = vld [vmem:[%s2159 + $0x38] sm:$0xf]
      %v2175 = vld [vmem:[%s2159 + $0x3c] sm:$0xf]
      %s2176 = scalar_lea.vmem %s9, 6
      %v2177 = vld [vmem:[%s2176] sm:$0x1]
      %v2179 = vlaneseq
      %v2180 = vshrl.u32 %v2179, 7
      %v2181 = vsub.s32 0, %v2180
      %v2182 = vrot.slane %v2177, %v2181
      %v2200 = vunpack.c.l.b16 %v2160
      %v2201 = vunpack.c.l.b16 %v2161
      %v2202 = vunpack.c.l.b16 %v2162
      %v2203 = vunpack.c.l.b16 %v2163
      %v2204 = vunpack.c.l.b16 %v2164
      %v2205 = vunpack.c.l.b16 %v2165
      %v2206 = vunpack.c.l.b16 %v2166
      %v2207 = vunpack.c.l.b16 %v2167
      %v2208 = vunpack.c.l.b16 %v2168
      %v2209 = vunpack.c.l.b16 %v2169
      %v2210 = vunpack.c.l.b16 %v2170
      %v2211 = vunpack.c.l.b16 %v2171
      %v2212 = vunpack.c.l.b16 %v2172
      %v2213 = vunpack.c.l.b16 %v2173
      %v2214 = vunpack.c.l.b16 %v2174
      %v2215 = vunpack.c.l.b16 %v2175
      %v2216 = vpack.c.b16 %v2201, %v2200
      %v2217 = vpack.c.b16 %v2203, %v2202
      %v2218 = vpack.c.b16 %v2205, %v2204
      %v2219 = vpack.c.b16 %v2207, %v2206
      %v2220 = vpack.c.b16 %v2209, %v2208
      %v2221 = vpack.c.b16 %v2211, %v2210
      %v2222 = vpack.c.b16 %v2213, %v2212
      %v2223 = vpack.c.b16 %v2215, %v2214
      %2232 = vmatprep.subr.bf16.mxu0 0
      %2233 = vmatpush1.bf16.msra.mxu0 %v2223
      %2234 = vmatprep.subr.bf16.mxu0 0
      %2235 = vmatpush1.bf16.msra.mxu0 %v2222
      %2236 = vmatprep.subr.bf16.mxu0 0
      %2237 = vmatpush1.bf16.msra.mxu0 %v2221
      %2238 = vmatprep.subr.bf16.mxu0 0
      %2239 = vmatpush1.bf16.msra.mxu0 %v2220
      %2240 = vmatprep.subr.bf16.mxu0 0
      %2241 = vmatpush1.bf16.msra.mxu0 %v2219
      %2242 = vmatprep.subr.bf16.mxu0 0
      %2243 = vmatpush1.bf16.msra.mxu0 %v2218
      %2244 = vmatprep.subr.bf16.mxu0 0
      %2245 = vmatpush1.bf16.msra.mxu0 %v2217
      %2246 = vmatprep.subr.bf16.mxu0 0
      %2247 = vmatpush1.bf16.msra.mxu0 %v2216
      %2248 = vmatprep.subr.bf16.mxu0 0
      %2249 = vmatpush2.bf16.msra.mxu0 0
      %2250 = vmatprep.subr.bf16.mxu0 0
      %2251 = vmatpush2.bf16.msra.mxu0 0
      %2252 = vmatprep.subr.bf16.mxu0 0
      %2253 = vmatpush2.bf16.msra.mxu0 0
      %2254 = vmatprep.subr.bf16.mxu0 0
      %2255 = vmatpush2.bf16.msra.mxu0 0
      %2256 = vmatprep.subr.bf16.mxu0 0
      %2257 = vmatpush2.bf16.msra.mxu0 0
      %2258 = vmatprep.subr.bf16.mxu0 0
      %2259 = vmatpush2.bf16.msra.mxu0 0
      %2260 = vmatprep.subr.bf16.mxu0 0
      %2261 = vmatpush2.bf16.msra.mxu0 0
      %2262 = vmatprep.subr.bf16.mxu0 0
      %2263 = vmatpush2.bf16.msra.mxu0 0
      %2264 = vmatprep.mubr.bf16.mxu0 0
      %2265 = vmatmul.mubr.bf16.gmra.mxu0 %v1031
      %v2266 = vpop.f32.mrf.mxu0
      %v2267 = vadd.f32 %v2182, %v2266
      %v2268 = vpop.f32.mrf.mxu0
      %v2269 = vpop.f32.mrf.mxu0
      %v2270 = vpop.f32.mrf.mxu0
      %2271 = vdwg.mxu0
      %s2272 = scalar_lea.vmem %s8, 640
      %v2273 = vld [vmem:[%s2272] sm:$0xf]
      %v2274 = vld [vmem:[%s2272 + $0x4] sm:$0xf]
      %v2275 = vld [vmem:[%s2272 + $0x8] sm:$0xf]
      %v2276 = vld [vmem:[%s2272 + $0xc] sm:$0xf]
      %v2277 = vld [vmem:[%s2272 + $0x10] sm:$0xf]
      %v2278 = vld [vmem:[%s2272 + $0x14] sm:$0xf]
      %v2279 = vld [vmem:[%s2272 + $0x18] sm:$0xf]
      %v2280 = vld [vmem:[%s2272 + $0x1c] sm:$0xf]
      %v2281 = vld [vmem:[%s2272 + $0x20] sm:$0xf]
      %v2282 = vld [vmem:[%s2272 + $0x24] sm:$0xf]
      %v2283 = vld [vmem:[%s2272 + $0x28] sm:$0xf]
      %v2284 = vld [vmem:[%s2272 + $0x2c] sm:$0xf]
      %v2285 = vld [vmem:[%s2272 + $0x30] sm:$0xf]
      %v2286 = vld [vmem:[%s2272 + $0x34] sm:$0xf]
      %v2287 = vld [vmem:[%s2272 + $0x38] sm:$0xf]
      %v2288 = vld [vmem:[%s2272 + $0x3c] sm:$0xf]
      %s2289 = scalar_lea.vmem %s9, 10
      %v2290 = vld [vmem:[%s2289] sm:$0x1]
      %v2292 = vlaneseq
      %v2293 = vshrl.u32 %v2292, 7
      %v2294 = vsub.s32 0, %v2293
      %v2295 = vrot.slane %v2290, %v2294
      %v2313 = vunpack.c.l.b16 %v2273
      %v2314 = vunpack.c.l.b16 %v2274
      %v2315 = vunpack.c.l.b16 %v2275
      %v2316 = vunpack.c.l.b16 %v2276
      %v2317 = vunpack.c.l.b16 %v2277
      %v2318 = vunpack.c.l.b16 %v2278
      %v2319 = vunpack.c.l.b16 %v2279
      %v2320 = vunpack.c.l.b16 %v2280
      %v2321 = vunpack.c.l.b16 %v2281
      %v2322 = vunpack.c.l.b16 %v2282
      %v2323 = vunpack.c.l.b16 %v2283
      %v2324 = vunpack.c.l.b16 %v2284
      %v2325 = vunpack.c.l.b16 %v2285
      %v2326 = vunpack.c.l.b16 %v2286
      %v2327 = vunpack.c.l.b16 %v2287
      %v2328 = vunpack.c.l.b16 %v2288
      %v2329 = vpack.c.b16 %v2314, %v2313
      %v2330 = vpack.c.b16 %v2316, %v2315
      %v2331 = vpack.c.b16 %v2318, %v2317
      %v2332 = vpack.c.b16 %v2320, %v2319
      %v2333 = vpack.c.b16 %v2322, %v2321
      %v2334 = vpack.c.b16 %v2324, %v2323
      %v2335 = vpack.c.b16 %v2326, %v2325
      %v2336 = vpack.c.b16 %v2328, %v2327
      %2345 = vmatprep.subr.bf16.mxu0 0
      %2346 = vmatpush1.bf16.msra.mxu0 %v2336
      %2347 = vmatprep.subr.bf16.mxu0 0
      %2348 = vmatpush1.bf16.msra.mxu0 %v2335
      %2349 = vmatprep.subr.bf16.mxu0 0
      %2350 = vmatpush1.bf16.msra.mxu0 %v2334
      %2351 = vmatprep.subr.bf16.mxu0 0
      %2352 = vmatpush1.bf16.msra.mxu0 %v2333
      %2353 = vmatprep.subr.bf16.mxu0 0
      %2354 = vmatpush1.bf16.msra.mxu0 %v2332
      %2355 = vmatprep.subr.bf16.mxu0 0
      %2356 = vmatpush1.bf16.msra.mxu0 %v2331
      %2357 = vmatprep.subr.bf16.mxu0 0
      %2358 = vmatpush1.bf16.msra.mxu0 %v2330
      %2359 = vmatprep.subr.bf16.mxu0 0
      %2360 = vmatpush1.bf16.msra.mxu0 %v2329
      %2361 = vmatprep.subr.bf16.mxu0 0
      %2362 = vmatpush2.bf16.msra.mxu0 0
      %2363 = vmatprep.subr.bf16.mxu0 0
      %2364 = vmatpush2.bf16.msra.mxu0 0
      %2365 = vmatprep.subr.bf16.mxu0 0
      %2366 = vmatpush2.bf16.msra.mxu0 0
      %2367 = vmatprep.subr.bf16.mxu0 0
      %2368 = vmatpush2.bf16.msra.mxu0 0
      %2369 = vmatprep.subr.bf16.mxu0 0
      %2370 = vmatpush2.bf16.msra.mxu0 0
      %2371 = vmatprep.subr.bf16.mxu0 0
      %2372 = vmatpush2.bf16.msra.mxu0 0
      %2373 = vmatprep.subr.bf16.mxu0 0
      %2374 = vmatpush2.bf16.msra.mxu0 0
      %2375 = vmatprep.subr.bf16.mxu0 0
      %2376 = vmatpush2.bf16.msra.mxu0 0
      %2377 = vmatprep.mubr.bf16.mxu0 0
      %2378 = vmatmul.mubr.bf16.gmra.mxu0 %v1031
      %v2379 = vpop.f32.mrf.mxu0
      %v2380 = vadd.f32 %v2295, %v2379
      %v2381 = vpop.f32.mrf.mxu0
      %v2382 = vpop.f32.mrf.mxu0
      %v2383 = vpop.f32.mrf.mxu0
      %2384 = vdwg.mxu0
      %v2385 = vpack.c.bf16 %v2154, %v2154
      %v2386 = vpack.c.bf16 %v2267, %v2267
      %v2388 = vsel %vm1371, %v2385, 0
      %v2391 = vsel %vm1371, %v2386, 0
      %2393 = vmatprep.subr.bf16.mxu0 0
      %2394 = vmatpush1.bf16.xpose.msra.mxu0 0
      %2395 = vmatprep.subr.bf16.mxu0 0
      %2396 = vmatpush1.bf16.xpose.msra.mxu0 0
      %2397 = vmatprep.subr.bf16.mxu0 0
      %2398 = vmatpush1.bf16.xpose.msra.mxu0 0
      %2399 = vmatprep.subr.bf16.mxu0 0
      %2400 = vmatpush1.bf16.xpose.msra.mxu0 0
      %2401 = vmatprep.subr.bf16.mxu0 0
      %2402 = vmatpush1.bf16.xpose.msra.mxu0 0
      %2403 = vmatprep.subr.bf16.mxu0 0
      %2404 = vmatpush1.bf16.xpose.msra.mxu0 0
      %2405 = vmatprep.subr.bf16.mxu0 0
      %2406 = vmatpush1.bf16.xpose.msra.mxu0 0
      %2407 = vmatprep.subr.bf16.mxu0 0
      %2408 = vmatpush1.bf16.xpose.msra.mxu0 %v2391
      %2409 = vmatprep.subr.bf16.mxu0 0
      %2410 = vmatpush2.bf16.xpose.msra.mxu0 0
      %2411 = vmatprep.subr.bf16.mxu0 0
      %2412 = vmatpush2.bf16.xpose.msra.mxu0 0
      %2413 = vmatprep.subr.bf16.mxu0 0
      %2414 = vmatpush2.bf16.xpose.msra.mxu0 0
      %2415 = vmatprep.subr.bf16.mxu0 0
      %2416 = vmatpush2.bf16.xpose.msra.mxu0 0
      %2417 = vmatprep.subr.bf16.mxu0 0
      %2418 = vmatpush2.bf16.xpose.msra.mxu0 0
      %2419 = vmatprep.subr.bf16.mxu0 0
      %2420 = vmatpush2.bf16.xpose.msra.mxu0 0
      %2421 = vmatprep.subr.bf16.mxu0 0
      %2422 = vmatpush2.bf16.xpose.msra.mxu0 0
      %2423 = vmatprep.subr.bf16.mxu0 0
      %2424 = vmatpush2.bf16.xpose.msra.mxu0 0
      %2425 = vmatprep.mubr.bf16.mxu0 0
      %2426 = vmatmul.mubr.bf16.gmra.mxu0 %v2388
      %v2427 = vpop.f32.mrf.mxu0
      %v2428 = vadd.f32 0.0, %v2427
      %v2429 = vpop.f32.mrf.mxu0
      %v2430 = vpop.f32.mrf.mxu0
      %v2431 = vpop.f32.mrf.mxu0
      %2432 = vdwg.mxu0
      %v2433 = vsel %vm1418, %v2428, -inf
      %2434 = vmax.xlane.f32.xlu0 %v2433
      %v2435 = vpop.xlane.xlu0 %2434
      %v2436 = vsub.f32 %v2428, %v2435
      %v2437 = vmul.f32 %v2436, 1.442695
      %v2438 = vpow.pop %v2437
      %v2439 = vsel %vm1418, %v2438, 0.0
      %2440 = vadd.xlane.f32.xlu0 %v2439
      %v2441 = vpop.xlane.xlu0 %2440
      %v2442 = vrcp.pop %v2441
      %v2443 = vmul.f32 %v2438, %v2442
      %v2444 = vpack.c.bf16 %v2443, %v2443
      %v2445 = vpack.c.bf16 %v2380, %v2380
      %v2447 = vsel %vm1418, %v2444, 0
      %v2450 = vsel %vm1435, %v2445, 0
      %2452 = vmatprep.subr.bf16.mxu0 0
      %2453 = vmatpush1.bf16.msra.mxu0 0
      %2454 = vmatprep.subr.bf16.mxu0 0
      %2455 = vmatpush1.bf16.msra.mxu0 0
      %2456 = vmatprep.subr.bf16.mxu0 0
      %2457 = vmatpush1.bf16.msra.mxu0 0
      %2458 = vmatprep.subr.bf16.mxu0 0
      %2459 = vmatpush1.bf16.msra.mxu0 0
      %2460 = vmatprep.subr.bf16.mxu0 0
      %2461 = vmatpush1.bf16.msra.mxu0 0
      %2462 = vmatprep.subr.bf16.mxu0 0
      %2463 = vmatpush1.bf16.msra.mxu0 0
      %2464 = vmatprep.subr.bf16.mxu0 0
      %2465 = vmatpush1.bf16.msra.mxu0 0
      %2466 = vmatprep.subr.bf16.mxu0 0
      %2467 = vmatpush1.bf16.msra.mxu0 %v2450
      %2468 = vmatprep.subr.bf16.mxu0 0
      %2469 = vmatpush2.bf16.msra.mxu0 0
      %2470 = vmatprep.subr.bf16.mxu0 0
      %2471 = vmatpush2.bf16.msra.mxu0 0
      %2472 = vmatprep.subr.bf16.mxu0 0
      %2473 = vmatpush2.bf16.msra.mxu0 0
      %2474 = vmatprep.subr.bf16.mxu0 0
      %2475 = vmatpush2.bf16.msra.mxu0 0
      %2476 = vmatprep.subr.bf16.mxu0 0
      %2477 = vmatpush2.bf16.msra.mxu0 0
      %2478 = vmatprep.subr.bf16.mxu0 0
      %2479 = vmatpush2.bf16.msra.mxu0 0
      %2480 = vmatprep.subr.bf16.mxu0 0
      %2481 = vmatpush2.bf16.msra.mxu0 0
      %2482 = vmatprep.subr.bf16.mxu0 0
      %2483 = vmatpush2.bf16.msra.mxu0 0
      %2484 = vmatprep.mubr.bf16.mxu0 0
      %2485 = vmatmul.mubr.bf16.gmra.mxu0 %v2447
      %v2486 = vpop.f32.mrf.mxu0
      %v2487 = vadd.f32 0.0, %v2486
      %v2488 = vpop.f32.mrf.mxu0
      %v2489 = vpop.f32.mrf.mxu0
      %v2490 = vpop.f32.mrf.mxu0
      %2491 = vdwg.mxu0
      %v2492 = vpack.c.bf16 %v2487, %v2487
      %s2493 = scalar_lea.vmem %s10, 32
      %v2494 = vld [vmem:[%s2493] sm:$0xf]
      %v2495 = vld [vmem:[%s2493 + $0x4] sm:$0xf]
      %v2496 = vld [vmem:[%s2493 + $0x8] sm:$0xf]
      %v2497 = vld [vmem:[%s2493 + $0xc] sm:$0xf]
      %v2502 = vunpack.c.l.b16 %v2494
      %v2503 = vunpack.c.l.b16 %v2495
      %v2504 = vunpack.c.l.b16 %v2496
      %v2505 = vunpack.c.l.b16 %v2497
      %v2506 = vpack.c.b16 %v2503, %v2502
      %v2507 = vpack.c.b16 %v2505, %v2504
      %v2511 = vsel %vm1371, %v2492, 0
      %2513 = vmatprep.subr.bf16.mxu0 0
      %2514 = vmatpush1.bf16.msra.mxu0 0
      %2515 = vmatprep.subr.bf16.mxu0 0
      %2516 = vmatpush1.bf16.msra.mxu0 0
      %2517 = vmatprep.subr.bf16.mxu0 0
      %2518 = vmatpush1.bf16.msra.mxu0 0
      %2519 = vmatprep.subr.bf16.mxu0 0
      %2520 = vmatpush1.bf16.msra.mxu0 0
      %2521 = vmatprep.subr.bf16.mxu0 0
      %2522 = vmatpush1.bf16.msra.mxu0 0
      %2523 = vmatprep.subr.bf16.mxu0 0
      %2524 = vmatpush1.bf16.msra.mxu0 0
      %2525 = vmatprep.subr.bf16.mxu0 0
      %2526 = vmatpush1.bf16.msra.mxu0 %v2507
      %2527 = vmatprep.subr.bf16.mxu0 0
      %2528 = vmatpush1.bf16.msra.mxu0 %v2506
      %2529 = vmatprep.subr.bf16.mxu0 0
      %2530 = vmatpush2.bf16.msra.mxu0 0
      %2531 = vmatprep.subr.bf16.mxu0 0
      %2532 = vmatpush2.bf16.msra.mxu0 0
      %2533 = vmatprep.subr.bf16.mxu0 0
      %2534 = vmatpush2.bf16.msra.mxu0 0
      %2535 = vmatprep.subr.bf16.mxu0 0
      %2536 = vmatpush2.bf16.msra.mxu0 0
      %2537 = vmatprep.subr.bf16.mxu0 0
      %2538 = vmatpush2.bf16.msra.mxu0 0
      %2539 = vmatprep.subr.bf16.mxu0 0
      %2540 = vmatpush2.bf16.msra.mxu0 0
      %2541 = vmatprep.subr.bf16.mxu0 0
      %2542 = vmatpush2.bf16.msra.mxu0 0
      %2543 = vmatprep.subr.bf16.mxu0 0
      %2544 = vmatpush2.bf16.msra.mxu0 0
      %2545 = vmatprep.mubr.bf16.mxu0 0
      %2546 = vmatmul.mubr.bf16.gmra.mxu0 %v2511
      %v2547 = vpop.f32.mrf.mxu0
      %v2548 = vadd.f32 0.0, %v2547
      %v2549 = vpop.f32.mrf.mxu0
      %v2550 = vpop.f32.mrf.mxu0
      %v2551 = vpop.f32.mrf.mxu0
      %2552 = vdwg.mxu0
      %v2553 = vadd.f32 %v2041, %v2548
      %s2554 = scalar_lea.vmem %s8, 192
      %v2555 = vld [vmem:[%s2554] sm:$0xf]
      %v2556 = vld [vmem:[%s2554 + $0x4] sm:$0xf]
      %v2557 = vld [vmem:[%s2554 + $0x8] sm:$0xf]
      %v2558 = vld [vmem:[%s2554 + $0xc] sm:$0xf]
      %v2559 = vld [vmem:[%s2554 + $0x10] sm:$0xf]
      %v2560 = vld [vmem:[%s2554 + $0x14] sm:$0xf]
      %v2561 = vld [vmem:[%s2554 + $0x18] sm:$0xf]
      %v2562 = vld [vmem:[%s2554 + $0x1c] sm:$0xf]
      %v2563 = vld [vmem:[%s2554 + $0x20] sm:$0xf]
      %v2564 = vld [vmem:[%s2554 + $0x24] sm:$0xf]
      %v2565 = vld [vmem:[%s2554 + $0x28] sm:$0xf]
      %v2566 = vld [vmem:[%s2554 + $0x2c] sm:$0xf]
      %v2567 = vld [vmem:[%s2554 + $0x30] sm:$0xf]
      %v2568 = vld [vmem:[%s2554 + $0x34] sm:$0xf]
      %v2569 = vld [vmem:[%s2554 + $0x38] sm:$0xf]
      %v2570 = vld [vmem:[%s2554 + $0x3c] sm:$0xf]
      %s2571 = scalar_lea.vmem %s9, 3
      %v2572 = vld [vmem:[%s2571] sm:$0x1]
      %v2574 = vlaneseq
      %v2575 = vshrl.u32 %v2574, 7
      %v2576 = vsub.s32 0, %v2575
      %v2577 = vrot.slane %v2572, %v2576
      %v2595 = vunpack.c.l.b16 %v2555
      %v2596 = vunpack.c.l.b16 %v2556
      %v2597 = vunpack.c.l.b16 %v2557
      %v2598 = vunpack.c.l.b16 %v2558
      %v2599 = vunpack.c.l.b16 %v2559
      %v2600 = vunpack.c.l.b16 %v2560
      %v2601 = vunpack.c.l.b16 %v2561
      %v2602 = vunpack.c.l.b16 %v2562
      %v2603 = vunpack.c.l.b16 %v2563
      %v2604 = vunpack.c.l.b16 %v2564
      %v2605 = vunpack.c.l.b16 %v2565
      %v2606 = vunpack.c.l.b16 %v2566
      %v2607 = vunpack.c.l.b16 %v2567
      %v2608 = vunpack.c.l.b16 %v2568
      %v2609 = vunpack.c.l.b16 %v2569
      %v2610 = vunpack.c.l.b16 %v2570
      %v2611 = vpack.c.b16 %v2596, %v2595
      %v2612 = vpack.c.b16 %v2598, %v2597
      %v2613 = vpack.c.b16 %v2600, %v2599
      %v2614 = vpack.c.b16 %v2602, %v2601
      %v2615 = vpack.c.b16 %v2604, %v2603
      %v2616 = vpack.c.b16 %v2606, %v2605
      %v2617 = vpack.c.b16 %v2608, %v2607
      %v2618 = vpack.c.b16 %v2610, %v2609
      %2627 = vmatprep.subr.bf16.mxu0 0
      %2628 = vmatpush1.bf16.msra.mxu0 %v2618
      %2629 = vmatprep.subr.bf16.mxu0 0
      %2630 = vmatpush1.bf16.msra.mxu0 %v2617
      %2631 = vmatprep.subr.bf16.mxu0 0
      %2632 = vmatpush1.bf16.msra.mxu0 %v2616
      %2633 = vmatprep.subr.bf16.mxu0 0
      %2634 = vmatpush1.bf16.msra.mxu0 %v2615
      %2635 = vmatprep.subr.bf16.mxu0 0
      %2636 = vmatpush1.bf16.msra.mxu0 %v2614
      %2637 = vmatprep.subr.bf16.mxu0 0
      %2638 = vmatpush1.bf16.msra.mxu0 %v2613
      %2639 = vmatprep.subr.bf16.mxu0 0
      %2640 = vmatpush1.bf16.msra.mxu0 %v2612
      %2641 = vmatprep.subr.bf16.mxu0 0
      %2642 = vmatpush1.bf16.msra.mxu0 %v2611
      %2643 = vmatprep.subr.bf16.mxu0 0
      %2644 = vmatpush2.bf16.msra.mxu0 0
      %2645 = vmatprep.subr.bf16.mxu0 0
      %2646 = vmatpush2.bf16.msra.mxu0 0
      %2647 = vmatprep.subr.bf16.mxu0 0
      %2648 = vmatpush2.bf16.msra.mxu0 0
      %2649 = vmatprep.subr.bf16.mxu0 0
      %2650 = vmatpush2.bf16.msra.mxu0 0
      %2651 = vmatprep.subr.bf16.mxu0 0
      %2652 = vmatpush2.bf16.msra.mxu0 0
      %2653 = vmatprep.subr.bf16.mxu0 0
      %2654 = vmatpush2.bf16.msra.mxu0 0
      %2655 = vmatprep.subr.bf16.mxu0 0
      %2656 = vmatpush2.bf16.msra.mxu0 0
      %2657 = vmatprep.subr.bf16.mxu0 0
      %2658 = vmatpush2.bf16.msra.mxu0 0
      %2659 = vmatprep.mubr.bf16.mxu0 0
      %2660 = vmatmul.mubr.bf16.gmra.mxu0 %v1031
      %v2661 = vpop.f32.mrf.mxu0
      %v2662 = vadd.f32 %v2577, %v2661
      %v2663 = vpop.f32.mrf.mxu0
      %v2664 = vpop.f32.mrf.mxu0
      %v2665 = vpop.f32.mrf.mxu0
      %2666 = vdwg.mxu0
      %s2667 = scalar_lea.vmem %s8, 448
      %v2668 = vld [vmem:[%s2667] sm:$0xf]
      %v2669 = vld [vmem:[%s2667 + $0x4] sm:$0xf]
      %v2670 = vld [vmem:[%s2667 + $0x8] sm:$0xf]
      %v2671 = vld [vmem:[%s2667 + $0xc] sm:$0xf]
      %v2672 = vld [vmem:[%s2667 + $0x10] sm:$0xf]
      %v2673 = vld [vmem:[%s2667 + $0x14] sm:$0xf]
      %v2674 = vld [vmem:[%s2667 + $0x18] sm:$0xf]
      %v2675 = vld [vmem:[%s2667 + $0x1c] sm:$0xf]
      %v2676 = vld [vmem:[%s2667 + $0x20] sm:$0xf]
      %v2677 = vld [vmem:[%s2667 + $0x24] sm:$0xf]
      %v2678 = vld [vmem:[%s2667 + $0x28] sm:$0xf]
      %v2679 = vld [vmem:[%s2667 + $0x2c] sm:$0xf]
      %v2680 = vld [vmem:[%s2667 + $0x30] sm:$0xf]
      %v2681 = vld [vmem:[%s2667 + $0x34] sm:$0xf]
      %v2682 = vld [vmem:[%s2667 + $0x38] sm:$0xf]
      %v2683 = vld [vmem:[%s2667 + $0x3c] sm:$0xf]
      %s2684 = scalar_lea.vmem %s9, 7
      %v2685 = vld [vmem:[%s2684] sm:$0x1]
      %v2687 = vlaneseq
      %v2688 = vshrl.u32 %v2687, 7
      %v2689 = vsub.s32 0, %v2688
      %v2690 = vrot.slane %v2685, %v2689
      %v2708 = vunpack.c.l.b16 %v2668
      %v2709 = vunpack.c.l.b16 %v2669
      %v2710 = vunpack.c.l.b16 %v2670
      %v2711 = vunpack.c.l.b16 %v2671
      %v2712 = vunpack.c.l.b16 %v2672
      %v2713 = vunpack.c.l.b16 %v2673
      %v2714 = vunpack.c.l.b16 %v2674
      %v2715 = vunpack.c.l.b16 %v2675
      %v2716 = vunpack.c.l.b16 %v2676
      %v2717 = vunpack.c.l.b16 %v2677
      %v2718 = vunpack.c.l.b16 %v2678
      %v2719 = vunpack.c.l.b16 %v2679
      %v2720 = vunpack.c.l.b16 %v2680
      %v2721 = vunpack.c.l.b16 %v2681
      %v2722 = vunpack.c.l.b16 %v2682
      %v2723 = vunpack.c.l.b16 %v2683
      %v2724 = vpack.c.b16 %v2709, %v2708
      %v2725 = vpack.c.b16 %v2711, %v2710
      %v2726 = vpack.c.b16 %v2713, %v2712
      %v2727 = vpack.c.b16 %v2715, %v2714
      %v2728 = vpack.c.b16 %v2717, %v2716
      %v2729 = vpack.c.b16 %v2719, %v2718
      %v2730 = vpack.c.b16 %v2721, %v2720
      %v2731 = vpack.c.b16 %v2723, %v2722
      %2740 = vmatprep.subr.bf16.mxu0 0
      %2741 = vmatpush1.bf16.msra.mxu0 %v2731
      %2742 = vmatprep.subr.bf16.mxu0 0
      %2743 = vmatpush1.bf16.msra.mxu0 %v2730
      %2744 = vmatprep.subr.bf16.mxu0 0
      %2745 = vmatpush1.bf16.msra.mxu0 %v2729
      %2746 = vmatprep.subr.bf16.mxu0 0
      %2747 = vmatpush1.bf16.msra.mxu0 %v2728
      %2748 = vmatprep.subr.bf16.mxu0 0
      %2749 = vmatpush1.bf16.msra.mxu0 %v2727
      %2750 = vmatprep.subr.bf16.mxu0 0
      %2751 = vmatpush1.bf16.msra.mxu0 %v2726
      %2752 = vmatprep.subr.bf16.mxu0 0
      %2753 = vmatpush1.bf16.msra.mxu0 %v2725
      %2754 = vmatprep.subr.bf16.mxu0 0
      %2755 = vmatpush1.bf16.msra.mxu0 %v2724
      %2756 = vmatprep.subr.bf16.mxu0 0
      %2757 = vmatpush2.bf16.msra.mxu0 0
      %2758 = vmatprep.subr.bf16.mxu0 0
      %2759 = vmatpush2.bf16.msra.mxu0 0
      %2760 = vmatprep.subr.bf16.mxu0 0
      %2761 = vmatpush2.bf16.msra.mxu0 0
      %2762 = vmatprep.subr.bf16.mxu0 0
      %2763 = vmatpush2.bf16.msra.mxu0 0
      %2764 = vmatprep.subr.bf16.mxu0 0
      %2765 = vmatpush2.bf16.msra.mxu0 0
      %2766 = vmatprep.subr.bf16.mxu0 0
      %2767 = vmatpush2.bf16.msra.mxu0 0
      %2768 = vmatprep.subr.bf16.mxu0 0
      %2769 = vmatpush2.bf16.msra.mxu0 0
      %2770 = vmatprep.subr.bf16.mxu0 0
      %2771 = vmatpush2.bf16.msra.mxu0 0
      %2772 = vmatprep.mubr.bf16.mxu0 0
      %2773 = vmatmul.mubr.bf16.gmra.mxu0 %v1031
      %v2774 = vpop.f32.mrf.mxu0
      %v2775 = vadd.f32 %v2690, %v2774
      %v2776 = vpop.f32.mrf.mxu0
      %v2777 = vpop.f32.mrf.mxu0
      %v2778 = vpop.f32.mrf.mxu0
      %2779 = vdwg.mxu0
      %s2780 = scalar_lea.vmem %s8, 704
      %v2781 = vld [vmem:[%s2780] sm:$0xf]
      %v2782 = vld [vmem:[%s2780 + $0x4] sm:$0xf]
      %v2783 = vld [vmem:[%s2780 + $0x8] sm:$0xf]
      %v2784 = vld [vmem:[%s2780 + $0xc] sm:$0xf]
      %v2785 = vld [vmem:[%s2780 + $0x10] sm:$0xf]
      %v2786 = vld [vmem:[%s2780 + $0x14] sm:$0xf]
      %v2787 = vld [vmem:[%s2780 + $0x18] sm:$0xf]
      %v2788 = vld [vmem:[%s2780 + $0x1c] sm:$0xf]
      %v2789 = vld [vmem:[%s2780 + $0x20] sm:$0xf]
      %v2790 = vld [vmem:[%s2780 + $0x24] sm:$0xf]
      %v2791 = vld [vmem:[%s2780 + $0x28] sm:$0xf]
      %v2792 = vld [vmem:[%s2780 + $0x2c] sm:$0xf]
      %v2793 = vld [vmem:[%s2780 + $0x30] sm:$0xf]
      %v2794 = vld [vmem:[%s2780 + $0x34] sm:$0xf]
      %v2795 = vld [vmem:[%s2780 + $0x38] sm:$0xf]
      %v2796 = vld [vmem:[%s2780 + $0x3c] sm:$0xf]
      %s2797 = scalar_lea.vmem %s9, 11
      %v2798 = vld [vmem:[%s2797] sm:$0x1]
      %v2800 = vlaneseq
      %v2801 = vshrl.u32 %v2800, 7
      %v2802 = vsub.s32 0, %v2801
      %v2803 = vrot.slane %v2798, %v2802
      %v2821 = vunpack.c.l.b16 %v2781
      %v2822 = vunpack.c.l.b16 %v2782
      %v2823 = vunpack.c.l.b16 %v2783
      %v2824 = vunpack.c.l.b16 %v2784
      %v2825 = vunpack.c.l.b16 %v2785
      %v2826 = vunpack.c.l.b16 %v2786
      %v2827 = vunpack.c.l.b16 %v2787
      %v2828 = vunpack.c.l.b16 %v2788
      %v2829 = vunpack.c.l.b16 %v2789
      %v2830 = vunpack.c.l.b16 %v2790
      %v2831 = vunpack.c.l.b16 %v2791
      %v2832 = vunpack.c.l.b16 %v2792
      %v2833 = vunpack.c.l.b16 %v2793
      %v2834 = vunpack.c.l.b16 %v2794
      %v2835 = vunpack.c.l.b16 %v2795
      %v2836 = vunpack.c.l.b16 %v2796
      %v2837 = vpack.c.b16 %v2822, %v2821
      %v2838 = vpack.c.b16 %v2824, %v2823
      %v2839 = vpack.c.b16 %v2826, %v2825
      %v2840 = vpack.c.b16 %v2828, %v2827
      %v2841 = vpack.c.b16 %v2830, %v2829
      %v2842 = vpack.c.b16 %v2832, %v2831
      %v2843 = vpack.c.b16 %v2834, %v2833
      %v2844 = vpack.c.b16 %v2836, %v2835
      %2853 = vmatprep.subr.bf16.mxu0 0
      %2854 = vmatpush1.bf16.msra.mxu0 %v2844
      %2855 = vmatprep.subr.bf16.mxu0 0
      %2856 = vmatpush1.bf16.msra.mxu0 %v2843
      %2857 = vmatprep.subr.bf16.mxu0 0
      %2858 = vmatpush1.bf16.msra.mxu0 %v2842
      %2859 = vmatprep.subr.bf16.mxu0 0
      %2860 = vmatpush1.bf16.msra.mxu0 %v2841
      %2861 = vmatprep.subr.bf16.mxu0 0
      %2862 = vmatpush1.bf16.msra.mxu0 %v2840
      %2863 = vmatprep.subr.bf16.mxu0 0
      %2864 = vmatpush1.bf16.msra.mxu0 %v2839
      %2865 = vmatprep.subr.bf16.mxu0 0
      %2866 = vmatpush1.bf16.msra.mxu0 %v2838
      %2867 = vmatprep.subr.bf16.mxu0 0
      %2868 = vmatpush1.bf16.msra.mxu0 %v2837
      %2869 = vmatprep.subr.bf16.mxu0 0
      %2870 = vmatpush2.bf16.msra.mxu0 0
      %2871 = vmatprep.subr.bf16.mxu0 0
      %2872 = vmatpush2.bf16.msra.mxu0 0
      %2873 = vmatprep.subr.bf16.mxu0 0
      %2874 = vmatpush2.bf16.msra.mxu0 0
      %2875 = vmatprep.subr.bf16.mxu0 0
      %2876 = vmatpush2.bf16.msra.mxu0 0
      %2877 = vmatprep.subr.bf16.mxu0 0
      %2878 = vmatpush2.bf16.msra.mxu0 0
      %2879 = vmatprep.subr.bf16.mxu0 0
      %2880 = vmatpush2.bf16.msra.mxu0 0
      %2881 = vmatprep.subr.bf16.mxu0 0
      %2882 = vmatpush2.bf16.msra.mxu0 0
      %2883 = vmatprep.subr.bf16.mxu0 0
      %2884 = vmatpush2.bf16.msra.mxu0 0
      %2885 = vmatprep.mubr.bf16.mxu0 0
      %2886 = vmatmul.mubr.bf16.gmra.mxu0 %v1031
      %v2887 = vpop.f32.mrf.mxu0
      %v2888 = vadd.f32 %v2803, %v2887
      %v2889 = vpop.f32.mrf.mxu0
      %v2890 = vpop.f32.mrf.mxu0
      %v2891 = vpop.f32.mrf.mxu0
      %2892 = vdwg.mxu0
      %v2893 = vpack.c.bf16 %v2662, %v2662
      %v2894 = vpack.c.bf16 %v2775, %v2775
      %v2896 = vsel %vm1371, %v2893, 0
      %v2899 = vsel %vm1371, %v2894, 0
      %2901 = vmatprep.subr.bf16.mxu0 0
      %2902 = vmatpush1.bf16.xpose.msra.mxu0 0
      %2903 = vmatprep.subr.bf16.mxu0 0
      %2904 = vmatpush1.bf16.xpose.msra.mxu0 0
      %2905 = vmatprep.subr.bf16.mxu0 0
      %2906 = vmatpush1.bf16.xpose.msra.mxu0 0
      %2907 = vmatprep.subr.bf16.mxu0 0
      %2908 = vmatpush1.bf16.xpose.msra.mxu0 0
      %2909 = vmatprep.subr.bf16.mxu0 0
      %2910 = vmatpush1.bf16.xpose.msra.mxu0 0
      %2911 = vmatprep.subr.bf16.mxu0 0
      %2912 = vmatpush1.bf16.xpose.msra.mxu0 0
      %2913 = vmatprep.subr.bf16.mxu0 0
      %2914 = vmatpush1.bf16.xpose.msra.mxu0 0
      %2915 = vmatprep.subr.bf16.mxu0 0
      %2916 = vmatpush1.bf16.xpose.msra.mxu0 %v2899
      %2917 = vmatprep.subr.bf16.mxu0 0
      %2918 = vmatpush2.bf16.xpose.msra.mxu0 0
      %2919 = vmatprep.subr.bf16.mxu0 0
      %2920 = vmatpush2.bf16.xpose.msra.mxu0 0
      %2921 = vmatprep.subr.bf16.mxu0 0
      %2922 = vmatpush2.bf16.xpose.msra.mxu0 0
      %2923 = vmatprep.subr.bf16.mxu0 0
      %2924 = vmatpush2.bf16.xpose.msra.mxu0 0
      %2925 = vmatprep.subr.bf16.mxu0 0
      %2926 = vmatpush2.bf16.xpose.msra.mxu0 0
      %2927 = vmatprep.subr.bf16.mxu0 0
      %2928 = vmatpush2.bf16.xpose.msra.mxu0 0
      %2929 = vmatprep.subr.bf16.mxu0 0
      %2930 = vmatpush2.bf16.xpose.msra.mxu0 0
      %2931 = vmatprep.subr.bf16.mxu0 0
      %2932 = vmatpush2.bf16.xpose.msra.mxu0 0
      %2933 = vmatprep.mubr.bf16.mxu0 0
      %2934 = vmatmul.mubr.bf16.gmra.mxu0 %v2896
      %v2935 = vpop.f32.mrf.mxu0
      %v2936 = vadd.f32 0.0, %v2935
      %v2937 = vpop.f32.mrf.mxu0
      %v2938 = vpop.f32.mrf.mxu0
      %v2939 = vpop.f32.mrf.mxu0
      %2940 = vdwg.mxu0
      %v2941 = vsel %vm1418, %v2936, -inf
      %2942 = vmax.xlane.f32.xlu0 %v2941
      %v2943 = vpop.xlane.xlu0 %2942
      %v2944 = vsub.f32 %v2936, %v2943
      %v2945 = vmul.f32 %v2944, 1.442695
      %v2946 = vpow.pop %v2945
      %v2947 = vsel %vm1418, %v2946, 0.0
      %2948 = vadd.xlane.f32.xlu0 %v2947
      %v2949 = vpop.xlane.xlu0 %2948
      %v2950 = vrcp.pop %v2949
      %v2951 = vmul.f32 %v2946, %v2950
      %v2952 = vpack.c.bf16 %v2951, %v2951
      %v2953 = vpack.c.bf16 %v2888, %v2888
      %v2955 = vsel %vm1418, %v2952, 0
      %v2958 = vsel %vm1435, %v2953, 0
      %2960 = vmatprep.subr.bf16.mxu0 0
      %2961 = vmatpush1.bf16.msra.mxu0 0
      %2962 = vmatprep.subr.bf16.mxu0 0
      %2963 = vmatpush1.bf16.msra.mxu0 0
      %2964 = vmatprep.subr.bf16.mxu0 0
      %2965 = vmatpush1.bf16.msra.mxu0 0
      %2966 = vmatprep.subr.bf16.mxu0 0
      %2967 = vmatpush1.bf16.msra.mxu0 0
      %2968 = vmatprep.subr.bf16.mxu0 0
      %2969 = vmatpush1.bf16.msra.mxu0 0
      %2970 = vmatprep.subr.bf16.mxu0 0
      %2971 = vmatpush1.bf16.msra.mxu0 0
      %2972 = vmatprep.subr.bf16.mxu0 0
      %2973 = vmatpush1.bf16.msra.mxu0 0
      %2974 = vmatprep.subr.bf16.mxu0 0
      %2975 = vmatpush1.bf16.msra.mxu0 %v2958
      %2976 = vmatprep.subr.bf16.mxu0 0
      %2977 = vmatpush2.bf16.msra.mxu0 0
      %2978 = vmatprep.subr.bf16.mxu0 0
      %2979 = vmatpush2.bf16.msra.mxu0 0
      %2980 = vmatprep.subr.bf16.mxu0 0
      %2981 = vmatpush2.bf16.msra.mxu0 0
      %2982 = vmatprep.subr.bf16.mxu0 0
      %2983 = vmatpush2.bf16.msra.mxu0 0
      %2984 = vmatprep.subr.bf16.mxu0 0
      %2985 = vmatpush2.bf16.msra.mxu0 0
      %2986 = vmatprep.subr.bf16.mxu0 0
      %2987 = vmatpush2.bf16.msra.mxu0 0
      %2988 = vmatprep.subr.bf16.mxu0 0
      %2989 = vmatpush2.bf16.msra.mxu0 0
      %2990 = vmatprep.subr.bf16.mxu0 0
      %2991 = vmatpush2.bf16.msra.mxu0 0
      %2992 = vmatprep.mubr.bf16.mxu0 0
      %2993 = vmatmul.mubr.bf16.gmra.mxu0 %v2955
      %v2994 = vpop.f32.mrf.mxu0
      %v2995 = vadd.f32 0.0, %v2994
      %v2996 = vpop.f32.mrf.mxu0
      %v2997 = vpop.f32.mrf.mxu0
      %v2998 = vpop.f32.mrf.mxu0
      %2999 = vdwg.mxu0
      %v3000 = vpack.c.bf16 %v2995, %v2995
      %s3001 = scalar_lea.vmem %s10, 48
      %v3002 = vld [vmem:[%s3001] sm:$0xf]
      %v3003 = vld [vmem:[%s3001 + $0x4] sm:$0xf]
      %v3004 = vld [vmem:[%s3001 + $0x8] sm:$0xf]
      %v3005 = vld [vmem:[%s3001 + $0xc] sm:$0xf]
      %v3010 = vunpack.c.l.b16 %v3002
      %v3011 = vunpack.c.l.b16 %v3003
      %v3012 = vunpack.c.l.b16 %v3004
      %v3013 = vunpack.c.l.b16 %v3005
      %v3014 = vpack.c.b16 %v3011, %v3010
      %v3015 = vpack.c.b16 %v3013, %v3012
      %v3019 = vsel %vm1371, %v3000, 0
      %3021 = vmatprep.subr.bf16.mxu0 0
      %3022 = vmatpush1.bf16.msra.mxu0 0
      %3023 = vmatprep.subr.bf16.mxu0 0
      %3024 = vmatpush1.bf16.msra.mxu0 0
      %3025 = vmatprep.subr.bf16.mxu0 0
      %3026 = vmatpush1.bf16.msra.mxu0 0
      %3027 = vmatprep.subr.bf16.mxu0 0
      %3028 = vmatpush1.bf16.msra.mxu0 0
      %3029 = vmatprep.subr.bf16.mxu0 0
      %3030 = vmatpush1.bf16.msra.mxu0 0
      %3031 = vmatprep.subr.bf16.mxu0 0
      %3032 = vmatpush1.bf16.msra.mxu0 0
      %3033 = vmatprep.subr.bf16.mxu0 0
      %3034 = vmatpush1.bf16.msra.mxu0 %v3015
      %3035 = vmatprep.subr.bf16.mxu0 0
      %3036 = vmatpush1.bf16.msra.mxu0 %v3014
      %3037 = vmatprep.subr.bf16.mxu0 0
      %3038 = vmatpush2.bf16.msra.mxu0 0
      %3039 = vmatprep.subr.bf16.mxu0 0
      %3040 = vmatpush2.bf16.msra.mxu0 0
      %3041 = vmatprep.subr.bf16.mxu0 0
      %3042 = vmatpush2.bf16.msra.mxu0 0
      %3043 = vmatprep.subr.bf16.mxu0 0
      %3044 = vmatpush2.bf16.msra.mxu0 0
      %3045 = vmatprep.subr.bf16.mxu0 0
      %3046 = vmatpush2.bf16.msra.mxu0 0
      %3047 = vmatprep.subr.bf16.mxu0 0
      %3048 = vmatpush2.bf16.msra.mxu0 0
      %3049 = vmatprep.subr.bf16.mxu0 0
      %3050 = vmatpush2.bf16.msra.mxu0 0
      %3051 = vmatprep.subr.bf16.mxu0 0
      %3052 = vmatpush2.bf16.msra.mxu0 0
      %3053 = vmatprep.mubr.bf16.mxu0 0
      %3054 = vmatmul.mubr.bf16.gmra.mxu0 %v3019
      %v3055 = vpop.f32.mrf.mxu0
      %v3056 = vadd.f32 0.0, %v3055
      %v3057 = vpop.f32.mrf.mxu0
      %v3058 = vpop.f32.mrf.mxu0
      %v3059 = vpop.f32.mrf.mxu0
      %3060 = vdwg.mxu0
      %v3061 = vadd.f32 %v2553, %v3056
      %v3062 = vadd.f32 %v999, %v3061
      %v3063 = vld [vmem:[%s11] sm:$0x1]
      %v3065 = vlaneseq
      %v3066 = vshrl.u32 %v3065, 7
      %v3067 = vsub.s32 0, %v3066
      %v3068 = vrot.slane %v3063, %v3067
      %v3070 = vadd.f32 %v3062, %v3068
      %3071 = vst [vmem:[%s617] sm:$0xff] %v3070
      %s3072 = scalar_lea.vmem %s2, 2
      %v3073 = vld [vmem:[%s3072] sm:$0x1]
      %s3074 = scalar_lea.vmem %s3, 2
      %v3075 = vld [vmem:[%s3074] sm:$0x1]
      %3076 = vadd.xlane.f32.xlu0 %v3070
      %v3077 = vpop.xlane.xlu0 %3076
      %v3078 = vmul.f32 %v3077, %v637
      %v3079 = vsub.f32 %v3070, %v3078
      %v3080 = vmul.f32 %v3079, %v3079
      %3081 = vadd.xlane.f32.xlu0 %v3080
      %v3082 = vpop.xlane.xlu0 %3081
      %v3083 = vmul.f32 %v3082, %v637
      %v3084 = vadd.f32 %v3083, 1e-05
      %v3085 = vrsqrt.pop %v3084
      %v3086 = vmul.f32 %v3079, %v3085
      %v3088 = vlaneseq
      %v3089 = vshrl.u32 %v3088, 7
      %v3090 = vsub.s32 0, %v3089
      %v3091 = vrot.slane %v3073, %v3090
      %v3093 = vmul.f32 %v3086, %v3091
      %v3095 = vlaneseq
      %v3096 = vshrl.u32 %v3095, 7
      %v3097 = vsub.s32 0, %v3096
      %v3098 = vrot.slane %v3075, %v3097
      %v3100 = vadd.f32 %v3093, %v3098
      %v3101 = vpack.c.bf16 %v3100, %v3100
      %v3102 = vld [vmem:[%s12] sm:$0xff]
      %v3103 = vld [vmem:[%s12 + $0x8] sm:$0xff]
      %v3104 = vld [vmem:[%s12 + $0x10] sm:$0xff]
      %v3105 = vld [vmem:[%s12 + $0x18] sm:$0xff]
      %v3106 = vld [vmem:[%s12 + $0x20] sm:$0xff]
      %v3107 = vld [vmem:[%s12 + $0x28] sm:$0xff]
      %v3108 = vld [vmem:[%s12 + $0x30] sm:$0xff]
      %v3109 = vld [vmem:[%s12 + $0x38] sm:$0xff]
      %v3110 = vld [vmem:[%s12 + $0x40] sm:$0xff]
      %v3111 = vld [vmem:[%s12 + $0x48] sm:$0xff]
      %v3112 = vld [vmem:[%s12 + $0x50] sm:$0xff]
      %v3113 = vld [vmem:[%s12 + $0x58] sm:$0xff]
      %v3114 = vld [vmem:[%s12 + $0x60] sm:$0xff]
      %v3115 = vld [vmem:[%s12 + $0x68] sm:$0xff]
      %v3116 = vld [vmem:[%s12 + $0x70] sm:$0xff]
      %v3117 = vld [vmem:[%s12 + $0x78] sm:$0xff]
      %v3118 = vld [vmem:[%s13] sm:$0x3]
      %v3120 = vlaneseq
      %v3121 = vshrl.u32 %v3120, 7
      %v3122 = vsub.s32 0, %v3121
      %v3123 = vrot.slane %v3118, %v3122
      %v3124 = vlaneseq
      %v3125 = vshrl.u32 %v3124, 7
      %v3126 = vsub.s32 1, %v3125
      %v3127 = vrot.slane %v3118, %v3126
      %v3146 = vunpack.c.l.b16 %v3102
      %v3147 = vunpack.c.h.b16 %v3102
      %v3148 = vunpack.c.l.b16 %v3103
      %v3149 = vunpack.c.h.b16 %v3103
      %v3150 = vunpack.c.l.b16 %v3104
      %v3151 = vunpack.c.h.b16 %v3104
      %v3152 = vunpack.c.l.b16 %v3105
      %v3153 = vunpack.c.h.b16 %v3105
      %v3154 = vunpack.c.l.b16 %v3106
      %v3155 = vunpack.c.h.b16 %v3106
      %v3156 = vunpack.c.l.b16 %v3107
      %v3157 = vunpack.c.h.b16 %v3107
      %v3158 = vunpack.c.l.b16 %v3108
      %v3159 = vunpack.c.h.b16 %v3108
      %v3160 = vunpack.c.l.b16 %v3109
      %v3161 = vunpack.c.h.b16 %v3109
      %v3162 = vunpack.c.l.b16 %v3110
      %v3163 = vunpack.c.h.b16 %v3110
      %v3164 = vunpack.c.l.b16 %v3111
      %v3165 = vunpack.c.h.b16 %v3111
      %v3166 = vunpack.c.l.b16 %v3112
      %v3167 = vunpack.c.h.b16 %v3112
      %v3168 = vunpack.c.l.b16 %v3113
      %v3169 = vunpack.c.h.b16 %v3113
      %v3170 = vunpack.c.l.b16 %v3114
      %v3171 = vunpack.c.h.b16 %v3114
      %v3172 = vunpack.c.l.b16 %v3115
      %v3173 = vunpack.c.h.b16 %v3115
      %v3174 = vunpack.c.l.b16 %v3116
      %v3175 = vunpack.c.h.b16 %v3116
      %v3176 = vunpack.c.l.b16 %v3117
      %v3177 = vunpack.c.h.b16 %v3117
      %v3178 = vpack.c.b16 %v3148, %v3146
      %v3179 = vpack.c.b16 %v3149, %v3147
      %v3180 = vpack.c.b16 %v3152, %v3150
      %v3181 = vpack.c.b16 %v3153, %v3151
      %v3182 = vpack.c.b16 %v3156, %v3154
      %v3183 = vpack.c.b16 %v3157, %v3155
      %v3184 = vpack.c.b16 %v3160, %v3158
      %v3185 = vpack.c.b16 %v3161, %v3159
      %v3186 = vpack.c.b16 %v3164, %v3162
      %v3187 = vpack.c.b16 %v3165, %v3163
      %v3188 = vpack.c.b16 %v3168, %v3166
      %v3189 = vpack.c.b16 %v3169, %v3167
      %v3190 = vpack.c.b16 %v3172, %v3170
      %v3191 = vpack.c.b16 %v3173, %v3171
      %v3192 = vpack.c.b16 %v3176, %v3174
      %v3193 = vpack.c.b16 %v3177, %v3175
      %3210 = vmatprep.subr.bf16.mxu0 %v3193
      %3211 = vmatpush1.bf16.msra.mxu0 %v3192
      %3212 = vmatprep.subr.bf16.mxu0 %v3191
      %3213 = vmatpush1.bf16.msra.mxu0 %v3190
      %3214 = vmatprep.subr.bf16.mxu0 %v3189
      %3215 = vmatpush1.bf16.msra.mxu0 %v3188
      %3216 = vmatprep.subr.bf16.mxu0 %v3187
      %3217 = vmatpush1.bf16.msra.mxu0 %v3186
      %3218 = vmatprep.subr.bf16.mxu0 %v3185
      %3219 = vmatpush1.bf16.msra.mxu0 %v3184
      %3220 = vmatprep.subr.bf16.mxu0 %v3183
      %3221 = vmatpush1.bf16.msra.mxu0 %v3182
      %3222 = vmatprep.subr.bf16.mxu0 %v3181
      %3223 = vmatpush1.bf16.msra.mxu0 %v3180
      %3224 = vmatprep.subr.bf16.mxu0 %v3179
      %3225 = vmatpush1.bf16.msra.mxu0 %v3178
      %3226 = vmatprep.subr.bf16.mxu0 0
      %3227 = vmatpush2.bf16.msra.mxu0 0
      %3228 = vmatprep.subr.bf16.mxu0 0
      %3229 = vmatpush2.bf16.msra.mxu0 0
      %3230 = vmatprep.subr.bf16.mxu0 0
      %3231 = vmatpush2.bf16.msra.mxu0 0
      %3232 = vmatprep.subr.bf16.mxu0 0
      %3233 = vmatpush2.bf16.msra.mxu0 0
      %3234 = vmatprep.subr.bf16.mxu0 0
      %3235 = vmatpush2.bf16.msra.mxu0 0
      %3236 = vmatprep.subr.bf16.mxu0 0
      %3237 = vmatpush2.bf16.msra.mxu0 0
      %3238 = vmatprep.subr.bf16.mxu0 0
      %3239 = vmatpush2.bf16.msra.mxu0 0
      %3240 = vmatprep.subr.bf16.mxu0 0
      %3241 = vmatpush2.bf16.msra.mxu0 0
      %3242 = vmatprep.mubr.bf16.mxu0 0
      %3243 = vmatmul.mubr.bf16.gmra.mxu0 %v3101
      %v3244 = vpop.f32.mrf.mxu0
      %v3245 = vadd.f32 %v3123, %v3244
      %v3246 = vpop.f32.mrf.mxu0
      %v3247 = vadd.f32 %v3127, %v3246
      %v3248 = vpop.f32.mrf.mxu0
      %v3249 = vpop.f32.mrf.mxu0
      %3250 = vdwg.mxu0
      %v3251 = vmul.f32 %v3245, 0.5
      %v3252 = vmul.f32 %v3247, 0.5
      %v3253 = vmul.f32 %v3245, 0.70710677
      %v3254 = vmul.f32 %v3247, 0.70710677
      %v3255 = verf.f32.pop %v3253
      %v3256 = verf.f32.pop %v3254
      %v3257 = vadd.f32 %v3255, 1.0
      %v3258 = vadd.f32 %v3256, 1.0
      %v3259 = vmul.f32 %v3251, %v3257
      %v3260 = vmul.f32 %v3252, %v3258
      %v3261 = vld [vmem:[%s14] sm:$0x3]
      %v3263 = vlaneseq
      %v3264 = vshrl.u32 %v3263, 7
      %v3265 = vsub.s32 0, %v3264
      %v3266 = vrot.slane %v3261, %v3265
      %v3267 = vlaneseq
      %v3268 = vshrl.u32 %v3267, 7
      %v3269 = vsub.s32 1, %v3268
      %v3270 = vrot.slane %v3261, %v3269
      %v3273 = vmul.f32 %v3259, %v3266
      %v3274 = vmul.f32 %v3260, %v3270
      %v3275 = vld [vmem:[%s15] sm:$0x3]
      %v3277 = vlaneseq
      %v3278 = vshrl.u32 %v3277, 7
      %v3279 = vsub.s32 0, %v3278
      %v3280 = vrot.slane %v3275, %v3279
      %v3281 = vlaneseq
      %v3282 = vshrl.u32 %v3281, 7
      %v3283 = vsub.s32 1, %v3282
      %v3284 = vrot.slane %v3275, %v3283
      %v3287 = vadd.f32 %v3273, %v3280
      %v3288 = vadd.f32 %v3274, %v3284
      %v3289 = vpack.c.bf16 %v3287, %v3287
      %v3290 = vpack.c.bf16 %v3288, %v3288
      %v3293 = vunpack.c.l.b16 %v3289
      %v3294 = vunpack.c.l.b16 %v3290
      %v3295 = vpack.c.b16 %v3294, %v3293
      %3297 = vst [vmem:[%s622] sm:$0xff] %v3295
      %v3298 = vrot.slane %v3287, 4
      %v3299 = vadd.f32 %v3287, %v3298
      %v3300 = vrot.slane %v3299, 2
      %v3301 = vadd.f32 %v3299, %v3300
      %v3302 = vrot.slane %v3301, 1
      %v3303 = vadd.f32 %v3301, %v3302
      %v3304 = vrot.slane %v3288, 4
      %v3305 = vadd.f32 %v3288, %v3304
      %v3306 = vrot.slane %v3305, 2
      %v3307 = vadd.f32 %v3305, %v3306
      %v3308 = vrot.slane %v3307, 1
      %v3309 = vadd.f32 %v3307, %v3308
      %v3312 = vcombine.low %v3303, %v3309
      %v3314 = vunpack.c.l.s4 1966171168
      %v3315 = vunpack.c.0.s8 %v3314
      %v3316 = vlaneseq
      %v3317 = vshrl.u32 %v3316, 7
      %v3318 = vsub.s32 %v3315, %v3317
      %v3319 = vrot.slane %v3312, %v3318
      %v3321 = vunpack.c.l.s4 1966171168
      %v3322 = vunpack.c.0.s8 %v3321
      %v3323 = vlaneseq
      %v3324 = vshrl.u32 %v3323, 7
      %v3325 = vsub.s32 %v3322, %v3324
      %v3326 = vrot.slane %v3319, %v3325
      %v3328 = vlaneseq
      %vm3329 = vcmp.ge.s32.totalorder %v3328, 0
      %vm3330 = vcmp.lt.s32.totalorder %v3328, 256
      %vm3331 = vmand %vm3329, %vm3330
      %3332 = vst.msk [vmem:[%s626] sm:$0x3] %vm3331, %v3326
      %v3333 = vmul.f32 %v3287, %v3287
      %v3334 = vmul.f32 %v3288, %v3288
      %v3335 = vrot.slane %v3333, 4
      %v3336 = vadd.f32 %v3333, %v3335
      %v3337 = vrot.slane %v3336, 2
      %v3338 = vadd.f32 %v3336, %v3337
      %v3339 = vrot.slane %v3338, 1
      %v3340 = vadd.f32 %v3338, %v3339
      %v3341 = vrot.slane %v3334, 4
      %v3342 = vadd.f32 %v3334, %v3341
      %v3343 = vrot.slane %v3342, 2
      %v3344 = vadd.f32 %v3342, %v3343
      %v3345 = vrot.slane %v3344, 1
      %v3346 = vadd.f32 %v3344, %v3345
      %v3349 = vcombine.low %v3340, %v3346
      %v3351 = vunpack.c.l.s4 1966171168
      %v3352 = vunpack.c.0.s8 %v3351
      %v3353 = vlaneseq
      %v3354 = vshrl.u32 %v3353, 7
      %v3355 = vsub.s32 %v3352, %v3354
      %v3356 = vrot.slane %v3349, %v3355
      %v3358 = vunpack.c.l.s4 1966171168
      %v3359 = vunpack.c.0.s8 %v3358
      %v3360 = vlaneseq
      %v3361 = vshrl.u32 %v3360, 7
      %v3362 = vsub.s32 %v3359, %v3361
      %v3363 = vrot.slane %v3356, %v3362
      %3365 = vst.msk [vmem:[%s630] sm:$0x3] %vm3331, %v3363
      %p3366 = scmp.lt.s32.totalorder %s31, 1
      %s3367 = scalar_select %p3366, %s31, 1
      %s3368 = smul.addr %s3367, 8
      %s3369 = scalar_lea.vmem %s16, %s3368
      %p3370 = scmp.lt.s32.totalorder %s31, 1
      %s3371 = scalar_select %p3370, %s31, 1
      %s3372 = smul.addr %s3371, 2
      %s3373 = smul.addr %s3372, 4
      %s3374 = scalar_lea.vmem %s17, %s3373
      %p3375 = scmp.lt.s32.totalorder %s31, 1
      %s3376 = scalar_select %p3375, %s31, 1
      %s3377 = smul.addr %s3376, 2
      %s3378 = scalar_lea.vmem %s18, %s3377
      %p3379 = scmp.lt.s32.totalorder %s31, 1
      %s3380 = scalar_select %p3379, %s31, 1
      %s3381 = smul.addr %s3380, 2
      %s3382 = scalar_lea.vmem %s19, %s3381
      // Predicated region
      $region85: #{w2vbert_forward.10} parent=83 // pred_check
        %p3383 = pneg %p390
      $region86: #{w2vbert_forward.10} parent=83 // pred_check_branch
        %3385 = sbr.rel (%p3383) target = $region88
      $region87: #{w2vbert_forward.10} parent=83 // pred_region
        _
      $region88: #{w2vbert_forward.10} parent=83 // pred_fallthru
        _
      // Predicated region
      $region89: #{w2vbert_forward.10} parent=83 // pred_check
        %p3386 = pneg %p416
      $region90: #{w2vbert_forward.10} parent=83 // pred_check_branch
        %3388 = sbr.rel (%p3386) target = $region92
      $region91: #{w2vbert_forward.10} parent=83 // pred_region
        _
      $region92: #{w2vbert_forward.10} parent=83 // pred_fallthru
        _
      // Predicated region
      $region93: #{w2vbert_forward.10} parent=83 // pred_check
        %p3389 = pneg %p442
      $region94: #{w2vbert_forward.10} parent=83 // pred_check_branch
        %3391 = sbr.rel (%p3389) target = $region96
      $region95: #{w2vbert_forward.10} parent=83 // pred_region
        _
      $region96: #{w2vbert_forward.10} parent=83 // pred_fallthru
        _
      // Predicated region
      $region97: #{w2vbert_forward.10} parent=83 // pred_check
        %p3392 = pneg %p468
      $region98: #{w2vbert_forward.10} parent=83 // pred_check_branch
        %3394 = sbr.rel (%p3392) target = $region100
      $region99: #{w2vbert_forward.10} parent=83 // pred_region
        _
      $region100: #{w2vbert_forward.10} parent=83 // pred_fallthru
        _
    $region84: #{w2vbert_forward.10} parent=5 // pred_fallthru
      _
    %p3395 = scmp.le.s32.totalorder 2, %s26
    // Predicated region
    $region101: #{w2vbert_forward.10} parent=5 // pred_check
      %p3396 = pneg %p3395
    $region102: #{w2vbert_forward.10} parent=5 // pred_check_branch
      %3398 = sbr.rel (%p3396) target = $region104
    $region103: #{w2vbert_forward.10} parent=5 // pred_region
      %s3399 = ssub.s32 %s26, 2
      // Predicated region
      $region105: #{w2vbert_forward.10} parent=103 // pred_check
        %p3400 = pneg %p396
      $region106: #{w2vbert_forward.10} parent=103 // pred_check_branch
        %3402 = sbr.rel (%p3400) target = $region108
      $region107: #{w2vbert_forward.10} parent=103 // pred_region
        %p3403 = scmp.lt.s32.totalorder %s32, 1
        %s3404 = scalar_select %p3403, %s32, 1
        %s3405 = smul.addr %s3404, 8
        %s3406 = scalar_lea.vmem %s16, %s3405
      $region108: #{w2vbert_forward.10} parent=103 // pred_fallthru
        _
      // Predicated region
      $region109: #{w2vbert_forward.10} parent=103 // pred_check
        %p3407 = pneg %p422
      $region110: #{w2vbert_forward.10} parent=103 // pred_check_branch
        %3409 = sbr.rel (%p3407) target = $region112
      $region111: #{w2vbert_forward.10} parent=103 // pred_region
        %p3410 = scmp.lt.s32.totalorder %s32, 1
        %s3411 = scalar_select %p3410, %s32, 1
        %s3412 = smul.addr %s3411, 2
        %s3413 = smul.addr %s3412, 4
        %s3414 = scalar_lea.vmem %s17, %s3413
      $region112: #{w2vbert_forward.10} parent=103 // pred_fallthru
        _
      // Predicated region
      $region113: #{w2vbert_forward.10} parent=103 // pred_check
        %p3415 = pneg %p448
      $region114: #{w2vbert_forward.10} parent=103 // pred_check_branch
        %3417 = sbr.rel (%p3415) target = $region116
      $region115: #{w2vbert_forward.10} parent=103 // pred_region
        %p3418 = scmp.lt.s32.totalorder %s32, 1
        %s3419 = scalar_select %p3418, %s32, 1
        %s3420 = smul.addr %s3419, 2
        %s3421 = scalar_lea.vmem %s18, %s3420
      $region116: #{w2vbert_forward.10} parent=103 // pred_fallthru
        _
      // Predicated region
      $region117: #{w2vbert_forward.10} parent=103 // pred_check
        %p3422 = pneg %p474
      $region118: #{w2vbert_forward.10} parent=103 // pred_check_branch
        %3424 = sbr.rel (%p3422) target = $region120
      $region119: #{w2vbert_forward.10} parent=103 // pred_region
        %p3425 = scmp.lt.s32.totalorder %s32, 1
        %s3426 = scalar_select %p3425, %s32, 1
        %s3427 = smul.addr %s3426, 2
        %s3428 = scalar_lea.vmem %s19, %s3427
      $region120: #{w2vbert_forward.10} parent=103 // pred_fallthru
        _
    $region104: #{w2vbert_forward.10} parent=5 // pred_fallthru
      _
  $region6: #{w2vbert_forward.10} parent=0 // loop_footer
    %s30 = sadd.s32 1, %s26
  $region7: #{w2vbert_forward.10} parent=0 // loop_footer_branch
    %25 = sbr.rel target = $region3
  $region8: #{w2vbert_forward.10} parent=0 // loop_exit
    _

</llo_original>
